<compile_context>
chip_gen: v7x
topology: tpu7x:2x2x1
jax: 0.10.0
libtpu: 0.0.40
codegen_flags: <defaults>
</compile_context>

<pallas_src>
import functools
from dataclasses import dataclass

import jax
import jax.numpy as jnp
from jax.experimental import pallas as pl
from jax.experimental.pallas import tpu as pltpu


@dataclass
class TimeEncoderConfig:
    kernel_size: list
    stride: list
    channels: list
    activations: list
    linear_dims: list


def _apply_act(y, name):
    name = name.lower()
    if name == "relu":
        return jnp.maximum(y, 0.0)
    if name == "tanh":
        return jnp.tanh(y)
    if name == "sigmoid":
        return jax.nn.sigmoid(y)
    if name == "gelu":
        return jax.nn.gelu(y)
    if name == "leaky_relu":
        return jnp.where(y >= 0, y, 0.01 * y)
    return jnp.maximum(y, 0.0)


# ----------------------------------------------------------------------------
# Static per-layer geometry (all Python ints, resolved at trace time)
# ----------------------------------------------------------------------------
def _layer_geometry(cfg, l_in0):
    geo, l_in = [], l_in0
    n_layers = len(cfg.kernel_size)
    for i in range(n_layers):
        k, s = cfg.kernel_size[i], cfg.stride[i]
        pad = s                                # padding == stride (see NOTE above)
        lp = l_in + 2 * pad                    # padded input length
        ld = lp - k + 1                        # dense (stride-1) conv length
        l_out = (lp - k) // s + 1              # strided conv length
        l_pool = l_out // 2                    # MaxPool1d(2), floor mode
        lm = ld - s                            # length of max(y[u], y[u+s])
        assert l_pool >= 1 and lm >= 2 * s * (l_pool - 1) + 1
        pad_next = cfg.stride[i + 1] if i + 1 < n_layers else 0
        cols = l_pool + 2 * pad_next           # next layer's (padded) input length
        geo.append(dict(k=k, s=s, pad=pad, lp=lp, ld=ld, l_out=l_out,
                        l_pool=l_pool, lm=lm, pad_next=pad_next, cols=cols))
        l_in = l_pool
    return geo


def _conv_scalar_offsets(cfg):
    """Offsets of each layer's (flat conv weight, bias) inside the packed SMEM array."""
    offs, pos = [], 0
    c, k = cfg.channels, cfg.kernel_size
    for i in range(len(k)):
        w_off = pos
        pos += c[i + 1] * c[i] * k[i]
        b_off = pos
        pos += c[i + 1]
        offs.append((w_off, b_off))
    return offs, pos


# ----------------------------------------------------------------------------
# One fused Pallas kernel for the whole forward pass
# ----------------------------------------------------------------------------
def _time_encoder_kernel(x_ref, cw_ref, w1_ref, b1_ref, w2_ref, b2_ref,
                         o_ref, pad_scr, *, cfg, geo, offs):
    # x_ref:   (N, C0, L0) f32 VMEM     -- raw NCW input
    # cw_ref:  (n_scalars,) f32 SMEM    -- packed conv weights + biases (scalars)
    # w1_ref:  (C4, L4, D1) f32 VMEM    -- fc1 weight, pre-split per channel slab
    # b1_ref:  (1, D1) f32 VMEM
    # w2_ref:  (D1, D2) f32 VMEM        -- fc2 weight, pre-transposed
    # b2_ref:  (1, D2) f32 VMEM
    # o_ref:   (N, D2) f32 VMEM
    # pad_scr: (C0*N, Lp0) f32 VMEM scratch -- zero-padded layer-1 input
    n, c0, l0 = x_ref.shape
    chans = cfg.channels

    # ---- layer-1 input: zero-pad inside the kernel --------------------------
    pad0 = geo[0]["pad"]
    pad_scr[...] = jnp.zeros(pad_scr.shape, jnp.float32)
    xv = x_ref[...]                                            # (N, C0, L0)
    for ci in range(c0):
        pad_scr[pl.ds(ci * n, n), pl.ds(pad0, l0)] = xv[:, ci, :]
    # activations carried as a Python list of per-channel (N, L) lane-dense slabs
    acts = [pad_scr[pl.ds(ci * n, n), :] for ci in range(c0)]  # each (N, Lp0)

    # ---- 4 x (conv -> act -> pool): VPU MACs + one exact MXU select per channel
    for li, g in enumerate(geo):
        c_in, c_out = chans[li], chans[li + 1]
        k, s, ld, lm = g["k"], g["s"], g["ld"], g["lm"]
        pad_next, cols = g["pad_next"], g["cols"]
        w_off, b_off = offs[li]

        # 0/1 selection matrix: column (pad_next + j) picks m[2*s*j]; all other
        # columns (the next layer's zero padding) have no matching row -> 0.
        u = jax.lax.broadcasted_iota(jnp.int32, (lm, cols), 0)
        v = jax.lax.broadcasted_iota(jnp.int32, (lm, cols), 1)
        sel = (u == 2 * s * (v - pad_next)).astype(jnp.float32)

        new_acts = []
        for co in range(c_out):
            # dense (stride-1) conv for this output channel: pure VPU, f32 exact,
            # every tap is a contiguous lane slice of a (N, Lp) slab.
            acc = jnp.zeros((n, ld), jnp.float32)
            for ci in range(c_in):
                a = acts[ci]
                for kk in range(k):
                    w = cw_ref[w_off + (co * c_in + ci) * k + kk]   # SMEM scalar
                    acc = acc + w * a[:, kk:kk + ld]
            acc = acc + cw_ref[b_off + co]                          # conv bias
            acc = _apply_act(acc, cfg.activations[li])              # act BEFORE pool
            # MaxPool(2) candidates of the strided conv: max(y[u], y[u+s]),
            # then the selection matmul keeps u = 2*s*j and writes it already
            # zero-padded for the next layer.
            m = jnp.maximum(acc[:, :lm], acc[:, s:s + lm])
            new_acts.append(jnp.dot(m, sel, preferred_element_type=jnp.float32))
        acts = new_acts

    # ---- flatten (channel-major, == PyTorch nn.Flatten on (N,C,L)) + MLP head --
    w1 = w1_ref[...]                                   # (C4, L4, D1)
    d1 = w1.shape[2]
    h = jnp.zeros((n, d1), jnp.float32)
    for c in range(w1.shape[0]):
        h = h + jnp.dot(acts[c], w1[c], preferred_element_type=jnp.float32)
    h = jnp.maximum(h + b1_ref[...], 0.0)              # fc1 + ReLU
    out = jnp.dot(h, w2_ref[...], preferred_element_type=jnp.float32) + b2_ref[...]
    o_ref[...] = out


# ----------------------------------------------------------------------------
# Hoisted (one-time) parameter repacking + forward wrapper
# ----------------------------------------------------------------------------
def prepare_params(params, cfg):
    """Done once: pack conv scalars for SMEM, pre-transpose fc weights."""
    n_layers = len(cfg.kernel_size)
    pieces = []
    for i in range(n_layers):
        pieces.append(params[f"conv{i+1}_w"].reshape(-1))   # (Cout,Cin,K) row-major
        pieces.append(params[f"conv{i+1}_b"].reshape(-1))
    conv_scalars = jnp.concatenate(pieces).astype(jnp.float32)

    d0, d1, d2 = cfg.linear_dims
    c4 = cfg.channels[-1]
    assert d0 % c4 == 0, "linear_dims[0] must equal C4 * L4"
    l4 = d0 // c4
    w1s = params["fc1_w"].reshape(d1, c4, l4).transpose(1, 2, 0).astype(jnp.float32)
    b1r = params["fc1_b"].reshape(1, d1).astype(jnp.float32)
    w2t = params["fc2_w"].T.astype(jnp.float32)              # (D1, D2)
    b2r = params["fc2_b"].reshape(1, d2).astype(jnp.float32)
    return dict(conv_scalars=conv_scalars, w1s=w1s, b1r=b1r, w2t=w2t, b2r=b2r)


def time_encoder_forward(x_ncw, prep, *, cfg):
    x = x_ncw.astype(jnp.float32)
    n, c0, l0 = x.shape
    geo = _layer_geometry(cfg, l0)
    offs, n_scalars = _conv_scalar_offsets(cfg)
    assert prep["conv_scalars"].shape == (n_scalars,)
    c4 = cfg.channels[-1]
    assert cfg.linear_dims[0] == c4 * geo[-1]["l_pool"], \
        "linear_dims[0] must equal C4 * final pooled length"
    d2 = cfg.linear_dims[2]

    kern = functools.partial(_time_encoder_kernel, cfg=cfg, geo=geo, offs=offs)
    return pl.pallas_call(
        kern,
        out_shape=jax.ShapeDtypeStruct((n, d2), jnp.float32),
        in_specs=[
            pl.BlockSpec(memory_space=pltpu.MemorySpace.VMEM),   # x (N, C0, L0)
            pl.BlockSpec(memory_space=pltpu.MemorySpace.SMEM),   # packed conv scalars
            pl.BlockSpec(memory_space=pltpu.MemorySpace.VMEM),   # fc1 weight slabs
            pl.BlockSpec(memory_space=pltpu.MemorySpace.VMEM),   # fc1 bias row
            pl.BlockSpec(memory_space=pltpu.MemorySpace.VMEM),   # fc2 weight (D1,D2)
            pl.BlockSpec(memory_space=pltpu.MemorySpace.VMEM),   # fc2 bias row
        ],
        out_specs=pl.BlockSpec(memory_space=pltpu.MemorySpace.VMEM),
        scratch_shapes=[pltpu.VMEM((c0 * n, geo[0]["lp"]), jnp.float32)],
    )(x, prep["conv_scalars"], prep["w1s"], prep["b1r"], prep["w2t"], prep["b2r"])


# ----------------------------------------------------------------------------
# Pure-JAX reference (for correctness check), mirrors the PyTorch module
# ----------------------------------------------------------------------------
def ref_forward(x_ncw, params, cfg):
    y = x_ncw.astype(jnp.float32)
    for i in range(4):
        w = params[f"conv{i+1}_w"]
        b = params[f"conv{i+1}_b"]
        s = cfg.stride[i]
        y = jax.lax.conv_general_dilated(
            y, w, window_strides=(s,), padding=[(s, s)],
            dimension_numbers=("NCH", "OIH", "NCH"),
            precision=jax.lax.Precision.HIGHEST)
        y = y + b[None, :, None]
        y = _apply_act(y, cfg.activations[i])
        lpool = y.shape[-1] // 2
        y = jnp.max(y[:, :, : 2 * lpool].reshape(y.shape[0], y.shape[1], lpool, 2),
                    axis=-1)
    flat = y.reshape(y.shape[0], -1)
    h = jnp.maximum(
        jnp.dot(flat, params["fc1_w"].T, precision=jax.lax.Precision.HIGHEST)
        + params["fc1_b"], 0.0)
    return (jnp.dot(h, params["fc2_w"].T, precision=jax.lax.Precision.HIGHEST)
            + params["fc2_b"])


# ----------------------------------------------------------------------------
# Deterministic parameter init (PyTorch-style uniform(-1/sqrt(fan_in), ...))
# ----------------------------------------------------------------------------
def init_params(key, cfg):
    params = {}
    c, k = cfg.channels, cfg.kernel_size
    keys = jax.random.split(key, 12)
    ki = 0

    def uinit(kk, shape, fan_in):
        bound = 1.0 / (fan_in ** 0.5)
        return jax.random.uniform(kk, shape, jnp.float32, -bound, bound)

    for i in range(4):
        fan_in = c[i] * k[i]
        params[f"conv{i+1}_w"] = uinit(keys[ki], (c[i + 1], c[i], k[i]), fan_in); ki += 1
        params[f"conv{i+1}_b"] = uinit(keys[ki], (c[i + 1],), fan_in); ki += 1
    d = cfg.linear_dims
    params["fc1_w"] = uinit(keys[ki], (d[1], d[0]), d[0]); ki += 1
    params["fc1_b"] = uinit(keys[ki], (d[1],), d[0]); ki += 1
    params["fc2_w"] = uinit(keys[ki], (d[2], d[1]), d[1]); ki += 1
    params["fc2_b"] = uinit(keys[ki], (d[2],), d[1]); ki += 1
    return params


if __name__ == "__main__":
    cfg = TimeEncoderConfig(
        kernel_size=[4, 4, 4, 4],
        stride=[2, 2, 2, 2],
        channels=[1, 2, 3, 4, 5],
        activations=["relu", "relu", "relu", "relu"],
        linear_dims=[20, 10, 2],   # 5 channels * final length 4 = 20
    )
    key = jax.random.PRNGKey(0)
    kx, kp = jax.random.split(key)
    # PyTorch-style NCW input: batch=2, channels=1, length=1024
    x = jax.random.normal(kx, (2, 1, 1024), jnp.float32)
    params = init_params(kp, cfg)

    prep = prepare_params(params, cfg)          # hoisted: one-time repack
    fwd = jax.jit(functools.partial(time_encoder_forward, cfg=cfg))

    out = fwd(x, prep)
    out = jax.block_until_ready(out)
    assert out.shape == (2, cfg.linear_dims[2])

    ref = ref_forward(x, params, cfg)
    err = float(jnp.max(jnp.abs(out - ref)))
    if not jnp.allclose(out, ref, atol=2e-3, rtol=2e-3):
        raise AssertionError(f"mismatch: max abs err {err}")

    print("KERNEL_OK")
</pallas_src>

<mosaic_0001>
module attributes {stable_mosaic.version = 11 : i64} {
  func.func @_time_encoder_kernel(%arg0: memref<2x1x1024xf32, #tpu.memory_space<vmem>>, %arg1: memref<174xf32, #tpu.memory_space<smem>>, %arg2: memref<5x4x10xf32, #tpu.memory_space<vmem>>, %arg3: memref<1x10xf32, #tpu.memory_space<vmem>>, %arg4: memref<10x2xf32, #tpu.memory_space<vmem>>, %arg5: memref<1x2xf32, #tpu.memory_space<vmem>>, %arg6: memref<2x2xf32, #tpu.memory_space<vmem>>, %arg7: memref<2x1028xf32, #tpu.memory_space<vmem>>) attributes {dimension_semantics = [], scalar_prefetch = 0 : i64, scratch_operands = 1 : i64, tpu.core_type = #tpu.core_type<tc>} {
    %cst = arith.constant 0.000000e+00 : f32
    %0 = vector.broadcast %cst : f32 to vector<2x1028xf32>
    %c0 = arith.constant 0 : index
    %c0_0 = arith.constant 0 : index
    %1 = vector.load %arg7[%c0, %c0_0] : memref<2x1028xf32, #tpu.memory_space<vmem>>, vector<2x1028xf32>
    tpu.vector_store %arg7[%c0, %c0_0], %0 {strides = array<i32>} : memref<2x1028xf32, #tpu.memory_space<vmem>>, vector<2x1028xf32>,
    %c0_1 = arith.constant 0 : index
    %c0_2 = arith.constant 0 : index
    %c0_3 = arith.constant 0 : index
    %2 = vector.load %arg0[%c0_1, %c0_2, %c0_3] : memref<2x1x1024xf32, #tpu.memory_space<vmem>>, vector<2x1x1024xf32>
    %3 = vector.shape_cast %2 : vector<2x1x1024xf32> to vector<2x1024xf32>
    %c0_4 = arith.constant 0 : index
    %c2 = arith.constant 2 : index
    %4 = vector.load %arg7[%c0_4, %c2] : memref<2x1028xf32, #tpu.memory_space<vmem>>, vector<2x1024xf32>
    tpu.vector_store %arg7[%c0_4, %c2], %3 {strides = array<i32>} : memref<2x1028xf32, #tpu.memory_space<vmem>>, vector<2x1024xf32>,
    %c0_5 = arith.constant 0 : index
    %c0_6 = arith.constant 0 : index
    %5 = vector.load %arg7[%c0_5, %c0_6] : memref<2x1028xf32, #tpu.memory_space<vmem>>, vector<2x1028xf32>
    %6 = tpu.iota {dimensions = array<i32: 0>} : vector<1023x260xi32>
    %7 = tpu.iota {dimensions = array<i32: 1>} : vector<1023x260xi32>
    %c2_i32 = arith.constant 2 : i32
    %8 = vector.broadcast %c2_i32 : i32 to vector<1023x260xi32>
    %9 = arith.subi %7, %8 : vector<1023x260xi32>
    %c4_i32 = arith.constant 4 : i32
    %10 = vector.broadcast %c4_i32 : i32 to vector<1023x260xi32>
    %11 = arith.muli %10, %9 : vector<1023x260xi32>
    %12 = arith.cmpi eq, %6, %11 : vector<1023x260xi32>
    %13 = arith.extui %12 : vector<1023x260xi1> to vector<1023x260xi32>
    %14 = arith.sitofp %13 : vector<1023x260xi32> to vector<1023x260xf32>
    %cst_7 = arith.constant 0.000000e+00 : f32
    %15 = vector.broadcast %cst_7 : f32 to vector<2x1025xf32>
    %c0_8 = arith.constant 0 : index
    %16 = memref.load %arg1[%c0_8] : memref<174xf32, #tpu.memory_space<smem>>
    %17 = vector.extract_strided_slice %5 {offsets = [0, 0], sizes = [2, 1025], strides = [1, 1]} : vector<2x1028xf32> to vector<2x1025xf32>
    %18 = vector.broadcast %16 : f32 to vector<2x1025xf32>
    %19 = arith.mulf %18, %17 : vector<2x1025xf32>
    %20 = arith.addf %15, %19 : vector<2x1025xf32>
    %c1 = arith.constant 1 : index
    %21 = memref.load %arg1[%c1] : memref<174xf32, #tpu.memory_space<smem>>
    %22 = vector.extract_strided_slice %5 {offsets = [0, 1], sizes = [2, 1025], strides = [1, 1]} : vector<2x1028xf32> to vector<2x1025xf32>
    %23 = vector.broadcast %21 : f32 to vector<2x1025xf32>
    %24 = arith.mulf %23, %22 : vector<2x1025xf32>
    %25 = arith.addf %20, %24 : vector<2x1025xf32>
    %c2_9 = arith.constant 2 : index
    %26 = memref.load %arg1[%c2_9] : memref<174xf32, #tpu.memory_space<smem>>
    %27 = vector.extract_strided_slice %5 {offsets = [0, 2], sizes = [2, 1025], strides = [1, 1]} : vector<2x1028xf32> to vector<2x1025xf32>
    %28 = vector.broadcast %26 : f32 to vector<2x1025xf32>
    %29 = arith.mulf %28, %27 : vector<2x1025xf32>
    %30 = arith.addf %25, %29 : vector<2x1025xf32>
    %c3 = arith.constant 3 : index
    %31 = memref.load %arg1[%c3] : memref<174xf32, #tpu.memory_space<smem>>
    %32 = vector.extract_strided_slice %5 {offsets = [0, 3], sizes = [2, 1025], strides = [1, 1]} : vector<2x1028xf32> to vector<2x1025xf32>
    %33 = vector.broadcast %31 : f32 to vector<2x1025xf32>
    %34 = arith.mulf %33, %32 : vector<2x1025xf32>
    %35 = arith.addf %30, %34 : vector<2x1025xf32>
    %c8 = arith.constant 8 : index
    %36 = memref.load %arg1[%c8] : memref<174xf32, #tpu.memory_space<smem>>
    %37 = vector.broadcast %36 : f32 to vector<2x1025xf32>
    %38 = arith.addf %35, %37 : vector<2x1025xf32>
    %cst_10 = arith.constant 0.000000e+00 : f32
    %39 = vector.broadcast %cst_10 : f32 to vector<2x1025xf32>
    %40 = arith.maximumf %38, %39 : vector<2x1025xf32>
    %41 = vector.extract_strided_slice %40 {offsets = [0, 0], sizes = [2, 1023], strides = [1, 1]} : vector<2x1025xf32> to vector<2x1023xf32>
    %42 = vector.extract_strided_slice %40 {offsets = [0, 2], sizes = [2, 1023], strides = [1, 1]} : vector<2x1025xf32> to vector<2x1023xf32>
    %43 = arith.maximumf %41, %42 : vector<2x1023xf32>
    %cst_11 = arith.constant dense<0.000000e+00> : vector<2x260xf32>
    %44 = tpu.matmul %43, %14, %cst_11 {dimension_numbers = #tpu.dot_dimension_numbers<[1], [0], [0], [1], [0, 0, 1, 1], [], []>} : vector<2x1023xf32>, vector<1023x260xf32>, vector<2x260xf32> -> vector<2x260xf32>
    %cst_12 = arith.constant 0.000000e+00 : f32
    %45 = vector.broadcast %cst_12 : f32 to vector<2x1025xf32>
    %c4 = arith.constant 4 : index
    %46 = memref.load %arg1[%c4] : memref<174xf32, #tpu.memory_space<smem>>
    %47 = vector.extract_strided_slice %5 {offsets = [0, 0], sizes = [2, 1025], strides = [1, 1]} : vector<2x1028xf32> to vector<2x1025xf32>
    %48 = vector.broadcast %46 : f32 to vector<2x1025xf32>
    %49 = arith.mulf %48, %47 : vector<2x1025xf32>
    %50 = arith.addf %45, %49 : vector<2x1025xf32>
    %c5 = arith.constant 5 : index
    %51 = memref.load %arg1[%c5] : memref<174xf32, #tpu.memory_space<smem>>
    %52 = vector.extract_strided_slice %5 {offsets = [0, 1], sizes = [2, 1025], strides = [1, 1]} : vector<2x1028xf32> to vector<2x1025xf32>
    %53 = vector.broadcast %51 : f32 to vector<2x1025xf32>
    %54 = arith.mulf %53, %52 : vector<2x1025xf32>
    %55 = arith.addf %50, %54 : vector<2x1025xf32>
    %c6 = arith.constant 6 : index
    %56 = memref.load %arg1[%c6] : memref<174xf32, #tpu.memory_space<smem>>
    %57 = vector.extract_strided_slice %5 {offsets = [0, 2], sizes = [2, 1025], strides = [1, 1]} : vector<2x1028xf32> to vector<2x1025xf32>
    %58 = vector.broadcast %56 : f32 to vector<2x1025xf32>
    %59 = arith.mulf %58, %57 : vector<2x1025xf32>
    %60 = arith.addf %55, %59 : vector<2x1025xf32>
    %c7 = arith.constant 7 : index
    %61 = memref.load %arg1[%c7] : memref<174xf32, #tpu.memory_space<smem>>
    %62 = vector.extract_strided_slice %5 {offsets = [0, 3], sizes = [2, 1025], strides = [1, 1]} : vector<2x1028xf32> to vector<2x1025xf32>
    %63 = vector.broadcast %61 : f32 to vector<2x1025xf32>
    %64 = arith.mulf %63, %62 : vector<2x1025xf32>
    %65 = arith.addf %60, %64 : vector<2x1025xf32>
    %c9 = arith.constant 9 : index
    %66 = memref.load %arg1[%c9] : memref<174xf32, #tpu.memory_space<smem>>
    %67 = vector.broadcast %66 : f32 to vector<2x1025xf32>
    %68 = arith.addf %65, %67 : vector<2x1025xf32>
    %cst_13 = arith.constant 0.000000e+00 : f32
    %69 = vector.broadcast %cst_13 : f32 to vector<2x1025xf32>
    %70 = arith.maximumf %68, %69 : vector<2x1025xf32>
    %71 = vector.extract_strided_slice %70 {offsets = [0, 0], sizes = [2, 1023], strides = [1, 1]} : vector<2x1025xf32> to vector<2x1023xf32>
    %72 = vector.extract_strided_slice %70 {offsets = [0, 2], sizes = [2, 1023], strides = [1, 1]} : vector<2x1025xf32> to vector<2x1023xf32>
    %73 = arith.maximumf %71, %72 : vector<2x1023xf32>
    %cst_14 = arith.constant dense<0.000000e+00> : vector<2x260xf32>
    %74 = tpu.matmul %73, %14, %cst_14 {dimension_numbers = #tpu.dot_dimension_numbers<[1], [0], [0], [1], [0, 0, 1, 1], [], []>} : vector<2x1023xf32>, vector<1023x260xf32>, vector<2x260xf32> -> vector<2x260xf32>
    %75 = tpu.iota {dimensions = array<i32: 0>} : vector<255x68xi32>
    %76 = tpu.iota {dimensions = array<i32: 1>} : vector<255x68xi32>
    %c2_i32_15 = arith.constant 2 : i32
    %77 = vector.broadcast %c2_i32_15 : i32 to vector<255x68xi32>
    %78 = arith.subi %76, %77 : vector<255x68xi32>
    %c4_i32_16 = arith.constant 4 : i32
    %79 = vector.broadcast %c4_i32_16 : i32 to vector<255x68xi32>
    %80 = arith.muli %79, %78 : vector<255x68xi32>
    %81 = arith.cmpi eq, %75, %80 : vector<255x68xi32>
    %82 = arith.extui %81 : vector<255x68xi1> to vector<255x68xi32>
    %83 = arith.sitofp %82 : vector<255x68xi32> to vector<255x68xf32>
    %cst_17 = arith.constant 0.000000e+00 : f32
    %84 = vector.broadcast %cst_17 : f32 to vector<2x257xf32>
    %c10 = arith.constant 10 : index
    %85 = memref.load %arg1[%c10] : memref<174xf32, #tpu.memory_space<smem>>
    %86 = vector.extract_strided_slice %44 {offsets = [0, 0], sizes = [2, 257], strides = [1, 1]} : vector<2x260xf32> to vector<2x257xf32>
    %87 = vector.broadcast %85 : f32 to vector<2x257xf32>
    %88 = arith.mulf %87, %86 : vector<2x257xf32>
    %89 = arith.addf %84, %88 : vector<2x257xf32>
    %c11 = arith.constant 11 : index
    %90 = memref.load %arg1[%c11] : memref<174xf32, #tpu.memory_space<smem>>
    %91 = vector.extract_strided_slice %44 {offsets = [0, 1], sizes = [2, 257], strides = [1, 1]} : vector<2x260xf32> to vector<2x257xf32>
    %92 = vector.broadcast %90 : f32 to vector<2x257xf32>
    %93 = arith.mulf %92, %91 : vector<2x257xf32>
    %94 = arith.addf %89, %93 : vector<2x257xf32>
    %c12 = arith.constant 12 : index
    %95 = memref.load %arg1[%c12] : memref<174xf32, #tpu.memory_space<smem>>
    %96 = vector.extract_strided_slice %44 {offsets = [0, 2], sizes = [2, 257], strides = [1, 1]} : vector<2x260xf32> to vector<2x257xf32>
    %97 = vector.broadcast %95 : f32 to vector<2x257xf32>
    %98 = arith.mulf %97, %96 : vector<2x257xf32>
    %99 = arith.addf %94, %98 : vector<2x257xf32>
    %c13 = arith.constant 13 : index
    %100 = memref.load %arg1[%c13] : memref<174xf32, #tpu.memory_space<smem>>
    %101 = vector.extract_strided_slice %44 {offsets = [0, 3], sizes = [2, 257], strides = [1, 1]} : vector<2x260xf32> to vector<2x257xf32>
    %102 = vector.broadcast %100 : f32 to vector<2x257xf32>
    %103 = arith.mulf %102, %101 : vector<2x257xf32>
    %104 = arith.addf %99, %103 : vector<2x257xf32>
    %c14 = arith.constant 14 : index
    %105 = memref.load %arg1[%c14] : memref<174xf32, #tpu.memory_space<smem>>
    %106 = vector.extract_strided_slice %74 {offsets = [0, 0], sizes = [2, 257], strides = [1, 1]} : vector<2x260xf32> to vector<2x257xf32>
    %107 = vector.broadcast %105 : f32 to vector<2x257xf32>
    %108 = arith.mulf %107, %106 : vector<2x257xf32>
    %109 = arith.addf %104, %108 : vector<2x257xf32>
    %c15 = arith.constant 15 : index
    %110 = memref.load %arg1[%c15] : memref<174xf32, #tpu.memory_space<smem>>
    %111 = vector.extract_strided_slice %74 {offsets = [0, 1], sizes = [2, 257], strides = [1, 1]} : vector<2x260xf32> to vector<2x257xf32>
    %112 = vector.broadcast %110 : f32 to vector<2x257xf32>
    %113 = arith.mulf %112, %111 : vector<2x257xf32>
    %114 = arith.addf %109, %113 : vector<2x257xf32>
    %c16 = arith.constant 16 : index
    %115 = memref.load %arg1[%c16] : memref<174xf32, #tpu.memory_space<smem>>
    %116 = vector.extract_strided_slice %74 {offsets = [0, 2], sizes = [2, 257], strides = [1, 1]} : vector<2x260xf32> to vector<2x257xf32>
    %117 = vector.broadcast %115 : f32 to vector<2x257xf32>
    %118 = arith.mulf %117, %116 : vector<2x257xf32>
    %119 = arith.addf %114, %118 : vector<2x257xf32>
    %c17 = arith.constant 17 : index
    %120 = memref.load %arg1[%c17] : memref<174xf32, #tpu.memory_space<smem>>
    %121 = vector.extract_strided_slice %74 {offsets = [0, 3], sizes = [2, 257], strides = [1, 1]} : vector<2x260xf32> to vector<2x257xf32>
    %122 = vector.broadcast %120 : f32 to vector<2x257xf32>
    %123 = arith.mulf %122, %121 : vector<2x257xf32>
    %124 = arith.addf %119, %123 : vector<2x257xf32>
    %c34 = arith.constant 34 : index
    %125 = memref.load %arg1[%c34] : memref<174xf32, #tpu.memory_space<smem>>
    %126 = vector.broadcast %125 : f32 to vector<2x257xf32>
    %127 = arith.addf %124, %126 : vector<2x257xf32>
    %cst_18 = arith.constant 0.000000e+00 : f32
    %128 = vector.broadcast %cst_18 : f32 to vector<2x257xf32>
    %129 = arith.maximumf %127, %128 : vector<2x257xf32>
    %130 = vector.extract_strided_slice %129 {offsets = [0, 0], sizes = [2, 255], strides = [1, 1]} : vector<2x257xf32> to vector<2x255xf32>
    %131 = vector.extract_strided_slice %129 {offsets = [0, 2], sizes = [2, 255], strides = [1, 1]} : vector<2x257xf32> to vector<2x255xf32>
    %132 = arith.maximumf %130, %131 : vector<2x255xf32>
    %cst_19 = arith.constant dense<0.000000e+00> : vector<2x68xf32>
    %133 = tpu.matmul %132, %83, %cst_19 {dimension_numbers = #tpu.dot_dimension_numbers<[1], [0], [0], [1], [0, 0, 1, 1], [], []>} : vector<2x255xf32>, vector<255x68xf32>, vector<2x68xf32> -> vector<2x68xf32>
    %cst_20 = arith.constant 0.000000e+00 : f32
    %134 = vector.broadcast %cst_20 : f32 to vector<2x257xf32>
    %c18 = arith.constant 18 : index
    %135 = memref.load %arg1[%c18] : memref<174xf32, #tpu.memory_space<smem>>
    %136 = vector.extract_strided_slice %44 {offsets = [0, 0], sizes = [2, 257], strides = [1, 1]} : vector<2x260xf32> to vector<2x257xf32>
    %137 = vector.broadcast %135 : f32 to vector<2x257xf32>
    %138 = arith.mulf %137, %136 : vector<2x257xf32>
    %139 = arith.addf %134, %138 : vector<2x257xf32>
    %c19 = arith.constant 19 : index
    %140 = memref.load %arg1[%c19] : memref<174xf32, #tpu.memory_space<smem>>
    %141 = vector.extract_strided_slice %44 {offsets = [0, 1], sizes = [2, 257], strides = [1, 1]} : vector<2x260xf32> to vector<2x257xf32>
    %142 = vector.broadcast %140 : f32 to vector<2x257xf32>
    %143 = arith.mulf %142, %141 : vector<2x257xf32>
    %144 = arith.addf %139, %143 : vector<2x257xf32>
    %c20 = arith.constant 20 : index
    %145 = memref.load %arg1[%c20] : memref<174xf32, #tpu.memory_space<smem>>
    %146 = vector.extract_strided_slice %44 {offsets = [0, 2], sizes = [2, 257], strides = [1, 1]} : vector<2x260xf32> to vector<2x257xf32>
    %147 = vector.broadcast %145 : f32 to vector<2x257xf32>
    %148 = arith.mulf %147, %146 : vector<2x257xf32>
    %149 = arith.addf %144, %148 : vector<2x257xf32>
    %c21 = arith.constant 21 : index
    %150 = memref.load %arg1[%c21] : memref<174xf32, #tpu.memory_space<smem>>
    %151 = vector.extract_strided_slice %44 {offsets = [0, 3], sizes = [2, 257], strides = [1, 1]} : vector<2x260xf32> to vector<2x257xf32>
    %152 = vector.broadcast %150 : f32 to vector<2x257xf32>
    %153 = arith.mulf %152, %151 : vector<2x257xf32>
    %154 = arith.addf %149, %153 : vector<2x257xf32>
    %c22 = arith.constant 22 : index
    %155 = memref.load %arg1[%c22] : memref<174xf32, #tpu.memory_space<smem>>
    %156 = vector.extract_strided_slice %74 {offsets = [0, 0], sizes = [2, 257], strides = [1, 1]} : vector<2x260xf32> to vector<2x257xf32>
    %157 = vector.broadcast %155 : f32 to vector<2x257xf32>
    %158 = arith.mulf %157, %156 : vector<2x257xf32>
    %159 = arith.addf %154, %158 : vector<2x257xf32>
    %c23 = arith.constant 23 : index
    %160 = memref.load %arg1[%c23] : memref<174xf32, #tpu.memory_space<smem>>
    %161 = vector.extract_strided_slice %74 {offsets = [0, 1], sizes = [2, 257], strides = [1, 1]} : vector<2x260xf32> to vector<2x257xf32>
    %162 = vector.broadcast %160 : f32 to vector<2x257xf32>
    %163 = arith.mulf %162, %161 : vector<2x257xf32>
    %164 = arith.addf %159, %163 : vector<2x257xf32>
    %c24 = arith.constant 24 : index
    %165 = memref.load %arg1[%c24] : memref<174xf32, #tpu.memory_space<smem>>
    %166 = vector.extract_strided_slice %74 {offsets = [0, 2], sizes = [2, 257], strides = [1, 1]} : vector<2x260xf32> to vector<2x257xf32>
    %167 = vector.broadcast %165 : f32 to vector<2x257xf32>
    %168 = arith.mulf %167, %166 : vector<2x257xf32>
    %169 = arith.addf %164, %168 : vector<2x257xf32>
    %c25 = arith.constant 25 : index
    %170 = memref.load %arg1[%c25] : memref<174xf32, #tpu.memory_space<smem>>
    %171 = vector.extract_strided_slice %74 {offsets = [0, 3], sizes = [2, 257], strides = [1, 1]} : vector<2x260xf32> to vector<2x257xf32>
    %172 = vector.broadcast %170 : f32 to vector<2x257xf32>
    %173 = arith.mulf %172, %171 : vector<2x257xf32>
    %174 = arith.addf %169, %173 : vector<2x257xf32>
    %c35 = arith.constant 35 : index
    %175 = memref.load %arg1[%c35] : memref<174xf32, #tpu.memory_space<smem>>
    %176 = vector.broadcast %175 : f32 to vector<2x257xf32>
    %177 = arith.addf %174, %176 : vector<2x257xf32>
    %cst_21 = arith.constant 0.000000e+00 : f32
    %178 = vector.broadcast %cst_21 : f32 to vector<2x257xf32>
    %179 = arith.maximumf %177, %178 : vector<2x257xf32>
    %180 = vector.extract_strided_slice %179 {offsets = [0, 0], sizes = [2, 255], strides = [1, 1]} : vector<2x257xf32> to vector<2x255xf32>
    %181 = vector.extract_strided_slice %179 {offsets = [0, 2], sizes = [2, 255], strides = [1, 1]} : vector<2x257xf32> to vector<2x255xf32>
    %182 = arith.maximumf %180, %181 : vector<2x255xf32>
    %cst_22 = arith.constant dense<0.000000e+00> : vector<2x68xf32>
    %183 = tpu.matmul %182, %83, %cst_22 {dimension_numbers = #tpu.dot_dimension_numbers<[1], [0], [0], [1], [0, 0, 1, 1], [], []>} : vector<2x255xf32>, vector<255x68xf32>, vector<2x68xf32> -> vector<2x68xf32>
    %cst_23 = arith.constant 0.000000e+00 : f32
    %184 = vector.broadcast %cst_23 : f32 to vector<2x257xf32>
    %c26 = arith.constant 26 : index
    %185 = memref.load %arg1[%c26] : memref<174xf32, #tpu.memory_space<smem>>
    %186 = vector.extract_strided_slice %44 {offsets = [0, 0], sizes = [2, 257], strides = [1, 1]} : vector<2x260xf32> to vector<2x257xf32>
    %187 = vector.broadcast %185 : f32 to vector<2x257xf32>
    %188 = arith.mulf %187, %186 : vector<2x257xf32>
    %189 = arith.addf %184, %188 : vector<2x257xf32>
    %c27 = arith.constant 27 : index
    %190 = memref.load %arg1[%c27] : memref<174xf32, #tpu.memory_space<smem>>
    %191 = vector.extract_strided_slice %44 {offsets = [0, 1], sizes = [2, 257], strides = [1, 1]} : vector<2x260xf32> to vector<2x257xf32>
    %192 = vector.broadcast %190 : f32 to vector<2x257xf32>
    %193 = arith.mulf %192, %191 : vector<2x257xf32>
    %194 = arith.addf %189, %193 : vector<2x257xf32>
    %c28 = arith.constant 28 : index
    %195 = memref.load %arg1[%c28] : memref<174xf32, #tpu.memory_space<smem>>
    %196 = vector.extract_strided_slice %44 {offsets = [0, 2], sizes = [2, 257], strides = [1, 1]} : vector<2x260xf32> to vector<2x257xf32>
    %197 = vector.broadcast %195 : f32 to vector<2x257xf32>
    %198 = arith.mulf %197, %196 : vector<2x257xf32>
    %199 = arith.addf %194, %198 : vector<2x257xf32>
    %c29 = arith.constant 29 : index
    %200 = memref.load %arg1[%c29] : memref<174xf32, #tpu.memory_space<smem>>
    %201 = vector.extract_strided_slice %44 {offsets = [0, 3], sizes = [2, 257], strides = [1, 1]} : vector<2x260xf32> to vector<2x257xf32>
    %202 = vector.broadcast %200 : f32 to vector<2x257xf32>
    %203 = arith.mulf %202, %201 : vector<2x257xf32>
    %204 = arith.addf %199, %203 : vector<2x257xf32>
    %c30 = arith.constant 30 : index
    %205 = memref.load %arg1[%c30] : memref<174xf32, #tpu.memory_space<smem>>
    %206 = vector.extract_strided_slice %74 {offsets = [0, 0], sizes = [2, 257], strides = [1, 1]} : vector<2x260xf32> to vector<2x257xf32>
    %207 = vector.broadcast %205 : f32 to vector<2x257xf32>
    %208 = arith.mulf %207, %206 : vector<2x257xf32>
    %209 = arith.addf %204, %208 : vector<2x257xf32>
    %c31 = arith.constant 31 : index
    %210 = memref.load %arg1[%c31] : memref<174xf32, #tpu.memory_space<smem>>
    %211 = vector.extract_strided_slice %74 {offsets = [0, 1], sizes = [2, 257], strides = [1, 1]} : vector<2x260xf32> to vector<2x257xf32>
    %212 = vector.broadcast %210 : f32 to vector<2x257xf32>
    %213 = arith.mulf %212, %211 : vector<2x257xf32>
    %214 = arith.addf %209, %213 : vector<2x257xf32>
    %c32 = arith.constant 32 : index
    %215 = memref.load %arg1[%c32] : memref<174xf32, #tpu.memory_space<smem>>
    %216 = vector.extract_strided_slice %74 {offsets = [0, 2], sizes = [2, 257], strides = [1, 1]} : vector<2x260xf32> to vector<2x257xf32>
    %217 = vector.broadcast %215 : f32 to vector<2x257xf32>
    %218 = arith.mulf %217, %216 : vector<2x257xf32>
    %219 = arith.addf %214, %218 : vector<2x257xf32>
    %c33 = arith.constant 33 : index
    %220 = memref.load %arg1[%c33] : memref<174xf32, #tpu.memory_space<smem>>
    %221 = vector.extract_strided_slice %74 {offsets = [0, 3], sizes = [2, 257], strides = [1, 1]} : vector<2x260xf32> to vector<2x257xf32>
    %222 = vector.broadcast %220 : f32 to vector<2x257xf32>
    %223 = arith.mulf %222, %221 : vector<2x257xf32>
    %224 = arith.addf %219, %223 : vector<2x257xf32>
    %c36 = arith.constant 36 : index
    %225 = memref.load %arg1[%c36] : memref<174xf32, #tpu.memory_space<smem>>
    %226 = vector.broadcast %225 : f32 to vector<2x257xf32>
    %227 = arith.addf %224, %226 : vector<2x257xf32>
    %cst_24 = arith.constant 0.000000e+00 : f32
    %228 = vector.broadcast %cst_24 : f32 to vector<2x257xf32>
    %229 = arith.maximumf %227, %228 : vector<2x257xf32>
    %230 = vector.extract_strided_slice %229 {offsets = [0, 0], sizes = [2, 255], strides = [1, 1]} : vector<2x257xf32> to vector<2x255xf32>
    %231 = vector.extract_strided_slice %229 {offsets = [0, 2], sizes = [2, 255], strides = [1, 1]} : vector<2x257xf32> to vector<2x255xf32>
    %232 = arith.maximumf %230, %231 : vector<2x255xf32>
    %cst_25 = arith.constant dense<0.000000e+00> : vector<2x68xf32>
    %233 = tpu.matmul %232, %83, %cst_25 {dimension_numbers = #tpu.dot_dimension_numbers<[1], [0], [0], [1], [0, 0, 1, 1], [], []>} : vector<2x255xf32>, vector<255x68xf32>, vector<2x68xf32> -> vector<2x68xf32>
    %234 = tpu.iota {dimensions = array<i32: 0>} : vector<63x20xi32>
    %235 = tpu.iota {dimensions = array<i32: 1>} : vector<63x20xi32>
    %c2_i32_26 = arith.constant 2 : i32
    %236 = vector.broadcast %c2_i32_26 : i32 to vector<63x20xi32>
    %237 = arith.subi %235, %236 : vector<63x20xi32>
    %c4_i32_27 = arith.constant 4 : i32
    %238 = vector.broadcast %c4_i32_27 : i32 to vector<63x20xi32>
    %239 = arith.muli %238, %237 : vector<63x20xi32>
    %240 = arith.cmpi eq, %234, %239 : vector<63x20xi32>
    %241 = arith.extui %240 : vector<63x20xi1> to vector<63x20xi32>
    %242 = arith.sitofp %241 : vector<63x20xi32> to vector<63x20xf32>
    %cst_28 = arith.constant 0.000000e+00 : f32
    %243 = vector.broadcast %cst_28 : f32 to vector<2x65xf32>
    %c37 = arith.constant 37 : index
    %244 = memref.load %arg1[%c37] : memref<174xf32, #tpu.memory_space<smem>>
    %245 = vector.extract_strided_slice %133 {offsets = [0, 0], sizes = [2, 65], strides = [1, 1]} : vector<2x68xf32> to vector<2x65xf32>
    %246 = vector.broadcast %244 : f32 to vector<2x65xf32>
    %247 = arith.mulf %246, %245 : vector<2x65xf32>
    %248 = arith.addf %243, %247 : vector<2x65xf32>
    %c38 = arith.constant 38 : index
    %249 = memref.load %arg1[%c38] : memref<174xf32, #tpu.memory_space<smem>>
    %250 = vector.extract_strided_slice %133 {offsets = [0, 1], sizes = [2, 65], strides = [1, 1]} : vector<2x68xf32> to vector<2x65xf32>
    %251 = vector.broadcast %249 : f32 to vector<2x65xf32>
    %252 = arith.mulf %251, %250 : vector<2x65xf32>
    %253 = arith.addf %248, %252 : vector<2x65xf32>
    %c39 = arith.constant 39 : index
    %254 = memref.load %arg1[%c39] : memref<174xf32, #tpu.memory_space<smem>>
    %255 = vector.extract_strided_slice %133 {offsets = [0, 2], sizes = [2, 65], strides = [1, 1]} : vector<2x68xf32> to vector<2x65xf32>
    %256 = vector.broadcast %254 : f32 to vector<2x65xf32>
    %257 = arith.mulf %256, %255 : vector<2x65xf32>
    %258 = arith.addf %253, %257 : vector<2x65xf32>
    %c40 = arith.constant 40 : index
    %259 = memref.load %arg1[%c40] : memref<174xf32, #tpu.memory_space<smem>>
    %260 = vector.extract_strided_slice %133 {offsets = [0, 3], sizes = [2, 65], strides = [1, 1]} : vector<2x68xf32> to vector<2x65xf32>
    %261 = vector.broadcast %259 : f32 to vector<2x65xf32>
    %262 = arith.mulf %261, %260 : vector<2x65xf32>
    %263 = arith.addf %258, %262 : vector<2x65xf32>
    %c41 = arith.constant 41 : index
    %264 = memref.load %arg1[%c41] : memref<174xf32, #tpu.memory_space<smem>>
    %265 = vector.extract_strided_slice %183 {offsets = [0, 0], sizes = [2, 65], strides = [1, 1]} : vector<2x68xf32> to vector<2x65xf32>
    %266 = vector.broadcast %264 : f32 to vector<2x65xf32>
    %267 = arith.mulf %266, %265 : vector<2x65xf32>
    %268 = arith.addf %263, %267 : vector<2x65xf32>
    %c42 = arith.constant 42 : index
    %269 = memref.load %arg1[%c42] : memref<174xf32, #tpu.memory_space<smem>>
    %270 = vector.extract_strided_slice %183 {offsets = [0, 1], sizes = [2, 65], strides = [1, 1]} : vector<2x68xf32> to vector<2x65xf32>
    %271 = vector.broadcast %269 : f32 to vector<2x65xf32>
    %272 = arith.mulf %271, %270 : vector<2x65xf32>
    %273 = arith.addf %268, %272 : vector<2x65xf32>
    %c43 = arith.constant 43 : index
    %274 = memref.load %arg1[%c43] : memref<174xf32, #tpu.memory_space<smem>>
    %275 = vector.extract_strided_slice %183 {offsets = [0, 2], sizes = [2, 65], strides = [1, 1]} : vector<2x68xf32> to vector<2x65xf32>
    %276 = vector.broadcast %274 : f32 to vector<2x65xf32>
    %277 = arith.mulf %276, %275 : vector<2x65xf32>
    %278 = arith.addf %273, %277 : vector<2x65xf32>
    %c44 = arith.constant 44 : index
    %279 = memref.load %arg1[%c44] : memref<174xf32, #tpu.memory_space<smem>>
    %280 = vector.extract_strided_slice %183 {offsets = [0, 3], sizes = [2, 65], strides = [1, 1]} : vector<2x68xf32> to vector<2x65xf32>
    %281 = vector.broadcast %279 : f32 to vector<2x65xf32>
    %282 = arith.mulf %281, %280 : vector<2x65xf32>
    %283 = arith.addf %278, %282 : vector<2x65xf32>
    %c45 = arith.constant 45 : index
    %284 = memref.load %arg1[%c45] : memref<174xf32, #tpu.memory_space<smem>>
    %285 = vector.extract_strided_slice %233 {offsets = [0, 0], sizes = [2, 65], strides = [1, 1]} : vector<2x68xf32> to vector<2x65xf32>
    %286 = vector.broadcast %284 : f32 to vector<2x65xf32>
    %287 = arith.mulf %286, %285 : vector<2x65xf32>
    %288 = arith.addf %283, %287 : vector<2x65xf32>
    %c46 = arith.constant 46 : index
    %289 = memref.load %arg1[%c46] : memref<174xf32, #tpu.memory_space<smem>>
    %290 = vector.extract_strided_slice %233 {offsets = [0, 1], sizes = [2, 65], strides = [1, 1]} : vector<2x68xf32> to vector<2x65xf32>
    %291 = vector.broadcast %289 : f32 to vector<2x65xf32>
    %292 = arith.mulf %291, %290 : vector<2x65xf32>
    %293 = arith.addf %288, %292 : vector<2x65xf32>
    %c47 = arith.constant 47 : index
    %294 = memref.load %arg1[%c47] : memref<174xf32, #tpu.memory_space<smem>>
    %295 = vector.extract_strided_slice %233 {offsets = [0, 2], sizes = [2, 65], strides = [1, 1]} : vector<2x68xf32> to vector<2x65xf32>
    %296 = vector.broadcast %294 : f32 to vector<2x65xf32>
    %297 = arith.mulf %296, %295 : vector<2x65xf32>
    %298 = arith.addf %293, %297 : vector<2x65xf32>
    %c48 = arith.constant 48 : index
    %299 = memref.load %arg1[%c48] : memref<174xf32, #tpu.memory_space<smem>>
    %300 = vector.extract_strided_slice %233 {offsets = [0, 3], sizes = [2, 65], strides = [1, 1]} : vector<2x68xf32> to vector<2x65xf32>
    %301 = vector.broadcast %299 : f32 to vector<2x65xf32>
    %302 = arith.mulf %301, %300 : vector<2x65xf32>
    %303 = arith.addf %298, %302 : vector<2x65xf32>
    %c85 = arith.constant 85 : index
    %304 = memref.load %arg1[%c85] : memref<174xf32, #tpu.memory_space<smem>>
    %305 = vector.broadcast %304 : f32 to vector<2x65xf32>
    %306 = arith.addf %303, %305 : vector<2x65xf32>
    %cst_29 = arith.constant 0.000000e+00 : f32
    %307 = vector.broadcast %cst_29 : f32 to vector<2x65xf32>
    %308 = arith.maximumf %306, %307 : vector<2x65xf32>
    %309 = vector.extract_strided_slice %308 {offsets = [0, 0], sizes = [2, 63], strides = [1, 1]} : vector<2x65xf32> to vector<2x63xf32>
    %310 = vector.extract_strided_slice %308 {offsets = [0, 2], sizes = [2, 63], strides = [1, 1]} : vector<2x65xf32> to vector<2x63xf32>
    %311 = arith.maximumf %309, %310 : vector<2x63xf32>
    %cst_30 = arith.constant dense<0.000000e+00> : vector<2x20xf32>
    %312 = tpu.matmul %311, %242, %cst_30 {dimension_numbers = #tpu.dot_dimension_numbers<[1], [0], [0], [1], [0, 0, 1, 1], [], []>} : vector<2x63xf32>, vector<63x20xf32>, vector<2x20xf32> -> vector<2x20xf32>
    %cst_31 = arith.constant 0.000000e+00 : f32
    %313 = vector.broadcast %cst_31 : f32 to vector<2x65xf32>
    %c49 = arith.constant 49 : index
    %314 = memref.load %arg1[%c49] : memref<174xf32, #tpu.memory_space<smem>>
    %315 = vector.extract_strided_slice %133 {offsets = [0, 0], sizes = [2, 65], strides = [1, 1]} : vector<2x68xf32> to vector<2x65xf32>
    %316 = vector.broadcast %314 : f32 to vector<2x65xf32>
    %317 = arith.mulf %316, %315 : vector<2x65xf32>
    %318 = arith.addf %313, %317 : vector<2x65xf32>
    %c50 = arith.constant 50 : index
    %319 = memref.load %arg1[%c50] : memref<174xf32, #tpu.memory_space<smem>>
    %320 = vector.extract_strided_slice %133 {offsets = [0, 1], sizes = [2, 65], strides = [1, 1]} : vector<2x68xf32> to vector<2x65xf32>
    %321 = vector.broadcast %319 : f32 to vector<2x65xf32>
    %322 = arith.mulf %321, %320 : vector<2x65xf32>
    %323 = arith.addf %318, %322 : vector<2x65xf32>
    %c51 = arith.constant 51 : index
    %324 = memref.load %arg1[%c51] : memref<174xf32, #tpu.memory_space<smem>>
    %325 = vector.extract_strided_slice %133 {offsets = [0, 2], sizes = [2, 65], strides = [1, 1]} : vector<2x68xf32> to vector<2x65xf32>
    %326 = vector.broadcast %324 : f32 to vector<2x65xf32>
    %327 = arith.mulf %326, %325 : vector<2x65xf32>
    %328 = arith.addf %323, %327 : vector<2x65xf32>
    %c52 = arith.constant 52 : index
    %329 = memref.load %arg1[%c52] : memref<174xf32, #tpu.memory_space<smem>>
    %330 = vector.extract_strided_slice %133 {offsets = [0, 3], sizes = [2, 65], strides = [1, 1]} : vector<2x68xf32> to vector<2x65xf32>
    %331 = vector.broadcast %329 : f32 to vector<2x65xf32>
    %332 = arith.mulf %331, %330 : vector<2x65xf32>
    %333 = arith.addf %328, %332 : vector<2x65xf32>
    %c53 = arith.constant 53 : index
    %334 = memref.load %arg1[%c53] : memref<174xf32, #tpu.memory_space<smem>>
    %335 = vector.extract_strided_slice %183 {offsets = [0, 0], sizes = [2, 65], strides = [1, 1]} : vector<2x68xf32> to vector<2x65xf32>
    %336 = vector.broadcast %334 : f32 to vector<2x65xf32>
    %337 = arith.mulf %336, %335 : vector<2x65xf32>
    %338 = arith.addf %333, %337 : vector<2x65xf32>
    %c54 = arith.constant 54 : index
    %339 = memref.load %arg1[%c54] : memref<174xf32, #tpu.memory_space<smem>>
    %340 = vector.extract_strided_slice %183 {offsets = [0, 1], sizes = [2, 65], strides = [1, 1]} : vector<2x68xf32> to vector<2x65xf32>
    %341 = vector.broadcast %339 : f32 to vector<2x65xf32>
    %342 = arith.mulf %341, %340 : vector<2x65xf32>
    %343 = arith.addf %338, %342 : vector<2x65xf32>
    %c55 = arith.constant 55 : index
    %344 = memref.load %arg1[%c55] : memref<174xf32, #tpu.memory_space<smem>>
    %345 = vector.extract_strided_slice %183 {offsets = [0, 2], sizes = [2, 65], strides = [1, 1]} : vector<2x68xf32> to vector<2x65xf32>
    %346 = vector.broadcast %344 : f32 to vector<2x65xf32>
    %347 = arith.mulf %346, %345 : vector<2x65xf32>
    %348 = arith.addf %343, %347 : vector<2x65xf32>
    %c56 = arith.constant 56 : index
    %349 = memref.load %arg1[%c56] : memref<174xf32, #tpu.memory_space<smem>>
    %350 = vector.extract_strided_slice %183 {offsets = [0, 3], sizes = [2, 65], strides = [1, 1]} : vector<2x68xf32> to vector<2x65xf32>
    %351 = vector.broadcast %349 : f32 to vector<2x65xf32>
    %352 = arith.mulf %351, %350 : vector<2x65xf32>
    %353 = arith.addf %348, %352 : vector<2x65xf32>
    %c57 = arith.constant 57 : index
    %354 = memref.load %arg1[%c57] : memref<174xf32, #tpu.memory_space<smem>>
    %355 = vector.extract_strided_slice %233 {offsets = [0, 0], sizes = [2, 65], strides = [1, 1]} : vector<2x68xf32> to vector<2x65xf32>
    %356 = vector.broadcast %354 : f32 to vector<2x65xf32>
    %357 = arith.mulf %356, %355 : vector<2x65xf32>
    %358 = arith.addf %353, %357 : vector<2x65xf32>
    %c58 = arith.constant 58 : index
    %359 = memref.load %arg1[%c58] : memref<174xf32, #tpu.memory_space<smem>>
    %360 = vector.extract_strided_slice %233 {offsets = [0, 1], sizes = [2, 65], strides = [1, 1]} : vector<2x68xf32> to vector<2x65xf32>
    %361 = vector.broadcast %359 : f32 to vector<2x65xf32>
    %362 = arith.mulf %361, %360 : vector<2x65xf32>
    %363 = arith.addf %358, %362 : vector<2x65xf32>
    %c59 = arith.constant 59 : index
    %364 = memref.load %arg1[%c59] : memref<174xf32, #tpu.memory_space<smem>>
    %365 = vector.extract_strided_slice %233 {offsets = [0, 2], sizes = [2, 65], strides = [1, 1]} : vector<2x68xf32> to vector<2x65xf32>
    %366 = vector.broadcast %364 : f32 to vector<2x65xf32>
    %367 = arith.mulf %366, %365 : vector<2x65xf32>
    %368 = arith.addf %363, %367 : vector<2x65xf32>
    %c60 = arith.constant 60 : index
    %369 = memref.load %arg1[%c60] : memref<174xf32, #tpu.memory_space<smem>>
    %370 = vector.extract_strided_slice %233 {offsets = [0, 3], sizes = [2, 65], strides = [1, 1]} : vector<2x68xf32> to vector<2x65xf32>
    %371 = vector.broadcast %369 : f32 to vector<2x65xf32>
    %372 = arith.mulf %371, %370 : vector<2x65xf32>
    %373 = arith.addf %368, %372 : vector<2x65xf32>
    %c86 = arith.constant 86 : index
    %374 = memref.load %arg1[%c86] : memref<174xf32, #tpu.memory_space<smem>>
    %375 = vector.broadcast %374 : f32 to vector<2x65xf32>
    %376 = arith.addf %373, %375 : vector<2x65xf32>
    %cst_32 = arith.constant 0.000000e+00 : f32
    %377 = vector.broadcast %cst_32 : f32 to vector<2x65xf32>
    %378 = arith.maximumf %376, %377 : vector<2x65xf32>
    %379 = vector.extract_strided_slice %378 {offsets = [0, 0], sizes = [2, 63], strides = [1, 1]} : vector<2x65xf32> to vector<2x63xf32>
    %380 = vector.extract_strided_slice %378 {offsets = [0, 2], sizes = [2, 63], strides = [1, 1]} : vector<2x65xf32> to vector<2x63xf32>
    %381 = arith.maximumf %379, %380 : vector<2x63xf32>
    %cst_33 = arith.constant dense<0.000000e+00> : vector<2x20xf32>
    %382 = tpu.matmul %381, %242, %cst_33 {dimension_numbers = #tpu.dot_dimension_numbers<[1], [0], [0], [1], [0, 0, 1, 1], [], []>} : vector<2x63xf32>, vector<63x20xf32>, vector<2x20xf32> -> vector<2x20xf32>
    %cst_34 = arith.constant 0.000000e+00 : f32
    %383 = vector.broadcast %cst_34 : f32 to vector<2x65xf32>
    %c61 = arith.constant 61 : index
    %384 = memref.load %arg1[%c61] : memref<174xf32, #tpu.memory_space<smem>>
    %385 = vector.extract_strided_slice %133 {offsets = [0, 0], sizes = [2, 65], strides = [1, 1]} : vector<2x68xf32> to vector<2x65xf32>
    %386 = vector.broadcast %384 : f32 to vector<2x65xf32>
    %387 = arith.mulf %386, %385 : vector<2x65xf32>
    %388 = arith.addf %383, %387 : vector<2x65xf32>
    %c62 = arith.constant 62 : index
    %389 = memref.load %arg1[%c62] : memref<174xf32, #tpu.memory_space<smem>>
    %390 = vector.extract_strided_slice %133 {offsets = [0, 1], sizes = [2, 65], strides = [1, 1]} : vector<2x68xf32> to vector<2x65xf32>
    %391 = vector.broadcast %389 : f32 to vector<2x65xf32>
    %392 = arith.mulf %391, %390 : vector<2x65xf32>
    %393 = arith.addf %388, %392 : vector<2x65xf32>
    %c63 = arith.constant 63 : index
    %394 = memref.load %arg1[%c63] : memref<174xf32, #tpu.memory_space<smem>>
    %395 = vector.extract_strided_slice %133 {offsets = [0, 2], sizes = [2, 65], strides = [1, 1]} : vector<2x68xf32> to vector<2x65xf32>
    %396 = vector.broadcast %394 : f32 to vector<2x65xf32>
    %397 = arith.mulf %396, %395 : vector<2x65xf32>
    %398 = arith.addf %393, %397 : vector<2x65xf32>
    %c64 = arith.constant 64 : index
    %399 = memref.load %arg1[%c64] : memref<174xf32, #tpu.memory_space<smem>>
    %400 = vector.extract_strided_slice %133 {offsets = [0, 3], sizes = [2, 65], strides = [1, 1]} : vector<2x68xf32> to vector<2x65xf32>
    %401 = vector.broadcast %399 : f32 to vector<2x65xf32>
    %402 = arith.mulf %401, %400 : vector<2x65xf32>
    %403 = arith.addf %398, %402 : vector<2x65xf32>
    %c65 = arith.constant 65 : index
    %404 = memref.load %arg1[%c65] : memref<174xf32, #tpu.memory_space<smem>>
    %405 = vector.extract_strided_slice %183 {offsets = [0, 0], sizes = [2, 65], strides = [1, 1]} : vector<2x68xf32> to vector<2x65xf32>
    %406 = vector.broadcast %404 : f32 to vector<2x65xf32>
    %407 = arith.mulf %406, %405 : vector<2x65xf32>
    %408 = arith.addf %403, %407 : vector<2x65xf32>
    %c66 = arith.constant 66 : index
    %409 = memref.load %arg1[%c66] : memref<174xf32, #tpu.memory_space<smem>>
    %410 = vector.extract_strided_slice %183 {offsets = [0, 1], sizes = [2, 65], strides = [1, 1]} : vector<2x68xf32> to vector<2x65xf32>
    %411 = vector.broadcast %409 : f32 to vector<2x65xf32>
    %412 = arith.mulf %411, %410 : vector<2x65xf32>
    %413 = arith.addf %408, %412 : vector<2x65xf32>
    %c67 = arith.constant 67 : index
    %414 = memref.load %arg1[%c67] : memref<174xf32, #tpu.memory_space<smem>>
    %415 = vector.extract_strided_slice %183 {offsets = [0, 2], sizes = [2, 65], strides = [1, 1]} : vector<2x68xf32> to vector<2x65xf32>
    %416 = vector.broadcast %414 : f32 to vector<2x65xf32>
    %417 = arith.mulf %416, %415 : vector<2x65xf32>
    %418 = arith.addf %413, %417 : vector<2x65xf32>
    %c68 = arith.constant 68 : index
    %419 = memref.load %arg1[%c68] : memref<174xf32, #tpu.memory_space<smem>>
    %420 = vector.extract_strided_slice %183 {offsets = [0, 3], sizes = [2, 65], strides = [1, 1]} : vector<2x68xf32> to vector<2x65xf32>
    %421 = vector.broadcast %419 : f32 to vector<2x65xf32>
    %422 = arith.mulf %421, %420 : vector<2x65xf32>
    %423 = arith.addf %418, %422 : vector<2x65xf32>
    %c69 = arith.constant 69 : index
    %424 = memref.load %arg1[%c69] : memref<174xf32, #tpu.memory_space<smem>>
    %425 = vector.extract_strided_slice %233 {offsets = [0, 0], sizes = [2, 65], strides = [1, 1]} : vector<2x68xf32> to vector<2x65xf32>
    %426 = vector.broadcast %424 : f32 to vector<2x65xf32>
    %427 = arith.mulf %426, %425 : vector<2x65xf32>
    %428 = arith.addf %423, %427 : vector<2x65xf32>
    %c70 = arith.constant 70 : index
    %429 = memref.load %arg1[%c70] : memref<174xf32, #tpu.memory_space<smem>>
    %430 = vector.extract_strided_slice %233 {offsets = [0, 1], sizes = [2, 65], strides = [1, 1]} : vector<2x68xf32> to vector<2x65xf32>
    %431 = vector.broadcast %429 : f32 to vector<2x65xf32>
    %432 = arith.mulf %431, %430 : vector<2x65xf32>
    %433 = arith.addf %428, %432 : vector<2x65xf32>
    %c71 = arith.constant 71 : index
    %434 = memref.load %arg1[%c71] : memref<174xf32, #tpu.memory_space<smem>>
    %435 = vector.extract_strided_slice %233 {offsets = [0, 2], sizes = [2, 65], strides = [1, 1]} : vector<2x68xf32> to vector<2x65xf32>
    %436 = vector.broadcast %434 : f32 to vector<2x65xf32>
    %437 = arith.mulf %436, %435 : vector<2x65xf32>
    %438 = arith.addf %433, %437 : vector<2x65xf32>
    %c72 = arith.constant 72 : index
    %439 = memref.load %arg1[%c72] : memref<174xf32, #tpu.memory_space<smem>>
    %440 = vector.extract_strided_slice %233 {offsets = [0, 3], sizes = [2, 65], strides = [1, 1]} : vector<2x68xf32> to vector<2x65xf32>
    %441 = vector.broadcast %439 : f32 to vector<2x65xf32>
    %442 = arith.mulf %441, %440 : vector<2x65xf32>
    %443 = arith.addf %438, %442 : vector<2x65xf32>
    %c87 = arith.constant 87 : index
    %444 = memref.load %arg1[%c87] : memref<174xf32, #tpu.memory_space<smem>>
    %445 = vector.broadcast %444 : f32 to vector<2x65xf32>
    %446 = arith.addf %443, %445 : vector<2x65xf32>
    %cst_35 = arith.constant 0.000000e+00 : f32
    %447 = vector.broadcast %cst_35 : f32 to vector<2x65xf32>
    %448 = arith.maximumf %446, %447 : vector<2x65xf32>
    %449 = vector.extract_strided_slice %448 {offsets = [0, 0], sizes = [2, 63], strides = [1, 1]} : vector<2x65xf32> to vector<2x63xf32>
    %450 = vector.extract_strided_slice %448 {offsets = [0, 2], sizes = [2, 63], strides = [1, 1]} : vector<2x65xf32> to vector<2x63xf32>
    %451 = arith.maximumf %449, %450 : vector<2x63xf32>
    %cst_36 = arith.constant dense<0.000000e+00> : vector<2x20xf32>
    %452 = tpu.matmul %451, %242, %cst_36 {dimension_numbers = #tpu.dot_dimension_numbers<[1], [0], [0], [1], [0, 0, 1, 1], [], []>} : vector<2x63xf32>, vector<63x20xf32>, vector<2x20xf32> -> vector<2x20xf32>
    %cst_37 = arith.constant 0.000000e+00 : f32
    %453 = vector.broadcast %cst_37 : f32 to vector<2x65xf32>
    %c73 = arith.constant 73 : index
    %454 = memref.load %arg1[%c73] : memref<174xf32, #tpu.memory_space<smem>>
    %455 = vector.extract_strided_slice %133 {offsets = [0, 0], sizes = [2, 65], strides = [1, 1]} : vector<2x68xf32> to vector<2x65xf32>
    %456 = vector.broadcast %454 : f32 to vector<2x65xf32>
    %457 = arith.mulf %456, %455 : vector<2x65xf32>
    %458 = arith.addf %453, %457 : vector<2x65xf32>
    %c74 = arith.constant 74 : index
    %459 = memref.load %arg1[%c74] : memref<174xf32, #tpu.memory_space<smem>>
    %460 = vector.extract_strided_slice %133 {offsets = [0, 1], sizes = [2, 65], strides = [1, 1]} : vector<2x68xf32> to vector<2x65xf32>
    %461 = vector.broadcast %459 : f32 to vector<2x65xf32>
    %462 = arith.mulf %461, %460 : vector<2x65xf32>
    %463 = arith.addf %458, %462 : vector<2x65xf32>
    %c75 = arith.constant 75 : index
    %464 = memref.load %arg1[%c75] : memref<174xf32, #tpu.memory_space<smem>>
    %465 = vector.extract_strided_slice %133 {offsets = [0, 2], sizes = [2, 65], strides = [1, 1]} : vector<2x68xf32> to vector<2x65xf32>
    %466 = vector.broadcast %464 : f32 to vector<2x65xf32>
    %467 = arith.mulf %466, %465 : vector<2x65xf32>
    %468 = arith.addf %463, %467 : vector<2x65xf32>
    %c76 = arith.constant 76 : index
    %469 = memref.load %arg1[%c76] : memref<174xf32, #tpu.memory_space<smem>>
    %470 = vector.extract_strided_slice %133 {offsets = [0, 3], sizes = [2, 65], strides = [1, 1]} : vector<2x68xf32> to vector<2x65xf32>
    %471 = vector.broadcast %469 : f32 to vector<2x65xf32>
    %472 = arith.mulf %471, %470 : vector<2x65xf32>
    %473 = arith.addf %468, %472 : vector<2x65xf32>
    %c77 = arith.constant 77 : index
    %474 = memref.load %arg1[%c77] : memref<174xf32, #tpu.memory_space<smem>>
    %475 = vector.extract_strided_slice %183 {offsets = [0, 0], sizes = [2, 65], strides = [1, 1]} : vector<2x68xf32> to vector<2x65xf32>
    %476 = vector.broadcast %474 : f32 to vector<2x65xf32>
    %477 = arith.mulf %476, %475 : vector<2x65xf32>
    %478 = arith.addf %473, %477 : vector<2x65xf32>
    %c78 = arith.constant 78 : index
    %479 = memref.load %arg1[%c78] : memref<174xf32, #tpu.memory_space<smem>>
    %480 = vector.extract_strided_slice %183 {offsets = [0, 1], sizes = [2, 65], strides = [1, 1]} : vector<2x68xf32> to vector<2x65xf32>
    %481 = vector.broadcast %479 : f32 to vector<2x65xf32>
    %482 = arith.mulf %481, %480 : vector<2x65xf32>
    %483 = arith.addf %478, %482 : vector<2x65xf32>
    %c79 = arith.constant 79 : index
    %484 = memref.load %arg1[%c79] : memref<174xf32, #tpu.memory_space<smem>>
    %485 = vector.extract_strided_slice %183 {offsets = [0, 2], sizes = [2, 65], strides = [1, 1]} : vector<2x68xf32> to vector<2x65xf32>
    %486 = vector.broadcast %484 : f32 to vector<2x65xf32>
    %487 = arith.mulf %486, %485 : vector<2x65xf32>
    %488 = arith.addf %483, %487 : vector<2x65xf32>
    %c80 = arith.constant 80 : index
    %489 = memref.load %arg1[%c80] : memref<174xf32, #tpu.memory_space<smem>>
    %490 = vector.extract_strided_slice %183 {offsets = [0, 3], sizes = [2, 65], strides = [1, 1]} : vector<2x68xf32> to vector<2x65xf32>
    %491 = vector.broadcast %489 : f32 to vector<2x65xf32>
    %492 = arith.mulf %491, %490 : vector<2x65xf32>
    %493 = arith.addf %488, %492 : vector<2x65xf32>
    %c81 = arith.constant 81 : index
    %494 = memref.load %arg1[%c81] : memref<174xf32, #tpu.memory_space<smem>>
    %495 = vector.extract_strided_slice %233 {offsets = [0, 0], sizes = [2, 65], strides = [1, 1]} : vector<2x68xf32> to vector<2x65xf32>
    %496 = vector.broadcast %494 : f32 to vector<2x65xf32>
    %497 = arith.mulf %496, %495 : vector<2x65xf32>
    %498 = arith.addf %493, %497 : vector<2x65xf32>
    %c82 = arith.constant 82 : index
    %499 = memref.load %arg1[%c82] : memref<174xf32, #tpu.memory_space<smem>>
    %500 = vector.extract_strided_slice %233 {offsets = [0, 1], sizes = [2, 65], strides = [1, 1]} : vector<2x68xf32> to vector<2x65xf32>
    %501 = vector.broadcast %499 : f32 to vector<2x65xf32>
    %502 = arith.mulf %501, %500 : vector<2x65xf32>
    %503 = arith.addf %498, %502 : vector<2x65xf32>
    %c83 = arith.constant 83 : index
    %504 = memref.load %arg1[%c83] : memref<174xf32, #tpu.memory_space<smem>>
    %505 = vector.extract_strided_slice %233 {offsets = [0, 2], sizes = [2, 65], strides = [1, 1]} : vector<2x68xf32> to vector<2x65xf32>
    %506 = vector.broadcast %504 : f32 to vector<2x65xf32>
    %507 = arith.mulf %506, %505 : vector<2x65xf32>
    %508 = arith.addf %503, %507 : vector<2x65xf32>
    %c84 = arith.constant 84 : index
    %509 = memref.load %arg1[%c84] : memref<174xf32, #tpu.memory_space<smem>>
    %510 = vector.extract_strided_slice %233 {offsets = [0, 3], sizes = [2, 65], strides = [1, 1]} : vector<2x68xf32> to vector<2x65xf32>
    %511 = vector.broadcast %509 : f32 to vector<2x65xf32>
    %512 = arith.mulf %511, %510 : vector<2x65xf32>
    %513 = arith.addf %508, %512 : vector<2x65xf32>
    %c88 = arith.constant 88 : index
    %514 = memref.load %arg1[%c88] : memref<174xf32, #tpu.memory_space<smem>>
    %515 = vector.broadcast %514 : f32 to vector<2x65xf32>
    %516 = arith.addf %513, %515 : vector<2x65xf32>
    %cst_38 = arith.constant 0.000000e+00 : f32
    %517 = vector.broadcast %cst_38 : f32 to vector<2x65xf32>
    %518 = arith.maximumf %516, %517 : vector<2x65xf32>
    %519 = vector.extract_strided_slice %518 {offsets = [0, 0], sizes = [2, 63], strides = [1, 1]} : vector<2x65xf32> to vector<2x63xf32>
    %520 = vector.extract_strided_slice %518 {offsets = [0, 2], sizes = [2, 63], strides = [1, 1]} : vector<2x65xf32> to vector<2x63xf32>
    %521 = arith.maximumf %519, %520 : vector<2x63xf32>
    %cst_39 = arith.constant dense<0.000000e+00> : vector<2x20xf32>
    %522 = tpu.matmul %521, %242, %cst_39 {dimension_numbers = #tpu.dot_dimension_numbers<[1], [0], [0], [1], [0, 0, 1, 1], [], []>} : vector<2x63xf32>, vector<63x20xf32>, vector<2x20xf32> -> vector<2x20xf32>
    %523 = tpu.iota {dimensions = array<i32: 0>} : vector<15x4xi32>
    %524 = tpu.iota {dimensions = array<i32: 1>} : vector<15x4xi32>
    %c0_i32 = arith.constant 0 : i32
    %525 = vector.broadcast %c0_i32 : i32 to vector<15x4xi32>
    %526 = arith.subi %524, %525 : vector<15x4xi32>
    %c4_i32_40 = arith.constant 4 : i32
    %527 = vector.broadcast %c4_i32_40 : i32 to vector<15x4xi32>
    %528 = arith.muli %527, %526 : vector<15x4xi32>
    %529 = arith.cmpi eq, %523, %528 : vector<15x4xi32>
    %530 = arith.extui %529 : vector<15x4xi1> to vector<15x4xi32>
    %531 = arith.sitofp %530 : vector<15x4xi32> to vector<15x4xf32>
    %cst_41 = arith.constant 0.000000e+00 : f32
    %532 = vector.broadcast %cst_41 : f32 to vector<2x17xf32>
    %c89 = arith.constant 89 : index
    %533 = memref.load %arg1[%c89] : memref<174xf32, #tpu.memory_space<smem>>
    %534 = vector.extract_strided_slice %312 {offsets = [0, 0], sizes = [2, 17], strides = [1, 1]} : vector<2x20xf32> to vector<2x17xf32>
    %535 = vector.broadcast %533 : f32 to vector<2x17xf32>
    %536 = arith.mulf %535, %534 : vector<2x17xf32>
    %537 = arith.addf %532, %536 : vector<2x17xf32>
    %c90 = arith.constant 90 : index
    %538 = memref.load %arg1[%c90] : memref<174xf32, #tpu.memory_space<smem>>
    %539 = vector.extract_strided_slice %312 {offsets = [0, 1], sizes = [2, 17], strides = [1, 1]} : vector<2x20xf32> to vector<2x17xf32>
    %540 = vector.broadcast %538 : f32 to vector<2x17xf32>
    %541 = arith.mulf %540, %539 : vector<2x17xf32>
    %542 = arith.addf %537, %541 : vector<2x17xf32>
    %c91 = arith.constant 91 : index
    %543 = memref.load %arg1[%c91] : memref<174xf32, #tpu.memory_space<smem>>
    %544 = vector.extract_strided_slice %312 {offsets = [0, 2], sizes = [2, 17], strides = [1, 1]} : vector<2x20xf32> to vector<2x17xf32>
    %545 = vector.broadcast %543 : f32 to vector<2x17xf32>
    %546 = arith.mulf %545, %544 : vector<2x17xf32>
    %547 = arith.addf %542, %546 : vector<2x17xf32>
    %c92 = arith.constant 92 : index
    %548 = memref.load %arg1[%c92] : memref<174xf32, #tpu.memory_space<smem>>
    %549 = vector.extract_strided_slice %312 {offsets = [0, 3], sizes = [2, 17], strides = [1, 1]} : vector<2x20xf32> to vector<2x17xf32>
    %550 = vector.broadcast %548 : f32 to vector<2x17xf32>
    %551 = arith.mulf %550, %549 : vector<2x17xf32>
    %552 = arith.addf %547, %551 : vector<2x17xf32>
    %c93 = arith.constant 93 : index
    %553 = memref.load %arg1[%c93] : memref<174xf32, #tpu.memory_space<smem>>
    %554 = vector.extract_strided_slice %382 {offsets = [0, 0], sizes = [2, 17], strides = [1, 1]} : vector<2x20xf32> to vector<2x17xf32>
    %555 = vector.broadcast %553 : f32 to vector<2x17xf32>
    %556 = arith.mulf %555, %554 : vector<2x17xf32>
    %557 = arith.addf %552, %556 : vector<2x17xf32>
    %c94 = arith.constant 94 : index
    %558 = memref.load %arg1[%c94] : memref<174xf32, #tpu.memory_space<smem>>
    %559 = vector.extract_strided_slice %382 {offsets = [0, 1], sizes = [2, 17], strides = [1, 1]} : vector<2x20xf32> to vector<2x17xf32>
    %560 = vector.broadcast %558 : f32 to vector<2x17xf32>
    %561 = arith.mulf %560, %559 : vector<2x17xf32>
    %562 = arith.addf %557, %561 : vector<2x17xf32>
    %c95 = arith.constant 95 : index
    %563 = memref.load %arg1[%c95] : memref<174xf32, #tpu.memory_space<smem>>
    %564 = vector.extract_strided_slice %382 {offsets = [0, 2], sizes = [2, 17], strides = [1, 1]} : vector<2x20xf32> to vector<2x17xf32>
    %565 = vector.broadcast %563 : f32 to vector<2x17xf32>
    %566 = arith.mulf %565, %564 : vector<2x17xf32>
    %567 = arith.addf %562, %566 : vector<2x17xf32>
    %c96 = arith.constant 96 : index
    %568 = memref.load %arg1[%c96] : memref<174xf32, #tpu.memory_space<smem>>
    %569 = vector.extract_strided_slice %382 {offsets = [0, 3], sizes = [2, 17], strides = [1, 1]} : vector<2x20xf32> to vector<2x17xf32>
    %570 = vector.broadcast %568 : f32 to vector<2x17xf32>
    %571 = arith.mulf %570, %569 : vector<2x17xf32>
    %572 = arith.addf %567, %571 : vector<2x17xf32>
    %c97 = arith.constant 97 : index
    %573 = memref.load %arg1[%c97] : memref<174xf32, #tpu.memory_space<smem>>
    %574 = vector.extract_strided_slice %452 {offsets = [0, 0], sizes = [2, 17], strides = [1, 1]} : vector<2x20xf32> to vector<2x17xf32>
    %575 = vector.broadcast %573 : f32 to vector<2x17xf32>
    %576 = arith.mulf %575, %574 : vector<2x17xf32>
    %577 = arith.addf %572, %576 : vector<2x17xf32>
    %c98 = arith.constant 98 : index
    %578 = memref.load %arg1[%c98] : memref<174xf32, #tpu.memory_space<smem>>
    %579 = vector.extract_strided_slice %452 {offsets = [0, 1], sizes = [2, 17], strides = [1, 1]} : vector<2x20xf32> to vector<2x17xf32>
    %580 = vector.broadcast %578 : f32 to vector<2x17xf32>
    %581 = arith.mulf %580, %579 : vector<2x17xf32>
    %582 = arith.addf %577, %581 : vector<2x17xf32>
    %c99 = arith.constant 99 : index
    %583 = memref.load %arg1[%c99] : memref<174xf32, #tpu.memory_space<smem>>
    %584 = vector.extract_strided_slice %452 {offsets = [0, 2], sizes = [2, 17], strides = [1, 1]} : vector<2x20xf32> to vector<2x17xf32>
    %585 = vector.broadcast %583 : f32 to vector<2x17xf32>
    %586 = arith.mulf %585, %584 : vector<2x17xf32>
    %587 = arith.addf %582, %586 : vector<2x17xf32>
    %c100 = arith.constant 100 : index
    %588 = memref.load %arg1[%c100] : memref<174xf32, #tpu.memory_space<smem>>
    %589 = vector.extract_strided_slice %452 {offsets = [0, 3], sizes = [2, 17], strides = [1, 1]} : vector<2x20xf32> to vector<2x17xf32>
    %590 = vector.broadcast %588 : f32 to vector<2x17xf32>
    %591 = arith.mulf %590, %589 : vector<2x17xf32>
    %592 = arith.addf %587, %591 : vector<2x17xf32>
    %c101 = arith.constant 101 : index
    %593 = memref.load %arg1[%c101] : memref<174xf32, #tpu.memory_space<smem>>
    %594 = vector.extract_strided_slice %522 {offsets = [0, 0], sizes = [2, 17], strides = [1, 1]} : vector<2x20xf32> to vector<2x17xf32>
    %595 = vector.broadcast %593 : f32 to vector<2x17xf32>
    %596 = arith.mulf %595, %594 : vector<2x17xf32>
    %597 = arith.addf %592, %596 : vector<2x17xf32>
    %c102 = arith.constant 102 : index
    %598 = memref.load %arg1[%c102] : memref<174xf32, #tpu.memory_space<smem>>
    %599 = vector.extract_strided_slice %522 {offsets = [0, 1], sizes = [2, 17], strides = [1, 1]} : vector<2x20xf32> to vector<2x17xf32>
    %600 = vector.broadcast %598 : f32 to vector<2x17xf32>
    %601 = arith.mulf %600, %599 : vector<2x17xf32>
    %602 = arith.addf %597, %601 : vector<2x17xf32>
    %c103 = arith.constant 103 : index
    %603 = memref.load %arg1[%c103] : memref<174xf32, #tpu.memory_space<smem>>
    %604 = vector.extract_strided_slice %522 {offsets = [0, 2], sizes = [2, 17], strides = [1, 1]} : vector<2x20xf32> to vector<2x17xf32>
    %605 = vector.broadcast %603 : f32 to vector<2x17xf32>
    %606 = arith.mulf %605, %604 : vector<2x17xf32>
    %607 = arith.addf %602, %606 : vector<2x17xf32>
    %c104 = arith.constant 104 : index
    %608 = memref.load %arg1[%c104] : memref<174xf32, #tpu.memory_space<smem>>
    %609 = vector.extract_strided_slice %522 {offsets = [0, 3], sizes = [2, 17], strides = [1, 1]} : vector<2x20xf32> to vector<2x17xf32>
    %610 = vector.broadcast %608 : f32 to vector<2x17xf32>
    %611 = arith.mulf %610, %609 : vector<2x17xf32>
    %612 = arith.addf %607, %611 : vector<2x17xf32>
    %c169 = arith.constant 169 : index
    %613 = memref.load %arg1[%c169] : memref<174xf32, #tpu.memory_space<smem>>
    %614 = vector.broadcast %613 : f32 to vector<2x17xf32>
    %615 = arith.addf %612, %614 : vector<2x17xf32>
    %cst_42 = arith.constant 0.000000e+00 : f32
    %616 = vector.broadcast %cst_42 : f32 to vector<2x17xf32>
    %617 = arith.maximumf %615, %616 : vector<2x17xf32>
    %618 = vector.extract_strided_slice %617 {offsets = [0, 0], sizes = [2, 15], strides = [1, 1]} : vector<2x17xf32> to vector<2x15xf32>
    %619 = vector.extract_strided_slice %617 {offsets = [0, 2], sizes = [2, 15], strides = [1, 1]} : vector<2x17xf32> to vector<2x15xf32>
    %620 = arith.maximumf %618, %619 : vector<2x15xf32>
    %cst_43 = arith.constant dense<0.000000e+00> : vector<2x4xf32>
    %621 = tpu.matmul %620, %531, %cst_43 {dimension_numbers = #tpu.dot_dimension_numbers<[1], [0], [0], [1], [0, 0, 1, 1], [], []>} : vector<2x15xf32>, vector<15x4xf32>, vector<2x4xf32> -> vector<2x4xf32>
    %cst_44 = arith.constant 0.000000e+00 : f32
    %622 = vector.broadcast %cst_44 : f32 to vector<2x17xf32>
    %c105 = arith.constant 105 : index
    %623 = memref.load %arg1[%c105] : memref<174xf32, #tpu.memory_space<smem>>
    %624 = vector.extract_strided_slice %312 {offsets = [0, 0], sizes = [2, 17], strides = [1, 1]} : vector<2x20xf32> to vector<2x17xf32>
    %625 = vector.broadcast %623 : f32 to vector<2x17xf32>
    %626 = arith.mulf %625, %624 : vector<2x17xf32>
    %627 = arith.addf %622, %626 : vector<2x17xf32>
    %c106 = arith.constant 106 : index
    %628 = memref.load %arg1[%c106] : memref<174xf32, #tpu.memory_space<smem>>
    %629 = vector.extract_strided_slice %312 {offsets = [0, 1], sizes = [2, 17], strides = [1, 1]} : vector<2x20xf32> to vector<2x17xf32>
    %630 = vector.broadcast %628 : f32 to vector<2x17xf32>
    %631 = arith.mulf %630, %629 : vector<2x17xf32>
    %632 = arith.addf %627, %631 : vector<2x17xf32>
    %c107 = arith.constant 107 : index
    %633 = memref.load %arg1[%c107] : memref<174xf32, #tpu.memory_space<smem>>
    %634 = vector.extract_strided_slice %312 {offsets = [0, 2], sizes = [2, 17], strides = [1, 1]} : vector<2x20xf32> to vector<2x17xf32>
    %635 = vector.broadcast %633 : f32 to vector<2x17xf32>
    %636 = arith.mulf %635, %634 : vector<2x17xf32>
    %637 = arith.addf %632, %636 : vector<2x17xf32>
    %c108 = arith.constant 108 : index
    %638 = memref.load %arg1[%c108] : memref<174xf32, #tpu.memory_space<smem>>
    %639 = vector.extract_strided_slice %312 {offsets = [0, 3], sizes = [2, 17], strides = [1, 1]} : vector<2x20xf32> to vector<2x17xf32>
    %640 = vector.broadcast %638 : f32 to vector<2x17xf32>
    %641 = arith.mulf %640, %639 : vector<2x17xf32>
    %642 = arith.addf %637, %641 : vector<2x17xf32>
    %c109 = arith.constant 109 : index
    %643 = memref.load %arg1[%c109] : memref<174xf32, #tpu.memory_space<smem>>
    %644 = vector.extract_strided_slice %382 {offsets = [0, 0], sizes = [2, 17], strides = [1, 1]} : vector<2x20xf32> to vector<2x17xf32>
    %645 = vector.broadcast %643 : f32 to vector<2x17xf32>
    %646 = arith.mulf %645, %644 : vector<2x17xf32>
    %647 = arith.addf %642, %646 : vector<2x17xf32>
    %c110 = arith.constant 110 : index
    %648 = memref.load %arg1[%c110] : memref<174xf32, #tpu.memory_space<smem>>
    %649 = vector.extract_strided_slice %382 {offsets = [0, 1], sizes = [2, 17], strides = [1, 1]} : vector<2x20xf32> to vector<2x17xf32>
    %650 = vector.broadcast %648 : f32 to vector<2x17xf32>
    %651 = arith.mulf %650, %649 : vector<2x17xf32>
    %652 = arith.addf %647, %651 : vector<2x17xf32>
    %c111 = arith.constant 111 : index
    %653 = memref.load %arg1[%c111] : memref<174xf32, #tpu.memory_space<smem>>
    %654 = vector.extract_strided_slice %382 {offsets = [0, 2], sizes = [2, 17], strides = [1, 1]} : vector<2x20xf32> to vector<2x17xf32>
    %655 = vector.broadcast %653 : f32 to vector<2x17xf32>
    %656 = arith.mulf %655, %654 : vector<2x17xf32>
    %657 = arith.addf %652, %656 : vector<2x17xf32>
    %c112 = arith.constant 112 : index
    %658 = memref.load %arg1[%c112] : memref<174xf32, #tpu.memory_space<smem>>
    %659 = vector.extract_strided_slice %382 {offsets = [0, 3], sizes = [2, 17], strides = [1, 1]} : vector<2x20xf32> to vector<2x17xf32>
    %660 = vector.broadcast %658 : f32 to vector<2x17xf32>
    %661 = arith.mulf %660, %659 : vector<2x17xf32>
    %662 = arith.addf %657, %661 : vector<2x17xf32>
    %c113 = arith.constant 113 : index
    %663 = memref.load %arg1[%c113] : memref<174xf32, #tpu.memory_space<smem>>
    %664 = vector.extract_strided_slice %452 {offsets = [0, 0], sizes = [2, 17], strides = [1, 1]} : vector<2x20xf32> to vector<2x17xf32>
    %665 = vector.broadcast %663 : f32 to vector<2x17xf32>
    %666 = arith.mulf %665, %664 : vector<2x17xf32>
    %667 = arith.addf %662, %666 : vector<2x17xf32>
    %c114 = arith.constant 114 : index
    %668 = memref.load %arg1[%c114] : memref<174xf32, #tpu.memory_space<smem>>
    %669 = vector.extract_strided_slice %452 {offsets = [0, 1], sizes = [2, 17], strides = [1, 1]} : vector<2x20xf32> to vector<2x17xf32>
    %670 = vector.broadcast %668 : f32 to vector<2x17xf32>
    %671 = arith.mulf %670, %669 : vector<2x17xf32>
    %672 = arith.addf %667, %671 : vector<2x17xf32>
    %c115 = arith.constant 115 : index
    %673 = memref.load %arg1[%c115] : memref<174xf32, #tpu.memory_space<smem>>
    %674 = vector.extract_strided_slice %452 {offsets = [0, 2], sizes = [2, 17], strides = [1, 1]} : vector<2x20xf32> to vector<2x17xf32>
    %675 = vector.broadcast %673 : f32 to vector<2x17xf32>
    %676 = arith.mulf %675, %674 : vector<2x17xf32>
    %677 = arith.addf %672, %676 : vector<2x17xf32>
    %c116 = arith.constant 116 : index
    %678 = memref.load %arg1[%c116] : memref<174xf32, #tpu.memory_space<smem>>
    %679 = vector.extract_strided_slice %452 {offsets = [0, 3], sizes = [2, 17], strides = [1, 1]} : vector<2x20xf32> to vector<2x17xf32>
    %680 = vector.broadcast %678 : f32 to vector<2x17xf32>
    %681 = arith.mulf %680, %679 : vector<2x17xf32>
    %682 = arith.addf %677, %681 : vector<2x17xf32>
    %c117 = arith.constant 117 : index
    %683 = memref.load %arg1[%c117] : memref<174xf32, #tpu.memory_space<smem>>
    %684 = vector.extract_strided_slice %522 {offsets = [0, 0], sizes = [2, 17], strides = [1, 1]} : vector<2x20xf32> to vector<2x17xf32>
    %685 = vector.broadcast %683 : f32 to vector<2x17xf32>
    %686 = arith.mulf %685, %684 : vector<2x17xf32>
    %687 = arith.addf %682, %686 : vector<2x17xf32>
    %c118 = arith.constant 118 : index
    %688 = memref.load %arg1[%c118] : memref<174xf32, #tpu.memory_space<smem>>
    %689 = vector.extract_strided_slice %522 {offsets = [0, 1], sizes = [2, 17], strides = [1, 1]} : vector<2x20xf32> to vector<2x17xf32>
    %690 = vector.broadcast %688 : f32 to vector<2x17xf32>
    %691 = arith.mulf %690, %689 : vector<2x17xf32>
    %692 = arith.addf %687, %691 : vector<2x17xf32>
    %c119 = arith.constant 119 : index
    %693 = memref.load %arg1[%c119] : memref<174xf32, #tpu.memory_space<smem>>
    %694 = vector.extract_strided_slice %522 {offsets = [0, 2], sizes = [2, 17], strides = [1, 1]} : vector<2x20xf32> to vector<2x17xf32>
    %695 = vector.broadcast %693 : f32 to vector<2x17xf32>
    %696 = arith.mulf %695, %694 : vector<2x17xf32>
    %697 = arith.addf %692, %696 : vector<2x17xf32>
    %c120 = arith.constant 120 : index
    %698 = memref.load %arg1[%c120] : memref<174xf32, #tpu.memory_space<smem>>
    %699 = vector.extract_strided_slice %522 {offsets = [0, 3], sizes = [2, 17], strides = [1, 1]} : vector<2x20xf32> to vector<2x17xf32>
    %700 = vector.broadcast %698 : f32 to vector<2x17xf32>
    %701 = arith.mulf %700, %699 : vector<2x17xf32>
    %702 = arith.addf %697, %701 : vector<2x17xf32>
    %c170 = arith.constant 170 : index
    %703 = memref.load %arg1[%c170] : memref<174xf32, #tpu.memory_space<smem>>
    %704 = vector.broadcast %703 : f32 to vector<2x17xf32>
    %705 = arith.addf %702, %704 : vector<2x17xf32>
    %cst_45 = arith.constant 0.000000e+00 : f32
    %706 = vector.broadcast %cst_45 : f32 to vector<2x17xf32>
    %707 = arith.maximumf %705, %706 : vector<2x17xf32>
    %708 = vector.extract_strided_slice %707 {offsets = [0, 0], sizes = [2, 15], strides = [1, 1]} : vector<2x17xf32> to vector<2x15xf32>
    %709 = vector.extract_strided_slice %707 {offsets = [0, 2], sizes = [2, 15], strides = [1, 1]} : vector<2x17xf32> to vector<2x15xf32>
    %710 = arith.maximumf %708, %709 : vector<2x15xf32>
    %cst_46 = arith.constant dense<0.000000e+00> : vector<2x4xf32>
    %711 = tpu.matmul %710, %531, %cst_46 {dimension_numbers = #tpu.dot_dimension_numbers<[1], [0], [0], [1], [0, 0, 1, 1], [], []>} : vector<2x15xf32>, vector<15x4xf32>, vector<2x4xf32> -> vector<2x4xf32>
    %cst_47 = arith.constant 0.000000e+00 : f32
    %712 = vector.broadcast %cst_47 : f32 to vector<2x17xf32>
    %c121 = arith.constant 121 : index
    %713 = memref.load %arg1[%c121] : memref<174xf32, #tpu.memory_space<smem>>
    %714 = vector.extract_strided_slice %312 {offsets = [0, 0], sizes = [2, 17], strides = [1, 1]} : vector<2x20xf32> to vector<2x17xf32>
    %715 = vector.broadcast %713 : f32 to vector<2x17xf32>
    %716 = arith.mulf %715, %714 : vector<2x17xf32>
    %717 = arith.addf %712, %716 : vector<2x17xf32>
    %c122 = arith.constant 122 : index
    %718 = memref.load %arg1[%c122] : memref<174xf32, #tpu.memory_space<smem>>
    %719 = vector.extract_strided_slice %312 {offsets = [0, 1], sizes = [2, 17], strides = [1, 1]} : vector<2x20xf32> to vector<2x17xf32>
    %720 = vector.broadcast %718 : f32 to vector<2x17xf32>
    %721 = arith.mulf %720, %719 : vector<2x17xf32>
    %722 = arith.addf %717, %721 : vector<2x17xf32>
    %c123 = arith.constant 123 : index
    %723 = memref.load %arg1[%c123] : memref<174xf32, #tpu.memory_space<smem>>
    %724 = vector.extract_strided_slice %312 {offsets = [0, 2], sizes = [2, 17], strides = [1, 1]} : vector<2x20xf32> to vector<2x17xf32>
    %725 = vector.broadcast %723 : f32 to vector<2x17xf32>
    %726 = arith.mulf %725, %724 : vector<2x17xf32>
    %727 = arith.addf %722, %726 : vector<2x17xf32>
    %c124 = arith.constant 124 : index
    %728 = memref.load %arg1[%c124] : memref<174xf32, #tpu.memory_space<smem>>
    %729 = vector.extract_strided_slice %312 {offsets = [0, 3], sizes = [2, 17], strides = [1, 1]} : vector<2x20xf32> to vector<2x17xf32>
    %730 = vector.broadcast %728 : f32 to vector<2x17xf32>
    %731 = arith.mulf %730, %729 : vector<2x17xf32>
    %732 = arith.addf %727, %731 : vector<2x17xf32>
    %c125 = arith.constant 125 : index
    %733 = memref.load %arg1[%c125] : memref<174xf32, #tpu.memory_space<smem>>
    %734 = vector.extract_strided_slice %382 {offsets = [0, 0], sizes = [2, 17], strides = [1, 1]} : vector<2x20xf32> to vector<2x17xf32>
    %735 = vector.broadcast %733 : f32 to vector<2x17xf32>
    %736 = arith.mulf %735, %734 : vector<2x17xf32>
    %737 = arith.addf %732, %736 : vector<2x17xf32>
    %c126 = arith.constant 126 : index
    %738 = memref.load %arg1[%c126] : memref<174xf32, #tpu.memory_space<smem>>
    %739 = vector.extract_strided_slice %382 {offsets = [0, 1], sizes = [2, 17], strides = [1, 1]} : vector<2x20xf32> to vector<2x17xf32>
    %740 = vector.broadcast %738 : f32 to vector<2x17xf32>
    %741 = arith.mulf %740, %739 : vector<2x17xf32>
    %742 = arith.addf %737, %741 : vector<2x17xf32>
    %c127 = arith.constant 127 : index
    %743 = memref.load %arg1[%c127] : memref<174xf32, #tpu.memory_space<smem>>
    %744 = vector.extract_strided_slice %382 {offsets = [0, 2], sizes = [2, 17], strides = [1, 1]} : vector<2x20xf32> to vector<2x17xf32>
    %745 = vector.broadcast %743 : f32 to vector<2x17xf32>
    %746 = arith.mulf %745, %744 : vector<2x17xf32>
    %747 = arith.addf %742, %746 : vector<2x17xf32>
    %c128 = arith.constant 128 : index
    %748 = memref.load %arg1[%c128] : memref<174xf32, #tpu.memory_space<smem>>
    %749 = vector.extract_strided_slice %382 {offsets = [0, 3], sizes = [2, 17], strides = [1, 1]} : vector<2x20xf32> to vector<2x17xf32>
    %750 = vector.broadcast %748 : f32 to vector<2x17xf32>
    %751 = arith.mulf %750, %749 : vector<2x17xf32>
    %752 = arith.addf %747, %751 : vector<2x17xf32>
    %c129 = arith.constant 129 : index
    %753 = memref.load %arg1[%c129] : memref<174xf32, #tpu.memory_space<smem>>
    %754 = vector.extract_strided_slice %452 {offsets = [0, 0], sizes = [2, 17], strides = [1, 1]} : vector<2x20xf32> to vector<2x17xf32>
    %755 = vector.broadcast %753 : f32 to vector<2x17xf32>
    %756 = arith.mulf %755, %754 : vector<2x17xf32>
    %757 = arith.addf %752, %756 : vector<2x17xf32>
    %c130 = arith.constant 130 : index
    %758 = memref.load %arg1[%c130] : memref<174xf32, #tpu.memory_space<smem>>
    %759 = vector.extract_strided_slice %452 {offsets = [0, 1], sizes = [2, 17], strides = [1, 1]} : vector<2x20xf32> to vector<2x17xf32>
    %760 = vector.broadcast %758 : f32 to vector<2x17xf32>
    %761 = arith.mulf %760, %759 : vector<2x17xf32>
    %762 = arith.addf %757, %761 : vector<2x17xf32>
    %c131 = arith.constant 131 : index
    %763 = memref.load %arg1[%c131] : memref<174xf32, #tpu.memory_space<smem>>
    %764 = vector.extract_strided_slice %452 {offsets = [0, 2], sizes = [2, 17], strides = [1, 1]} : vector<2x20xf32> to vector<2x17xf32>
    %765 = vector.broadcast %763 : f32 to vector<2x17xf32>
    %766 = arith.mulf %765, %764 : vector<2x17xf32>
    %767 = arith.addf %762, %766 : vector<2x17xf32>
    %c132 = arith.constant 132 : index
    %768 = memref.load %arg1[%c132] : memref<174xf32, #tpu.memory_space<smem>>
    %769 = vector.extract_strided_slice %452 {offsets = [0, 3], sizes = [2, 17], strides = [1, 1]} : vector<2x20xf32> to vector<2x17xf32>
    %770 = vector.broadcast %768 : f32 to vector<2x17xf32>
    %771 = arith.mulf %770, %769 : vector<2x17xf32>
    %772 = arith.addf %767, %771 : vector<2x17xf32>
    %c133 = arith.constant 133 : index
    %773 = memref.load %arg1[%c133] : memref<174xf32, #tpu.memory_space<smem>>
    %774 = vector.extract_strided_slice %522 {offsets = [0, 0], sizes = [2, 17], strides = [1, 1]} : vector<2x20xf32> to vector<2x17xf32>
    %775 = vector.broadcast %773 : f32 to vector<2x17xf32>
    %776 = arith.mulf %775, %774 : vector<2x17xf32>
    %777 = arith.addf %772, %776 : vector<2x17xf32>
    %c134 = arith.constant 134 : index
    %778 = memref.load %arg1[%c134] : memref<174xf32, #tpu.memory_space<smem>>
    %779 = vector.extract_strided_slice %522 {offsets = [0, 1], sizes = [2, 17], strides = [1, 1]} : vector<2x20xf32> to vector<2x17xf32>
    %780 = vector.broadcast %778 : f32 to vector<2x17xf32>
    %781 = arith.mulf %780, %779 : vector<2x17xf32>
    %782 = arith.addf %777, %781 : vector<2x17xf32>
    %c135 = arith.constant 135 : index
    %783 = memref.load %arg1[%c135] : memref<174xf32, #tpu.memory_space<smem>>
    %784 = vector.extract_strided_slice %522 {offsets = [0, 2], sizes = [2, 17], strides = [1, 1]} : vector<2x20xf32> to vector<2x17xf32>
    %785 = vector.broadcast %783 : f32 to vector<2x17xf32>
    %786 = arith.mulf %785, %784 : vector<2x17xf32>
    %787 = arith.addf %782, %786 : vector<2x17xf32>
    %c136 = arith.constant 136 : index
    %788 = memref.load %arg1[%c136] : memref<174xf32, #tpu.memory_space<smem>>
    %789 = vector.extract_strided_slice %522 {offsets = [0, 3], sizes = [2, 17], strides = [1, 1]} : vector<2x20xf32> to vector<2x17xf32>
    %790 = vector.broadcast %788 : f32 to vector<2x17xf32>
    %791 = arith.mulf %790, %789 : vector<2x17xf32>
    %792 = arith.addf %787, %791 : vector<2x17xf32>
    %c171 = arith.constant 171 : index
    %793 = memref.load %arg1[%c171] : memref<174xf32, #tpu.memory_space<smem>>
    %794 = vector.broadcast %793 : f32 to vector<2x17xf32>
    %795 = arith.addf %792, %794 : vector<2x17xf32>
    %cst_48 = arith.constant 0.000000e+00 : f32
    %796 = vector.broadcast %cst_48 : f32 to vector<2x17xf32>
    %797 = arith.maximumf %795, %796 : vector<2x17xf32>
    %798 = vector.extract_strided_slice %797 {offsets = [0, 0], sizes = [2, 15], strides = [1, 1]} : vector<2x17xf32> to vector<2x15xf32>
    %799 = vector.extract_strided_slice %797 {offsets = [0, 2], sizes = [2, 15], strides = [1, 1]} : vector<2x17xf32> to vector<2x15xf32>
    %800 = arith.maximumf %798, %799 : vector<2x15xf32>
    %cst_49 = arith.constant dense<0.000000e+00> : vector<2x4xf32>
    %801 = tpu.matmul %800, %531, %cst_49 {dimension_numbers = #tpu.dot_dimension_numbers<[1], [0], [0], [1], [0, 0, 1, 1], [], []>} : vector<2x15xf32>, vector<15x4xf32>, vector<2x4xf32> -> vector<2x4xf32>
    %cst_50 = arith.constant 0.000000e+00 : f32
    %802 = vector.broadcast %cst_50 : f32 to vector<2x17xf32>
    %c137 = arith.constant 137 : index
    %803 = memref.load %arg1[%c137] : memref<174xf32, #tpu.memory_space<smem>>
    %804 = vector.extract_strided_slice %312 {offsets = [0, 0], sizes = [2, 17], strides = [1, 1]} : vector<2x20xf32> to vector<2x17xf32>
    %805 = vector.broadcast %803 : f32 to vector<2x17xf32>
    %806 = arith.mulf %805, %804 : vector<2x17xf32>
    %807 = arith.addf %802, %806 : vector<2x17xf32>
    %c138 = arith.constant 138 : index
    %808 = memref.load %arg1[%c138] : memref<174xf32, #tpu.memory_space<smem>>
    %809 = vector.extract_strided_slice %312 {offsets = [0, 1], sizes = [2, 17], strides = [1, 1]} : vector<2x20xf32> to vector<2x17xf32>
    %810 = vector.broadcast %808 : f32 to vector<2x17xf32>
    %811 = arith.mulf %810, %809 : vector<2x17xf32>
    %812 = arith.addf %807, %811 : vector<2x17xf32>
    %c139 = arith.constant 139 : index
    %813 = memref.load %arg1[%c139] : memref<174xf32, #tpu.memory_space<smem>>
    %814 = vector.extract_strided_slice %312 {offsets = [0, 2], sizes = [2, 17], strides = [1, 1]} : vector<2x20xf32> to vector<2x17xf32>
    %815 = vector.broadcast %813 : f32 to vector<2x17xf32>
    %816 = arith.mulf %815, %814 : vector<2x17xf32>
    %817 = arith.addf %812, %816 : vector<2x17xf32>
    %c140 = arith.constant 140 : index
    %818 = memref.load %arg1[%c140] : memref<174xf32, #tpu.memory_space<smem>>
    %819 = vector.extract_strided_slice %312 {offsets = [0, 3], sizes = [2, 17], strides = [1, 1]} : vector<2x20xf32> to vector<2x17xf32>
    %820 = vector.broadcast %818 : f32 to vector<2x17xf32>
    %821 = arith.mulf %820, %819 : vector<2x17xf32>
    %822 = arith.addf %817, %821 : vector<2x17xf32>
    %c141 = arith.constant 141 : index
    %823 = memref.load %arg1[%c141] : memref<174xf32, #tpu.memory_space<smem>>
    %824 = vector.extract_strided_slice %382 {offsets = [0, 0], sizes = [2, 17], strides = [1, 1]} : vector<2x20xf32> to vector<2x17xf32>
    %825 = vector.broadcast %823 : f32 to vector<2x17xf32>
    %826 = arith.mulf %825, %824 : vector<2x17xf32>
    %827 = arith.addf %822, %826 : vector<2x17xf32>
    %c142 = arith.constant 142 : index
    %828 = memref.load %arg1[%c142] : memref<174xf32, #tpu.memory_space<smem>>
    %829 = vector.extract_strided_slice %382 {offsets = [0, 1], sizes = [2, 17], strides = [1, 1]} : vector<2x20xf32> to vector<2x17xf32>
    %830 = vector.broadcast %828 : f32 to vector<2x17xf32>
    %831 = arith.mulf %830, %829 : vector<2x17xf32>
    %832 = arith.addf %827, %831 : vector<2x17xf32>
    %c143 = arith.constant 143 : index
    %833 = memref.load %arg1[%c143] : memref<174xf32, #tpu.memory_space<smem>>
    %834 = vector.extract_strided_slice %382 {offsets = [0, 2], sizes = [2, 17], strides = [1, 1]} : vector<2x20xf32> to vector<2x17xf32>
    %835 = vector.broadcast %833 : f32 to vector<2x17xf32>
    %836 = arith.mulf %835, %834 : vector<2x17xf32>
    %837 = arith.addf %832, %836 : vector<2x17xf32>
    %c144 = arith.constant 144 : index
    %838 = memref.load %arg1[%c144] : memref<174xf32, #tpu.memory_space<smem>>
    %839 = vector.extract_strided_slice %382 {offsets = [0, 3], sizes = [2, 17], strides = [1, 1]} : vector<2x20xf32> to vector<2x17xf32>
    %840 = vector.broadcast %838 : f32 to vector<2x17xf32>
    %841 = arith.mulf %840, %839 : vector<2x17xf32>
    %842 = arith.addf %837, %841 : vector<2x17xf32>
    %c145 = arith.constant 145 : index
    %843 = memref.load %arg1[%c145] : memref<174xf32, #tpu.memory_space<smem>>
    %844 = vector.extract_strided_slice %452 {offsets = [0, 0], sizes = [2, 17], strides = [1, 1]} : vector<2x20xf32> to vector<2x17xf32>
    %845 = vector.broadcast %843 : f32 to vector<2x17xf32>
    %846 = arith.mulf %845, %844 : vector<2x17xf32>
    %847 = arith.addf %842, %846 : vector<2x17xf32>
    %c146 = arith.constant 146 : index
    %848 = memref.load %arg1[%c146] : memref<174xf32, #tpu.memory_space<smem>>
    %849 = vector.extract_strided_slice %452 {offsets = [0, 1], sizes = [2, 17], strides = [1, 1]} : vector<2x20xf32> to vector<2x17xf32>
    %850 = vector.broadcast %848 : f32 to vector<2x17xf32>
    %851 = arith.mulf %850, %849 : vector<2x17xf32>
    %852 = arith.addf %847, %851 : vector<2x17xf32>
    %c147 = arith.constant 147 : index
    %853 = memref.load %arg1[%c147] : memref<174xf32, #tpu.memory_space<smem>>
    %854 = vector.extract_strided_slice %452 {offsets = [0, 2], sizes = [2, 17], strides = [1, 1]} : vector<2x20xf32> to vector<2x17xf32>
    %855 = vector.broadcast %853 : f32 to vector<2x17xf32>
    %856 = arith.mulf %855, %854 : vector<2x17xf32>
    %857 = arith.addf %852, %856 : vector<2x17xf32>
    %c148 = arith.constant 148 : index
    %858 = memref.load %arg1[%c148] : memref<174xf32, #tpu.memory_space<smem>>
    %859 = vector.extract_strided_slice %452 {offsets = [0, 3], sizes = [2, 17], strides = [1, 1]} : vector<2x20xf32> to vector<2x17xf32>
    %860 = vector.broadcast %858 : f32 to vector<2x17xf32>
    %861 = arith.mulf %860, %859 : vector<2x17xf32>
    %862 = arith.addf %857, %861 : vector<2x17xf32>
    %c149 = arith.constant 149 : index
    %863 = memref.load %arg1[%c149] : memref<174xf32, #tpu.memory_space<smem>>
    %864 = vector.extract_strided_slice %522 {offsets = [0, 0], sizes = [2, 17], strides = [1, 1]} : vector<2x20xf32> to vector<2x17xf32>
    %865 = vector.broadcast %863 : f32 to vector<2x17xf32>
    %866 = arith.mulf %865, %864 : vector<2x17xf32>
    %867 = arith.addf %862, %866 : vector<2x17xf32>
    %c150 = arith.constant 150 : index
    %868 = memref.load %arg1[%c150] : memref<174xf32, #tpu.memory_space<smem>>
    %869 = vector.extract_strided_slice %522 {offsets = [0, 1], sizes = [2, 17], strides = [1, 1]} : vector<2x20xf32> to vector<2x17xf32>
    %870 = vector.broadcast %868 : f32 to vector<2x17xf32>
    %871 = arith.mulf %870, %869 : vector<2x17xf32>
    %872 = arith.addf %867, %871 : vector<2x17xf32>
    %c151 = arith.constant 151 : index
    %873 = memref.load %arg1[%c151] : memref<174xf32, #tpu.memory_space<smem>>
    %874 = vector.extract_strided_slice %522 {offsets = [0, 2], sizes = [2, 17], strides = [1, 1]} : vector<2x20xf32> to vector<2x17xf32>
    %875 = vector.broadcast %873 : f32 to vector<2x17xf32>
    %876 = arith.mulf %875, %874 : vector<2x17xf32>
    %877 = arith.addf %872, %876 : vector<2x17xf32>
    %c152 = arith.constant 152 : index
    %878 = memref.load %arg1[%c152] : memref<174xf32, #tpu.memory_space<smem>>
    %879 = vector.extract_strided_slice %522 {offsets = [0, 3], sizes = [2, 17], strides = [1, 1]} : vector<2x20xf32> to vector<2x17xf32>
    %880 = vector.broadcast %878 : f32 to vector<2x17xf32>
    %881 = arith.mulf %880, %879 : vector<2x17xf32>
    %882 = arith.addf %877, %881 : vector<2x17xf32>
    %c172 = arith.constant 172 : index
    %883 = memref.load %arg1[%c172] : memref<174xf32, #tpu.memory_space<smem>>
    %884 = vector.broadcast %883 : f32 to vector<2x17xf32>
    %885 = arith.addf %882, %884 : vector<2x17xf32>
    %cst_51 = arith.constant 0.000000e+00 : f32
    %886 = vector.broadcast %cst_51 : f32 to vector<2x17xf32>
    %887 = arith.maximumf %885, %886 : vector<2x17xf32>
    %888 = vector.extract_strided_slice %887 {offsets = [0, 0], sizes = [2, 15], strides = [1, 1]} : vector<2x17xf32> to vector<2x15xf32>
    %889 = vector.extract_strided_slice %887 {offsets = [0, 2], sizes = [2, 15], strides = [1, 1]} : vector<2x17xf32> to vector<2x15xf32>
    %890 = arith.maximumf %888, %889 : vector<2x15xf32>
    %cst_52 = arith.constant dense<0.000000e+00> : vector<2x4xf32>
    %891 = tpu.matmul %890, %531, %cst_52 {dimension_numbers = #tpu.dot_dimension_numbers<[1], [0], [0], [1], [0, 0, 1, 1], [], []>} : vector<2x15xf32>, vector<15x4xf32>, vector<2x4xf32> -> vector<2x4xf32>
    %cst_53 = arith.constant 0.000000e+00 : f32
    %892 = vector.broadcast %cst_53 : f32 to vector<2x17xf32>
    %c153 = arith.constant 153 : index
    %893 = memref.load %arg1[%c153] : memref<174xf32, #tpu.memory_space<smem>>
    %894 = vector.extract_strided_slice %312 {offsets = [0, 0], sizes = [2, 17], strides = [1, 1]} : vector<2x20xf32> to vector<2x17xf32>
    %895 = vector.broadcast %893 : f32 to vector<2x17xf32>
    %896 = arith.mulf %895, %894 : vector<2x17xf32>
    %897 = arith.addf %892, %896 : vector<2x17xf32>
    %c154 = arith.constant 154 : index
    %898 = memref.load %arg1[%c154] : memref<174xf32, #tpu.memory_space<smem>>
    %899 = vector.extract_strided_slice %312 {offsets = [0, 1], sizes = [2, 17], strides = [1, 1]} : vector<2x20xf32> to vector<2x17xf32>
    %900 = vector.broadcast %898 : f32 to vector<2x17xf32>
    %901 = arith.mulf %900, %899 : vector<2x17xf32>
    %902 = arith.addf %897, %901 : vector<2x17xf32>
    %c155 = arith.constant 155 : index
    %903 = memref.load %arg1[%c155] : memref<174xf32, #tpu.memory_space<smem>>
    %904 = vector.extract_strided_slice %312 {offsets = [0, 2], sizes = [2, 17], strides = [1, 1]} : vector<2x20xf32> to vector<2x17xf32>
    %905 = vector.broadcast %903 : f32 to vector<2x17xf32>
    %906 = arith.mulf %905, %904 : vector<2x17xf32>
    %907 = arith.addf %902, %906 : vector<2x17xf32>
    %c156 = arith.constant 156 : index
    %908 = memref.load %arg1[%c156] : memref<174xf32, #tpu.memory_space<smem>>
    %909 = vector.extract_strided_slice %312 {offsets = [0, 3], sizes = [2, 17], strides = [1, 1]} : vector<2x20xf32> to vector<2x17xf32>
    %910 = vector.broadcast %908 : f32 to vector<2x17xf32>
    %911 = arith.mulf %910, %909 : vector<2x17xf32>
    %912 = arith.addf %907, %911 : vector<2x17xf32>
    %c157 = arith.constant 157 : index
    %913 = memref.load %arg1[%c157] : memref<174xf32, #tpu.memory_space<smem>>
    %914 = vector.extract_strided_slice %382 {offsets = [0, 0], sizes = [2, 17], strides = [1, 1]} : vector<2x20xf32> to vector<2x17xf32>
    %915 = vector.broadcast %913 : f32 to vector<2x17xf32>
    %916 = arith.mulf %915, %914 : vector<2x17xf32>
    %917 = arith.addf %912, %916 : vector<2x17xf32>
    %c158 = arith.constant 158 : index
    %918 = memref.load %arg1[%c158] : memref<174xf32, #tpu.memory_space<smem>>
    %919 = vector.extract_strided_slice %382 {offsets = [0, 1], sizes = [2, 17], strides = [1, 1]} : vector<2x20xf32> to vector<2x17xf32>
    %920 = vector.broadcast %918 : f32 to vector<2x17xf32>
    %921 = arith.mulf %920, %919 : vector<2x17xf32>
    %922 = arith.addf %917, %921 : vector<2x17xf32>
    %c159 = arith.constant 159 : index
    %923 = memref.load %arg1[%c159] : memref<174xf32, #tpu.memory_space<smem>>
    %924 = vector.extract_strided_slice %382 {offsets = [0, 2], sizes = [2, 17], strides = [1, 1]} : vector<2x20xf32> to vector<2x17xf32>
    %925 = vector.broadcast %923 : f32 to vector<2x17xf32>
    %926 = arith.mulf %925, %924 : vector<2x17xf32>
    %927 = arith.addf %922, %926 : vector<2x17xf32>
    %c160 = arith.constant 160 : index
    %928 = memref.load %arg1[%c160] : memref<174xf32, #tpu.memory_space<smem>>
    %929 = vector.extract_strided_slice %382 {offsets = [0, 3], sizes = [2, 17], strides = [1, 1]} : vector<2x20xf32> to vector<2x17xf32>
    %930 = vector.broadcast %928 : f32 to vector<2x17xf32>
    %931 = arith.mulf %930, %929 : vector<2x17xf32>
    %932 = arith.addf %927, %931 : vector<2x17xf32>
    %c161 = arith.constant 161 : index
    %933 = memref.load %arg1[%c161] : memref<174xf32, #tpu.memory_space<smem>>
    %934 = vector.extract_strided_slice %452 {offsets = [0, 0], sizes = [2, 17], strides = [1, 1]} : vector<2x20xf32> to vector<2x17xf32>
    %935 = vector.broadcast %933 : f32 to vector<2x17xf32>
    %936 = arith.mulf %935, %934 : vector<2x17xf32>
    %937 = arith.addf %932, %936 : vector<2x17xf32>
    %c162 = arith.constant 162 : index
    %938 = memref.load %arg1[%c162] : memref<174xf32, #tpu.memory_space<smem>>
    %939 = vector.extract_strided_slice %452 {offsets = [0, 1], sizes = [2, 17], strides = [1, 1]} : vector<2x20xf32> to vector<2x17xf32>
    %940 = vector.broadcast %938 : f32 to vector<2x17xf32>
    %941 = arith.mulf %940, %939 : vector<2x17xf32>
    %942 = arith.addf %937, %941 : vector<2x17xf32>
    %c163 = arith.constant 163 : index
    %943 = memref.load %arg1[%c163] : memref<174xf32, #tpu.memory_space<smem>>
    %944 = vector.extract_strided_slice %452 {offsets = [0, 2], sizes = [2, 17], strides = [1, 1]} : vector<2x20xf32> to vector<2x17xf32>
    %945 = vector.broadcast %943 : f32 to vector<2x17xf32>
    %946 = arith.mulf %945, %944 : vector<2x17xf32>
    %947 = arith.addf %942, %946 : vector<2x17xf32>
    %c164 = arith.constant 164 : index
    %948 = memref.load %arg1[%c164] : memref<174xf32, #tpu.memory_space<smem>>
    %949 = vector.extract_strided_slice %452 {offsets = [0, 3], sizes = [2, 17], strides = [1, 1]} : vector<2x20xf32> to vector<2x17xf32>
    %950 = vector.broadcast %948 : f32 to vector<2x17xf32>
    %951 = arith.mulf %950, %949 : vector<2x17xf32>
    %952 = arith.addf %947, %951 : vector<2x17xf32>
    %c165 = arith.constant 165 : index
    %953 = memref.load %arg1[%c165] : memref<174xf32, #tpu.memory_space<smem>>
    %954 = vector.extract_strided_slice %522 {offsets = [0, 0], sizes = [2, 17], strides = [1, 1]} : vector<2x20xf32> to vector<2x17xf32>
    %955 = vector.broadcast %953 : f32 to vector<2x17xf32>
    %956 = arith.mulf %955, %954 : vector<2x17xf32>
    %957 = arith.addf %952, %956 : vector<2x17xf32>
    %c166 = arith.constant 166 : index
    %958 = memref.load %arg1[%c166] : memref<174xf32, #tpu.memory_space<smem>>
    %959 = vector.extract_strided_slice %522 {offsets = [0, 1], sizes = [2, 17], strides = [1, 1]} : vector<2x20xf32> to vector<2x17xf32>
    %960 = vector.broadcast %958 : f32 to vector<2x17xf32>
    %961 = arith.mulf %960, %959 : vector<2x17xf32>
    %962 = arith.addf %957, %961 : vector<2x17xf32>
    %c167 = arith.constant 167 : index
    %963 = memref.load %arg1[%c167] : memref<174xf32, #tpu.memory_space<smem>>
    %964 = vector.extract_strided_slice %522 {offsets = [0, 2], sizes = [2, 17], strides = [1, 1]} : vector<2x20xf32> to vector<2x17xf32>
    %965 = vector.broadcast %963 : f32 to vector<2x17xf32>
    %966 = arith.mulf %965, %964 : vector<2x17xf32>
    %967 = arith.addf %962, %966 : vector<2x17xf32>
    %c168 = arith.constant 168 : index
    %968 = memref.load %arg1[%c168] : memref<174xf32, #tpu.memory_space<smem>>
    %969 = vector.extract_strided_slice %522 {offsets = [0, 3], sizes = [2, 17], strides = [1, 1]} : vector<2x20xf32> to vector<2x17xf32>
    %970 = vector.broadcast %968 : f32 to vector<2x17xf32>
    %971 = arith.mulf %970, %969 : vector<2x17xf32>
    %972 = arith.addf %967, %971 : vector<2x17xf32>
    %c173 = arith.constant 173 : index
    %973 = memref.load %arg1[%c173] : memref<174xf32, #tpu.memory_space<smem>>
    %974 = vector.broadcast %973 : f32 to vector<2x17xf32>
    %975 = arith.addf %972, %974 : vector<2x17xf32>
    %cst_54 = arith.constant 0.000000e+00 : f32
    %976 = vector.broadcast %cst_54 : f32 to vector<2x17xf32>
    %977 = arith.maximumf %975, %976 : vector<2x17xf32>
    %978 = vector.extract_strided_slice %977 {offsets = [0, 0], sizes = [2, 15], strides = [1, 1]} : vector<2x17xf32> to vector<2x15xf32>
    %979 = vector.extract_strided_slice %977 {offsets = [0, 2], sizes = [2, 15], strides = [1, 1]} : vector<2x17xf32> to vector<2x15xf32>
    %980 = arith.maximumf %978, %979 : vector<2x15xf32>
    %cst_55 = arith.constant dense<0.000000e+00> : vector<2x4xf32>
    %981 = tpu.matmul %980, %531, %cst_55 {dimension_numbers = #tpu.dot_dimension_numbers<[1], [0], [0], [1], [0, 0, 1, 1], [], []>} : vector<2x15xf32>, vector<15x4xf32>, vector<2x4xf32> -> vector<2x4xf32>
    %c0_56 = arith.constant 0 : index
    %c0_57 = arith.constant 0 : index
    %c0_58 = arith.constant 0 : index
    %982 = vector.load %arg2[%c0_56, %c0_57, %c0_58] : memref<5x4x10xf32, #tpu.memory_space<vmem>>, vector<5x4x10xf32>
    %cst_59 = arith.constant 0.000000e+00 : f32
    %983 = vector.broadcast %cst_59 : f32 to vector<2x10xf32>
    %984 = vector.extract_strided_slice %982 {offsets = [0, 0, 0], sizes = [1, 4, 10], strides = [1, 1, 1]} : vector<5x4x10xf32> to vector<1x4x10xf32>
    %985 = vector.shape_cast %984 : vector<1x4x10xf32> to vector<4x10xf32>
    %cst_60 = arith.constant dense<0.000000e+00> : vector<2x10xf32>
    %986 = tpu.matmul %621, %985, %cst_60 {dimension_numbers = #tpu.dot_dimension_numbers<[1], [0], [0], [1], [0, 0, 1, 1], [], []>} : vector<2x4xf32>, vector<4x10xf32>, vector<2x10xf32> -> vector<2x10xf32>
    %987 = arith.addf %983, %986 : vector<2x10xf32>
    %988 = vector.extract_strided_slice %982 {offsets = [1, 0, 0], sizes = [1, 4, 10], strides = [1, 1, 1]} : vector<5x4x10xf32> to vector<1x4x10xf32>
    %989 = vector.shape_cast %988 : vector<1x4x10xf32> to vector<4x10xf32>
    %cst_61 = arith.constant dense<0.000000e+00> : vector<2x10xf32>
    %990 = tpu.matmul %711, %989, %cst_61 {dimension_numbers = #tpu.dot_dimension_numbers<[1], [0], [0], [1], [0, 0, 1, 1], [], []>} : vector<2x4xf32>, vector<4x10xf32>, vector<2x10xf32> -> vector<2x10xf32>
    %991 = arith.addf %987, %990 : vector<2x10xf32>
    %992 = vector.extract_strided_slice %982 {offsets = [2, 0, 0], sizes = [1, 4, 10], strides = [1, 1, 1]} : vector<5x4x10xf32> to vector<1x4x10xf32>
    %993 = vector.shape_cast %992 : vector<1x4x10xf32> to vector<4x10xf32>
    %cst_62 = arith.constant dense<0.000000e+00> : vector<2x10xf32>
    %994 = tpu.matmul %801, %993, %cst_62 {dimension_numbers = #tpu.dot_dimension_numbers<[1], [0], [0], [1], [0, 0, 1, 1], [], []>} : vector<2x4xf32>, vector<4x10xf32>, vector<2x10xf32> -> vector<2x10xf32>
    %995 = arith.addf %991, %994 : vector<2x10xf32>
    %996 = vector.extract_strided_slice %982 {offsets = [3, 0, 0], sizes = [1, 4, 10], strides = [1, 1, 1]} : vector<5x4x10xf32> to vector<1x4x10xf32>
    %997 = vector.shape_cast %996 : vector<1x4x10xf32> to vector<4x10xf32>
    %cst_63 = arith.constant dense<0.000000e+00> : vector<2x10xf32>
    %998 = tpu.matmul %891, %997, %cst_63 {dimension_numbers = #tpu.dot_dimension_numbers<[1], [0], [0], [1], [0, 0, 1, 1], [], []>} : vector<2x4xf32>, vector<4x10xf32>, vector<2x10xf32> -> vector<2x10xf32>
    %999 = arith.addf %995, %998 : vector<2x10xf32>
    %1000 = vector.extract_strided_slice %982 {offsets = [4, 0, 0], sizes = [1, 4, 10], strides = [1, 1, 1]} : vector<5x4x10xf32> to vector<1x4x10xf32>
    %1001 = vector.shape_cast %1000 : vector<1x4x10xf32> to vector<4x10xf32>
    %cst_64 = arith.constant dense<0.000000e+00> : vector<2x10xf32>
    %1002 = tpu.matmul %981, %1001, %cst_64 {dimension_numbers = #tpu.dot_dimension_numbers<[1], [0], [0], [1], [0, 0, 1, 1], [], []>} : vector<2x4xf32>, vector<4x10xf32>, vector<2x10xf32> -> vector<2x10xf32>
    %1003 = arith.addf %999, %1002 : vector<2x10xf32>
    %c0_65 = arith.constant 0 : index
    %c0_66 = arith.constant 0 : index
    %1004 = vector.load %arg3[%c0_65, %c0_66] : memref<1x10xf32, #tpu.memory_space<vmem>>, vector<1x10xf32>
    %1005 = vector.broadcast %1004 : vector<1x10xf32> to vector<2x10xf32>
    %1006 = arith.addf %1003, %1005 : vector<2x10xf32>
    %cst_67 = arith.constant 0.000000e+00 : f32
    %1007 = vector.broadcast %cst_67 : f32 to vector<2x10xf32>
    %1008 = arith.maximumf %1006, %1007 : vector<2x10xf32>
    %c0_68 = arith.constant 0 : index
    %c0_69 = arith.constant 0 : index
    %1009 = vector.load %arg4[%c0_68, %c0_69] : memref<10x2xf32, #tpu.memory_space<vmem>>, vector<10x2xf32>
    %cst_70 = arith.constant dense<0.000000e+00> : vector<2x2xf32>
    %1010 = tpu.matmul %1008, %1009, %cst_70 {dimension_numbers = #tpu.dot_dimension_numbers<[1], [0], [0], [1], [0, 0, 1, 1], [], []>} : vector<2x10xf32>, vector<10x2xf32>, vector<2x2xf32> -> vector<2x2xf32>
    %c0_71 = arith.constant 0 : index
    %c0_72 = arith.constant 0 : index
    %1011 = vector.load %arg5[%c0_71, %c0_72] : memref<1x2xf32, #tpu.memory_space<vmem>>, vector<1x2xf32>
    %1012 = vector.broadcast %1011 : vector<1x2xf32> to vector<2x2xf32>
    %1013 = arith.addf %1010, %1012 : vector<2x2xf32>
    %c0_73 = arith.constant 0 : index
    %c0_74 = arith.constant 0 : index
    %1014 = vector.load %arg6[%c0_73, %c0_74] : memref<2x2xf32, #tpu.memory_space<vmem>>, vector<2x2xf32>
    tpu.vector_store %arg6[%c0_73, %c0_74], %1013 {strides = array<i32>} : memref<2x2xf32, #tpu.memory_space<vmem>>, vector<2x2xf32>,
    return
  }
}

</mosaic_0001>

<llo_original>
// kernel: time_encoder_forward.1
$region0: #{time_encoder_forward.1}
  #allocation0 [shape = 'u32[]', space=smem, size = 0x4, offset = 0x4, fixed_abs, tag = 'smem constant byte address 0x4 - core index']
  #allocation1 [shape = 'u32[144,128]{1,0:T(1,128)}', space=vmem, size = 0x12000, scoped, tag = 'internal scratch']
  #allocation2 [shape = 'f32[2,1028]{1,0:T(2,128)}', space=vmem, size = 0x2400, scoped, tag = 'scratch operand']
  %s0 = inlined_call_operand.hbm [shape: f32[2,1,1024], index: 0, kind: input, shape index: {}]
  %s1 = inlined_call_operand.vmem [shape: f32[174], index: 1, kind: input, shape index: {}]
  %s2 = inlined_call_operand.vmem [shape: f32[5,4,10], index: 2, kind: input, shape index: {}]
  %s3 = inlined_call_operand.vmem [shape: f32[1,10], index: 3, kind: input, shape index: {}]
  %s4 = inlined_call_operand.vmem [shape: f32[10,2], index: 4, kind: input, shape index: {}]
  %s5 = inlined_call_operand.vmem [shape: f32[1,2], index: 5, kind: input, shape index: {}]
  %s6 = inlined_call_operand.hbm [shape: f32[2,2], index: 6, kind: output, shape index: {}]
  %s7 = sld [smem:[#allocation0]]
  $region42: #{time_encoder_forward.1} parent=0
    _
  %s9 = ssub.s32 1, %s7
  %s10 = scalar_select 0, %s9, %s7
  $region1: #{time_encoder_forward.1} parent=0
    #allocation3 [shape = 'u8[8192]{0}', space=vmem, size = 0x2000, scoped, tag = 'input window, operand 0, single buffered']
    #allocation4 [shape = 's32[1]{0}', space=sflag, size = 0x4, scoped, tag = 'scoped memory for time_encoder_forward.1']
    #allocation5 [shape = 's32[1]{0}', space=sflag, size = 0x4, scoped, tag = 'scoped memory for time_encoder_forward.1']
    #allocation6 [shape = 's32[1]{0}', space=sflag, size = 0x4, scoped, tag = 'scoped memory for time_encoder_forward.1']
    #allocation7 [shape = 'u8[1024]{0}', space=smem, size = 0x400, scoped, tag = 'input window, operand 1, single buffered']
    #allocation8 [shape = 'u8[1024]{0}', space=vmem, size = 0x400, scoped, tag = 'output window, operand 0, single buffered']
    %11 = vsyncpa [#allocation4], 0
    %12 = vsyncpa [#allocation6], 0
    %13 = vsyncpa [#allocation5], 0
    // Predicated region
    $region2: #{time_encoder_forward.1} parent=1 // pred_check
      _
    $region3: #{time_encoder_forward.1} parent=1 // pred_check_branch
      %15 = sbr.rel (0) target = $region5
    $region4: #{time_encoder_forward.1} parent=1 // pred_region
      %s17 = ssub.s32 256, 256
      %18 = vsyncadd [#allocation4], %s17
      %s19 = sshll.u32 [#allocation3], 4
      %s20 = int_to_ptr.vmem [resolvable:$true] %s19
      %25 = dma.hbm_to_vmem [thread:$0]  %s0, 256, %s20, [#allocation4], 128, 128, 8
    $region5: #{time_encoder_forward.1} parent=1 // pred_fallthru
      _
    // Predicated region
    $region6: #{time_encoder_forward.1} parent=1 // pred_check
      _
    $region7: #{time_encoder_forward.1} parent=1 // pred_check_branch
      %27 = sbr.rel (0) target = $region9
    $region8: #{time_encoder_forward.1} parent=1 // pred_region
      %s29 = ssub.s32 32, 32
      %30 = vsyncadd [#allocation6], %s29
      %s32 = sshll.u32 %s1, 4
      %s33 = int_to_ptr.vmem [resolvable:$true] %s32
      %35 = dma.vmem_to_smem %s33, 32, [#allocation7], [#allocation6]
    $region9: #{time_encoder_forward.1} parent=1 // pred_fallthru
      _
    // Predicated region
    $region10: #{time_encoder_forward.1} parent=1 // pred_check
      _
    $region11: #{time_encoder_forward.1} parent=1 // pred_check_branch
      %37 = sbr.rel (0) target = $region13
    $region12: #{time_encoder_forward.1} parent=1 // pred_region
      _
    $region13: #{time_encoder_forward.1} parent=1 // pred_fallthru
      _
    // Predicated region
    $region14: #{time_encoder_forward.1} parent=1 // pred_check
      _
    $region15: #{time_encoder_forward.1} parent=1 // pred_check_branch
      %39 = sbr.rel (0) target = $region17
    $region16: #{time_encoder_forward.1} parent=1 // pred_region
      _
    $region17: #{time_encoder_forward.1} parent=1 // pred_fallthru
      _
    // Predicated region
    $region18: #{time_encoder_forward.1} parent=1 // pred_check
      _
    $region19: #{time_encoder_forward.1} parent=1 // pred_check_branch
      %41 = sbr.rel (0) target = $region21
    $region20: #{time_encoder_forward.1} parent=1 // pred_region
      _
    $region21: #{time_encoder_forward.1} parent=1 // pred_fallthru
      _
    // Predicated region
    $region22: #{time_encoder_forward.1} parent=1 // pred_check
      _
    $region23: #{time_encoder_forward.1} parent=1 // pred_check_branch
      %43 = sbr.rel (0) target = $region25
    $region24: #{time_encoder_forward.1} parent=1 // pred_region
      _
    $region25: #{time_encoder_forward.1} parent=1 // pred_fallthru
      _
    // Predicated region
    $region26: #{time_encoder_forward.1} parent=1 // pred_check
      _
    $region27: #{time_encoder_forward.1} parent=1 // pred_check_branch
      %45 = sbr.rel (0) target = $region29
    $region28: #{time_encoder_forward.1} parent=1 // pred_region
      %46 = dma.done [#allocation4], 256
    $region29: #{time_encoder_forward.1} parent=1 // pred_fallthru
      _
    // Predicated region
    $region30: #{time_encoder_forward.1} parent=1 // pred_check
      _
    $region31: #{time_encoder_forward.1} parent=1 // pred_check_branch
      %48 = sbr.rel (0) target = $region33
    $region32: #{time_encoder_forward.1} parent=1 // pred_region
      %49 = dma.done [#allocation6], 32
    $region33: #{time_encoder_forward.1} parent=1 // pred_fallthru
      _
    %50 = sfence
    %51 = vst [vmem:[#allocation2] sm:$0xff] 0.0
    %52 = vst [vmem:[#allocation2 + $0x8] sm:$0xff] 0.0
    %vm53 = vcmask 25600
    %54 = vst.msk [vmem:[#allocation2 + $0x10] sm:$0x3] %vm53, 0.0
    %v55 = vld [vmem:[#allocation3] sm:$0xff]
    %v56 = vld [vmem:[#allocation3 + $0x8] sm:$0xff]
    %v59 = vcombine.low %v55, %v56
    %v60 = vcombine.high %v55, %v56
    %v62 = vunpack.c.l.s4 1935823168
    %v63 = vunpack.c.0.s8 %v62
    %v64 = vlaneseq
    %v65 = vshrl.u32 %v64, 7
    %v66 = vsub.s32 %v63, %v65
    %v67 = vrot.slane %v59, %v66
    %v69 = vunpack.c.l.s4 1935823168
    %v70 = vunpack.c.0.s8 %v69
    %v71 = vlaneseq
    %v72 = vshrl.u32 %v71, 7
    %v73 = vsub.s32 %v70, %v72
    %v74 = vrot.slane %v60, %v73
    %75 = vrot.lane.b32.xlu0 %v67, 2
    %v76 = vpop.permute.xlu0 %75
    %77 = vrot.lane.b32.xlu0 %v74, 2
    %v78 = vpop.permute.xlu0 %77
    %v79 = vrot.slane %v76, 6
    %v80 = vrot.slane %v78, 6
    %vm81 = vcmask 15360
    %v82 = vsel %vm81, %v79, %v76
    %vm83 = vcmask 1041408
    %v84 = vsel %vm83, %v79, %v80
    %v85 = vsel %vm81, %v84, %v78
    %vm89 = vcmask 1041424
    %vm90 = vcmask 1043458
    %vm91 = vmor %vm90, %vm89
    %vm92 = vcmask 1045508
    %vm93 = vmor %vm92, %vm91
    %vm94 = vcmask 1047558
    %vm95 = vmor %vm94, %vm93
    %96 = vst.msk [vmem:[#allocation2] sm:$0xff] %vm95, %v82
    %97 = vst [vmem:[#allocation2 + $0x8] sm:$0xff] %v85
    %vm98 = vcmask 9216
    %99 = vst.msk [vmem:[#allocation2 + $0x10] sm:$0x3] %vm98, %v80
    %v100 = vld [vmem:[#allocation2] sm:$0xff]
    %v101 = vld [vmem:[#allocation2 + $0x8] sm:$0xff]
    %v102 = vld [vmem:[#allocation2 + $0x10] sm:$0x3]
    %v103 = vlaneseq
    %v104 = vshrl.u32 %v103, 7
    %v105 = vadd.s32 %v104, 8
    %v106 = vadd.s32 %v104, 16
    %v107 = vadd.s32 %v104, 24
    %v108 = vadd.s32 %v104, 32
    %v109 = vadd.s32 %v104, 40
    %v110 = vadd.s32 %v104, 48
    %v111 = vadd.s32 %v104, 56
    %v112 = vadd.s32 %v104, 64
    %v113 = vadd.s32 %v104, 72
    %v114 = vadd.s32 %v104, 80
    %v115 = vadd.s32 %v104, 88
    %v116 = vadd.s32 %v104, 96
    %v117 = vadd.s32 %v104, 104
    %v118 = vadd.s32 %v104, 112
    %v119 = vadd.s32 %v104, 120
    %v120 = vadd.s32 %v104, 128
    %v121 = vadd.s32 %v104, 136
    %v122 = vadd.s32 %v104, 144
    %v123 = vadd.s32 %v104, 152
    %v124 = vadd.s32 %v104, 160
    %v125 = vadd.s32 %v104, 168
    %v126 = vadd.s32 %v104, 176
    %v127 = vadd.s32 %v104, 184
    %v128 = vadd.s32 %v104, 192
    %v129 = vadd.s32 %v104, 200
    %v130 = vadd.s32 %v104, 208
    %v131 = vadd.s32 %v104, 216
    %v132 = vadd.s32 %v104, 224
    %v133 = vadd.s32 %v104, 232
    %v134 = vadd.s32 %v104, 240
    %v135 = vadd.s32 %v104, 248
    %v136 = vadd.s32 %v104, 256
    %v137 = vadd.s32 %v104, 264
    %v138 = vadd.s32 %v104, 272
    %v139 = vadd.s32 %v104, 280
    %v140 = vadd.s32 %v104, 288
    %v141 = vadd.s32 %v104, 296
    %v142 = vadd.s32 %v104, 304
    %v143 = vadd.s32 %v104, 312
    %v144 = vadd.s32 %v104, 320
    %v145 = vadd.s32 %v104, 328
    %v146 = vadd.s32 %v104, 336
    %v147 = vadd.s32 %v104, 344
    %v148 = vadd.s32 %v104, 352
    %v149 = vadd.s32 %v104, 360
    %v150 = vadd.s32 %v104, 368
    %v151 = vadd.s32 %v104, 376
    %v152 = vadd.s32 %v104, 384
    %v153 = vadd.s32 %v104, 392
    %v154 = vadd.s32 %v104, 400
    %v155 = vadd.s32 %v104, 408
    %v156 = vadd.s32 %v104, 416
    %v157 = vadd.s32 %v104, 424
    %v158 = vadd.s32 %v104, 432
    %v159 = vadd.s32 %v104, 440
    %v160 = vadd.s32 %v104, 448
    %v161 = vadd.s32 %v104, 456
    %v162 = vadd.s32 %v104, 464
    %v163 = vadd.s32 %v104, 472
    %v164 = vadd.s32 %v104, 480
    %v165 = vadd.s32 %v104, 488
    %v166 = vadd.s32 %v104, 496
    %v167 = vadd.s32 %v104, 504
    %v168 = vadd.s32 %v104, 512
    %v169 = vadd.s32 %v104, 520
    %v170 = vadd.s32 %v104, 528
    %v171 = vadd.s32 %v104, 536
    %v172 = vadd.s32 %v104, 544
    %v173 = vadd.s32 %v104, 552
    %v174 = vadd.s32 %v104, 560
    %v175 = vadd.s32 %v104, 568
    %v176 = vadd.s32 %v104, 576
    %v177 = vadd.s32 %v104, 584
    %v178 = vadd.s32 %v104, 592
    %v179 = vadd.s32 %v104, 600
    %v180 = vadd.s32 %v104, 608
    %v181 = vadd.s32 %v104, 616
    %v182 = vadd.s32 %v104, 624
    %v183 = vadd.s32 %v104, 632
    %v184 = vadd.s32 %v104, 640
    %v185 = vadd.s32 %v104, 648
    %v186 = vadd.s32 %v104, 656
    %v187 = vadd.s32 %v104, 664
    %v188 = vadd.s32 %v104, 672
    %v189 = vadd.s32 %v104, 680
    %v190 = vadd.s32 %v104, 688
    %v191 = vadd.s32 %v104, 696
    %v192 = vadd.s32 %v104, 704
    %v193 = vadd.s32 %v104, 712
    %v194 = vadd.s32 %v104, 720
    %v195 = vadd.s32 %v104, 728
    %v196 = vadd.s32 %v104, 736
    %v197 = vadd.s32 %v104, 744
    %v198 = vadd.s32 %v104, 752
    %v199 = vadd.s32 %v104, 760
    %v200 = vadd.s32 %v104, 768
    %v201 = vadd.s32 %v104, 776
    %v202 = vadd.s32 %v104, 784
    %v203 = vadd.s32 %v104, 792
    %v204 = vadd.s32 %v104, 800
    %v205 = vadd.s32 %v104, 808
    %v206 = vadd.s32 %v104, 816
    %v207 = vadd.s32 %v104, 824
    %v208 = vadd.s32 %v104, 832
    %v209 = vadd.s32 %v104, 840
    %v210 = vadd.s32 %v104, 848
    %v211 = vadd.s32 %v104, 856
    %v212 = vadd.s32 %v104, 864
    %v213 = vadd.s32 %v104, 872
    %v214 = vadd.s32 %v104, 880
    %v215 = vadd.s32 %v104, 888
    %v216 = vadd.s32 %v104, 896
    %v217 = vadd.s32 %v104, 904
    %v218 = vadd.s32 %v104, 912
    %v219 = vadd.s32 %v104, 920
    %v220 = vadd.s32 %v104, 928
    %v221 = vadd.s32 %v104, 936
    %v222 = vadd.s32 %v104, 944
    %v223 = vadd.s32 %v104, 952
    %v224 = vadd.s32 %v104, 960
    %v225 = vadd.s32 %v104, 968
    %v226 = vadd.s32 %v104, 976
    %v227 = vadd.s32 %v104, 984
    %v228 = vadd.s32 %v104, 992
    %v229 = vadd.s32 %v104, 1000
    %v230 = vadd.s32 %v104, 1008
    %v231 = vadd.s32 %v104, 1016
    %v232 = vlaneseq
    %v233 = vand.u32 %v232, 127
    %v234 = vadd.s32 %v233, 128
    %v235 = vadd.s32 %v233, 256
    %v236 = vsub.s32 %v233, 2
    %v237 = vsub.s32 %v234, 2
    %v238 = vsub.s32 %v235, 2
    %v239 = vmul.u32 %v236, 4
    %v240 = vmul.u32 %v237, 4
    %v241 = vmul.u32 %v238, 4
    %vm242 = vcmp.eq.s32.totalorder %v104, %v239
    %vm243 = vcmp.eq.s32.totalorder %v104, %v240
    %vm244 = vcmp.eq.s32.totalorder %v104, %v241
    %vm245 = vcmp.eq.s32.totalorder %v105, %v239
    %vm246 = vcmp.eq.s32.totalorder %v105, %v240
    %vm247 = vcmp.eq.s32.totalorder %v105, %v241
    %vm248 = vcmp.eq.s32.totalorder %v106, %v239
    %vm249 = vcmp.eq.s32.totalorder %v106, %v240
    %vm250 = vcmp.eq.s32.totalorder %v106, %v241
    %vm251 = vcmp.eq.s32.totalorder %v107, %v239
    %vm252 = vcmp.eq.s32.totalorder %v107, %v240
    %vm253 = vcmp.eq.s32.totalorder %v107, %v241
    %vm254 = vcmp.eq.s32.totalorder %v108, %v239
    %vm255 = vcmp.eq.s32.totalorder %v108, %v240
    %vm256 = vcmp.eq.s32.totalorder %v108, %v241
    %vm257 = vcmp.eq.s32.totalorder %v109, %v239
    %vm258 = vcmp.eq.s32.totalorder %v109, %v240
    %vm259 = vcmp.eq.s32.totalorder %v109, %v241
    %vm260 = vcmp.eq.s32.totalorder %v110, %v239
    %vm261 = vcmp.eq.s32.totalorder %v110, %v240
    %vm262 = vcmp.eq.s32.totalorder %v110, %v241
    %vm263 = vcmp.eq.s32.totalorder %v111, %v239
    %vm264 = vcmp.eq.s32.totalorder %v111, %v240
    %vm265 = vcmp.eq.s32.totalorder %v111, %v241
    %vm266 = vcmp.eq.s32.totalorder %v112, %v239
    %vm267 = vcmp.eq.s32.totalorder %v112, %v240
    %vm268 = vcmp.eq.s32.totalorder %v112, %v241
    %vm269 = vcmp.eq.s32.totalorder %v113, %v239
    %vm270 = vcmp.eq.s32.totalorder %v113, %v240
    %vm271 = vcmp.eq.s32.totalorder %v113, %v241
    %vm272 = vcmp.eq.s32.totalorder %v114, %v239
    %vm273 = vcmp.eq.s32.totalorder %v114, %v240
    %vm274 = vcmp.eq.s32.totalorder %v114, %v241
    %vm275 = vcmp.eq.s32.totalorder %v115, %v239
    %vm276 = vcmp.eq.s32.totalorder %v115, %v240
    %vm277 = vcmp.eq.s32.totalorder %v115, %v241
    %vm278 = vcmp.eq.s32.totalorder %v116, %v239
    %vm279 = vcmp.eq.s32.totalorder %v116, %v240
    %vm280 = vcmp.eq.s32.totalorder %v116, %v241
    %vm281 = vcmp.eq.s32.totalorder %v117, %v239
    %vm282 = vcmp.eq.s32.totalorder %v117, %v240
    %vm283 = vcmp.eq.s32.totalorder %v117, %v241
    %vm284 = vcmp.eq.s32.totalorder %v118, %v239
    %vm285 = vcmp.eq.s32.totalorder %v118, %v240
    %vm286 = vcmp.eq.s32.totalorder %v118, %v241
    %vm287 = vcmp.eq.s32.totalorder %v119, %v239
    %vm288 = vcmp.eq.s32.totalorder %v119, %v240
    %vm289 = vcmp.eq.s32.totalorder %v119, %v241
    %vm290 = vcmp.eq.s32.totalorder %v120, %v239
    %vm291 = vcmp.eq.s32.totalorder %v120, %v240
    %vm292 = vcmp.eq.s32.totalorder %v120, %v241
    %vm293 = vcmp.eq.s32.totalorder %v121, %v239
    %vm294 = vcmp.eq.s32.totalorder %v121, %v240
    %vm295 = vcmp.eq.s32.totalorder %v121, %v241
    %vm296 = vcmp.eq.s32.totalorder %v122, %v239
    %vm297 = vcmp.eq.s32.totalorder %v122, %v240
    %vm298 = vcmp.eq.s32.totalorder %v122, %v241
    %vm299 = vcmp.eq.s32.totalorder %v123, %v239
    %vm300 = vcmp.eq.s32.totalorder %v123, %v240
    %vm301 = vcmp.eq.s32.totalorder %v123, %v241
    %vm302 = vcmp.eq.s32.totalorder %v124, %v239
    %vm303 = vcmp.eq.s32.totalorder %v124, %v240
    %vm304 = vcmp.eq.s32.totalorder %v124, %v241
    %vm305 = vcmp.eq.s32.totalorder %v125, %v239
    %vm306 = vcmp.eq.s32.totalorder %v125, %v240
    %vm307 = vcmp.eq.s32.totalorder %v125, %v241
    %vm308 = vcmp.eq.s32.totalorder %v126, %v239
    %vm309 = vcmp.eq.s32.totalorder %v126, %v240
    %vm310 = vcmp.eq.s32.totalorder %v126, %v241
    %vm311 = vcmp.eq.s32.totalorder %v127, %v239
    %vm312 = vcmp.eq.s32.totalorder %v127, %v240
    %vm313 = vcmp.eq.s32.totalorder %v127, %v241
    %vm314 = vcmp.eq.s32.totalorder %v128, %v239
    %vm315 = vcmp.eq.s32.totalorder %v128, %v240
    %vm316 = vcmp.eq.s32.totalorder %v128, %v241
    %vm317 = vcmp.eq.s32.totalorder %v129, %v239
    %vm318 = vcmp.eq.s32.totalorder %v129, %v240
    %vm319 = vcmp.eq.s32.totalorder %v129, %v241
    %vm320 = vcmp.eq.s32.totalorder %v130, %v239
    %vm321 = vcmp.eq.s32.totalorder %v130, %v240
    %vm322 = vcmp.eq.s32.totalorder %v130, %v241
    %vm323 = vcmp.eq.s32.totalorder %v131, %v239
    %vm324 = vcmp.eq.s32.totalorder %v131, %v240
    %vm325 = vcmp.eq.s32.totalorder %v131, %v241
    %vm326 = vcmp.eq.s32.totalorder %v132, %v239
    %vm327 = vcmp.eq.s32.totalorder %v132, %v240
    %vm328 = vcmp.eq.s32.totalorder %v132, %v241
    %vm329 = vcmp.eq.s32.totalorder %v133, %v239
    %vm330 = vcmp.eq.s32.totalorder %v133, %v240
    %vm331 = vcmp.eq.s32.totalorder %v133, %v241
    %vm332 = vcmp.eq.s32.totalorder %v134, %v239
    %vm333 = vcmp.eq.s32.totalorder %v134, %v240
    %vm334 = vcmp.eq.s32.totalorder %v134, %v241
    %vm335 = vcmp.eq.s32.totalorder %v135, %v239
    %vm336 = vcmp.eq.s32.totalorder %v135, %v240
    %vm337 = vcmp.eq.s32.totalorder %v135, %v241
    %vm338 = vcmp.eq.s32.totalorder %v136, %v239
    %vm339 = vcmp.eq.s32.totalorder %v136, %v240
    %vm340 = vcmp.eq.s32.totalorder %v136, %v241
    %vm341 = vcmp.eq.s32.totalorder %v137, %v239
    %vm342 = vcmp.eq.s32.totalorder %v137, %v240
    %vm343 = vcmp.eq.s32.totalorder %v137, %v241
    %vm344 = vcmp.eq.s32.totalorder %v138, %v239
    %vm345 = vcmp.eq.s32.totalorder %v138, %v240
    %vm346 = vcmp.eq.s32.totalorder %v138, %v241
    %vm347 = vcmp.eq.s32.totalorder %v139, %v239
    %vm348 = vcmp.eq.s32.totalorder %v139, %v240
    %vm349 = vcmp.eq.s32.totalorder %v139, %v241
    %vm350 = vcmp.eq.s32.totalorder %v140, %v239
    %vm351 = vcmp.eq.s32.totalorder %v140, %v240
    %vm352 = vcmp.eq.s32.totalorder %v140, %v241
    %vm353 = vcmp.eq.s32.totalorder %v141, %v239
    %vm354 = vcmp.eq.s32.totalorder %v141, %v240
    %vm355 = vcmp.eq.s32.totalorder %v141, %v241
    %vm356 = vcmp.eq.s32.totalorder %v142, %v239
    %vm357 = vcmp.eq.s32.totalorder %v142, %v240
    %vm358 = vcmp.eq.s32.totalorder %v142, %v241
    %vm359 = vcmp.eq.s32.totalorder %v143, %v239
    %vm360 = vcmp.eq.s32.totalorder %v143, %v240
    %vm361 = vcmp.eq.s32.totalorder %v143, %v241
    %vm362 = vcmp.eq.s32.totalorder %v144, %v239
    %vm363 = vcmp.eq.s32.totalorder %v144, %v240
    %vm364 = vcmp.eq.s32.totalorder %v144, %v241
    %vm365 = vcmp.eq.s32.totalorder %v145, %v239
    %vm366 = vcmp.eq.s32.totalorder %v145, %v240
    %vm367 = vcmp.eq.s32.totalorder %v145, %v241
    %vm368 = vcmp.eq.s32.totalorder %v146, %v239
    %vm369 = vcmp.eq.s32.totalorder %v146, %v240
    %vm370 = vcmp.eq.s32.totalorder %v146, %v241
    %vm371 = vcmp.eq.s32.totalorder %v147, %v239
    %vm372 = vcmp.eq.s32.totalorder %v147, %v240
    %vm373 = vcmp.eq.s32.totalorder %v147, %v241
    %vm374 = vcmp.eq.s32.totalorder %v148, %v239
    %vm375 = vcmp.eq.s32.totalorder %v148, %v240
    %vm376 = vcmp.eq.s32.totalorder %v148, %v241
    %vm377 = vcmp.eq.s32.totalorder %v149, %v239
    %vm378 = vcmp.eq.s32.totalorder %v149, %v240
    %vm379 = vcmp.eq.s32.totalorder %v149, %v241
    %vm380 = vcmp.eq.s32.totalorder %v150, %v239
    %vm381 = vcmp.eq.s32.totalorder %v150, %v240
    %vm382 = vcmp.eq.s32.totalorder %v150, %v241
    %vm383 = vcmp.eq.s32.totalorder %v151, %v239
    %vm384 = vcmp.eq.s32.totalorder %v151, %v240
    %vm385 = vcmp.eq.s32.totalorder %v151, %v241
    %vm386 = vcmp.eq.s32.totalorder %v152, %v239
    %vm387 = vcmp.eq.s32.totalorder %v152, %v240
    %vm388 = vcmp.eq.s32.totalorder %v152, %v241
    %vm389 = vcmp.eq.s32.totalorder %v153, %v239
    %vm390 = vcmp.eq.s32.totalorder %v153, %v240
    %vm391 = vcmp.eq.s32.totalorder %v153, %v241
    %vm392 = vcmp.eq.s32.totalorder %v154, %v239
    %vm393 = vcmp.eq.s32.totalorder %v154, %v240
    %vm394 = vcmp.eq.s32.totalorder %v154, %v241
    %vm395 = vcmp.eq.s32.totalorder %v155, %v239
    %vm396 = vcmp.eq.s32.totalorder %v155, %v240
    %vm397 = vcmp.eq.s32.totalorder %v155, %v241
    %vm398 = vcmp.eq.s32.totalorder %v156, %v239
    %vm399 = vcmp.eq.s32.totalorder %v156, %v240
    %vm400 = vcmp.eq.s32.totalorder %v156, %v241
    %vm401 = vcmp.eq.s32.totalorder %v157, %v239
    %vm402 = vcmp.eq.s32.totalorder %v157, %v240
    %vm403 = vcmp.eq.s32.totalorder %v157, %v241
    %vm404 = vcmp.eq.s32.totalorder %v158, %v239
    %vm405 = vcmp.eq.s32.totalorder %v158, %v240
    %vm406 = vcmp.eq.s32.totalorder %v158, %v241
    %vm407 = vcmp.eq.s32.totalorder %v159, %v239
    %vm408 = vcmp.eq.s32.totalorder %v159, %v240
    %vm409 = vcmp.eq.s32.totalorder %v159, %v241
    %vm410 = vcmp.eq.s32.totalorder %v160, %v239
    %vm411 = vcmp.eq.s32.totalorder %v160, %v240
    %vm412 = vcmp.eq.s32.totalorder %v160, %v241
    %vm413 = vcmp.eq.s32.totalorder %v161, %v239
    %vm414 = vcmp.eq.s32.totalorder %v161, %v240
    %vm415 = vcmp.eq.s32.totalorder %v161, %v241
    %vm416 = vcmp.eq.s32.totalorder %v162, %v239
    %vm417 = vcmp.eq.s32.totalorder %v162, %v240
    %vm418 = vcmp.eq.s32.totalorder %v162, %v241
    %vm419 = vcmp.eq.s32.totalorder %v163, %v239
    %vm420 = vcmp.eq.s32.totalorder %v163, %v240
    %vm421 = vcmp.eq.s32.totalorder %v163, %v241
    %vm422 = vcmp.eq.s32.totalorder %v164, %v239
    %vm423 = vcmp.eq.s32.totalorder %v164, %v240
    %vm424 = vcmp.eq.s32.totalorder %v164, %v241
    %vm425 = vcmp.eq.s32.totalorder %v165, %v239
    %vm426 = vcmp.eq.s32.totalorder %v165, %v240
    %vm427 = vcmp.eq.s32.totalorder %v165, %v241
    %vm428 = vcmp.eq.s32.totalorder %v166, %v239
    %vm429 = vcmp.eq.s32.totalorder %v166, %v240
    %vm430 = vcmp.eq.s32.totalorder %v166, %v241
    %vm431 = vcmp.eq.s32.totalorder %v167, %v239
    %vm432 = vcmp.eq.s32.totalorder %v167, %v240
    %vm433 = vcmp.eq.s32.totalorder %v167, %v241
    %vm434 = vcmp.eq.s32.totalorder %v168, %v239
    %vm435 = vcmp.eq.s32.totalorder %v168, %v240
    %vm436 = vcmp.eq.s32.totalorder %v168, %v241
    %vm437 = vcmp.eq.s32.totalorder %v169, %v239
    %vm438 = vcmp.eq.s32.totalorder %v169, %v240
    %vm439 = vcmp.eq.s32.totalorder %v169, %v241
    %vm440 = vcmp.eq.s32.totalorder %v170, %v239
    %vm441 = vcmp.eq.s32.totalorder %v170, %v240
    %vm442 = vcmp.eq.s32.totalorder %v170, %v241
    %vm443 = vcmp.eq.s32.totalorder %v171, %v239
    %vm444 = vcmp.eq.s32.totalorder %v171, %v240
    %vm445 = vcmp.eq.s32.totalorder %v171, %v241
    %vm446 = vcmp.eq.s32.totalorder %v172, %v239
    %vm447 = vcmp.eq.s32.totalorder %v172, %v240
    %vm448 = vcmp.eq.s32.totalorder %v172, %v241
    %vm449 = vcmp.eq.s32.totalorder %v173, %v239
    %vm450 = vcmp.eq.s32.totalorder %v173, %v240
    %vm451 = vcmp.eq.s32.totalorder %v173, %v241
    %vm452 = vcmp.eq.s32.totalorder %v174, %v239
    %vm453 = vcmp.eq.s32.totalorder %v174, %v240
    %vm454 = vcmp.eq.s32.totalorder %v174, %v241
    %vm455 = vcmp.eq.s32.totalorder %v175, %v239
    %vm456 = vcmp.eq.s32.totalorder %v175, %v240
    %vm457 = vcmp.eq.s32.totalorder %v175, %v241
    %vm458 = vcmp.eq.s32.totalorder %v176, %v239
    %vm459 = vcmp.eq.s32.totalorder %v176, %v240
    %vm460 = vcmp.eq.s32.totalorder %v176, %v241
    %vm461 = vcmp.eq.s32.totalorder %v177, %v239
    %vm462 = vcmp.eq.s32.totalorder %v177, %v240
    %vm463 = vcmp.eq.s32.totalorder %v177, %v241
    %vm464 = vcmp.eq.s32.totalorder %v178, %v239
    %vm465 = vcmp.eq.s32.totalorder %v178, %v240
    %vm466 = vcmp.eq.s32.totalorder %v178, %v241
    %vm467 = vcmp.eq.s32.totalorder %v179, %v239
    %vm468 = vcmp.eq.s32.totalorder %v179, %v240
    %vm469 = vcmp.eq.s32.totalorder %v179, %v241
    %vm470 = vcmp.eq.s32.totalorder %v180, %v239
    %vm471 = vcmp.eq.s32.totalorder %v180, %v240
    %vm472 = vcmp.eq.s32.totalorder %v180, %v241
    %vm473 = vcmp.eq.s32.totalorder %v181, %v239
    %vm474 = vcmp.eq.s32.totalorder %v181, %v240
    %vm475 = vcmp.eq.s32.totalorder %v181, %v241
    %vm476 = vcmp.eq.s32.totalorder %v182, %v239
    %vm477 = vcmp.eq.s32.totalorder %v182, %v240
    %vm478 = vcmp.eq.s32.totalorder %v182, %v241
    %vm479 = vcmp.eq.s32.totalorder %v183, %v239
    %vm480 = vcmp.eq.s32.totalorder %v183, %v240
    %vm481 = vcmp.eq.s32.totalorder %v183, %v241
    %vm482 = vcmp.eq.s32.totalorder %v184, %v239
    %vm483 = vcmp.eq.s32.totalorder %v184, %v240
    %vm484 = vcmp.eq.s32.totalorder %v184, %v241
    %vm485 = vcmp.eq.s32.totalorder %v185, %v239
    %vm486 = vcmp.eq.s32.totalorder %v185, %v240
    %vm487 = vcmp.eq.s32.totalorder %v185, %v241
    %vm488 = vcmp.eq.s32.totalorder %v186, %v239
    %vm489 = vcmp.eq.s32.totalorder %v186, %v240
    %vm490 = vcmp.eq.s32.totalorder %v186, %v241
    %vm491 = vcmp.eq.s32.totalorder %v187, %v239
    %vm492 = vcmp.eq.s32.totalorder %v187, %v240
    %vm493 = vcmp.eq.s32.totalorder %v187, %v241
    %vm494 = vcmp.eq.s32.totalorder %v188, %v239
    %vm495 = vcmp.eq.s32.totalorder %v188, %v240
    %vm496 = vcmp.eq.s32.totalorder %v188, %v241
    %vm497 = vcmp.eq.s32.totalorder %v189, %v239
    %vm498 = vcmp.eq.s32.totalorder %v189, %v240
    %vm499 = vcmp.eq.s32.totalorder %v189, %v241
    %vm500 = vcmp.eq.s32.totalorder %v190, %v239
    %vm501 = vcmp.eq.s32.totalorder %v190, %v240
    %vm502 = vcmp.eq.s32.totalorder %v190, %v241
    %vm503 = vcmp.eq.s32.totalorder %v191, %v239
    %vm504 = vcmp.eq.s32.totalorder %v191, %v240
    %vm505 = vcmp.eq.s32.totalorder %v191, %v241
    %vm506 = vcmp.eq.s32.totalorder %v192, %v239
    %vm507 = vcmp.eq.s32.totalorder %v192, %v240
    %vm508 = vcmp.eq.s32.totalorder %v192, %v241
    %vm509 = vcmp.eq.s32.totalorder %v193, %v239
    %vm510 = vcmp.eq.s32.totalorder %v193, %v240
    %vm511 = vcmp.eq.s32.totalorder %v193, %v241
    %vm512 = vcmp.eq.s32.totalorder %v194, %v239
    %vm513 = vcmp.eq.s32.totalorder %v194, %v240
    %vm514 = vcmp.eq.s32.totalorder %v194, %v241
    %vm515 = vcmp.eq.s32.totalorder %v195, %v239
    %vm516 = vcmp.eq.s32.totalorder %v195, %v240
    %vm517 = vcmp.eq.s32.totalorder %v195, %v241
    %vm518 = vcmp.eq.s32.totalorder %v196, %v239
    %vm519 = vcmp.eq.s32.totalorder %v196, %v240
    %vm520 = vcmp.eq.s32.totalorder %v196, %v241
    %vm521 = vcmp.eq.s32.totalorder %v197, %v239
    %vm522 = vcmp.eq.s32.totalorder %v197, %v240
    %vm523 = vcmp.eq.s32.totalorder %v197, %v241
    %vm524 = vcmp.eq.s32.totalorder %v198, %v239
    %vm525 = vcmp.eq.s32.totalorder %v198, %v240
    %vm526 = vcmp.eq.s32.totalorder %v198, %v241
    %vm527 = vcmp.eq.s32.totalorder %v199, %v239
    %vm528 = vcmp.eq.s32.totalorder %v199, %v240
    %vm529 = vcmp.eq.s32.totalorder %v199, %v241
    %vm530 = vcmp.eq.s32.totalorder %v200, %v239
    %vm531 = vcmp.eq.s32.totalorder %v200, %v240
    %vm532 = vcmp.eq.s32.totalorder %v200, %v241
    %vm533 = vcmp.eq.s32.totalorder %v201, %v239
    %vm534 = vcmp.eq.s32.totalorder %v201, %v240
    %vm535 = vcmp.eq.s32.totalorder %v201, %v241
    %vm536 = vcmp.eq.s32.totalorder %v202, %v239
    %vm537 = vcmp.eq.s32.totalorder %v202, %v240
    %vm538 = vcmp.eq.s32.totalorder %v202, %v241
    %vm539 = vcmp.eq.s32.totalorder %v203, %v239
    %vm540 = vcmp.eq.s32.totalorder %v203, %v240
    %vm541 = vcmp.eq.s32.totalorder %v203, %v241
    %vm542 = vcmp.eq.s32.totalorder %v204, %v239
    %vm543 = vcmp.eq.s32.totalorder %v204, %v240
    %vm544 = vcmp.eq.s32.totalorder %v204, %v241
    %vm545 = vcmp.eq.s32.totalorder %v205, %v239
    %vm546 = vcmp.eq.s32.totalorder %v205, %v240
    %vm547 = vcmp.eq.s32.totalorder %v205, %v241
    %vm548 = vcmp.eq.s32.totalorder %v206, %v239
    %vm549 = vcmp.eq.s32.totalorder %v206, %v240
    %vm550 = vcmp.eq.s32.totalorder %v206, %v241
    %vm551 = vcmp.eq.s32.totalorder %v207, %v239
    %vm552 = vcmp.eq.s32.totalorder %v207, %v240
    %vm553 = vcmp.eq.s32.totalorder %v207, %v241
    %vm554 = vcmp.eq.s32.totalorder %v208, %v239
    %vm555 = vcmp.eq.s32.totalorder %v208, %v240
    %vm556 = vcmp.eq.s32.totalorder %v208, %v241
    %vm557 = vcmp.eq.s32.totalorder %v209, %v239
    %vm558 = vcmp.eq.s32.totalorder %v209, %v240
    %vm559 = vcmp.eq.s32.totalorder %v209, %v241
    %vm560 = vcmp.eq.s32.totalorder %v210, %v239
    %vm561 = vcmp.eq.s32.totalorder %v210, %v240
    %vm562 = vcmp.eq.s32.totalorder %v210, %v241
    %vm563 = vcmp.eq.s32.totalorder %v211, %v239
    %vm564 = vcmp.eq.s32.totalorder %v211, %v240
    %vm565 = vcmp.eq.s32.totalorder %v211, %v241
    %vm566 = vcmp.eq.s32.totalorder %v212, %v239
    %vm567 = vcmp.eq.s32.totalorder %v212, %v240
    %vm568 = vcmp.eq.s32.totalorder %v212, %v241
    %vm569 = vcmp.eq.s32.totalorder %v213, %v239
    %vm570 = vcmp.eq.s32.totalorder %v213, %v240
    %vm571 = vcmp.eq.s32.totalorder %v213, %v241
    %vm572 = vcmp.eq.s32.totalorder %v214, %v239
    %vm573 = vcmp.eq.s32.totalorder %v214, %v240
    %vm574 = vcmp.eq.s32.totalorder %v214, %v241
    %vm575 = vcmp.eq.s32.totalorder %v215, %v239
    %vm576 = vcmp.eq.s32.totalorder %v215, %v240
    %vm577 = vcmp.eq.s32.totalorder %v215, %v241
    %vm578 = vcmp.eq.s32.totalorder %v216, %v239
    %vm579 = vcmp.eq.s32.totalorder %v216, %v240
    %vm580 = vcmp.eq.s32.totalorder %v216, %v241
    %vm581 = vcmp.eq.s32.totalorder %v217, %v239
    %vm582 = vcmp.eq.s32.totalorder %v217, %v240
    %vm583 = vcmp.eq.s32.totalorder %v217, %v241
    %vm584 = vcmp.eq.s32.totalorder %v218, %v239
    %vm585 = vcmp.eq.s32.totalorder %v218, %v240
    %vm586 = vcmp.eq.s32.totalorder %v218, %v241
    %vm587 = vcmp.eq.s32.totalorder %v219, %v239
    %vm588 = vcmp.eq.s32.totalorder %v219, %v240
    %vm589 = vcmp.eq.s32.totalorder %v219, %v241
    %vm590 = vcmp.eq.s32.totalorder %v220, %v239
    %vm591 = vcmp.eq.s32.totalorder %v220, %v240
    %vm592 = vcmp.eq.s32.totalorder %v220, %v241
    %vm593 = vcmp.eq.s32.totalorder %v221, %v239
    %vm594 = vcmp.eq.s32.totalorder %v221, %v240
    %vm595 = vcmp.eq.s32.totalorder %v221, %v241
    %vm596 = vcmp.eq.s32.totalorder %v222, %v239
    %vm597 = vcmp.eq.s32.totalorder %v222, %v240
    %vm598 = vcmp.eq.s32.totalorder %v222, %v241
    %vm599 = vcmp.eq.s32.totalorder %v223, %v239
    %vm600 = vcmp.eq.s32.totalorder %v223, %v240
    %vm601 = vcmp.eq.s32.totalorder %v223, %v241
    %vm602 = vcmp.eq.s32.totalorder %v224, %v239
    %vm603 = vcmp.eq.s32.totalorder %v224, %v240
    %vm604 = vcmp.eq.s32.totalorder %v224, %v241
    %vm605 = vcmp.eq.s32.totalorder %v225, %v239
    %vm606 = vcmp.eq.s32.totalorder %v225, %v240
    %vm607 = vcmp.eq.s32.totalorder %v225, %v241
    %vm608 = vcmp.eq.s32.totalorder %v226, %v239
    %vm609 = vcmp.eq.s32.totalorder %v226, %v240
    %vm610 = vcmp.eq.s32.totalorder %v226, %v241
    %vm611 = vcmp.eq.s32.totalorder %v227, %v239
    %vm612 = vcmp.eq.s32.totalorder %v227, %v240
    %vm613 = vcmp.eq.s32.totalorder %v227, %v241
    %vm614 = vcmp.eq.s32.totalorder %v228, %v239
    %vm615 = vcmp.eq.s32.totalorder %v228, %v240
    %vm616 = vcmp.eq.s32.totalorder %v228, %v241
    %vm617 = vcmp.eq.s32.totalorder %v229, %v239
    %vm618 = vcmp.eq.s32.totalorder %v229, %v240
    %vm619 = vcmp.eq.s32.totalorder %v229, %v241
    %vm620 = vcmp.eq.s32.totalorder %v230, %v239
    %vm621 = vcmp.eq.s32.totalorder %v230, %v240
    %vm622 = vcmp.eq.s32.totalorder %v230, %v241
    %vm623 = vcmp.eq.s32.totalorder %v231, %v239
    %vm624 = vcmp.eq.s32.totalorder %v231, %v240
    %vm625 = vcmp.eq.s32.totalorder %v231, %v241
    %v626 = vsel %vm242, 1, 0
    %v627 = vsel %vm243, 1, 0
    %v628 = vsel %vm244, 1, 0
    %v629 = vsel %vm245, 1, 0
    %v630 = vsel %vm246, 1, 0
    %v631 = vsel %vm247, 1, 0
    %v632 = vsel %vm248, 1, 0
    %v633 = vsel %vm249, 1, 0
    %v634 = vsel %vm250, 1, 0
    %v635 = vsel %vm251, 1, 0
    %v636 = vsel %vm252, 1, 0
    %v637 = vsel %vm253, 1, 0
    %v638 = vsel %vm254, 1, 0
    %v639 = vsel %vm255, 1, 0
    %v640 = vsel %vm256, 1, 0
    %v641 = vsel %vm257, 1, 0
    %v642 = vsel %vm258, 1, 0
    %v643 = vsel %vm259, 1, 0
    %v644 = vsel %vm260, 1, 0
    %v645 = vsel %vm261, 1, 0
    %v646 = vsel %vm262, 1, 0
    %v647 = vsel %vm263, 1, 0
    %v648 = vsel %vm264, 1, 0
    %v649 = vsel %vm265, 1, 0
    %v650 = vsel %vm266, 1, 0
    %v651 = vsel %vm267, 1, 0
    %v652 = vsel %vm268, 1, 0
    %v653 = vsel %vm269, 1, 0
    %v654 = vsel %vm270, 1, 0
    %v655 = vsel %vm271, 1, 0
    %v656 = vsel %vm272, 1, 0
    %v657 = vsel %vm273, 1, 0
    %v658 = vsel %vm274, 1, 0
    %v659 = vsel %vm275, 1, 0
    %v660 = vsel %vm276, 1, 0
    %v661 = vsel %vm277, 1, 0
    %v662 = vsel %vm278, 1, 0
    %v663 = vsel %vm279, 1, 0
    %v664 = vsel %vm280, 1, 0
    %v665 = vsel %vm281, 1, 0
    %v666 = vsel %vm282, 1, 0
    %v667 = vsel %vm283, 1, 0
    %v668 = vsel %vm284, 1, 0
    %v669 = vsel %vm285, 1, 0
    %v670 = vsel %vm286, 1, 0
    %v671 = vsel %vm287, 1, 0
    %v672 = vsel %vm288, 1, 0
    %v673 = vsel %vm289, 1, 0
    %v674 = vsel %vm290, 1, 0
    %v675 = vsel %vm291, 1, 0
    %v676 = vsel %vm292, 1, 0
    %v677 = vsel %vm293, 1, 0
    %v678 = vsel %vm294, 1, 0
    %v679 = vsel %vm295, 1, 0
    %v680 = vsel %vm296, 1, 0
    %v681 = vsel %vm297, 1, 0
    %v682 = vsel %vm298, 1, 0
    %v683 = vsel %vm299, 1, 0
    %v684 = vsel %vm300, 1, 0
    %v685 = vsel %vm301, 1, 0
    %v686 = vsel %vm302, 1, 0
    %v687 = vsel %vm303, 1, 0
    %v688 = vsel %vm304, 1, 0
    %v689 = vsel %vm305, 1, 0
    %v690 = vsel %vm306, 1, 0
    %v691 = vsel %vm307, 1, 0
    %v692 = vsel %vm308, 1, 0
    %v693 = vsel %vm309, 1, 0
    %v694 = vsel %vm310, 1, 0
    %v695 = vsel %vm311, 1, 0
    %v696 = vsel %vm312, 1, 0
    %v697 = vsel %vm313, 1, 0
    %v698 = vsel %vm314, 1, 0
    %v699 = vsel %vm315, 1, 0
    %v700 = vsel %vm316, 1, 0
    %v701 = vsel %vm317, 1, 0
    %v702 = vsel %vm318, 1, 0
    %v703 = vsel %vm319, 1, 0
    %v704 = vsel %vm320, 1, 0
    %v705 = vsel %vm321, 1, 0
    %v706 = vsel %vm322, 1, 0
    %v707 = vsel %vm323, 1, 0
    %v708 = vsel %vm324, 1, 0
    %v709 = vsel %vm325, 1, 0
    %v710 = vsel %vm326, 1, 0
    %v711 = vsel %vm327, 1, 0
    %v712 = vsel %vm328, 1, 0
    %v713 = vsel %vm329, 1, 0
    %v714 = vsel %vm330, 1, 0
    %v715 = vsel %vm331, 1, 0
    %v716 = vsel %vm332, 1, 0
    %v717 = vsel %vm333, 1, 0
    %v718 = vsel %vm334, 1, 0
    %v719 = vsel %vm335, 1, 0
    %v720 = vsel %vm336, 1, 0
    %v721 = vsel %vm337, 1, 0
    %v722 = vsel %vm338, 1, 0
    %v723 = vsel %vm339, 1, 0
    %v724 = vsel %vm340, 1, 0
    %v725 = vsel %vm341, 1, 0
    %v726 = vsel %vm342, 1, 0
    %v727 = vsel %vm343, 1, 0
    %v728 = vsel %vm344, 1, 0
    %v729 = vsel %vm345, 1, 0
    %v730 = vsel %vm346, 1, 0
    %v731 = vsel %vm347, 1, 0
    %v732 = vsel %vm348, 1, 0
    %v733 = vsel %vm349, 1, 0
    %v734 = vsel %vm350, 1, 0
    %v735 = vsel %vm351, 1, 0
    %v736 = vsel %vm352, 1, 0
    %v737 = vsel %vm353, 1, 0
    %v738 = vsel %vm354, 1, 0
    %v739 = vsel %vm355, 1, 0
    %v740 = vsel %vm356, 1, 0
    %v741 = vsel %vm357, 1, 0
    %v742 = vsel %vm358, 1, 0
    %v743 = vsel %vm359, 1, 0
    %v744 = vsel %vm360, 1, 0
    %v745 = vsel %vm361, 1, 0
    %v746 = vsel %vm362, 1, 0
    %v747 = vsel %vm363, 1, 0
    %v748 = vsel %vm364, 1, 0
    %v749 = vsel %vm365, 1, 0
    %v750 = vsel %vm366, 1, 0
    %v751 = vsel %vm367, 1, 0
    %v752 = vsel %vm368, 1, 0
    %v753 = vsel %vm369, 1, 0
    %v754 = vsel %vm370, 1, 0
    %v755 = vsel %vm371, 1, 0
    %v756 = vsel %vm372, 1, 0
    %v757 = vsel %vm373, 1, 0
    %v758 = vsel %vm374, 1, 0
    %v759 = vsel %vm375, 1, 0
    %v760 = vsel %vm376, 1, 0
    %v761 = vsel %vm377, 1, 0
    %v762 = vsel %vm378, 1, 0
    %v763 = vsel %vm379, 1, 0
    %v764 = vsel %vm380, 1, 0
    %v765 = vsel %vm381, 1, 0
    %v766 = vsel %vm382, 1, 0
    %v767 = vsel %vm383, 1, 0
    %v768 = vsel %vm384, 1, 0
    %v769 = vsel %vm385, 1, 0
    %v770 = vsel %vm386, 1, 0
    %v771 = vsel %vm387, 1, 0
    %v772 = vsel %vm388, 1, 0
    %v773 = vsel %vm389, 1, 0
    %v774 = vsel %vm390, 1, 0
    %v775 = vsel %vm391, 1, 0
    %v776 = vsel %vm392, 1, 0
    %v777 = vsel %vm393, 1, 0
    %v778 = vsel %vm394, 1, 0
    %v779 = vsel %vm395, 1, 0
    %v780 = vsel %vm396, 1, 0
    %v781 = vsel %vm397, 1, 0
    %v782 = vsel %vm398, 1, 0
    %v783 = vsel %vm399, 1, 0
    %v784 = vsel %vm400, 1, 0
    %v785 = vsel %vm401, 1, 0
    %v786 = vsel %vm402, 1, 0
    %v787 = vsel %vm403, 1, 0
    %v788 = vsel %vm404, 1, 0
    %v789 = vsel %vm405, 1, 0
    %v790 = vsel %vm406, 1, 0
    %v791 = vsel %vm407, 1, 0
    %v792 = vsel %vm408, 1, 0
    %v793 = vsel %vm409, 1, 0
    %v794 = vsel %vm410, 1, 0
    %v795 = vsel %vm411, 1, 0
    %v796 = vsel %vm412, 1, 0
    %v797 = vsel %vm413, 1, 0
    %v798 = vsel %vm414, 1, 0
    %v799 = vsel %vm415, 1, 0
    %v800 = vsel %vm416, 1, 0
    %v801 = vsel %vm417, 1, 0
    %v802 = vsel %vm418, 1, 0
    %v803 = vsel %vm419, 1, 0
    %v804 = vsel %vm420, 1, 0
    %v805 = vsel %vm421, 1, 0
    %v806 = vsel %vm422, 1, 0
    %v807 = vsel %vm423, 1, 0
    %v808 = vsel %vm424, 1, 0
    %v809 = vsel %vm425, 1, 0
    %v810 = vsel %vm426, 1, 0
    %v811 = vsel %vm427, 1, 0
    %v812 = vsel %vm428, 1, 0
    %v813 = vsel %vm429, 1, 0
    %v814 = vsel %vm430, 1, 0
    %v815 = vsel %vm431, 1, 0
    %v816 = vsel %vm432, 1, 0
    %v817 = vsel %vm433, 1, 0
    %v818 = vsel %vm434, 1, 0
    %v819 = vsel %vm435, 1, 0
    %v820 = vsel %vm436, 1, 0
    %v821 = vsel %vm437, 1, 0
    %v822 = vsel %vm438, 1, 0
    %v823 = vsel %vm439, 1, 0
    %v824 = vsel %vm440, 1, 0
    %v825 = vsel %vm441, 1, 0
    %v826 = vsel %vm442, 1, 0
    %v827 = vsel %vm443, 1, 0
    %v828 = vsel %vm444, 1, 0
    %v829 = vsel %vm445, 1, 0
    %v830 = vsel %vm446, 1, 0
    %v831 = vsel %vm447, 1, 0
    %v832 = vsel %vm448, 1, 0
    %v833 = vsel %vm449, 1, 0
    %v834 = vsel %vm450, 1, 0
    %v835 = vsel %vm451, 1, 0
    %v836 = vsel %vm452, 1, 0
    %v837 = vsel %vm453, 1, 0
    %v838 = vsel %vm454, 1, 0
    %v839 = vsel %vm455, 1, 0
    %v840 = vsel %vm456, 1, 0
    %v841 = vsel %vm457, 1, 0
    %v842 = vsel %vm458, 1, 0
    %v843 = vsel %vm459, 1, 0
    %v844 = vsel %vm460, 1, 0
    %v845 = vsel %vm461, 1, 0
    %v846 = vsel %vm462, 1, 0
    %v847 = vsel %vm463, 1, 0
    %v848 = vsel %vm464, 1, 0
    %v849 = vsel %vm465, 1, 0
    %v850 = vsel %vm466, 1, 0
    %v851 = vsel %vm467, 1, 0
    %v852 = vsel %vm468, 1, 0
    %v853 = vsel %vm469, 1, 0
    %v854 = vsel %vm470, 1, 0
    %v855 = vsel %vm471, 1, 0
    %v856 = vsel %vm472, 1, 0
    %v857 = vsel %vm473, 1, 0
    %v858 = vsel %vm474, 1, 0
    %v859 = vsel %vm475, 1, 0
    %v860 = vsel %vm476, 1, 0
    %v861 = vsel %vm477, 1, 0
    %v862 = vsel %vm478, 1, 0
    %v863 = vsel %vm479, 1, 0
    %v864 = vsel %vm480, 1, 0
    %v865 = vsel %vm481, 1, 0
    %v866 = vsel %vm482, 1, 0
    %v867 = vsel %vm483, 1, 0
    %v868 = vsel %vm484, 1, 0
    %v869 = vsel %vm485, 1, 0
    %v870 = vsel %vm486, 1, 0
    %v871 = vsel %vm487, 1, 0
    %v872 = vsel %vm488, 1, 0
    %v873 = vsel %vm489, 1, 0
    %v874 = vsel %vm490, 1, 0
    %v875 = vsel %vm491, 1, 0
    %v876 = vsel %vm492, 1, 0
    %v877 = vsel %vm493, 1, 0
    %v878 = vsel %vm494, 1, 0
    %v879 = vsel %vm495, 1, 0
    %v880 = vsel %vm496, 1, 0
    %v881 = vsel %vm497, 1, 0
    %v882 = vsel %vm498, 1, 0
    %v883 = vsel %vm499, 1, 0
    %v884 = vsel %vm500, 1, 0
    %v885 = vsel %vm501, 1, 0
    %v886 = vsel %vm502, 1, 0
    %v887 = vsel %vm503, 1, 0
    %v888 = vsel %vm504, 1, 0
    %v889 = vsel %vm505, 1, 0
    %v890 = vsel %vm506, 1, 0
    %v891 = vsel %vm507, 1, 0
    %v892 = vsel %vm508, 1, 0
    %v893 = vsel %vm509, 1, 0
    %v894 = vsel %vm510, 1, 0
    %v895 = vsel %vm511, 1, 0
    %v896 = vsel %vm512, 1, 0
    %v897 = vsel %vm513, 1, 0
    %v898 = vsel %vm514, 1, 0
    %v899 = vsel %vm515, 1, 0
    %v900 = vsel %vm516, 1, 0
    %v901 = vsel %vm517, 1, 0
    %v902 = vsel %vm518, 1, 0
    %v903 = vsel %vm519, 1, 0
    %v904 = vsel %vm520, 1, 0
    %v905 = vsel %vm521, 1, 0
    %v906 = vsel %vm522, 1, 0
    %v907 = vsel %vm523, 1, 0
    %v908 = vsel %vm524, 1, 0
    %v909 = vsel %vm525, 1, 0
    %v910 = vsel %vm526, 1, 0
    %v911 = vsel %vm527, 1, 0
    %v912 = vsel %vm528, 1, 0
    %v913 = vsel %vm529, 1, 0
    %v914 = vsel %vm530, 1, 0
    %v915 = vsel %vm531, 1, 0
    %v916 = vsel %vm532, 1, 0
    %v917 = vsel %vm533, 1, 0
    %v918 = vsel %vm534, 1, 0
    %v919 = vsel %vm535, 1, 0
    %v920 = vsel %vm536, 1, 0
    %v921 = vsel %vm537, 1, 0
    %v922 = vsel %vm538, 1, 0
    %v923 = vsel %vm539, 1, 0
    %v924 = vsel %vm540, 1, 0
    %v925 = vsel %vm541, 1, 0
    %v926 = vsel %vm542, 1, 0
    %v927 = vsel %vm543, 1, 0
    %v928 = vsel %vm544, 1, 0
    %v929 = vsel %vm545, 1, 0
    %v930 = vsel %vm546, 1, 0
    %v931 = vsel %vm547, 1, 0
    %v932 = vsel %vm548, 1, 0
    %v933 = vsel %vm549, 1, 0
    %v934 = vsel %vm550, 1, 0
    %v935 = vsel %vm551, 1, 0
    %v936 = vsel %vm552, 1, 0
    %v937 = vsel %vm553, 1, 0
    %v938 = vsel %vm554, 1, 0
    %v939 = vsel %vm555, 1, 0
    %v940 = vsel %vm556, 1, 0
    %v941 = vsel %vm557, 1, 0
    %v942 = vsel %vm558, 1, 0
    %v943 = vsel %vm559, 1, 0
    %v944 = vsel %vm560, 1, 0
    %v945 = vsel %vm561, 1, 0
    %v946 = vsel %vm562, 1, 0
    %v947 = vsel %vm563, 1, 0
    %v948 = vsel %vm564, 1, 0
    %v949 = vsel %vm565, 1, 0
    %v950 = vsel %vm566, 1, 0
    %v951 = vsel %vm567, 1, 0
    %v952 = vsel %vm568, 1, 0
    %v953 = vsel %vm569, 1, 0
    %v954 = vsel %vm570, 1, 0
    %v955 = vsel %vm571, 1, 0
    %v956 = vsel %vm572, 1, 0
    %v957 = vsel %vm573, 1, 0
    %v958 = vsel %vm574, 1, 0
    %v959 = vsel %vm575, 1, 0
    %v960 = vsel %vm576, 1, 0
    %v961 = vsel %vm577, 1, 0
    %v962 = vsel %vm578, 1, 0
    %v963 = vsel %vm579, 1, 0
    %v964 = vsel %vm580, 1, 0
    %v965 = vsel %vm581, 1, 0
    %v966 = vsel %vm582, 1, 0
    %v967 = vsel %vm583, 1, 0
    %v968 = vsel %vm584, 1, 0
    %v969 = vsel %vm585, 1, 0
    %v970 = vsel %vm586, 1, 0
    %v971 = vsel %vm587, 1, 0
    %v972 = vsel %vm588, 1, 0
    %v973 = vsel %vm589, 1, 0
    %v974 = vsel %vm590, 1, 0
    %v975 = vsel %vm591, 1, 0
    %v976 = vsel %vm592, 1, 0
    %v977 = vsel %vm593, 1, 0
    %v978 = vsel %vm594, 1, 0
    %v979 = vsel %vm595, 1, 0
    %v980 = vsel %vm596, 1, 0
    %v981 = vsel %vm597, 1, 0
    %v982 = vsel %vm598, 1, 0
    %v983 = vsel %vm599, 1, 0
    %v984 = vsel %vm600, 1, 0
    %v985 = vsel %vm601, 1, 0
    %v986 = vsel %vm602, 1, 0
    %v987 = vsel %vm603, 1, 0
    %v988 = vsel %vm604, 1, 0
    %v989 = vsel %vm605, 1, 0
    %v990 = vsel %vm606, 1, 0
    %v991 = vsel %vm607, 1, 0
    %v992 = vsel %vm608, 1, 0
    %v993 = vsel %vm609, 1, 0
    %v994 = vsel %vm610, 1, 0
    %v995 = vsel %vm611, 1, 0
    %v996 = vsel %vm612, 1, 0
    %v997 = vsel %vm613, 1, 0
    %v998 = vsel %vm614, 1, 0
    %v999 = vsel %vm615, 1, 0
    %v1000 = vsel %vm616, 1, 0
    %v1001 = vsel %vm617, 1, 0
    %v1002 = vsel %vm618, 1, 0
    %v1003 = vsel %vm619, 1, 0
    %v1004 = vsel %vm620, 1, 0
    %v1005 = vsel %vm621, 1, 0
    %v1006 = vsel %vm622, 1, 0
    %v1007 = vsel %vm623, 1, 0
    %v1008 = vsel %vm624, 1, 0
    %v1009 = vsel %vm625, 1, 0
    %v1010 = vcvt.s32.f32 %v626
    %v1011 = vcvt.s32.f32 %v627
    %v1012 = vcvt.s32.f32 %v628
    %v1013 = vcvt.s32.f32 %v629
    %v1014 = vcvt.s32.f32 %v630
    %v1015 = vcvt.s32.f32 %v631
    %v1016 = vcvt.s32.f32 %v632
    %v1017 = vcvt.s32.f32 %v633
    %v1018 = vcvt.s32.f32 %v634
    %v1019 = vcvt.s32.f32 %v635
    %v1020 = vcvt.s32.f32 %v636
    %v1021 = vcvt.s32.f32 %v637
    %v1022 = vcvt.s32.f32 %v638
    %v1023 = vcvt.s32.f32 %v639
    %v1024 = vcvt.s32.f32 %v640
    %v1025 = vcvt.s32.f32 %v641
    %v1026 = vcvt.s32.f32 %v642
    %v1027 = vcvt.s32.f32 %v643
    %v1028 = vcvt.s32.f32 %v644
    %v1029 = vcvt.s32.f32 %v645
    %v1030 = vcvt.s32.f32 %v646
    %v1031 = vcvt.s32.f32 %v647
    %v1032 = vcvt.s32.f32 %v648
    %v1033 = vcvt.s32.f32 %v649
    %v1034 = vcvt.s32.f32 %v650
    %v1035 = vcvt.s32.f32 %v651
    %v1036 = vcvt.s32.f32 %v652
    %v1037 = vcvt.s32.f32 %v653
    %v1038 = vcvt.s32.f32 %v654
    %v1039 = vcvt.s32.f32 %v655
    %v1040 = vcvt.s32.f32 %v656
    %v1041 = vcvt.s32.f32 %v657
    %v1042 = vcvt.s32.f32 %v658
    %v1043 = vcvt.s32.f32 %v659
    %v1044 = vcvt.s32.f32 %v660
    %v1045 = vcvt.s32.f32 %v661
    %v1046 = vcvt.s32.f32 %v662
    %v1047 = vcvt.s32.f32 %v663
    %v1048 = vcvt.s32.f32 %v664
    %v1049 = vcvt.s32.f32 %v665
    %v1050 = vcvt.s32.f32 %v666
    %v1051 = vcvt.s32.f32 %v667
    %v1052 = vcvt.s32.f32 %v668
    %v1053 = vcvt.s32.f32 %v669
    %v1054 = vcvt.s32.f32 %v670
    %v1055 = vcvt.s32.f32 %v671
    %v1056 = vcvt.s32.f32 %v672
    %v1057 = vcvt.s32.f32 %v673
    %v1058 = vcvt.s32.f32 %v674
    %v1059 = vcvt.s32.f32 %v675
    %v1060 = vcvt.s32.f32 %v676
    %v1061 = vcvt.s32.f32 %v677
    %v1062 = vcvt.s32.f32 %v678
    %v1063 = vcvt.s32.f32 %v679
    %v1064 = vcvt.s32.f32 %v680
    %v1065 = vcvt.s32.f32 %v681
    %v1066 = vcvt.s32.f32 %v682
    %v1067 = vcvt.s32.f32 %v683
    %v1068 = vcvt.s32.f32 %v684
    %v1069 = vcvt.s32.f32 %v685
    %v1070 = vcvt.s32.f32 %v686
    %v1071 = vcvt.s32.f32 %v687
    %v1072 = vcvt.s32.f32 %v688
    %v1073 = vcvt.s32.f32 %v689
    %v1074 = vcvt.s32.f32 %v690
    %v1075 = vcvt.s32.f32 %v691
    %v1076 = vcvt.s32.f32 %v692
    %v1077 = vcvt.s32.f32 %v693
    %v1078 = vcvt.s32.f32 %v694
    %v1079 = vcvt.s32.f32 %v695
    %v1080 = vcvt.s32.f32 %v696
    %v1081 = vcvt.s32.f32 %v697
    %v1082 = vcvt.s32.f32 %v698
    %v1083 = vcvt.s32.f32 %v699
    %v1084 = vcvt.s32.f32 %v700
    %v1085 = vcvt.s32.f32 %v701
    %v1086 = vcvt.s32.f32 %v702
    %v1087 = vcvt.s32.f32 %v703
    %v1088 = vcvt.s32.f32 %v704
    %v1089 = vcvt.s32.f32 %v705
    %v1090 = vcvt.s32.f32 %v706
    %v1091 = vcvt.s32.f32 %v707
    %v1092 = vcvt.s32.f32 %v708
    %v1093 = vcvt.s32.f32 %v709
    %v1094 = vcvt.s32.f32 %v710
    %v1095 = vcvt.s32.f32 %v711
    %v1096 = vcvt.s32.f32 %v712
    %v1097 = vcvt.s32.f32 %v713
    %v1098 = vcvt.s32.f32 %v714
    %v1099 = vcvt.s32.f32 %v715
    %v1100 = vcvt.s32.f32 %v716
    %v1101 = vcvt.s32.f32 %v717
    %v1102 = vcvt.s32.f32 %v718
    %v1103 = vcvt.s32.f32 %v719
    %v1104 = vcvt.s32.f32 %v720
    %v1105 = vcvt.s32.f32 %v721
    %v1106 = vcvt.s32.f32 %v722
    %v1107 = vcvt.s32.f32 %v723
    %v1108 = vcvt.s32.f32 %v724
    %v1109 = vcvt.s32.f32 %v725
    %v1110 = vcvt.s32.f32 %v726
    %v1111 = vcvt.s32.f32 %v727
    %v1112 = vcvt.s32.f32 %v728
    %v1113 = vcvt.s32.f32 %v729
    %v1114 = vcvt.s32.f32 %v730
    %v1115 = vcvt.s32.f32 %v731
    %v1116 = vcvt.s32.f32 %v732
    %v1117 = vcvt.s32.f32 %v733
    %v1118 = vcvt.s32.f32 %v734
    %v1119 = vcvt.s32.f32 %v735
    %v1120 = vcvt.s32.f32 %v736
    %v1121 = vcvt.s32.f32 %v737
    %v1122 = vcvt.s32.f32 %v738
    %v1123 = vcvt.s32.f32 %v739
    %v1124 = vcvt.s32.f32 %v740
    %v1125 = vcvt.s32.f32 %v741
    %v1126 = vcvt.s32.f32 %v742
    %v1127 = vcvt.s32.f32 %v743
    %v1128 = vcvt.s32.f32 %v744
    %v1129 = vcvt.s32.f32 %v745
    %v1130 = vcvt.s32.f32 %v746
    %v1131 = vcvt.s32.f32 %v747
    %v1132 = vcvt.s32.f32 %v748
    %v1133 = vcvt.s32.f32 %v749
    %v1134 = vcvt.s32.f32 %v750
    %v1135 = vcvt.s32.f32 %v751
    %v1136 = vcvt.s32.f32 %v752
    %v1137 = vcvt.s32.f32 %v753
    %v1138 = vcvt.s32.f32 %v754
    %v1139 = vcvt.s32.f32 %v755
    %v1140 = vcvt.s32.f32 %v756
    %v1141 = vcvt.s32.f32 %v757
    %v1142 = vcvt.s32.f32 %v758
    %v1143 = vcvt.s32.f32 %v759
    %v1144 = vcvt.s32.f32 %v760
    %v1145 = vcvt.s32.f32 %v761
    %v1146 = vcvt.s32.f32 %v762
    %v1147 = vcvt.s32.f32 %v763
    %v1148 = vcvt.s32.f32 %v764
    %v1149 = vcvt.s32.f32 %v765
    %v1150 = vcvt.s32.f32 %v766
    %v1151 = vcvt.s32.f32 %v767
    %v1152 = vcvt.s32.f32 %v768
    %v1153 = vcvt.s32.f32 %v769
    %v1154 = vcvt.s32.f32 %v770
    %v1155 = vcvt.s32.f32 %v771
    %v1156 = vcvt.s32.f32 %v772
    %v1157 = vcvt.s32.f32 %v773
    %v1158 = vcvt.s32.f32 %v774
    %v1159 = vcvt.s32.f32 %v775
    %v1160 = vcvt.s32.f32 %v776
    %v1161 = vcvt.s32.f32 %v777
    %v1162 = vcvt.s32.f32 %v778
    %v1163 = vcvt.s32.f32 %v779
    %v1164 = vcvt.s32.f32 %v780
    %v1165 = vcvt.s32.f32 %v781
    %v1166 = vcvt.s32.f32 %v782
    %v1167 = vcvt.s32.f32 %v783
    %v1168 = vcvt.s32.f32 %v784
    %v1169 = vcvt.s32.f32 %v785
    %v1170 = vcvt.s32.f32 %v786
    %v1171 = vcvt.s32.f32 %v787
    %v1172 = vcvt.s32.f32 %v788
    %v1173 = vcvt.s32.f32 %v789
    %v1174 = vcvt.s32.f32 %v790
    %v1175 = vcvt.s32.f32 %v791
    %v1176 = vcvt.s32.f32 %v792
    %v1177 = vcvt.s32.f32 %v793
    %v1178 = vcvt.s32.f32 %v794
    %v1179 = vcvt.s32.f32 %v795
    %v1180 = vcvt.s32.f32 %v796
    %v1181 = vcvt.s32.f32 %v797
    %v1182 = vcvt.s32.f32 %v798
    %v1183 = vcvt.s32.f32 %v799
    %v1184 = vcvt.s32.f32 %v800
    %v1185 = vcvt.s32.f32 %v801
    %v1186 = vcvt.s32.f32 %v802
    %v1187 = vcvt.s32.f32 %v803
    %v1188 = vcvt.s32.f32 %v804
    %v1189 = vcvt.s32.f32 %v805
    %v1190 = vcvt.s32.f32 %v806
    %v1191 = vcvt.s32.f32 %v807
    %v1192 = vcvt.s32.f32 %v808
    %v1193 = vcvt.s32.f32 %v809
    %v1194 = vcvt.s32.f32 %v810
    %v1195 = vcvt.s32.f32 %v811
    %v1196 = vcvt.s32.f32 %v812
    %v1197 = vcvt.s32.f32 %v813
    %v1198 = vcvt.s32.f32 %v814
    %v1199 = vcvt.s32.f32 %v815
    %v1200 = vcvt.s32.f32 %v816
    %v1201 = vcvt.s32.f32 %v817
    %v1202 = vcvt.s32.f32 %v818
    %v1203 = vcvt.s32.f32 %v819
    %v1204 = vcvt.s32.f32 %v820
    %v1205 = vcvt.s32.f32 %v821
    %v1206 = vcvt.s32.f32 %v822
    %v1207 = vcvt.s32.f32 %v823
    %v1208 = vcvt.s32.f32 %v824
    %v1209 = vcvt.s32.f32 %v825
    %v1210 = vcvt.s32.f32 %v826
    %v1211 = vcvt.s32.f32 %v827
    %v1212 = vcvt.s32.f32 %v828
    %v1213 = vcvt.s32.f32 %v829
    %v1214 = vcvt.s32.f32 %v830
    %v1215 = vcvt.s32.f32 %v831
    %v1216 = vcvt.s32.f32 %v832
    %v1217 = vcvt.s32.f32 %v833
    %v1218 = vcvt.s32.f32 %v834
    %v1219 = vcvt.s32.f32 %v835
    %v1220 = vcvt.s32.f32 %v836
    %v1221 = vcvt.s32.f32 %v837
    %v1222 = vcvt.s32.f32 %v838
    %v1223 = vcvt.s32.f32 %v839
    %v1224 = vcvt.s32.f32 %v840
    %v1225 = vcvt.s32.f32 %v841
    %v1226 = vcvt.s32.f32 %v842
    %v1227 = vcvt.s32.f32 %v843
    %v1228 = vcvt.s32.f32 %v844
    %v1229 = vcvt.s32.f32 %v845
    %v1230 = vcvt.s32.f32 %v846
    %v1231 = vcvt.s32.f32 %v847
    %v1232 = vcvt.s32.f32 %v848
    %v1233 = vcvt.s32.f32 %v849
    %v1234 = vcvt.s32.f32 %v850
    %v1235 = vcvt.s32.f32 %v851
    %v1236 = vcvt.s32.f32 %v852
    %v1237 = vcvt.s32.f32 %v853
    %v1238 = vcvt.s32.f32 %v854
    %v1239 = vcvt.s32.f32 %v855
    %v1240 = vcvt.s32.f32 %v856
    %v1241 = vcvt.s32.f32 %v857
    %v1242 = vcvt.s32.f32 %v858
    %v1243 = vcvt.s32.f32 %v859
    %v1244 = vcvt.s32.f32 %v860
    %v1245 = vcvt.s32.f32 %v861
    %v1246 = vcvt.s32.f32 %v862
    %v1247 = vcvt.s32.f32 %v863
    %v1248 = vcvt.s32.f32 %v864
    %v1249 = vcvt.s32.f32 %v865
    %v1250 = vcvt.s32.f32 %v866
    %v1251 = vcvt.s32.f32 %v867
    %v1252 = vcvt.s32.f32 %v868
    %v1253 = vcvt.s32.f32 %v869
    %v1254 = vcvt.s32.f32 %v870
    %v1255 = vcvt.s32.f32 %v871
    %v1256 = vcvt.s32.f32 %v872
    %v1257 = vcvt.s32.f32 %v873
    %v1258 = vcvt.s32.f32 %v874
    %v1259 = vcvt.s32.f32 %v875
    %v1260 = vcvt.s32.f32 %v876
    %v1261 = vcvt.s32.f32 %v877
    %v1262 = vcvt.s32.f32 %v878
    %v1263 = vcvt.s32.f32 %v879
    %v1264 = vcvt.s32.f32 %v880
    %v1265 = vcvt.s32.f32 %v881
    %v1266 = vcvt.s32.f32 %v882
    %v1267 = vcvt.s32.f32 %v883
    %v1268 = vcvt.s32.f32 %v884
    %v1269 = vcvt.s32.f32 %v885
    %v1270 = vcvt.s32.f32 %v886
    %v1271 = vcvt.s32.f32 %v887
    %v1272 = vcvt.s32.f32 %v888
    %v1273 = vcvt.s32.f32 %v889
    %v1274 = vcvt.s32.f32 %v890
    %v1275 = vcvt.s32.f32 %v891
    %v1276 = vcvt.s32.f32 %v892
    %v1277 = vcvt.s32.f32 %v893
    %v1278 = vcvt.s32.f32 %v894
    %v1279 = vcvt.s32.f32 %v895
    %v1280 = vcvt.s32.f32 %v896
    %v1281 = vcvt.s32.f32 %v897
    %v1282 = vcvt.s32.f32 %v898
    %v1283 = vcvt.s32.f32 %v899
    %v1284 = vcvt.s32.f32 %v900
    %v1285 = vcvt.s32.f32 %v901
    %v1286 = vcvt.s32.f32 %v902
    %v1287 = vcvt.s32.f32 %v903
    %v1288 = vcvt.s32.f32 %v904
    %v1289 = vcvt.s32.f32 %v905
    %v1290 = vcvt.s32.f32 %v906
    %v1291 = vcvt.s32.f32 %v907
    %v1292 = vcvt.s32.f32 %v908
    %v1293 = vcvt.s32.f32 %v909
    %v1294 = vcvt.s32.f32 %v910
    %v1295 = vcvt.s32.f32 %v911
    %v1296 = vcvt.s32.f32 %v912
    %v1297 = vcvt.s32.f32 %v913
    %v1298 = vcvt.s32.f32 %v914
    %v1299 = vcvt.s32.f32 %v915
    %v1300 = vcvt.s32.f32 %v916
    %v1301 = vcvt.s32.f32 %v917
    %v1302 = vcvt.s32.f32 %v918
    %v1303 = vcvt.s32.f32 %v919
    %v1304 = vcvt.s32.f32 %v920
    %v1305 = vcvt.s32.f32 %v921
    %v1306 = vcvt.s32.f32 %v922
    %v1307 = vcvt.s32.f32 %v923
    %v1308 = vcvt.s32.f32 %v924
    %v1309 = vcvt.s32.f32 %v925
    %v1310 = vcvt.s32.f32 %v926
    %v1311 = vcvt.s32.f32 %v927
    %v1312 = vcvt.s32.f32 %v928
    %v1313 = vcvt.s32.f32 %v929
    %v1314 = vcvt.s32.f32 %v930
    %v1315 = vcvt.s32.f32 %v931
    %v1316 = vcvt.s32.f32 %v932
    %v1317 = vcvt.s32.f32 %v933
    %v1318 = vcvt.s32.f32 %v934
    %v1319 = vcvt.s32.f32 %v935
    %v1320 = vcvt.s32.f32 %v936
    %v1321 = vcvt.s32.f32 %v937
    %v1322 = vcvt.s32.f32 %v938
    %v1323 = vcvt.s32.f32 %v939
    %v1324 = vcvt.s32.f32 %v940
    %v1325 = vcvt.s32.f32 %v941
    %v1326 = vcvt.s32.f32 %v942
    %v1327 = vcvt.s32.f32 %v943
    %v1328 = vcvt.s32.f32 %v944
    %v1329 = vcvt.s32.f32 %v945
    %v1330 = vcvt.s32.f32 %v946
    %v1331 = vcvt.s32.f32 %v947
    %v1332 = vcvt.s32.f32 %v948
    %v1333 = vcvt.s32.f32 %v949
    %v1334 = vcvt.s32.f32 %v950
    %v1335 = vcvt.s32.f32 %v951
    %v1336 = vcvt.s32.f32 %v952
    %v1337 = vcvt.s32.f32 %v953
    %v1338 = vcvt.s32.f32 %v954
    %v1339 = vcvt.s32.f32 %v955
    %v1340 = vcvt.s32.f32 %v956
    %v1341 = vcvt.s32.f32 %v957
    %v1342 = vcvt.s32.f32 %v958
    %v1343 = vcvt.s32.f32 %v959
    %v1344 = vcvt.s32.f32 %v960
    %v1345 = vcvt.s32.f32 %v961
    %v1346 = vcvt.s32.f32 %v962
    %v1347 = vcvt.s32.f32 %v963
    %v1348 = vcvt.s32.f32 %v964
    %v1349 = vcvt.s32.f32 %v965
    %v1350 = vcvt.s32.f32 %v966
    %v1351 = vcvt.s32.f32 %v967
    %v1352 = vcvt.s32.f32 %v968
    %v1353 = vcvt.s32.f32 %v969
    %v1354 = vcvt.s32.f32 %v970
    %v1355 = vcvt.s32.f32 %v971
    %v1356 = vcvt.s32.f32 %v972
    %v1357 = vcvt.s32.f32 %v973
    %v1358 = vcvt.s32.f32 %v974
    %v1359 = vcvt.s32.f32 %v975
    %v1360 = vcvt.s32.f32 %v976
    %v1361 = vcvt.s32.f32 %v977
    %v1362 = vcvt.s32.f32 %v978
    %v1363 = vcvt.s32.f32 %v979
    %v1364 = vcvt.s32.f32 %v980
    %v1365 = vcvt.s32.f32 %v981
    %v1366 = vcvt.s32.f32 %v982
    %v1367 = vcvt.s32.f32 %v983
    %v1368 = vcvt.s32.f32 %v984
    %v1369 = vcvt.s32.f32 %v985
    %v1370 = vcvt.s32.f32 %v986
    %v1371 = vcvt.s32.f32 %v987
    %v1372 = vcvt.s32.f32 %v988
    %v1373 = vcvt.s32.f32 %v989
    %v1374 = vcvt.s32.f32 %v990
    %v1375 = vcvt.s32.f32 %v991
    %v1376 = vcvt.s32.f32 %v992
    %v1377 = vcvt.s32.f32 %v993
    %v1378 = vcvt.s32.f32 %v994
    %v1379 = vcvt.s32.f32 %v995
    %v1380 = vcvt.s32.f32 %v996
    %v1381 = vcvt.s32.f32 %v997
    %v1382 = vcvt.s32.f32 %v998
    %v1383 = vcvt.s32.f32 %v999
    %v1384 = vcvt.s32.f32 %v1000
    %v1385 = vcvt.s32.f32 %v1001
    %v1386 = vcvt.s32.f32 %v1002
    %v1387 = vcvt.s32.f32 %v1003
    %v1388 = vcvt.s32.f32 %v1004
    %v1389 = vcvt.s32.f32 %v1005
    %v1390 = vcvt.s32.f32 %v1006
    %v1391 = vcvt.s32.f32 %v1007
    %v1392 = vcvt.s32.f32 %v1008
    %v1393 = vcvt.s32.f32 %v1009
    %s1394 = sld [smem:[#allocation7]]
    %v1395 = vstv %s1394
    %v1396 = vmul.f32 %v1395, %v100
    %v1397 = vmul.f32 %v1395, %v101
    %v1398 = vmul.f32 %v1395, %v102
    %v1399 = vadd.f32 %v1396, 0.0
    %v1400 = vadd.f32 %v1397, 0.0
    %v1401 = vadd.f32 %v1398, 0.0
    %s1402 = sld [smem:[#allocation7 + $0x1]]
    %v1403 = vstv %s1402
    %v1404 = vmul.f32 %v1403, %v100
    %v1405 = vmul.f32 %v1403, %v101
    %v1406 = vmul.f32 %v1403, %v102
    %1410 = vrot.lane.b32.xlu0 %v1404, 127
    %v1411 = vpop.permute.xlu0 %1410
    %1412 = vrot.lane.b32.xlu0 %v1405, 127
    %v1413 = vpop.permute.xlu0 %1412
    %1414 = vrot.lane.b32.xlu0 %v1406, 127
    %v1415 = vpop.permute.xlu0 %1414
    %v1416 = vrot.slane %v1411, 2
    %v1417 = vrot.slane %v1413, 2
    %v1418 = vrot.slane %v1415, 2
    %vm1419 = vcmask 1045504
    %v1420 = vsel %vm1419, %v1416, %v1417
    %vm1421 = vcmask 1039360
    %v1422 = vsel %vm1421, %v1411, %v1420
    %v1423 = vsel %vm1419, %v1417, %v1418
    %v1424 = vsel %vm1421, %v1413, %v1423
    %v1428 = vadd.f32 %v1399, %v1422
    %v1429 = vadd.f32 %v1400, %v1424
    %v1430 = vadd.f32 %v1401, %v1415
    %s1431 = sld [smem:[#allocation7 + $0x2]]
    %v1432 = vstv %s1431
    %v1433 = vmul.f32 %v1432, %v100
    %v1434 = vmul.f32 %v1432, %v101
    %v1435 = vmul.f32 %v1432, %v102
    %1439 = vrot.lane.b32.xlu0 %v1433, 126
    %v1440 = vpop.permute.xlu0 %1439
    %1441 = vrot.lane.b32.xlu0 %v1434, 126
    %v1442 = vpop.permute.xlu0 %1441
    %1443 = vrot.lane.b32.xlu0 %v1435, 126
    %v1444 = vpop.permute.xlu0 %1443
    %v1445 = vrot.slane %v1440, 2
    %v1446 = vrot.slane %v1442, 2
    %v1447 = vrot.slane %v1444, 2
    %v1448 = vsel %vm1419, %v1445, %v1446
    %vm1449 = vcmask 1031168
    %v1450 = vsel %vm1449, %v1440, %v1448
    %v1451 = vsel %vm1419, %v1446, %v1447
    %v1452 = vsel %vm1449, %v1442, %v1451
    %v1456 = vadd.f32 %v1428, %v1450
    %v1457 = vadd.f32 %v1429, %v1452
    %v1458 = vadd.f32 %v1430, %v1444
    %s1459 = sld [smem:[#allocation7 + $0x3]]
    %v1460 = vstv %s1459
    %v1461 = vmul.f32 %v1460, %v100
    %v1462 = vmul.f32 %v1460, %v101
    %v1463 = vmul.f32 %v1460, %v102
    %1467 = vrot.lane.b32.xlu0 %v1461, 125
    %v1468 = vpop.permute.xlu0 %1467
    %1469 = vrot.lane.b32.xlu0 %v1462, 125
    %v1470 = vpop.permute.xlu0 %1469
    %1471 = vrot.lane.b32.xlu0 %v1463, 125
    %v1472 = vpop.permute.xlu0 %1471
    %v1473 = vrot.slane %v1468, 2
    %v1474 = vrot.slane %v1470, 2
    %v1475 = vrot.slane %v1472, 2
    %v1476 = vsel %vm1419, %v1473, %v1474
    %vm1477 = vcmask 1022976
    %v1478 = vsel %vm1477, %v1468, %v1476
    %v1479 = vsel %vm1419, %v1474, %v1475
    %v1480 = vsel %vm1477, %v1470, %v1479
    %v1484 = vadd.f32 %v1456, %v1478
    %v1485 = vadd.f32 %v1457, %v1480
    %v1486 = vadd.f32 %v1458, %v1472
    %s1487 = sld [smem:[#allocation7 + $0x8]]
    %v1488 = vstv %s1487
    %v1489 = vadd.f32 %v1484, %v1488
    %v1490 = vadd.f32 %v1485, %v1488
    %v1491 = vadd.f32 %v1486, %v1488
    %v1492 = vmax.f32 %v1489, 0.0
    %v1493 = vmax.f32 %v1490, 0.0
    %v1494 = vmax.f32 %v1491, 0.0
    %1498 = vrot.lane.b32.xlu0 %v1492, 126
    %v1499 = vpop.permute.xlu0 %1498
    %1500 = vrot.lane.b32.xlu0 %v1493, 126
    %v1501 = vpop.permute.xlu0 %1500
    %1502 = vrot.lane.b32.xlu0 %v1494, 126
    %v1503 = vpop.permute.xlu0 %1502
    %v1504 = vrot.slane %v1499, 2
    %v1505 = vrot.slane %v1501, 2
    %v1506 = vrot.slane %v1503, 2
    %v1507 = vsel %vm1419, %v1504, %v1505
    %v1508 = vsel %vm1449, %v1499, %v1507
    %v1509 = vsel %vm1419, %v1505, %v1506
    %v1510 = vsel %vm1449, %v1501, %v1509
    %v1513 = vmax.f32 %v1492, %v1508
    %v1514 = vmax.f32 %v1493, %v1510
    %v1517 = vcombine.high %v1513, %v1513
    %v1519 = vunpack.c.l.s4 1983009808
    %v1520 = vunpack.c.0.s8 %v1519
    %v1521 = vlaneseq
    %v1522 = vshrl.u32 %v1521, 7
    %v1523 = vsub.s32 %v1520, %v1522
    %v1524 = vrot.slane %v1513, %v1523
    %v1526 = vunpack.c.l.s4 1983009808
    %v1527 = vunpack.c.0.s8 %v1526
    %v1528 = vlaneseq
    %v1529 = vshrl.u32 %v1528, 7
    %v1530 = vsub.s32 %v1527, %v1529
    %v1531 = vrot.slane %v1517, %v1530
    %v1532 = vcombine.high %v1524, %v1524
    %v1533 = vcombine.high %v1531, %v1531
    %v1534 = vcombine.high %v1514, %v1514
    %v1536 = vunpack.c.l.s4 1983009808
    %v1537 = vunpack.c.0.s8 %v1536
    %v1538 = vlaneseq
    %v1539 = vshrl.u32 %v1538, 7
    %v1540 = vsub.s32 %v1537, %v1539
    %v1541 = vrot.slane %v1514, %v1540
    %v1543 = vunpack.c.l.s4 1983009808
    %v1544 = vunpack.c.0.s8 %v1543
    %v1545 = vlaneseq
    %v1546 = vshrl.u32 %v1545, 7
    %v1547 = vsub.s32 %v1544, %v1546
    %v1548 = vrot.slane %v1534, %v1547
    %v1549 = vcombine.high %v1541, %v1541
    %v1550 = vcombine.high %v1548, %v1548
    %v1558 = vsel %vm1421, %v1550, 0
    %vm1560 = vcmask 1046528
    %v1562 = vsel %vm1560, %v1391, 0
    %v1565 = vsel %vm1560, %v1392, 0
    %v1568 = vsel %vm1560, %v1393, 0
    %1570 = vmatprep.subr.mxu0 %v1011
    %1571 = vmatpush1.msra.mxu0 %v1010
    %1572 = vmatprep.subr.mxu0 %v1014
    %1573 = vmatpush1.msra.mxu0 %v1013
    %1574 = vmatprep.subr.mxu0 %v1017
    %1575 = vmatpush1.msra.mxu0 %v1016
    %1576 = vmatprep.subr.mxu0 %v1020
    %1577 = vmatpush1.msra.mxu0 %v1019
    %1578 = vmatprep.subr.mxu0 %v1023
    %1579 = vmatpush1.msra.mxu0 %v1022
    %1580 = vmatprep.subr.mxu0 %v1026
    %1581 = vmatpush1.msra.mxu0 %v1025
    %1582 = vmatprep.subr.mxu0 %v1029
    %1583 = vmatpush1.msra.mxu0 %v1028
    %1584 = vmatprep.subr.mxu0 %v1032
    %1585 = vmatpush1.msra.mxu0 %v1031
    %1586 = vmatprep.subr.mxu0 %v1035
    %1587 = vmatpush1.msra.mxu0 %v1034
    %1588 = vmatprep.subr.mxu0 %v1038
    %1589 = vmatpush1.msra.mxu0 %v1037
    %1590 = vmatprep.subr.mxu0 %v1041
    %1591 = vmatpush1.msra.mxu0 %v1040
    %1592 = vmatprep.subr.mxu0 %v1044
    %1593 = vmatpush1.msra.mxu0 %v1043
    %1594 = vmatprep.subr.mxu0 %v1047
    %1595 = vmatpush1.msra.mxu0 %v1046
    %1596 = vmatprep.subr.mxu0 %v1050
    %1597 = vmatpush1.msra.mxu0 %v1049
    %1598 = vmatprep.subr.mxu0 %v1053
    %1599 = vmatpush1.msra.mxu0 %v1052
    %1600 = vmatprep.subr.mxu0 %v1056
    %1601 = vmatpush1.msra.mxu0 %v1055
    %1602 = vmatprep.subr.mxu0 %v1059
    %1603 = vmatpush1.msra.mxu0 %v1058
    %1604 = vmatprep.subr.mxu0 %v1062
    %1605 = vmatpush1.msra.mxu0 %v1061
    %1606 = vmatprep.subr.mxu0 %v1065
    %1607 = vmatpush1.msra.mxu0 %v1064
    %1608 = vmatprep.subr.mxu0 %v1068
    %1609 = vmatpush1.msra.mxu0 %v1067
    %1610 = vmatprep.subr.mxu0 %v1071
    %1611 = vmatpush1.msra.mxu0 %v1070
    %1612 = vmatprep.subr.mxu0 %v1074
    %1613 = vmatpush1.msra.mxu0 %v1073
    %1614 = vmatprep.subr.mxu0 %v1077
    %1615 = vmatpush1.msra.mxu0 %v1076
    %1616 = vmatprep.subr.mxu0 %v1080
    %1617 = vmatpush1.msra.mxu0 %v1079
    %1618 = vmatprep.subr.mxu0 %v1083
    %1619 = vmatpush1.msra.mxu0 %v1082
    %1620 = vmatprep.subr.mxu0 %v1086
    %1621 = vmatpush1.msra.mxu0 %v1085
    %1622 = vmatprep.subr.mxu0 %v1089
    %1623 = vmatpush1.msra.mxu0 %v1088
    %1624 = vmatprep.subr.mxu0 %v1092
    %1625 = vmatpush1.msra.mxu0 %v1091
    %1626 = vmatprep.subr.mxu0 %v1095
    %1627 = vmatpush1.msra.mxu0 %v1094
    %1628 = vmatprep.subr.mxu0 %v1098
    %1629 = vmatpush1.msra.mxu0 %v1097
    %1630 = vmatprep.subr.mxu0 %v1101
    %1631 = vmatpush1.msra.mxu0 %v1100
    %1632 = vmatprep.subr.mxu0 %v1104
    %1633 = vmatpush1.msra.mxu0 %v1103
    %1634 = vmatprep.mubr.f32.mxu0 %v1532
    %1635 = vmatmul.mubr.f32.gmra.mrb[0].mxu0 %v1524
    %v1636 = vpop.f32.mrb[0].mxu0
    %v1637 = vadd.f32 0.0, %v1636
    %v1638 = vpop.f32.mrb[0].mxu0
    %v1639 = vadd.f32 0.0, %v1638
    %1640 = vdwg.mxu0
    %1641 = vmatprep.subr.mxu0 %v1107
    %1642 = vmatpush1.msra.mxu0 %v1106
    %1643 = vmatprep.subr.mxu0 %v1110
    %1644 = vmatpush1.msra.mxu0 %v1109
    %1645 = vmatprep.subr.mxu0 %v1113
    %1646 = vmatpush1.msra.mxu0 %v1112
    %1647 = vmatprep.subr.mxu0 %v1116
    %1648 = vmatpush1.msra.mxu0 %v1115
    %1649 = vmatprep.subr.mxu0 %v1119
    %1650 = vmatpush1.msra.mxu0 %v1118
    %1651 = vmatprep.subr.mxu0 %v1122
    %1652 = vmatpush1.msra.mxu0 %v1121
    %1653 = vmatprep.subr.mxu0 %v1125
    %1654 = vmatpush1.msra.mxu0 %v1124
    %1655 = vmatprep.subr.mxu0 %v1128
    %1656 = vmatpush1.msra.mxu0 %v1127
    %1657 = vmatprep.subr.mxu0 %v1131
    %1658 = vmatpush1.msra.mxu0 %v1130
    %1659 = vmatprep.subr.mxu0 %v1134
    %1660 = vmatpush1.msra.mxu0 %v1133
    %1661 = vmatprep.subr.mxu0 %v1137
    %1662 = vmatpush1.msra.mxu0 %v1136
    %1663 = vmatprep.subr.mxu0 %v1140
    %1664 = vmatpush1.msra.mxu0 %v1139
    %1665 = vmatprep.subr.mxu0 %v1143
    %1666 = vmatpush1.msra.mxu0 %v1142
    %1667 = vmatprep.subr.mxu0 %v1146
    %1668 = vmatpush1.msra.mxu0 %v1145
    %1669 = vmatprep.subr.mxu0 %v1149
    %1670 = vmatpush1.msra.mxu0 %v1148
    %1671 = vmatprep.subr.mxu0 %v1152
    %1672 = vmatpush1.msra.mxu0 %v1151
    %1673 = vmatprep.subr.mxu0 %v1155
    %1674 = vmatpush1.msra.mxu0 %v1154
    %1675 = vmatprep.subr.mxu0 %v1158
    %1676 = vmatpush1.msra.mxu0 %v1157
    %1677 = vmatprep.subr.mxu0 %v1161
    %1678 = vmatpush1.msra.mxu0 %v1160
    %1679 = vmatprep.subr.mxu0 %v1164
    %1680 = vmatpush1.msra.mxu0 %v1163
    %1681 = vmatprep.subr.mxu0 %v1167
    %1682 = vmatpush1.msra.mxu0 %v1166
    %1683 = vmatprep.subr.mxu0 %v1170
    %1684 = vmatpush1.msra.mxu0 %v1169
    %1685 = vmatprep.subr.mxu0 %v1173
    %1686 = vmatpush1.msra.mxu0 %v1172
    %1687 = vmatprep.subr.mxu0 %v1176
    %1688 = vmatpush1.msra.mxu0 %v1175
    %1689 = vmatprep.subr.mxu0 %v1179
    %1690 = vmatpush1.msra.mxu0 %v1178
    %1691 = vmatprep.subr.mxu0 %v1182
    %1692 = vmatpush1.msra.mxu0 %v1181
    %1693 = vmatprep.subr.mxu0 %v1185
    %1694 = vmatpush1.msra.mxu0 %v1184
    %1695 = vmatprep.subr.mxu0 %v1188
    %1696 = vmatpush1.msra.mxu0 %v1187
    %1697 = vmatprep.subr.mxu0 %v1191
    %1698 = vmatpush1.msra.mxu0 %v1190
    %1699 = vmatprep.subr.mxu0 %v1194
    %1700 = vmatpush1.msra.mxu0 %v1193
    %1701 = vmatprep.subr.mxu0 %v1197
    %1702 = vmatpush1.msra.mxu0 %v1196
    %1703 = vmatprep.subr.mxu0 %v1200
    %1704 = vmatpush1.msra.mxu0 %v1199
    %1705 = vmatprep.mubr.f32.mxu0 %v1533
    %1706 = vmatmul.mubr.f32.gmra.mrb[0].mxu0 %v1531
    %v1707 = vpop.f32.mrb[0].mxu0
    %v1708 = vadd.f32 %v1637, %v1707
    %v1709 = vpop.f32.mrb[0].mxu0
    %v1710 = vadd.f32 %v1639, %v1709
    %1711 = vdwg.mxu0
    %1712 = vmatprep.subr.mxu0 %v1203
    %1713 = vmatpush1.msra.mxu0 %v1202
    %1714 = vmatprep.subr.mxu0 %v1206
    %1715 = vmatpush1.msra.mxu0 %v1205
    %1716 = vmatprep.subr.mxu0 %v1209
    %1717 = vmatpush1.msra.mxu0 %v1208
    %1718 = vmatprep.subr.mxu0 %v1212
    %1719 = vmatpush1.msra.mxu0 %v1211
    %1720 = vmatprep.subr.mxu0 %v1215
    %1721 = vmatpush1.msra.mxu0 %v1214
    %1722 = vmatprep.subr.mxu0 %v1218
    %1723 = vmatpush1.msra.mxu0 %v1217
    %1724 = vmatprep.subr.mxu0 %v1221
    %1725 = vmatpush1.msra.mxu0 %v1220
    %1726 = vmatprep.subr.mxu0 %v1224
    %1727 = vmatpush1.msra.mxu0 %v1223
    %1728 = vmatprep.subr.mxu0 %v1227
    %1729 = vmatpush1.msra.mxu0 %v1226
    %1730 = vmatprep.subr.mxu0 %v1230
    %1731 = vmatpush1.msra.mxu0 %v1229
    %1732 = vmatprep.subr.mxu0 %v1233
    %1733 = vmatpush1.msra.mxu0 %v1232
    %1734 = vmatprep.subr.mxu0 %v1236
    %1735 = vmatpush1.msra.mxu0 %v1235
    %1736 = vmatprep.subr.mxu0 %v1239
    %1737 = vmatpush1.msra.mxu0 %v1238
    %1738 = vmatprep.subr.mxu0 %v1242
    %1739 = vmatpush1.msra.mxu0 %v1241
    %1740 = vmatprep.subr.mxu0 %v1245
    %1741 = vmatpush1.msra.mxu0 %v1244
    %1742 = vmatprep.subr.mxu0 %v1248
    %1743 = vmatpush1.msra.mxu0 %v1247
    %1744 = vmatprep.subr.mxu0 %v1251
    %1745 = vmatpush1.msra.mxu0 %v1250
    %1746 = vmatprep.subr.mxu0 %v1254
    %1747 = vmatpush1.msra.mxu0 %v1253
    %1748 = vmatprep.subr.mxu0 %v1257
    %1749 = vmatpush1.msra.mxu0 %v1256
    %1750 = vmatprep.subr.mxu0 %v1260
    %1751 = vmatpush1.msra.mxu0 %v1259
    %1752 = vmatprep.subr.mxu0 %v1263
    %1753 = vmatpush1.msra.mxu0 %v1262
    %1754 = vmatprep.subr.mxu0 %v1266
    %1755 = vmatpush1.msra.mxu0 %v1265
    %1756 = vmatprep.subr.mxu0 %v1269
    %1757 = vmatpush1.msra.mxu0 %v1268
    %1758 = vmatprep.subr.mxu0 %v1272
    %1759 = vmatpush1.msra.mxu0 %v1271
    %1760 = vmatprep.subr.mxu0 %v1275
    %1761 = vmatpush1.msra.mxu0 %v1274
    %1762 = vmatprep.subr.mxu0 %v1278
    %1763 = vmatpush1.msra.mxu0 %v1277
    %1764 = vmatprep.subr.mxu0 %v1281
    %1765 = vmatpush1.msra.mxu0 %v1280
    %1766 = vmatprep.subr.mxu0 %v1284
    %1767 = vmatpush1.msra.mxu0 %v1283
    %1768 = vmatprep.subr.mxu0 %v1287
    %1769 = vmatpush1.msra.mxu0 %v1286
    %1770 = vmatprep.subr.mxu0 %v1290
    %1771 = vmatpush1.msra.mxu0 %v1289
    %1772 = vmatprep.subr.mxu0 %v1293
    %1773 = vmatpush1.msra.mxu0 %v1292
    %1774 = vmatprep.subr.mxu0 %v1296
    %1775 = vmatpush1.msra.mxu0 %v1295
    %1776 = vmatprep.mubr.f32.mxu0 %v1549
    %1777 = vmatmul.mubr.f32.gmra.mrb[0].mxu0 %v1541
    %v1778 = vpop.f32.mrb[0].mxu0
    %v1779 = vadd.f32 %v1708, %v1778
    %v1780 = vpop.f32.mrb[0].mxu0
    %v1781 = vadd.f32 %v1710, %v1780
    %1782 = vdwg.mxu0
    %1783 = vmatprep.subr.mxu0 %v1299
    %1784 = vmatpush1.msra.mxu0 %v1298
    %1785 = vmatprep.subr.mxu0 %v1302
    %1786 = vmatpush1.msra.mxu0 %v1301
    %1787 = vmatprep.subr.mxu0 %v1305
    %1788 = vmatpush1.msra.mxu0 %v1304
    %1789 = vmatprep.subr.mxu0 %v1308
    %1790 = vmatpush1.msra.mxu0 %v1307
    %1791 = vmatprep.subr.mxu0 %v1311
    %1792 = vmatpush1.msra.mxu0 %v1310
    %1793 = vmatprep.subr.mxu0 %v1314
    %1794 = vmatpush1.msra.mxu0 %v1313
    %1795 = vmatprep.subr.mxu0 %v1317
    %1796 = vmatpush1.msra.mxu0 %v1316
    %1797 = vmatprep.subr.mxu0 %v1320
    %1798 = vmatpush1.msra.mxu0 %v1319
    %1799 = vmatprep.subr.mxu0 %v1323
    %1800 = vmatpush1.msra.mxu0 %v1322
    %1801 = vmatprep.subr.mxu0 %v1326
    %1802 = vmatpush1.msra.mxu0 %v1325
    %1803 = vmatprep.subr.mxu0 %v1329
    %1804 = vmatpush1.msra.mxu0 %v1328
    %1805 = vmatprep.subr.mxu0 %v1332
    %1806 = vmatpush1.msra.mxu0 %v1331
    %1807 = vmatprep.subr.mxu0 %v1335
    %1808 = vmatpush1.msra.mxu0 %v1334
    %1809 = vmatprep.subr.mxu0 %v1338
    %1810 = vmatpush1.msra.mxu0 %v1337
    %1811 = vmatprep.subr.mxu0 %v1341
    %1812 = vmatpush1.msra.mxu0 %v1340
    %1813 = vmatprep.subr.mxu0 %v1344
    %1814 = vmatpush1.msra.mxu0 %v1343
    %1815 = vmatprep.subr.mxu0 %v1347
    %1816 = vmatpush1.msra.mxu0 %v1346
    %1817 = vmatprep.subr.mxu0 %v1350
    %1818 = vmatpush1.msra.mxu0 %v1349
    %1819 = vmatprep.subr.mxu0 %v1353
    %1820 = vmatpush1.msra.mxu0 %v1352
    %1821 = vmatprep.subr.mxu0 %v1356
    %1822 = vmatpush1.msra.mxu0 %v1355
    %1823 = vmatprep.subr.mxu0 %v1359
    %1824 = vmatpush1.msra.mxu0 %v1358
    %1825 = vmatprep.subr.mxu0 %v1362
    %1826 = vmatpush1.msra.mxu0 %v1361
    %1827 = vmatprep.subr.mxu0 %v1365
    %1828 = vmatpush1.msra.mxu0 %v1364
    %1829 = vmatprep.subr.mxu0 %v1368
    %1830 = vmatpush1.msra.mxu0 %v1367
    %1831 = vmatprep.subr.mxu0 %v1371
    %1832 = vmatpush1.msra.mxu0 %v1370
    %1833 = vmatprep.subr.mxu0 %v1374
    %1834 = vmatpush1.msra.mxu0 %v1373
    %1835 = vmatprep.subr.mxu0 %v1377
    %1836 = vmatpush1.msra.mxu0 %v1376
    %1837 = vmatprep.subr.mxu0 %v1380
    %1838 = vmatpush1.msra.mxu0 %v1379
    %1839 = vmatprep.subr.mxu0 %v1383
    %1840 = vmatpush1.msra.mxu0 %v1382
    %1841 = vmatprep.subr.mxu0 %v1386
    %1842 = vmatpush1.msra.mxu0 %v1385
    %1843 = vmatprep.subr.mxu0 %v1389
    %1844 = vmatpush1.msra.mxu0 %v1388
    %1845 = vmatprep.subr.mxu0 %v1565
    %1846 = vmatpush1.msra.mxu0 %v1562
    %1847 = vmatprep.mubr.f32.mxu0 %v1558
    %1848 = vmatmul.mubr.f32.gmra.mrb[0].mxu0 %v1548
    %v1849 = vpop.f32.mrb[0].mxu0
    %v1850 = vadd.f32 %v1779, %v1849
    %v1851 = vpop.f32.mrb[0].mxu0
    %v1852 = vadd.f32 %v1781, %v1851
    %1853 = vdwg.mxu0
    %1854 = vmatprep.subr.mxu0 0.0
    %1855 = vmatpush1.msra.mxu0 %v1012
    %1856 = vmatprep.subr.mxu0 0.0
    %1857 = vmatpush1.msra.mxu0 %v1015
    %1858 = vmatprep.subr.mxu0 0.0
    %1859 = vmatpush1.msra.mxu0 %v1018
    %1860 = vmatprep.subr.mxu0 0.0
    %1861 = vmatpush1.msra.mxu0 %v1021
    %1862 = vmatprep.subr.mxu0 0.0
    %1863 = vmatpush1.msra.mxu0 %v1024
    %1864 = vmatprep.subr.mxu0 0.0
    %1865 = vmatpush1.msra.mxu0 %v1027
    %1866 = vmatprep.subr.mxu0 0.0
    %1867 = vmatpush1.msra.mxu0 %v1030
    %1868 = vmatprep.subr.mxu0 0.0
    %1869 = vmatpush1.msra.mxu0 %v1033
    %1870 = vmatprep.subr.mxu0 0.0
    %1871 = vmatpush1.msra.mxu0 %v1036
    %1872 = vmatprep.subr.mxu0 0.0
    %1873 = vmatpush1.msra.mxu0 %v1039
    %1874 = vmatprep.subr.mxu0 0.0
    %1875 = vmatpush1.msra.mxu0 %v1042
    %1876 = vmatprep.subr.mxu0 0.0
    %1877 = vmatpush1.msra.mxu0 %v1045
    %1878 = vmatprep.subr.mxu0 0.0
    %1879 = vmatpush1.msra.mxu0 %v1048
    %1880 = vmatprep.subr.mxu0 0.0
    %1881 = vmatpush1.msra.mxu0 %v1051
    %1882 = vmatprep.subr.mxu0 0.0
    %1883 = vmatpush1.msra.mxu0 %v1054
    %1884 = vmatprep.subr.mxu0 0.0
    %1885 = vmatpush1.msra.mxu0 %v1057
    %1886 = vmatprep.subr.mxu0 0.0
    %1887 = vmatpush1.msra.mxu0 %v1060
    %1888 = vmatprep.subr.mxu0 0.0
    %1889 = vmatpush1.msra.mxu0 %v1063
    %1890 = vmatprep.subr.mxu0 0.0
    %1891 = vmatpush1.msra.mxu0 %v1066
    %1892 = vmatprep.subr.mxu0 0.0
    %1893 = vmatpush1.msra.mxu0 %v1069
    %1894 = vmatprep.subr.mxu0 0.0
    %1895 = vmatpush1.msra.mxu0 %v1072
    %1896 = vmatprep.subr.mxu0 0.0
    %1897 = vmatpush1.msra.mxu0 %v1075
    %1898 = vmatprep.subr.mxu0 0.0
    %1899 = vmatpush1.msra.mxu0 %v1078
    %1900 = vmatprep.subr.mxu0 0.0
    %1901 = vmatpush1.msra.mxu0 %v1081
    %1902 = vmatprep.subr.mxu0 0.0
    %1903 = vmatpush1.msra.mxu0 %v1084
    %1904 = vmatprep.subr.mxu0 0.0
    %1905 = vmatpush1.msra.mxu0 %v1087
    %1906 = vmatprep.subr.mxu0 0.0
    %1907 = vmatpush1.msra.mxu0 %v1090
    %1908 = vmatprep.subr.mxu0 0.0
    %1909 = vmatpush1.msra.mxu0 %v1093
    %1910 = vmatprep.subr.mxu0 0.0
    %1911 = vmatpush1.msra.mxu0 %v1096
    %1912 = vmatprep.subr.mxu0 0.0
    %1913 = vmatpush1.msra.mxu0 %v1099
    %1914 = vmatprep.subr.mxu0 0.0
    %1915 = vmatpush1.msra.mxu0 %v1102
    %1916 = vmatprep.subr.mxu0 0.0
    %1917 = vmatpush1.msra.mxu0 %v1105
    %1918 = vmatprep.mubr.f32.mxu0 %v1532
    %1919 = vmatmul.mubr.f32.gmra.mrb[0].mxu0 %v1524
    %v1920 = vpop.f32.mrb[0].mxu0
    %v1921 = vadd.f32 0.0, %v1920
    %v1922 = vpop.f32.mrb[0].mxu0
    %1923 = vdwg.mxu0
    %1924 = vmatprep.subr.mxu0 0.0
    %1925 = vmatpush1.msra.mxu0 %v1108
    %1926 = vmatprep.subr.mxu0 0.0
    %1927 = vmatpush1.msra.mxu0 %v1111
    %1928 = vmatprep.subr.mxu0 0.0
    %1929 = vmatpush1.msra.mxu0 %v1114
    %1930 = vmatprep.subr.mxu0 0.0
    %1931 = vmatpush1.msra.mxu0 %v1117
    %1932 = vmatprep.subr.mxu0 0.0
    %1933 = vmatpush1.msra.mxu0 %v1120
    %1934 = vmatprep.subr.mxu0 0.0
    %1935 = vmatpush1.msra.mxu0 %v1123
    %1936 = vmatprep.subr.mxu0 0.0
    %1937 = vmatpush1.msra.mxu0 %v1126
    %1938 = vmatprep.subr.mxu0 0.0
    %1939 = vmatpush1.msra.mxu0 %v1129
    %1940 = vmatprep.subr.mxu0 0.0
    %1941 = vmatpush1.msra.mxu0 %v1132
    %1942 = vmatprep.subr.mxu0 0.0
    %1943 = vmatpush1.msra.mxu0 %v1135
    %1944 = vmatprep.subr.mxu0 0.0
    %1945 = vmatpush1.msra.mxu0 %v1138
    %1946 = vmatprep.subr.mxu0 0.0
    %1947 = vmatpush1.msra.mxu0 %v1141
    %1948 = vmatprep.subr.mxu0 0.0
    %1949 = vmatpush1.msra.mxu0 %v1144
    %1950 = vmatprep.subr.mxu0 0.0
    %1951 = vmatpush1.msra.mxu0 %v1147
    %1952 = vmatprep.subr.mxu0 0.0
    %1953 = vmatpush1.msra.mxu0 %v1150
    %1954 = vmatprep.subr.mxu0 0.0
    %1955 = vmatpush1.msra.mxu0 %v1153
    %1956 = vmatprep.subr.mxu0 0.0
    %1957 = vmatpush1.msra.mxu0 %v1156
    %1958 = vmatprep.subr.mxu0 0.0
    %1959 = vmatpush1.msra.mxu0 %v1159
    %1960 = vmatprep.subr.mxu0 0.0
    %1961 = vmatpush1.msra.mxu0 %v1162
    %1962 = vmatprep.subr.mxu0 0.0
    %1963 = vmatpush1.msra.mxu0 %v1165
    %1964 = vmatprep.subr.mxu0 0.0
    %1965 = vmatpush1.msra.mxu0 %v1168
    %1966 = vmatprep.subr.mxu0 0.0
    %1967 = vmatpush1.msra.mxu0 %v1171
    %1968 = vmatprep.subr.mxu0 0.0
    %1969 = vmatpush1.msra.mxu0 %v1174
    %1970 = vmatprep.subr.mxu0 0.0
    %1971 = vmatpush1.msra.mxu0 %v1177
    %1972 = vmatprep.subr.mxu0 0.0
    %1973 = vmatpush1.msra.mxu0 %v1180
    %1974 = vmatprep.subr.mxu0 0.0
    %1975 = vmatpush1.msra.mxu0 %v1183
    %1976 = vmatprep.subr.mxu0 0.0
    %1977 = vmatpush1.msra.mxu0 %v1186
    %1978 = vmatprep.subr.mxu0 0.0
    %1979 = vmatpush1.msra.mxu0 %v1189
    %1980 = vmatprep.subr.mxu0 0.0
    %1981 = vmatpush1.msra.mxu0 %v1192
    %1982 = vmatprep.subr.mxu0 0.0
    %1983 = vmatpush1.msra.mxu0 %v1195
    %1984 = vmatprep.subr.mxu0 0.0
    %1985 = vmatpush1.msra.mxu0 %v1198
    %1986 = vmatprep.subr.mxu0 0.0
    %1987 = vmatpush1.msra.mxu0 %v1201
    %1988 = vmatprep.mubr.f32.mxu0 %v1533
    %1989 = vmatmul.mubr.f32.gmra.mrb[0].mxu0 %v1531
    %v1990 = vpop.f32.mrb[0].mxu0
    %v1991 = vadd.f32 %v1921, %v1990
    %v1992 = vpop.f32.mrb[0].mxu0
    %1993 = vdwg.mxu0
    %1994 = vmatprep.subr.mxu0 0.0
    %1995 = vmatpush1.msra.mxu0 %v1204
    %1996 = vmatprep.subr.mxu0 0.0
    %1997 = vmatpush1.msra.mxu0 %v1207
    %1998 = vmatprep.subr.mxu0 0.0
    %1999 = vmatpush1.msra.mxu0 %v1210
    %2000 = vmatprep.subr.mxu0 0.0
    %2001 = vmatpush1.msra.mxu0 %v1213
    %2002 = vmatprep.subr.mxu0 0.0
    %2003 = vmatpush1.msra.mxu0 %v1216
    %2004 = vmatprep.subr.mxu0 0.0
    %2005 = vmatpush1.msra.mxu0 %v1219
    %2006 = vmatprep.subr.mxu0 0.0
    %2007 = vmatpush1.msra.mxu0 %v1222
    %2008 = vmatprep.subr.mxu0 0.0
    %2009 = vmatpush1.msra.mxu0 %v1225
    %2010 = vmatprep.subr.mxu0 0.0
    %2011 = vmatpush1.msra.mxu0 %v1228
    %2012 = vmatprep.subr.mxu0 0.0
    %2013 = vmatpush1.msra.mxu0 %v1231
    %2014 = vmatprep.subr.mxu0 0.0
    %2015 = vmatpush1.msra.mxu0 %v1234
    %2016 = vmatprep.subr.mxu0 0.0
    %2017 = vmatpush1.msra.mxu0 %v1237
    %2018 = vmatprep.subr.mxu0 0.0
    %2019 = vmatpush1.msra.mxu0 %v1240
    %2020 = vmatprep.subr.mxu0 0.0
    %2021 = vmatpush1.msra.mxu0 %v1243
    %2022 = vmatprep.subr.mxu0 0.0
    %2023 = vmatpush1.msra.mxu0 %v1246
    %2024 = vmatprep.subr.mxu0 0.0
    %2025 = vmatpush1.msra.mxu0 %v1249
    %2026 = vmatprep.subr.mxu0 0.0
    %2027 = vmatpush1.msra.mxu0 %v1252
    %2028 = vmatprep.subr.mxu0 0.0
    %2029 = vmatpush1.msra.mxu0 %v1255
    %2030 = vmatprep.subr.mxu0 0.0
    %2031 = vmatpush1.msra.mxu0 %v1258
    %2032 = vmatprep.subr.mxu0 0.0
    %2033 = vmatpush1.msra.mxu0 %v1261
    %2034 = vmatprep.subr.mxu0 0.0
    %2035 = vmatpush1.msra.mxu0 %v1264
    %2036 = vmatprep.subr.mxu0 0.0
    %2037 = vmatpush1.msra.mxu0 %v1267
    %2038 = vmatprep.subr.mxu0 0.0
    %2039 = vmatpush1.msra.mxu0 %v1270
    %2040 = vmatprep.subr.mxu0 0.0
    %2041 = vmatpush1.msra.mxu0 %v1273
    %2042 = vmatprep.subr.mxu0 0.0
    %2043 = vmatpush1.msra.mxu0 %v1276
    %2044 = vmatprep.subr.mxu0 0.0
    %2045 = vmatpush1.msra.mxu0 %v1279
    %2046 = vmatprep.subr.mxu0 0.0
    %2047 = vmatpush1.msra.mxu0 %v1282
    %2048 = vmatprep.subr.mxu0 0.0
    %2049 = vmatpush1.msra.mxu0 %v1285
    %2050 = vmatprep.subr.mxu0 0.0
    %2051 = vmatpush1.msra.mxu0 %v1288
    %2052 = vmatprep.subr.mxu0 0.0
    %2053 = vmatpush1.msra.mxu0 %v1291
    %2054 = vmatprep.subr.mxu0 0.0
    %2055 = vmatpush1.msra.mxu0 %v1294
    %2056 = vmatprep.subr.mxu0 0.0
    %2057 = vmatpush1.msra.mxu0 %v1297
    %2058 = vmatprep.mubr.f32.mxu0 %v1549
    %2059 = vmatmul.mubr.f32.gmra.mrb[0].mxu0 %v1541
    %v2060 = vpop.f32.mrb[0].mxu0
    %v2061 = vadd.f32 %v1991, %v2060
    %v2062 = vpop.f32.mrb[0].mxu0
    %2063 = vdwg.mxu0
    %2064 = vmatprep.subr.mxu0 0.0
    %2065 = vmatpush1.msra.mxu0 %v1300
    %2066 = vmatprep.subr.mxu0 0.0
    %2067 = vmatpush1.msra.mxu0 %v1303
    %2068 = vmatprep.subr.mxu0 0.0
    %2069 = vmatpush1.msra.mxu0 %v1306
    %2070 = vmatprep.subr.mxu0 0.0
    %2071 = vmatpush1.msra.mxu0 %v1309
    %2072 = vmatprep.subr.mxu0 0.0
    %2073 = vmatpush1.msra.mxu0 %v1312
    %2074 = vmatprep.subr.mxu0 0.0
    %2075 = vmatpush1.msra.mxu0 %v1315
    %2076 = vmatprep.subr.mxu0 0.0
    %2077 = vmatpush1.msra.mxu0 %v1318
    %2078 = vmatprep.subr.mxu0 0.0
    %2079 = vmatpush1.msra.mxu0 %v1321
    %2080 = vmatprep.subr.mxu0 0.0
    %2081 = vmatpush1.msra.mxu0 %v1324
    %2082 = vmatprep.subr.mxu0 0.0
    %2083 = vmatpush1.msra.mxu0 %v1327
    %2084 = vmatprep.subr.mxu0 0.0
    %2085 = vmatpush1.msra.mxu0 %v1330
    %2086 = vmatprep.subr.mxu0 0.0
    %2087 = vmatpush1.msra.mxu0 %v1333
    %2088 = vmatprep.subr.mxu0 0.0
    %2089 = vmatpush1.msra.mxu0 %v1336
    %2090 = vmatprep.subr.mxu0 0.0
    %2091 = vmatpush1.msra.mxu0 %v1339
    %2092 = vmatprep.subr.mxu0 0.0
    %2093 = vmatpush1.msra.mxu0 %v1342
    %2094 = vmatprep.subr.mxu0 0.0
    %2095 = vmatpush1.msra.mxu0 %v1345
    %2096 = vmatprep.subr.mxu0 0.0
    %2097 = vmatpush1.msra.mxu0 %v1348
    %2098 = vmatprep.subr.mxu0 0.0
    %2099 = vmatpush1.msra.mxu0 %v1351
    %2100 = vmatprep.subr.mxu0 0.0
    %2101 = vmatpush1.msra.mxu0 %v1354
    %2102 = vmatprep.subr.mxu0 0.0
    %2103 = vmatpush1.msra.mxu0 %v1357
    %2104 = vmatprep.subr.mxu0 0.0
    %2105 = vmatpush1.msra.mxu0 %v1360
    %2106 = vmatprep.subr.mxu0 0.0
    %2107 = vmatpush1.msra.mxu0 %v1363
    %2108 = vmatprep.subr.mxu0 0.0
    %2109 = vmatpush1.msra.mxu0 %v1366
    %2110 = vmatprep.subr.mxu0 0.0
    %2111 = vmatpush1.msra.mxu0 %v1369
    %2112 = vmatprep.subr.mxu0 0.0
    %2113 = vmatpush1.msra.mxu0 %v1372
    %2114 = vmatprep.subr.mxu0 0.0
    %2115 = vmatpush1.msra.mxu0 %v1375
    %2116 = vmatprep.subr.mxu0 0.0
    %2117 = vmatpush1.msra.mxu0 %v1378
    %2118 = vmatprep.subr.mxu0 0.0
    %2119 = vmatpush1.msra.mxu0 %v1381
    %2120 = vmatprep.subr.mxu0 0.0
    %2121 = vmatpush1.msra.mxu0 %v1384
    %2122 = vmatprep.subr.mxu0 0.0
    %2123 = vmatpush1.msra.mxu0 %v1387
    %2124 = vmatprep.subr.mxu0 0.0
    %2125 = vmatpush1.msra.mxu0 %v1390
    %2126 = vmatprep.subr.mxu0 0.0
    %2127 = vmatpush1.msra.mxu0 %v1568
    %2128 = vmatprep.mubr.f32.mxu0 %v1558
    %2129 = vmatmul.mubr.f32.gmra.mrb[0].mxu0 %v1548
    %v2130 = vpop.f32.mrb[0].mxu0
    %v2131 = vadd.f32 %v2061, %v2130
    %v2132 = vpop.f32.mrb[0].mxu0
    %2133 = vdwg.mxu0
    %s2134 = sld [smem:[#allocation7 + $0x4]]
    %v2135 = vstv %s2134
    %v2136 = vmul.f32 %v2135, %v100
    %v2137 = vmul.f32 %v2135, %v101
    %v2138 = vmul.f32 %v2135, %v102
    %v2139 = vadd.f32 %v2136, 0.0
    %v2140 = vadd.f32 %v2137, 0.0
    %v2141 = vadd.f32 %v2138, 0.0
    %s2142 = sld [smem:[#allocation7 + $0x5]]
    %v2143 = vstv %s2142
    %v2144 = vmul.f32 %v2143, %v100
    %v2145 = vmul.f32 %v2143, %v101
    %v2146 = vmul.f32 %v2143, %v102
    %2150 = vrot.lane.b32.xlu0 %v2144, 127
    %v2151 = vpop.permute.xlu0 %2150
    %2152 = vrot.lane.b32.xlu0 %v2145, 127
    %v2153 = vpop.permute.xlu0 %2152
    %2154 = vrot.lane.b32.xlu0 %v2146, 127
    %v2155 = vpop.permute.xlu0 %2154
    %v2156 = vrot.slane %v2151, 2
    %v2157 = vrot.slane %v2153, 2
    %v2158 = vrot.slane %v2155, 2
    %v2159 = vsel %vm1419, %v2156, %v2157
    %v2160 = vsel %vm1421, %v2151, %v2159
    %v2161 = vsel %vm1419, %v2157, %v2158
    %v2162 = vsel %vm1421, %v2153, %v2161
    %v2166 = vadd.f32 %v2139, %v2160
    %v2167 = vadd.f32 %v2140, %v2162
    %v2168 = vadd.f32 %v2141, %v2155
    %s2169 = sld [smem:[#allocation7 + $0x6]]
    %v2170 = vstv %s2169
    %v2171 = vmul.f32 %v2170, %v100
    %v2172 = vmul.f32 %v2170, %v101
    %v2173 = vmul.f32 %v2170, %v102
    %2177 = vrot.lane.b32.xlu0 %v2171, 126
    %v2178 = vpop.permute.xlu0 %2177
    %2179 = vrot.lane.b32.xlu0 %v2172, 126
    %v2180 = vpop.permute.xlu0 %2179
    %2181 = vrot.lane.b32.xlu0 %v2173, 126
    %v2182 = vpop.permute.xlu0 %2181
    %v2183 = vrot.slane %v2178, 2
    %v2184 = vrot.slane %v2180, 2
    %v2185 = vrot.slane %v2182, 2
    %v2186 = vsel %vm1419, %v2183, %v2184
    %v2187 = vsel %vm1449, %v2178, %v2186
    %v2188 = vsel %vm1419, %v2184, %v2185
    %v2189 = vsel %vm1449, %v2180, %v2188
    %v2193 = vadd.f32 %v2166, %v2187
    %v2194 = vadd.f32 %v2167, %v2189
    %v2195 = vadd.f32 %v2168, %v2182
    %s2196 = sld [smem:[#allocation7 + $0x7]]
    %v2197 = vstv %s2196
    %v2198 = vmul.f32 %v2197, %v100
    %v2199 = vmul.f32 %v2197, %v101
    %v2200 = vmul.f32 %v2197, %v102
    %2204 = vrot.lane.b32.xlu0 %v2198, 125
    %v2205 = vpop.permute.xlu0 %2204
    %2206 = vrot.lane.b32.xlu0 %v2199, 125
    %v2207 = vpop.permute.xlu0 %2206
    %2208 = vrot.lane.b32.xlu0 %v2200, 125
    %v2209 = vpop.permute.xlu0 %2208
    %v2210 = vrot.slane %v2205, 2
    %v2211 = vrot.slane %v2207, 2
    %v2212 = vrot.slane %v2209, 2
    %v2213 = vsel %vm1419, %v2210, %v2211
    %v2214 = vsel %vm1477, %v2205, %v2213
    %v2215 = vsel %vm1419, %v2211, %v2212
    %v2216 = vsel %vm1477, %v2207, %v2215
    %v2220 = vadd.f32 %v2193, %v2214
    %v2221 = vadd.f32 %v2194, %v2216
    %v2222 = vadd.f32 %v2195, %v2209
    %s2223 = sld [smem:[#allocation7 + $0x9]]
    %v2224 = vstv %s2223
    %v2225 = vadd.f32 %v2220, %v2224
    %v2226 = vadd.f32 %v2221, %v2224
    %v2227 = vadd.f32 %v2222, %v2224
    %v2228 = vmax.f32 %v2225, 0.0
    %v2229 = vmax.f32 %v2226, 0.0
    %v2230 = vmax.f32 %v2227, 0.0
    %2234 = vrot.lane.b32.xlu0 %v2228, 126
    %v2235 = vpop.permute.xlu0 %2234
    %2236 = vrot.lane.b32.xlu0 %v2229, 126
    %v2237 = vpop.permute.xlu0 %2236
    %2238 = vrot.lane.b32.xlu0 %v2230, 126
    %v2239 = vpop.permute.xlu0 %2238
    %v2240 = vrot.slane %v2235, 2
    %v2241 = vrot.slane %v2237, 2
    %v2242 = vrot.slane %v2239, 2
    %v2243 = vsel %vm1419, %v2240, %v2241
    %v2244 = vsel %vm1449, %v2235, %v2243
    %v2245 = vsel %vm1419, %v2241, %v2242
    %v2246 = vsel %vm1449, %v2237, %v2245
    %v2249 = vmax.f32 %v2228, %v2244
    %v2250 = vmax.f32 %v2229, %v2246
    %v2253 = vcombine.high %v2249, %v2249
    %v2255 = vunpack.c.l.s4 1983009808
    %v2256 = vunpack.c.0.s8 %v2255
    %v2257 = vlaneseq
    %v2258 = vshrl.u32 %v2257, 7
    %v2259 = vsub.s32 %v2256, %v2258
    %v2260 = vrot.slane %v2249, %v2259
    %v2262 = vunpack.c.l.s4 1983009808
    %v2263 = vunpack.c.0.s8 %v2262
    %v2264 = vlaneseq
    %v2265 = vshrl.u32 %v2264, 7
    %v2266 = vsub.s32 %v2263, %v2265
    %v2267 = vrot.slane %v2253, %v2266
    %v2268 = vcombine.high %v2260, %v2260
    %v2269 = vcombine.high %v2267, %v2267
    %v2270 = vcombine.high %v2250, %v2250
    %v2272 = vunpack.c.l.s4 1983009808
    %v2273 = vunpack.c.0.s8 %v2272
    %v2274 = vlaneseq
    %v2275 = vshrl.u32 %v2274, 7
    %v2276 = vsub.s32 %v2273, %v2275
    %v2277 = vrot.slane %v2250, %v2276
    %v2279 = vunpack.c.l.s4 1983009808
    %v2280 = vunpack.c.0.s8 %v2279
    %v2281 = vlaneseq
    %v2282 = vshrl.u32 %v2281, 7
    %v2283 = vsub.s32 %v2280, %v2282
    %v2284 = vrot.slane %v2270, %v2283
    %v2285 = vcombine.high %v2277, %v2277
    %v2286 = vcombine.high %v2284, %v2284
    %v2294 = vsel %vm1421, %v2286, 0
    %2296 = vmatprep.subr.mxu0 %v1011
    %2297 = vmatpush1.msra.mxu0 %v1010
    %2298 = vmatprep.subr.mxu0 %v1014
    %2299 = vmatpush1.msra.mxu0 %v1013
    %2300 = vmatprep.subr.mxu0 %v1017
    %2301 = vmatpush1.msra.mxu0 %v1016
    %2302 = vmatprep.subr.mxu0 %v1020
    %2303 = vmatpush1.msra.mxu0 %v1019
    %2304 = vmatprep.subr.mxu0 %v1023
    %2305 = vmatpush1.msra.mxu0 %v1022
    %2306 = vmatprep.subr.mxu0 %v1026
    %2307 = vmatpush1.msra.mxu0 %v1025
    %2308 = vmatprep.subr.mxu0 %v1029
    %2309 = vmatpush1.msra.mxu0 %v1028
    %2310 = vmatprep.subr.mxu0 %v1032
    %2311 = vmatpush1.msra.mxu0 %v1031
    %2312 = vmatprep.subr.mxu0 %v1035
    %2313 = vmatpush1.msra.mxu0 %v1034
    %2314 = vmatprep.subr.mxu0 %v1038
    %2315 = vmatpush1.msra.mxu0 %v1037
    %2316 = vmatprep.subr.mxu0 %v1041
    %2317 = vmatpush1.msra.mxu0 %v1040
    %2318 = vmatprep.subr.mxu0 %v1044
    %2319 = vmatpush1.msra.mxu0 %v1043
    %2320 = vmatprep.subr.mxu0 %v1047
    %2321 = vmatpush1.msra.mxu0 %v1046
    %2322 = vmatprep.subr.mxu0 %v1050
    %2323 = vmatpush1.msra.mxu0 %v1049
    %2324 = vmatprep.subr.mxu0 %v1053
    %2325 = vmatpush1.msra.mxu0 %v1052
    %2326 = vmatprep.subr.mxu0 %v1056
    %2327 = vmatpush1.msra.mxu0 %v1055
    %2328 = vmatprep.subr.mxu0 %v1059
    %2329 = vmatpush1.msra.mxu0 %v1058
    %2330 = vmatprep.subr.mxu0 %v1062
    %2331 = vmatpush1.msra.mxu0 %v1061
    %2332 = vmatprep.subr.mxu0 %v1065
    %2333 = vmatpush1.msra.mxu0 %v1064
    %2334 = vmatprep.subr.mxu0 %v1068
    %2335 = vmatpush1.msra.mxu0 %v1067
    %2336 = vmatprep.subr.mxu0 %v1071
    %2337 = vmatpush1.msra.mxu0 %v1070
    %2338 = vmatprep.subr.mxu0 %v1074
    %2339 = vmatpush1.msra.mxu0 %v1073
    %2340 = vmatprep.subr.mxu0 %v1077
    %2341 = vmatpush1.msra.mxu0 %v1076
    %2342 = vmatprep.subr.mxu0 %v1080
    %2343 = vmatpush1.msra.mxu0 %v1079
    %2344 = vmatprep.subr.mxu0 %v1083
    %2345 = vmatpush1.msra.mxu0 %v1082
    %2346 = vmatprep.subr.mxu0 %v1086
    %2347 = vmatpush1.msra.mxu0 %v1085
    %2348 = vmatprep.subr.mxu0 %v1089
    %2349 = vmatpush1.msra.mxu0 %v1088
    %2350 = vmatprep.subr.mxu0 %v1092
    %2351 = vmatpush1.msra.mxu0 %v1091
    %2352 = vmatprep.subr.mxu0 %v1095
    %2353 = vmatpush1.msra.mxu0 %v1094
    %2354 = vmatprep.subr.mxu0 %v1098
    %2355 = vmatpush1.msra.mxu0 %v1097
    %2356 = vmatprep.subr.mxu0 %v1101
    %2357 = vmatpush1.msra.mxu0 %v1100
    %2358 = vmatprep.subr.mxu0 %v1104
    %2359 = vmatpush1.msra.mxu0 %v1103
    %2360 = vmatprep.mubr.f32.mxu0 %v2268
    %2361 = vmatmul.mubr.f32.gmra.mrb[0].mxu0 %v2260
    %v2362 = vpop.f32.mrb[0].mxu0
    %v2363 = vadd.f32 0.0, %v2362
    %v2364 = vpop.f32.mrb[0].mxu0
    %v2365 = vadd.f32 0.0, %v2364
    %2366 = vdwg.mxu0
    %2367 = vmatprep.subr.mxu0 %v1107
    %2368 = vmatpush1.msra.mxu0 %v1106
    %2369 = vmatprep.subr.mxu0 %v1110
    %2370 = vmatpush1.msra.mxu0 %v1109
    %2371 = vmatprep.subr.mxu0 %v1113
    %2372 = vmatpush1.msra.mxu0 %v1112
    %2373 = vmatprep.subr.mxu0 %v1116
    %2374 = vmatpush1.msra.mxu0 %v1115
    %2375 = vmatprep.subr.mxu0 %v1119
    %2376 = vmatpush1.msra.mxu0 %v1118
    %2377 = vmatprep.subr.mxu0 %v1122
    %2378 = vmatpush1.msra.mxu0 %v1121
    %2379 = vmatprep.subr.mxu0 %v1125
    %2380 = vmatpush1.msra.mxu0 %v1124
    %2381 = vmatprep.subr.mxu0 %v1128
    %2382 = vmatpush1.msra.mxu0 %v1127
    %2383 = vmatprep.subr.mxu0 %v1131
    %2384 = vmatpush1.msra.mxu0 %v1130
    %2385 = vmatprep.subr.mxu0 %v1134
    %2386 = vmatpush1.msra.mxu0 %v1133
    %2387 = vmatprep.subr.mxu0 %v1137
    %2388 = vmatpush1.msra.mxu0 %v1136
    %2389 = vmatprep.subr.mxu0 %v1140
    %2390 = vmatpush1.msra.mxu0 %v1139
    %2391 = vmatprep.subr.mxu0 %v1143
    %2392 = vmatpush1.msra.mxu0 %v1142
    %2393 = vmatprep.subr.mxu0 %v1146
    %2394 = vmatpush1.msra.mxu0 %v1145
    %2395 = vmatprep.subr.mxu0 %v1149
    %2396 = vmatpush1.msra.mxu0 %v1148
    %2397 = vmatprep.subr.mxu0 %v1152
    %2398 = vmatpush1.msra.mxu0 %v1151
    %2399 = vmatprep.subr.mxu0 %v1155
    %2400 = vmatpush1.msra.mxu0 %v1154
    %2401 = vmatprep.subr.mxu0 %v1158
    %2402 = vmatpush1.msra.mxu0 %v1157
    %2403 = vmatprep.subr.mxu0 %v1161
    %2404 = vmatpush1.msra.mxu0 %v1160
    %2405 = vmatprep.subr.mxu0 %v1164
    %2406 = vmatpush1.msra.mxu0 %v1163
    %2407 = vmatprep.subr.mxu0 %v1167
    %2408 = vmatpush1.msra.mxu0 %v1166
    %2409 = vmatprep.subr.mxu0 %v1170
    %2410 = vmatpush1.msra.mxu0 %v1169
    %2411 = vmatprep.subr.mxu0 %v1173
    %2412 = vmatpush1.msra.mxu0 %v1172
    %2413 = vmatprep.subr.mxu0 %v1176
    %2414 = vmatpush1.msra.mxu0 %v1175
    %2415 = vmatprep.subr.mxu0 %v1179
    %2416 = vmatpush1.msra.mxu0 %v1178
    %2417 = vmatprep.subr.mxu0 %v1182
    %2418 = vmatpush1.msra.mxu0 %v1181
    %2419 = vmatprep.subr.mxu0 %v1185
    %2420 = vmatpush1.msra.mxu0 %v1184
    %2421 = vmatprep.subr.mxu0 %v1188
    %2422 = vmatpush1.msra.mxu0 %v1187
    %2423 = vmatprep.subr.mxu0 %v1191
    %2424 = vmatpush1.msra.mxu0 %v1190
    %2425 = vmatprep.subr.mxu0 %v1194
    %2426 = vmatpush1.msra.mxu0 %v1193
    %2427 = vmatprep.subr.mxu0 %v1197
    %2428 = vmatpush1.msra.mxu0 %v1196
    %2429 = vmatprep.subr.mxu0 %v1200
    %2430 = vmatpush1.msra.mxu0 %v1199
    %2431 = vmatprep.mubr.f32.mxu0 %v2269
    %2432 = vmatmul.mubr.f32.gmra.mrb[0].mxu0 %v2267
    %v2433 = vpop.f32.mrb[0].mxu0
    %v2434 = vadd.f32 %v2363, %v2433
    %v2435 = vpop.f32.mrb[0].mxu0
    %v2436 = vadd.f32 %v2365, %v2435
    %2437 = vdwg.mxu0
    %2438 = vmatprep.subr.mxu0 %v1203
    %2439 = vmatpush1.msra.mxu0 %v1202
    %2440 = vmatprep.subr.mxu0 %v1206
    %2441 = vmatpush1.msra.mxu0 %v1205
    %2442 = vmatprep.subr.mxu0 %v1209
    %2443 = vmatpush1.msra.mxu0 %v1208
    %2444 = vmatprep.subr.mxu0 %v1212
    %2445 = vmatpush1.msra.mxu0 %v1211
    %2446 = vmatprep.subr.mxu0 %v1215
    %2447 = vmatpush1.msra.mxu0 %v1214
    %2448 = vmatprep.subr.mxu0 %v1218
    %2449 = vmatpush1.msra.mxu0 %v1217
    %2450 = vmatprep.subr.mxu0 %v1221
    %2451 = vmatpush1.msra.mxu0 %v1220
    %2452 = vmatprep.subr.mxu0 %v1224
    %2453 = vmatpush1.msra.mxu0 %v1223
    %2454 = vmatprep.subr.mxu0 %v1227
    %2455 = vmatpush1.msra.mxu0 %v1226
    %2456 = vmatprep.subr.mxu0 %v1230
    %2457 = vmatpush1.msra.mxu0 %v1229
    %2458 = vmatprep.subr.mxu0 %v1233
    %2459 = vmatpush1.msra.mxu0 %v1232
    %2460 = vmatprep.subr.mxu0 %v1236
    %2461 = vmatpush1.msra.mxu0 %v1235
    %2462 = vmatprep.subr.mxu0 %v1239
    %2463 = vmatpush1.msra.mxu0 %v1238
    %2464 = vmatprep.subr.mxu0 %v1242
    %2465 = vmatpush1.msra.mxu0 %v1241
    %2466 = vmatprep.subr.mxu0 %v1245
    %2467 = vmatpush1.msra.mxu0 %v1244
    %2468 = vmatprep.subr.mxu0 %v1248
    %2469 = vmatpush1.msra.mxu0 %v1247
    %2470 = vmatprep.subr.mxu0 %v1251
    %2471 = vmatpush1.msra.mxu0 %v1250
    %2472 = vmatprep.subr.mxu0 %v1254
    %2473 = vmatpush1.msra.mxu0 %v1253
    %2474 = vmatprep.subr.mxu0 %v1257
    %2475 = vmatpush1.msra.mxu0 %v1256
    %2476 = vmatprep.subr.mxu0 %v1260
    %2477 = vmatpush1.msra.mxu0 %v1259
    %2478 = vmatprep.subr.mxu0 %v1263
    %2479 = vmatpush1.msra.mxu0 %v1262
    %2480 = vmatprep.subr.mxu0 %v1266
    %2481 = vmatpush1.msra.mxu0 %v1265
    %2482 = vmatprep.subr.mxu0 %v1269
    %2483 = vmatpush1.msra.mxu0 %v1268
    %2484 = vmatprep.subr.mxu0 %v1272
    %2485 = vmatpush1.msra.mxu0 %v1271
    %2486 = vmatprep.subr.mxu0 %v1275
    %2487 = vmatpush1.msra.mxu0 %v1274
    %2488 = vmatprep.subr.mxu0 %v1278
    %2489 = vmatpush1.msra.mxu0 %v1277
    %2490 = vmatprep.subr.mxu0 %v1281
    %2491 = vmatpush1.msra.mxu0 %v1280
    %2492 = vmatprep.subr.mxu0 %v1284
    %2493 = vmatpush1.msra.mxu0 %v1283
    %2494 = vmatprep.subr.mxu0 %v1287
    %2495 = vmatpush1.msra.mxu0 %v1286
    %2496 = vmatprep.subr.mxu0 %v1290
    %2497 = vmatpush1.msra.mxu0 %v1289
    %2498 = vmatprep.subr.mxu0 %v1293
    %2499 = vmatpush1.msra.mxu0 %v1292
    %2500 = vmatprep.subr.mxu0 %v1296
    %2501 = vmatpush1.msra.mxu0 %v1295
    %2502 = vmatprep.mubr.f32.mxu0 %v2285
    %2503 = vmatmul.mubr.f32.gmra.mrb[0].mxu0 %v2277
    %v2504 = vpop.f32.mrb[0].mxu0
    %v2505 = vadd.f32 %v2434, %v2504
    %v2506 = vpop.f32.mrb[0].mxu0
    %v2507 = vadd.f32 %v2436, %v2506
    %2508 = vdwg.mxu0
    %2509 = vmatprep.subr.mxu0 %v1299
    %2510 = vmatpush1.msra.mxu0 %v1298
    %2511 = vmatprep.subr.mxu0 %v1302
    %2512 = vmatpush1.msra.mxu0 %v1301
    %2513 = vmatprep.subr.mxu0 %v1305
    %2514 = vmatpush1.msra.mxu0 %v1304
    %2515 = vmatprep.subr.mxu0 %v1308
    %2516 = vmatpush1.msra.mxu0 %v1307
    %2517 = vmatprep.subr.mxu0 %v1311
    %2518 = vmatpush1.msra.mxu0 %v1310
    %2519 = vmatprep.subr.mxu0 %v1314
    %2520 = vmatpush1.msra.mxu0 %v1313
    %2521 = vmatprep.subr.mxu0 %v1317
    %2522 = vmatpush1.msra.mxu0 %v1316
    %2523 = vmatprep.subr.mxu0 %v1320
    %2524 = vmatpush1.msra.mxu0 %v1319
    %2525 = vmatprep.subr.mxu0 %v1323
    %2526 = vmatpush1.msra.mxu0 %v1322
    %2527 = vmatprep.subr.mxu0 %v1326
    %2528 = vmatpush1.msra.mxu0 %v1325
    %2529 = vmatprep.subr.mxu0 %v1329
    %2530 = vmatpush1.msra.mxu0 %v1328
    %2531 = vmatprep.subr.mxu0 %v1332
    %2532 = vmatpush1.msra.mxu0 %v1331
    %2533 = vmatprep.subr.mxu0 %v1335
    %2534 = vmatpush1.msra.mxu0 %v1334
    %2535 = vmatprep.subr.mxu0 %v1338
    %2536 = vmatpush1.msra.mxu0 %v1337
    %2537 = vmatprep.subr.mxu0 %v1341
    %2538 = vmatpush1.msra.mxu0 %v1340
    %2539 = vmatprep.subr.mxu0 %v1344
    %2540 = vmatpush1.msra.mxu0 %v1343
    %2541 = vmatprep.subr.mxu0 %v1347
    %2542 = vmatpush1.msra.mxu0 %v1346
    %2543 = vmatprep.subr.mxu0 %v1350
    %2544 = vmatpush1.msra.mxu0 %v1349
    %2545 = vmatprep.subr.mxu0 %v1353
    %2546 = vmatpush1.msra.mxu0 %v1352
    %2547 = vmatprep.subr.mxu0 %v1356
    %2548 = vmatpush1.msra.mxu0 %v1355
    %2549 = vmatprep.subr.mxu0 %v1359
    %2550 = vmatpush1.msra.mxu0 %v1358
    %2551 = vmatprep.subr.mxu0 %v1362
    %2552 = vmatpush1.msra.mxu0 %v1361
    %2553 = vmatprep.subr.mxu0 %v1365
    %2554 = vmatpush1.msra.mxu0 %v1364
    %2555 = vmatprep.subr.mxu0 %v1368
    %2556 = vmatpush1.msra.mxu0 %v1367
    %2557 = vmatprep.subr.mxu0 %v1371
    %2558 = vmatpush1.msra.mxu0 %v1370
    %2559 = vmatprep.subr.mxu0 %v1374
    %2560 = vmatpush1.msra.mxu0 %v1373
    %2561 = vmatprep.subr.mxu0 %v1377
    %2562 = vmatpush1.msra.mxu0 %v1376
    %2563 = vmatprep.subr.mxu0 %v1380
    %2564 = vmatpush1.msra.mxu0 %v1379
    %2565 = vmatprep.subr.mxu0 %v1383
    %2566 = vmatpush1.msra.mxu0 %v1382
    %2567 = vmatprep.subr.mxu0 %v1386
    %2568 = vmatpush1.msra.mxu0 %v1385
    %2569 = vmatprep.subr.mxu0 %v1389
    %2570 = vmatpush1.msra.mxu0 %v1388
    %2571 = vmatprep.subr.mxu0 %v1565
    %2572 = vmatpush1.msra.mxu0 %v1562
    %2573 = vmatprep.mubr.f32.mxu0 %v2294
    %2574 = vmatmul.mubr.f32.gmra.mrb[0].mxu0 %v2284
    %v2575 = vpop.f32.mrb[0].mxu0
    %v2576 = vadd.f32 %v2505, %v2575
    %v2577 = vpop.f32.mrb[0].mxu0
    %v2578 = vadd.f32 %v2507, %v2577
    %2579 = vdwg.mxu0
    %2580 = vmatprep.subr.mxu0 0.0
    %2581 = vmatpush1.msra.mxu0 %v1012
    %2582 = vmatprep.subr.mxu0 0.0
    %2583 = vmatpush1.msra.mxu0 %v1015
    %2584 = vmatprep.subr.mxu0 0.0
    %2585 = vmatpush1.msra.mxu0 %v1018
    %2586 = vmatprep.subr.mxu0 0.0
    %2587 = vmatpush1.msra.mxu0 %v1021
    %2588 = vmatprep.subr.mxu0 0.0
    %2589 = vmatpush1.msra.mxu0 %v1024
    %2590 = vmatprep.subr.mxu0 0.0
    %2591 = vmatpush1.msra.mxu0 %v1027
    %2592 = vmatprep.subr.mxu0 0.0
    %2593 = vmatpush1.msra.mxu0 %v1030
    %2594 = vmatprep.subr.mxu0 0.0
    %2595 = vmatpush1.msra.mxu0 %v1033
    %2596 = vmatprep.subr.mxu0 0.0
    %2597 = vmatpush1.msra.mxu0 %v1036
    %2598 = vmatprep.subr.mxu0 0.0
    %2599 = vmatpush1.msra.mxu0 %v1039
    %2600 = vmatprep.subr.mxu0 0.0
    %2601 = vmatpush1.msra.mxu0 %v1042
    %2602 = vmatprep.subr.mxu0 0.0
    %2603 = vmatpush1.msra.mxu0 %v1045
    %2604 = vmatprep.subr.mxu0 0.0
    %2605 = vmatpush1.msra.mxu0 %v1048
    %2606 = vmatprep.subr.mxu0 0.0
    %2607 = vmatpush1.msra.mxu0 %v1051
    %2608 = vmatprep.subr.mxu0 0.0
    %2609 = vmatpush1.msra.mxu0 %v1054
    %2610 = vmatprep.subr.mxu0 0.0
    %2611 = vmatpush1.msra.mxu0 %v1057
    %2612 = vmatprep.subr.mxu0 0.0
    %2613 = vmatpush1.msra.mxu0 %v1060
    %2614 = vmatprep.subr.mxu0 0.0
    %2615 = vmatpush1.msra.mxu0 %v1063
    %2616 = vmatprep.subr.mxu0 0.0
    %2617 = vmatpush1.msra.mxu0 %v1066
    %2618 = vmatprep.subr.mxu0 0.0
    %2619 = vmatpush1.msra.mxu0 %v1069
    %2620 = vmatprep.subr.mxu0 0.0
    %2621 = vmatpush1.msra.mxu0 %v1072
    %2622 = vmatprep.subr.mxu0 0.0
    %2623 = vmatpush1.msra.mxu0 %v1075
    %2624 = vmatprep.subr.mxu0 0.0
    %2625 = vmatpush1.msra.mxu0 %v1078
    %2626 = vmatprep.subr.mxu0 0.0
    %2627 = vmatpush1.msra.mxu0 %v1081
    %2628 = vmatprep.subr.mxu0 0.0
    %2629 = vmatpush1.msra.mxu0 %v1084
    %2630 = vmatprep.subr.mxu0 0.0
    %2631 = vmatpush1.msra.mxu0 %v1087
    %2632 = vmatprep.subr.mxu0 0.0
    %2633 = vmatpush1.msra.mxu0 %v1090
    %2634 = vmatprep.subr.mxu0 0.0
    %2635 = vmatpush1.msra.mxu0 %v1093
    %2636 = vmatprep.subr.mxu0 0.0
    %2637 = vmatpush1.msra.mxu0 %v1096
    %2638 = vmatprep.subr.mxu0 0.0
    %2639 = vmatpush1.msra.mxu0 %v1099
    %2640 = vmatprep.subr.mxu0 0.0
    %2641 = vmatpush1.msra.mxu0 %v1102
    %2642 = vmatprep.subr.mxu0 0.0
    %2643 = vmatpush1.msra.mxu0 %v1105
    %2644 = vmatprep.mubr.f32.mxu0 %v2268
    %2645 = vmatmul.mubr.f32.gmra.mrb[0].mxu0 %v2260
    %v2646 = vpop.f32.mrb[0].mxu0
    %v2647 = vadd.f32 0.0, %v2646
    %v2648 = vpop.f32.mrb[0].mxu0
    %2649 = vdwg.mxu0
    %2650 = vmatprep.subr.mxu0 0.0
    %2651 = vmatpush1.msra.mxu0 %v1108
    %2652 = vmatprep.subr.mxu0 0.0
    %2653 = vmatpush1.msra.mxu0 %v1111
    %2654 = vmatprep.subr.mxu0 0.0
    %2655 = vmatpush1.msra.mxu0 %v1114
    %2656 = vmatprep.subr.mxu0 0.0
    %2657 = vmatpush1.msra.mxu0 %v1117
    %2658 = vmatprep.subr.mxu0 0.0
    %2659 = vmatpush1.msra.mxu0 %v1120
    %2660 = vmatprep.subr.mxu0 0.0
    %2661 = vmatpush1.msra.mxu0 %v1123
    %2662 = vmatprep.subr.mxu0 0.0
    %2663 = vmatpush1.msra.mxu0 %v1126
    %2664 = vmatprep.subr.mxu0 0.0
    %2665 = vmatpush1.msra.mxu0 %v1129
    %2666 = vmatprep.subr.mxu0 0.0
    %2667 = vmatpush1.msra.mxu0 %v1132
    %2668 = vmatprep.subr.mxu0 0.0
    %2669 = vmatpush1.msra.mxu0 %v1135
    %2670 = vmatprep.subr.mxu0 0.0
    %2671 = vmatpush1.msra.mxu0 %v1138
    %2672 = vmatprep.subr.mxu0 0.0
    %2673 = vmatpush1.msra.mxu0 %v1141
    %2674 = vmatprep.subr.mxu0 0.0
    %2675 = vmatpush1.msra.mxu0 %v1144
    %2676 = vmatprep.subr.mxu0 0.0
    %2677 = vmatpush1.msra.mxu0 %v1147
    %2678 = vmatprep.subr.mxu0 0.0
    %2679 = vmatpush1.msra.mxu0 %v1150
    %2680 = vmatprep.subr.mxu0 0.0
    %2681 = vmatpush1.msra.mxu0 %v1153
    %2682 = vmatprep.subr.mxu0 0.0
    %2683 = vmatpush1.msra.mxu0 %v1156
    %2684 = vmatprep.subr.mxu0 0.0
    %2685 = vmatpush1.msra.mxu0 %v1159
    %2686 = vmatprep.subr.mxu0 0.0
    %2687 = vmatpush1.msra.mxu0 %v1162
    %2688 = vmatprep.subr.mxu0 0.0
    %2689 = vmatpush1.msra.mxu0 %v1165
    %2690 = vmatprep.subr.mxu0 0.0
    %2691 = vmatpush1.msra.mxu0 %v1168
    %2692 = vmatprep.subr.mxu0 0.0
    %2693 = vmatpush1.msra.mxu0 %v1171
    %2694 = vmatprep.subr.mxu0 0.0
    %2695 = vmatpush1.msra.mxu0 %v1174
    %2696 = vmatprep.subr.mxu0 0.0
    %2697 = vmatpush1.msra.mxu0 %v1177
    %2698 = vmatprep.subr.mxu0 0.0
    %2699 = vmatpush1.msra.mxu0 %v1180
    %2700 = vmatprep.subr.mxu0 0.0
    %2701 = vmatpush1.msra.mxu0 %v1183
    %2702 = vmatprep.subr.mxu0 0.0
    %2703 = vmatpush1.msra.mxu0 %v1186
    %2704 = vmatprep.subr.mxu0 0.0
    %2705 = vmatpush1.msra.mxu0 %v1189
    %2706 = vmatprep.subr.mxu0 0.0
    %2707 = vmatpush1.msra.mxu0 %v1192
    %2708 = vmatprep.subr.mxu0 0.0
    %2709 = vmatpush1.msra.mxu0 %v1195
    %2710 = vmatprep.subr.mxu0 0.0
    %2711 = vmatpush1.msra.mxu0 %v1198
    %2712 = vmatprep.subr.mxu0 0.0
    %2713 = vmatpush1.msra.mxu0 %v1201
    %2714 = vmatprep.mubr.f32.mxu0 %v2269
    %2715 = vmatmul.mubr.f32.gmra.mrb[0].mxu0 %v2267
    %v2716 = vpop.f32.mrb[0].mxu0
    %v2717 = vadd.f32 %v2647, %v2716
    %v2718 = vpop.f32.mrb[0].mxu0
    %2719 = vdwg.mxu0
    %2720 = vmatprep.subr.mxu0 0.0
    %2721 = vmatpush1.msra.mxu0 %v1204
    %2722 = vmatprep.subr.mxu0 0.0
    %2723 = vmatpush1.msra.mxu0 %v1207
    %2724 = vmatprep.subr.mxu0 0.0
    %2725 = vmatpush1.msra.mxu0 %v1210
    %2726 = vmatprep.subr.mxu0 0.0
    %2727 = vmatpush1.msra.mxu0 %v1213
    %2728 = vmatprep.subr.mxu0 0.0
    %2729 = vmatpush1.msra.mxu0 %v1216
    %2730 = vmatprep.subr.mxu0 0.0
    %2731 = vmatpush1.msra.mxu0 %v1219
    %2732 = vmatprep.subr.mxu0 0.0
    %2733 = vmatpush1.msra.mxu0 %v1222
    %2734 = vmatprep.subr.mxu0 0.0
    %2735 = vmatpush1.msra.mxu0 %v1225
    %2736 = vmatprep.subr.mxu0 0.0
    %2737 = vmatpush1.msra.mxu0 %v1228
    %2738 = vmatprep.subr.mxu0 0.0
    %2739 = vmatpush1.msra.mxu0 %v1231
    %2740 = vmatprep.subr.mxu0 0.0
    %2741 = vmatpush1.msra.mxu0 %v1234
    %2742 = vmatprep.subr.mxu0 0.0
    %2743 = vmatpush1.msra.mxu0 %v1237
    %2744 = vmatprep.subr.mxu0 0.0
    %2745 = vmatpush1.msra.mxu0 %v1240
    %2746 = vmatprep.subr.mxu0 0.0
    %2747 = vmatpush1.msra.mxu0 %v1243
    %2748 = vmatprep.subr.mxu0 0.0
    %2749 = vmatpush1.msra.mxu0 %v1246
    %2750 = vmatprep.subr.mxu0 0.0
    %2751 = vmatpush1.msra.mxu0 %v1249
    %2752 = vmatprep.subr.mxu0 0.0
    %2753 = vmatpush1.msra.mxu0 %v1252
    %2754 = vmatprep.subr.mxu0 0.0
    %2755 = vmatpush1.msra.mxu0 %v1255
    %2756 = vmatprep.subr.mxu0 0.0
    %2757 = vmatpush1.msra.mxu0 %v1258
    %2758 = vmatprep.subr.mxu0 0.0
    %2759 = vmatpush1.msra.mxu0 %v1261
    %2760 = vmatprep.subr.mxu0 0.0
    %2761 = vmatpush1.msra.mxu0 %v1264
    %2762 = vmatprep.subr.mxu0 0.0
    %2763 = vmatpush1.msra.mxu0 %v1267
    %2764 = vmatprep.subr.mxu0 0.0
    %2765 = vmatpush1.msra.mxu0 %v1270
    %2766 = vmatprep.subr.mxu0 0.0
    %2767 = vmatpush1.msra.mxu0 %v1273
    %2768 = vmatprep.subr.mxu0 0.0
    %2769 = vmatpush1.msra.mxu0 %v1276
    %2770 = vmatprep.subr.mxu0 0.0
    %2771 = vmatpush1.msra.mxu0 %v1279
    %2772 = vmatprep.subr.mxu0 0.0
    %2773 = vmatpush1.msra.mxu0 %v1282
    %2774 = vmatprep.subr.mxu0 0.0
    %2775 = vmatpush1.msra.mxu0 %v1285
    %2776 = vmatprep.subr.mxu0 0.0
    %2777 = vmatpush1.msra.mxu0 %v1288
    %2778 = vmatprep.subr.mxu0 0.0
    %2779 = vmatpush1.msra.mxu0 %v1291
    %2780 = vmatprep.subr.mxu0 0.0
    %2781 = vmatpush1.msra.mxu0 %v1294
    %2782 = vmatprep.subr.mxu0 0.0
    %2783 = vmatpush1.msra.mxu0 %v1297
    %2784 = vmatprep.mubr.f32.mxu0 %v2285
    %2785 = vmatmul.mubr.f32.gmra.mrb[0].mxu0 %v2277
    %v2786 = vpop.f32.mrb[0].mxu0
    %v2787 = vadd.f32 %v2717, %v2786
    %v2788 = vpop.f32.mrb[0].mxu0
    %2789 = vdwg.mxu0
    %2790 = vmatprep.subr.mxu0 0.0
    %2791 = vmatpush1.msra.mxu0 %v1300
    %2792 = vmatprep.subr.mxu0 0.0
    %2793 = vmatpush1.msra.mxu0 %v1303
    %2794 = vmatprep.subr.mxu0 0.0
    %2795 = vmatpush1.msra.mxu0 %v1306
    %2796 = vmatprep.subr.mxu0 0.0
    %2797 = vmatpush1.msra.mxu0 %v1309
    %2798 = vmatprep.subr.mxu0 0.0
    %2799 = vmatpush1.msra.mxu0 %v1312
    %2800 = vmatprep.subr.mxu0 0.0
    %2801 = vmatpush1.msra.mxu0 %v1315
    %2802 = vmatprep.subr.mxu0 0.0
    %2803 = vmatpush1.msra.mxu0 %v1318
    %2804 = vmatprep.subr.mxu0 0.0
    %2805 = vmatpush1.msra.mxu0 %v1321
    %2806 = vmatprep.subr.mxu0 0.0
    %2807 = vmatpush1.msra.mxu0 %v1324
    %2808 = vmatprep.subr.mxu0 0.0
    %2809 = vmatpush1.msra.mxu0 %v1327
    %2810 = vmatprep.subr.mxu0 0.0
    %2811 = vmatpush1.msra.mxu0 %v1330
    %2812 = vmatprep.subr.mxu0 0.0
    %2813 = vmatpush1.msra.mxu0 %v1333
    %2814 = vmatprep.subr.mxu0 0.0
    %2815 = vmatpush1.msra.mxu0 %v1336
    %2816 = vmatprep.subr.mxu0 0.0
    %2817 = vmatpush1.msra.mxu0 %v1339
    %2818 = vmatprep.subr.mxu0 0.0
    %2819 = vmatpush1.msra.mxu0 %v1342
    %2820 = vmatprep.subr.mxu0 0.0
    %2821 = vmatpush1.msra.mxu0 %v1345
    %2822 = vmatprep.subr.mxu0 0.0
    %2823 = vmatpush1.msra.mxu0 %v1348
    %2824 = vmatprep.subr.mxu0 0.0
    %2825 = vmatpush1.msra.mxu0 %v1351
    %2826 = vmatprep.subr.mxu0 0.0
    %2827 = vmatpush1.msra.mxu0 %v1354
    %2828 = vmatprep.subr.mxu0 0.0
    %2829 = vmatpush1.msra.mxu0 %v1357
    %2830 = vmatprep.subr.mxu0 0.0
    %2831 = vmatpush1.msra.mxu0 %v1360
    %2832 = vmatprep.subr.mxu0 0.0
    %2833 = vmatpush1.msra.mxu0 %v1363
    %2834 = vmatprep.subr.mxu0 0.0
    %2835 = vmatpush1.msra.mxu0 %v1366
    %2836 = vmatprep.subr.mxu0 0.0
    %2837 = vmatpush1.msra.mxu0 %v1369
    %2838 = vmatprep.subr.mxu0 0.0
    %2839 = vmatpush1.msra.mxu0 %v1372
    %2840 = vmatprep.subr.mxu0 0.0
    %2841 = vmatpush1.msra.mxu0 %v1375
    %2842 = vmatprep.subr.mxu0 0.0
    %2843 = vmatpush1.msra.mxu0 %v1378
    %2844 = vmatprep.subr.mxu0 0.0
    %2845 = vmatpush1.msra.mxu0 %v1381
    %2846 = vmatprep.subr.mxu0 0.0
    %2847 = vmatpush1.msra.mxu0 %v1384
    %2848 = vmatprep.subr.mxu0 0.0
    %2849 = vmatpush1.msra.mxu0 %v1387
    %2850 = vmatprep.subr.mxu0 0.0
    %2851 = vmatpush1.msra.mxu0 %v1390
    %2852 = vmatprep.subr.mxu0 0.0
    %2853 = vmatpush1.msra.mxu0 %v1568
    %2854 = vmatprep.mubr.f32.mxu0 %v2294
    %2855 = vmatmul.mubr.f32.gmra.mrb[0].mxu0 %v2284
    %v2856 = vpop.f32.mrb[0].mxu0
    %v2857 = vadd.f32 %v2787, %v2856
    %v2858 = vpop.f32.mrb[0].mxu0
    %2859 = vdwg.mxu0
    %s2860 = sld [smem:[#allocation7 + $0xa]]
    %v2861 = vstv %s2860
    %v2862 = vmul.f32 %v2861, %v1850
    %v2863 = vmul.f32 %v2861, %v1852
    %v2864 = vmul.f32 %v2861, %v2131
    %v2865 = vadd.f32 %v2862, 0.0
    %v2866 = vadd.f32 %v2863, 0.0
    %v2867 = vadd.f32 %v2864, 0.0
    %s2868 = sld [smem:[#allocation7 + $0xb]]
    %v2869 = vstv %s2868
    %v2870 = vmul.f32 %v2869, %v1850
    %v2871 = vmul.f32 %v2869, %v1852
    %v2872 = vmul.f32 %v2869, %v2131
    %2876 = vrot.lane.b32.xlu0 %v2870, 127
    %v2877 = vpop.permute.xlu0 %2876
    %2878 = vrot.lane.b32.xlu0 %v2871, 127
    %v2879 = vpop.permute.xlu0 %2878
    %2880 = vrot.lane.b32.xlu0 %v2872, 127
    %v2881 = vpop.permute.xlu0 %2880
    %v2882 = vsel %vm1421, %v2877, %v2879
    %v2883 = vsel %vm1421, %v2879, %v2881
    %v2887 = vadd.f32 %v2865, %v2882
    %v2888 = vadd.f32 %v2866, %v2883
    %v2889 = vadd.f32 %v2867, %v2881
    %s2890 = sld [smem:[#allocation7 + $0xc]]
    %v2891 = vstv %s2890
    %v2892 = vmul.f32 %v2891, %v1850
    %v2893 = vmul.f32 %v2891, %v1852
    %v2894 = vmul.f32 %v2891, %v2131
    %2898 = vrot.lane.b32.xlu0 %v2892, 126
    %v2899 = vpop.permute.xlu0 %2898
    %2900 = vrot.lane.b32.xlu0 %v2893, 126
    %v2901 = vpop.permute.xlu0 %2900
    %2902 = vrot.lane.b32.xlu0 %v2894, 126
    %v2903 = vpop.permute.xlu0 %2902
    %v2904 = vsel %vm1449, %v2899, %v2901
    %v2905 = vsel %vm1449, %v2901, %v2903
    %v2909 = vadd.f32 %v2887, %v2904
    %v2910 = vadd.f32 %v2888, %v2905
    %v2911 = vadd.f32 %v2889, %v2903
    %s2912 = sld [smem:[#allocation7 + $0xd]]
    %v2913 = vstv %s2912
    %v2914 = vmul.f32 %v2913, %v1850
    %v2915 = vmul.f32 %v2913, %v1852
    %v2916 = vmul.f32 %v2913, %v2131
    %2920 = vrot.lane.b32.xlu0 %v2914, 125
    %v2921 = vpop.permute.xlu0 %2920
    %2922 = vrot.lane.b32.xlu0 %v2915, 125
    %v2923 = vpop.permute.xlu0 %2922
    %2924 = vrot.lane.b32.xlu0 %v2916, 125
    %v2925 = vpop.permute.xlu0 %2924
    %v2926 = vsel %vm1477, %v2921, %v2923
    %v2927 = vsel %vm1477, %v2923, %v2925
    %v2931 = vadd.f32 %v2909, %v2926
    %v2932 = vadd.f32 %v2910, %v2927
    %v2933 = vadd.f32 %v2911, %v2925
    %s2934 = sld [smem:[#allocation7 + $0xe]]
    %v2935 = vstv %s2934
    %v2936 = vmul.f32 %v2935, %v2576
    %v2937 = vmul.f32 %v2935, %v2578
    %v2938 = vmul.f32 %v2935, %v2857
    %v2939 = vadd.f32 %v2931, %v2936
    %v2940 = vadd.f32 %v2932, %v2937
    %v2941 = vadd.f32 %v2933, %v2938
    %s2942 = sld [smem:[#allocation7 + $0xf]]
    %v2943 = vstv %s2942
    %v2944 = vmul.f32 %v2943, %v2576
    %v2945 = vmul.f32 %v2943, %v2578
    %v2946 = vmul.f32 %v2943, %v2857
    %2950 = vrot.lane.b32.xlu0 %v2944, 127
    %v2951 = vpop.permute.xlu0 %2950
    %2952 = vrot.lane.b32.xlu0 %v2945, 127
    %v2953 = vpop.permute.xlu0 %2952
    %2954 = vrot.lane.b32.xlu0 %v2946, 127
    %v2955 = vpop.permute.xlu0 %2954
    %v2956 = vsel %vm1421, %v2951, %v2953
    %v2957 = vsel %vm1421, %v2953, %v2955
    %v2961 = vadd.f32 %v2939, %v2956
    %v2962 = vadd.f32 %v2940, %v2957
    %v2963 = vadd.f32 %v2941, %v2955
    %s2964 = sld [smem:[#allocation7 + $0x10]]
    %v2965 = vstv %s2964
    %v2966 = vmul.f32 %v2965, %v2576
    %v2967 = vmul.f32 %v2965, %v2578
    %v2968 = vmul.f32 %v2965, %v2857
    %2972 = vrot.lane.b32.xlu0 %v2966, 126
    %v2973 = vpop.permute.xlu0 %2972
    %2974 = vrot.lane.b32.xlu0 %v2967, 126
    %v2975 = vpop.permute.xlu0 %2974
    %2976 = vrot.lane.b32.xlu0 %v2968, 126
    %v2977 = vpop.permute.xlu0 %2976
    %v2978 = vsel %vm1449, %v2973, %v2975
    %v2979 = vsel %vm1449, %v2975, %v2977
    %v2983 = vadd.f32 %v2961, %v2978
    %v2984 = vadd.f32 %v2962, %v2979
    %v2985 = vadd.f32 %v2963, %v2977
    %s2986 = sld [smem:[#allocation7 + $0x11]]
    %v2987 = vstv %s2986
    %v2988 = vmul.f32 %v2987, %v2576
    %v2989 = vmul.f32 %v2987, %v2578
    %v2990 = vmul.f32 %v2987, %v2857
    %2994 = vrot.lane.b32.xlu0 %v2988, 125
    %v2995 = vpop.permute.xlu0 %2994
    %2996 = vrot.lane.b32.xlu0 %v2989, 125
    %v2997 = vpop.permute.xlu0 %2996
    %2998 = vrot.lane.b32.xlu0 %v2990, 125
    %v2999 = vpop.permute.xlu0 %2998
    %v3000 = vsel %vm1477, %v2995, %v2997
    %v3001 = vsel %vm1477, %v2997, %v2999
    %v3005 = vadd.f32 %v2983, %v3000
    %v3006 = vadd.f32 %v2984, %v3001
    %v3007 = vadd.f32 %v2985, %v2999
    %s3008 = sld [smem:[#allocation7 + $0x22]]
    %v3009 = vstv %s3008
    %v3010 = vadd.f32 %v3005, %v3009
    %v3011 = vadd.f32 %v3006, %v3009
    %v3012 = vadd.f32 %v3007, %v3009
    %v3013 = vmax.f32 %v3010, 0.0
    %v3014 = vmax.f32 %v3011, 0.0
    %v3015 = vmax.f32 %v3012, 0.0
    %3019 = vrot.lane.b32.xlu0 %v3013, 126
    %v3020 = vpop.permute.xlu0 %3019
    %3021 = vrot.lane.b32.xlu0 %v3014, 126
    %v3022 = vpop.permute.xlu0 %3021
    %3023 = vrot.lane.b32.xlu0 %v3015, 126
    %v3024 = vpop.permute.xlu0 %3023
    %v3025 = vsel %vm1449, %v3020, %v3022
    %v3026 = vsel %vm1449, %v3022, %v3024
    %v3029 = vmax.f32 %v3013, %v3025
    %v3030 = vmax.f32 %v3014, %v3026
    %v3032 = vsel %vm1421, %v3030, 0
    %v3035 = vsel %vm1560, %v1103, 0
    %3037 = vmatprep.subr.mxu0 0.0
    %3038 = vmatpush1.msra.mxu0 %v1010
    %3039 = vmatprep.subr.mxu0 0.0
    %3040 = vmatpush1.msra.mxu0 %v1013
    %3041 = vmatprep.subr.mxu0 0.0
    %3042 = vmatpush1.msra.mxu0 %v1016
    %3043 = vmatprep.subr.mxu0 0.0
    %3044 = vmatpush1.msra.mxu0 %v1019
    %3045 = vmatprep.subr.mxu0 0.0
    %3046 = vmatpush1.msra.mxu0 %v1022
    %3047 = vmatprep.subr.mxu0 0.0
    %3048 = vmatpush1.msra.mxu0 %v1025
    %3049 = vmatprep.subr.mxu0 0.0
    %3050 = vmatpush1.msra.mxu0 %v1028
    %3051 = vmatprep.subr.mxu0 0.0
    %3052 = vmatpush1.msra.mxu0 %v1031
    %3053 = vmatprep.subr.mxu0 0.0
    %3054 = vmatpush1.msra.mxu0 %v1034
    %3055 = vmatprep.subr.mxu0 0.0
    %3056 = vmatpush1.msra.mxu0 %v1037
    %3057 = vmatprep.subr.mxu0 0.0
    %3058 = vmatpush1.msra.mxu0 %v1040
    %3059 = vmatprep.subr.mxu0 0.0
    %3060 = vmatpush1.msra.mxu0 %v1043
    %3061 = vmatprep.subr.mxu0 0.0
    %3062 = vmatpush1.msra.mxu0 %v1046
    %3063 = vmatprep.subr.mxu0 0.0
    %3064 = vmatpush1.msra.mxu0 %v1049
    %3065 = vmatprep.subr.mxu0 0.0
    %3066 = vmatpush1.msra.mxu0 %v1052
    %3067 = vmatprep.subr.mxu0 0.0
    %3068 = vmatpush1.msra.mxu0 %v1055
    %3069 = vmatprep.subr.mxu0 0.0
    %3070 = vmatpush1.msra.mxu0 %v1058
    %3071 = vmatprep.subr.mxu0 0.0
    %3072 = vmatpush1.msra.mxu0 %v1061
    %3073 = vmatprep.subr.mxu0 0.0
    %3074 = vmatpush1.msra.mxu0 %v1064
    %3075 = vmatprep.subr.mxu0 0.0
    %3076 = vmatpush1.msra.mxu0 %v1067
    %3077 = vmatprep.subr.mxu0 0.0
    %3078 = vmatpush1.msra.mxu0 %v1070
    %3079 = vmatprep.subr.mxu0 0.0
    %3080 = vmatpush1.msra.mxu0 %v1073
    %3081 = vmatprep.subr.mxu0 0.0
    %3082 = vmatpush1.msra.mxu0 %v1076
    %3083 = vmatprep.subr.mxu0 0.0
    %3084 = vmatpush1.msra.mxu0 %v1079
    %3085 = vmatprep.subr.mxu0 0.0
    %3086 = vmatpush1.msra.mxu0 %v1082
    %3087 = vmatprep.subr.mxu0 0.0
    %3088 = vmatpush1.msra.mxu0 %v1085
    %3089 = vmatprep.subr.mxu0 0.0
    %3090 = vmatpush1.msra.mxu0 %v1088
    %3091 = vmatprep.subr.mxu0 0.0
    %3092 = vmatpush1.msra.mxu0 %v1091
    %3093 = vmatprep.subr.mxu0 0.0
    %3094 = vmatpush1.msra.mxu0 %v1094
    %3095 = vmatprep.subr.mxu0 0.0
    %3096 = vmatpush1.msra.mxu0 %v1097
    %3097 = vmatprep.subr.mxu0 0.0
    %3098 = vmatpush1.msra.mxu0 %v1100
    %3099 = vmatprep.subr.mxu0 0.0
    %3100 = vmatpush1.msra.mxu0 %v3035
    %3101 = vmatprep.mubr.f32.mxu0 %v3032
    %3102 = vmatmul.mubr.f32.gmra.mrb[0].mxu0 %v3029
    %v3103 = vpop.f32.mrb[0].mxu0
    %v3104 = vadd.f32 0.0, %v3103
    %v3105 = vpop.f32.mrb[0].mxu0
    %3106 = vdwg.mxu0
    %s3107 = sld [smem:[#allocation7 + $0x12]]
    %v3108 = vstv %s3107
    %v3109 = vmul.f32 %v3108, %v1850
    %v3110 = vmul.f32 %v3108, %v1852
    %v3111 = vmul.f32 %v3108, %v2131
    %v3112 = vadd.f32 %v3109, 0.0
    %v3113 = vadd.f32 %v3110, 0.0
    %v3114 = vadd.f32 %v3111, 0.0
    %s3115 = sld [smem:[#allocation7 + $0x13]]
    %v3116 = vstv %s3115
    %v3117 = vmul.f32 %v3116, %v1850
    %v3118 = vmul.f32 %v3116, %v1852
    %v3119 = vmul.f32 %v3116, %v2131
    %3123 = vrot.lane.b32.xlu0 %v3117, 127
    %v3124 = vpop.permute.xlu0 %3123
    %3125 = vrot.lane.b32.xlu0 %v3118, 127
    %v3126 = vpop.permute.xlu0 %3125
    %3127 = vrot.lane.b32.xlu0 %v3119, 127
    %v3128 = vpop.permute.xlu0 %3127
    %v3129 = vsel %vm1421, %v3124, %v3126
    %v3130 = vsel %vm1421, %v3126, %v3128
    %v3134 = vadd.f32 %v3112, %v3129
    %v3135 = vadd.f32 %v3113, %v3130
    %v3136 = vadd.f32 %v3114, %v3128
    %s3137 = sld [smem:[#allocation7 + $0x14]]
    %v3138 = vstv %s3137
    %v3139 = vmul.f32 %v3138, %v1850
    %v3140 = vmul.f32 %v3138, %v1852
    %v3141 = vmul.f32 %v3138, %v2131
    %3145 = vrot.lane.b32.xlu0 %v3139, 126
    %v3146 = vpop.permute.xlu0 %3145
    %3147 = vrot.lane.b32.xlu0 %v3140, 126
    %v3148 = vpop.permute.xlu0 %3147
    %3149 = vrot.lane.b32.xlu0 %v3141, 126
    %v3150 = vpop.permute.xlu0 %3149
    %v3151 = vsel %vm1449, %v3146, %v3148
    %v3152 = vsel %vm1449, %v3148, %v3150
    %v3156 = vadd.f32 %v3134, %v3151
    %v3157 = vadd.f32 %v3135, %v3152
    %v3158 = vadd.f32 %v3136, %v3150
    %s3159 = sld [smem:[#allocation7 + $0x15]]
    %v3160 = vstv %s3159
    %v3161 = vmul.f32 %v3160, %v1850
    %v3162 = vmul.f32 %v3160, %v1852
    %v3163 = vmul.f32 %v3160, %v2131
    %3167 = vrot.lane.b32.xlu0 %v3161, 125
    %v3168 = vpop.permute.xlu0 %3167
    %3169 = vrot.lane.b32.xlu0 %v3162, 125
    %v3170 = vpop.permute.xlu0 %3169
    %3171 = vrot.lane.b32.xlu0 %v3163, 125
    %v3172 = vpop.permute.xlu0 %3171
    %v3173 = vsel %vm1477, %v3168, %v3170
    %v3174 = vsel %vm1477, %v3170, %v3172
    %v3178 = vadd.f32 %v3156, %v3173
    %v3179 = vadd.f32 %v3157, %v3174
    %v3180 = vadd.f32 %v3158, %v3172
    %s3181 = sld [smem:[#allocation7 + $0x16]]
    %v3182 = vstv %s3181
    %v3183 = vmul.f32 %v3182, %v2576
    %v3184 = vmul.f32 %v3182, %v2578
    %v3185 = vmul.f32 %v3182, %v2857
    %v3186 = vadd.f32 %v3178, %v3183
    %v3187 = vadd.f32 %v3179, %v3184
    %v3188 = vadd.f32 %v3180, %v3185
    %s3189 = sld [smem:[#allocation7 + $0x17]]
    %v3190 = vstv %s3189
    %v3191 = vmul.f32 %v3190, %v2576
    %v3192 = vmul.f32 %v3190, %v2578
    %v3193 = vmul.f32 %v3190, %v2857
    %3197 = vrot.lane.b32.xlu0 %v3191, 127
    %v3198 = vpop.permute.xlu0 %3197
    %3199 = vrot.lane.b32.xlu0 %v3192, 127
    %v3200 = vpop.permute.xlu0 %3199
    %3201 = vrot.lane.b32.xlu0 %v3193, 127
    %v3202 = vpop.permute.xlu0 %3201
    %v3203 = vsel %vm1421, %v3198, %v3200
    %v3204 = vsel %vm1421, %v3200, %v3202
    %v3208 = vadd.f32 %v3186, %v3203
    %v3209 = vadd.f32 %v3187, %v3204
    %v3210 = vadd.f32 %v3188, %v3202
    %s3211 = sld [smem:[#allocation7 + $0x18]]
    %v3212 = vstv %s3211
    %v3213 = vmul.f32 %v3212, %v2576
    %v3214 = vmul.f32 %v3212, %v2578
    %v3215 = vmul.f32 %v3212, %v2857
    %3219 = vrot.lane.b32.xlu0 %v3213, 126
    %v3220 = vpop.permute.xlu0 %3219
    %3221 = vrot.lane.b32.xlu0 %v3214, 126
    %v3222 = vpop.permute.xlu0 %3221
    %3223 = vrot.lane.b32.xlu0 %v3215, 126
    %v3224 = vpop.permute.xlu0 %3223
    %v3225 = vsel %vm1449, %v3220, %v3222
    %v3226 = vsel %vm1449, %v3222, %v3224
    %v3230 = vadd.f32 %v3208, %v3225
    %v3231 = vadd.f32 %v3209, %v3226
    %v3232 = vadd.f32 %v3210, %v3224
    %s3233 = sld [smem:[#allocation7 + $0x19]]
    %v3234 = vstv %s3233
    %v3235 = vmul.f32 %v3234, %v2576
    %v3236 = vmul.f32 %v3234, %v2578
    %v3237 = vmul.f32 %v3234, %v2857
    %3241 = vrot.lane.b32.xlu0 %v3235, 125
    %v3242 = vpop.permute.xlu0 %3241
    %3243 = vrot.lane.b32.xlu0 %v3236, 125
    %v3244 = vpop.permute.xlu0 %3243
    %3245 = vrot.lane.b32.xlu0 %v3237, 125
    %v3246 = vpop.permute.xlu0 %3245
    %v3247 = vsel %vm1477, %v3242, %v3244
    %v3248 = vsel %vm1477, %v3244, %v3246
    %v3252 = vadd.f32 %v3230, %v3247
    %v3253 = vadd.f32 %v3231, %v3248
    %v3254 = vadd.f32 %v3232, %v3246
    %s3255 = sld [smem:[#allocation7 + $0x23]]
    %v3256 = vstv %s3255
    %v3257 = vadd.f32 %v3252, %v3256
    %v3258 = vadd.f32 %v3253, %v3256
    %v3259 = vadd.f32 %v3254, %v3256
    %v3260 = vmax.f32 %v3257, 0.0
    %v3261 = vmax.f32 %v3258, 0.0
    %v3262 = vmax.f32 %v3259, 0.0
    %3266 = vrot.lane.b32.xlu0 %v3260, 126
    %v3267 = vpop.permute.xlu0 %3266
    %3268 = vrot.lane.b32.xlu0 %v3261, 126
    %v3269 = vpop.permute.xlu0 %3268
    %3270 = vrot.lane.b32.xlu0 %v3262, 126
    %v3271 = vpop.permute.xlu0 %3270
    %v3272 = vsel %vm1449, %v3267, %v3269
    %v3273 = vsel %vm1449, %v3269, %v3271
    %v3276 = vmax.f32 %v3260, %v3272
    %v3277 = vmax.f32 %v3261, %v3273
    %v3279 = vsel %vm1421, %v3277, 0
    %3281 = vmatprep.subr.mxu0 0.0
    %3282 = vmatpush1.msra.mxu0 %v1010
    %3283 = vmatprep.subr.mxu0 0.0
    %3284 = vmatpush1.msra.mxu0 %v1013
    %3285 = vmatprep.subr.mxu0 0.0
    %3286 = vmatpush1.msra.mxu0 %v1016
    %3287 = vmatprep.subr.mxu0 0.0
    %3288 = vmatpush1.msra.mxu0 %v1019
    %3289 = vmatprep.subr.mxu0 0.0
    %3290 = vmatpush1.msra.mxu0 %v1022
    %3291 = vmatprep.subr.mxu0 0.0
    %3292 = vmatpush1.msra.mxu0 %v1025
    %3293 = vmatprep.subr.mxu0 0.0
    %3294 = vmatpush1.msra.mxu0 %v1028
    %3295 = vmatprep.subr.mxu0 0.0
    %3296 = vmatpush1.msra.mxu0 %v1031
    %3297 = vmatprep.subr.mxu0 0.0
    %3298 = vmatpush1.msra.mxu0 %v1034
    %3299 = vmatprep.subr.mxu0 0.0
    %3300 = vmatpush1.msra.mxu0 %v1037
    %3301 = vmatprep.subr.mxu0 0.0
    %3302 = vmatpush1.msra.mxu0 %v1040
    %3303 = vmatprep.subr.mxu0 0.0
    %3304 = vmatpush1.msra.mxu0 %v1043
    %3305 = vmatprep.subr.mxu0 0.0
    %3306 = vmatpush1.msra.mxu0 %v1046
    %3307 = vmatprep.subr.mxu0 0.0
    %3308 = vmatpush1.msra.mxu0 %v1049
    %3309 = vmatprep.subr.mxu0 0.0
    %3310 = vmatpush1.msra.mxu0 %v1052
    %3311 = vmatprep.subr.mxu0 0.0
    %3312 = vmatpush1.msra.mxu0 %v1055
    %3313 = vmatprep.subr.mxu0 0.0
    %3314 = vmatpush1.msra.mxu0 %v1058
    %3315 = vmatprep.subr.mxu0 0.0
    %3316 = vmatpush1.msra.mxu0 %v1061
    %3317 = vmatprep.subr.mxu0 0.0
    %3318 = vmatpush1.msra.mxu0 %v1064
    %3319 = vmatprep.subr.mxu0 0.0
    %3320 = vmatpush1.msra.mxu0 %v1067
    %3321 = vmatprep.subr.mxu0 0.0
    %3322 = vmatpush1.msra.mxu0 %v1070
    %3323 = vmatprep.subr.mxu0 0.0
    %3324 = vmatpush1.msra.mxu0 %v1073
    %3325 = vmatprep.subr.mxu0 0.0
    %3326 = vmatpush1.msra.mxu0 %v1076
    %3327 = vmatprep.subr.mxu0 0.0
    %3328 = vmatpush1.msra.mxu0 %v1079
    %3329 = vmatprep.subr.mxu0 0.0
    %3330 = vmatpush1.msra.mxu0 %v1082
    %3331 = vmatprep.subr.mxu0 0.0
    %3332 = vmatpush1.msra.mxu0 %v1085
    %3333 = vmatprep.subr.mxu0 0.0
    %3334 = vmatpush1.msra.mxu0 %v1088
    %3335 = vmatprep.subr.mxu0 0.0
    %3336 = vmatpush1.msra.mxu0 %v1091
    %3337 = vmatprep.subr.mxu0 0.0
    %3338 = vmatpush1.msra.mxu0 %v1094
    %3339 = vmatprep.subr.mxu0 0.0
    %3340 = vmatpush1.msra.mxu0 %v1097
    %3341 = vmatprep.subr.mxu0 0.0
    %3342 = vmatpush1.msra.mxu0 %v1100
    %3343 = vmatprep.subr.mxu0 0.0
    %3344 = vmatpush1.msra.mxu0 %v3035
    %3345 = vmatprep.mubr.f32.mxu0 %v3279
    %3346 = vmatmul.mubr.f32.gmra.mrb[0].mxu0 %v3276
    %v3347 = vpop.f32.mrb[0].mxu0
    %v3348 = vadd.f32 0.0, %v3347
    %v3349 = vpop.f32.mrb[0].mxu0
    %3350 = vdwg.mxu0
    %s3351 = sld [smem:[#allocation7 + $0x1a]]
    %v3352 = vstv %s3351
    %v3353 = vmul.f32 %v3352, %v1850
    %v3354 = vmul.f32 %v3352, %v1852
    %v3355 = vmul.f32 %v3352, %v2131
    %v3356 = vadd.f32 %v3353, 0.0
    %v3357 = vadd.f32 %v3354, 0.0
    %v3358 = vadd.f32 %v3355, 0.0
    %s3359 = sld [smem:[#allocation7 + $0x1b]]
    %v3360 = vstv %s3359
    %v3361 = vmul.f32 %v3360, %v1850
    %v3362 = vmul.f32 %v3360, %v1852
    %v3363 = vmul.f32 %v3360, %v2131
    %3367 = vrot.lane.b32.xlu0 %v3361, 127
    %v3368 = vpop.permute.xlu0 %3367
    %3369 = vrot.lane.b32.xlu0 %v3362, 127
    %v3370 = vpop.permute.xlu0 %3369
    %3371 = vrot.lane.b32.xlu0 %v3363, 127
    %v3372 = vpop.permute.xlu0 %3371
    %v3373 = vsel %vm1421, %v3368, %v3370
    %v3374 = vsel %vm1421, %v3370, %v3372
    %v3378 = vadd.f32 %v3356, %v3373
    %v3379 = vadd.f32 %v3357, %v3374
    %v3380 = vadd.f32 %v3358, %v3372
    %s3381 = sld [smem:[#allocation7 + $0x1c]]
    %v3382 = vstv %s3381
    %v3383 = vmul.f32 %v3382, %v1850
    %v3384 = vmul.f32 %v3382, %v1852
    %v3385 = vmul.f32 %v3382, %v2131
    %3389 = vrot.lane.b32.xlu0 %v3383, 126
    %v3390 = vpop.permute.xlu0 %3389
    %3391 = vrot.lane.b32.xlu0 %v3384, 126
    %v3392 = vpop.permute.xlu0 %3391
    %3393 = vrot.lane.b32.xlu0 %v3385, 126
    %v3394 = vpop.permute.xlu0 %3393
    %v3395 = vsel %vm1449, %v3390, %v3392
    %v3396 = vsel %vm1449, %v3392, %v3394
    %v3400 = vadd.f32 %v3378, %v3395
    %v3401 = vadd.f32 %v3379, %v3396
    %v3402 = vadd.f32 %v3380, %v3394
    %s3403 = sld [smem:[#allocation7 + $0x1d]]
    %v3404 = vstv %s3403
    %v3405 = vmul.f32 %v3404, %v1850
    %v3406 = vmul.f32 %v3404, %v1852
    %v3407 = vmul.f32 %v3404, %v2131
    %3411 = vrot.lane.b32.xlu0 %v3405, 125
    %v3412 = vpop.permute.xlu0 %3411
    %3413 = vrot.lane.b32.xlu0 %v3406, 125
    %v3414 = vpop.permute.xlu0 %3413
    %3415 = vrot.lane.b32.xlu0 %v3407, 125
    %v3416 = vpop.permute.xlu0 %3415
    %v3417 = vsel %vm1477, %v3412, %v3414
    %v3418 = vsel %vm1477, %v3414, %v3416
    %v3422 = vadd.f32 %v3400, %v3417
    %v3423 = vadd.f32 %v3401, %v3418
    %v3424 = vadd.f32 %v3402, %v3416
    %s3425 = sld [smem:[#allocation7 + $0x1e]]
    %v3426 = vstv %s3425
    %v3427 = vmul.f32 %v3426, %v2576
    %v3428 = vmul.f32 %v3426, %v2578
    %v3429 = vmul.f32 %v3426, %v2857
    %v3430 = vadd.f32 %v3422, %v3427
    %v3431 = vadd.f32 %v3423, %v3428
    %v3432 = vadd.f32 %v3424, %v3429
    %s3433 = sld [smem:[#allocation7 + $0x1f]]
    %v3434 = vstv %s3433
    %v3435 = vmul.f32 %v3434, %v2576
    %v3436 = vmul.f32 %v3434, %v2578
    %v3437 = vmul.f32 %v3434, %v2857
    %3441 = vrot.lane.b32.xlu0 %v3435, 127
    %v3442 = vpop.permute.xlu0 %3441
    %3443 = vrot.lane.b32.xlu0 %v3436, 127
    %v3444 = vpop.permute.xlu0 %3443
    %3445 = vrot.lane.b32.xlu0 %v3437, 127
    %v3446 = vpop.permute.xlu0 %3445
    %v3447 = vsel %vm1421, %v3442, %v3444
    %v3448 = vsel %vm1421, %v3444, %v3446
    %v3452 = vadd.f32 %v3430, %v3447
    %v3453 = vadd.f32 %v3431, %v3448
    %v3454 = vadd.f32 %v3432, %v3446
    %s3455 = sld [smem:[#allocation7 + $0x20]]
    %v3456 = vstv %s3455
    %v3457 = vmul.f32 %v3456, %v2576
    %v3458 = vmul.f32 %v3456, %v2578
    %v3459 = vmul.f32 %v3456, %v2857
    %3463 = vrot.lane.b32.xlu0 %v3457, 126
    %v3464 = vpop.permute.xlu0 %3463
    %3465 = vrot.lane.b32.xlu0 %v3458, 126
    %v3466 = vpop.permute.xlu0 %3465
    %3467 = vrot.lane.b32.xlu0 %v3459, 126
    %v3468 = vpop.permute.xlu0 %3467
    %v3469 = vsel %vm1449, %v3464, %v3466
    %v3470 = vsel %vm1449, %v3466, %v3468
    %v3474 = vadd.f32 %v3452, %v3469
    %v3475 = vadd.f32 %v3453, %v3470
    %v3476 = vadd.f32 %v3454, %v3468
    %s3477 = sld [smem:[#allocation7 + $0x21]]
    %v3478 = vstv %s3477
    %v3479 = vmul.f32 %v3478, %v2576
    %v3480 = vmul.f32 %v3478, %v2578
    %v3481 = vmul.f32 %v3478, %v2857
    %3485 = vrot.lane.b32.xlu0 %v3479, 125
    %v3486 = vpop.permute.xlu0 %3485
    %3487 = vrot.lane.b32.xlu0 %v3480, 125
    %v3488 = vpop.permute.xlu0 %3487
    %3489 = vrot.lane.b32.xlu0 %v3481, 125
    %v3490 = vpop.permute.xlu0 %3489
    %v3491 = vsel %vm1477, %v3486, %v3488
    %v3492 = vsel %vm1477, %v3488, %v3490
    %v3496 = vadd.f32 %v3474, %v3491
    %v3497 = vadd.f32 %v3475, %v3492
    %v3498 = vadd.f32 %v3476, %v3490
    %s3499 = sld [smem:[#allocation7 + $0x24]]
    %v3500 = vstv %s3499
    %v3501 = vadd.f32 %v3496, %v3500
    %v3502 = vadd.f32 %v3497, %v3500
    %v3503 = vadd.f32 %v3498, %v3500
    %v3504 = vmax.f32 %v3501, 0.0
    %v3505 = vmax.f32 %v3502, 0.0
    %v3506 = vmax.f32 %v3503, 0.0
    %3510 = vrot.lane.b32.xlu0 %v3504, 126
    %v3511 = vpop.permute.xlu0 %3510
    %3512 = vrot.lane.b32.xlu0 %v3505, 126
    %v3513 = vpop.permute.xlu0 %3512
    %3514 = vrot.lane.b32.xlu0 %v3506, 126
    %v3515 = vpop.permute.xlu0 %3514
    %v3516 = vsel %vm1449, %v3511, %v3513
    %v3517 = vsel %vm1449, %v3513, %v3515
    %v3520 = vmax.f32 %v3504, %v3516
    %v3521 = vmax.f32 %v3505, %v3517
    %v3523 = vsel %vm1421, %v3521, 0
    %3525 = vmatprep.subr.mxu0 0.0
    %3526 = vmatpush1.msra.mxu0 %v1010
    %3527 = vmatprep.subr.mxu0 0.0
    %3528 = vmatpush1.msra.mxu0 %v1013
    %3529 = vmatprep.subr.mxu0 0.0
    %3530 = vmatpush1.msra.mxu0 %v1016
    %3531 = vmatprep.subr.mxu0 0.0
    %3532 = vmatpush1.msra.mxu0 %v1019
    %3533 = vmatprep.subr.mxu0 0.0
    %3534 = vmatpush1.msra.mxu0 %v1022
    %3535 = vmatprep.subr.mxu0 0.0
    %3536 = vmatpush1.msra.mxu0 %v1025
    %3537 = vmatprep.subr.mxu0 0.0
    %3538 = vmatpush1.msra.mxu0 %v1028
    %3539 = vmatprep.subr.mxu0 0.0
    %3540 = vmatpush1.msra.mxu0 %v1031
    %3541 = vmatprep.subr.mxu0 0.0
    %3542 = vmatpush1.msra.mxu0 %v1034
    %3543 = vmatprep.subr.mxu0 0.0
    %3544 = vmatpush1.msra.mxu0 %v1037
    %3545 = vmatprep.subr.mxu0 0.0
    %3546 = vmatpush1.msra.mxu0 %v1040
    %3547 = vmatprep.subr.mxu0 0.0
    %3548 = vmatpush1.msra.mxu0 %v1043
    %3549 = vmatprep.subr.mxu0 0.0
    %3550 = vmatpush1.msra.mxu0 %v1046
    %3551 = vmatprep.subr.mxu0 0.0
    %3552 = vmatpush1.msra.mxu0 %v1049
    %3553 = vmatprep.subr.mxu0 0.0
    %3554 = vmatpush1.msra.mxu0 %v1052
    %3555 = vmatprep.subr.mxu0 0.0
    %3556 = vmatpush1.msra.mxu0 %v1055
    %3557 = vmatprep.subr.mxu0 0.0
    %3558 = vmatpush1.msra.mxu0 %v1058
    %3559 = vmatprep.subr.mxu0 0.0
    %3560 = vmatpush1.msra.mxu0 %v1061
    %3561 = vmatprep.subr.mxu0 0.0
    %3562 = vmatpush1.msra.mxu0 %v1064
    %3563 = vmatprep.subr.mxu0 0.0
    %3564 = vmatpush1.msra.mxu0 %v1067
    %3565 = vmatprep.subr.mxu0 0.0
    %3566 = vmatpush1.msra.mxu0 %v1070
    %3567 = vmatprep.subr.mxu0 0.0
    %3568 = vmatpush1.msra.mxu0 %v1073
    %3569 = vmatprep.subr.mxu0 0.0
    %3570 = vmatpush1.msra.mxu0 %v1076
    %3571 = vmatprep.subr.mxu0 0.0
    %3572 = vmatpush1.msra.mxu0 %v1079
    %3573 = vmatprep.subr.mxu0 0.0
    %3574 = vmatpush1.msra.mxu0 %v1082
    %3575 = vmatprep.subr.mxu0 0.0
    %3576 = vmatpush1.msra.mxu0 %v1085
    %3577 = vmatprep.subr.mxu0 0.0
    %3578 = vmatpush1.msra.mxu0 %v1088
    %3579 = vmatprep.subr.mxu0 0.0
    %3580 = vmatpush1.msra.mxu0 %v1091
    %3581 = vmatprep.subr.mxu0 0.0
    %3582 = vmatpush1.msra.mxu0 %v1094
    %3583 = vmatprep.subr.mxu0 0.0
    %3584 = vmatpush1.msra.mxu0 %v1097
    %3585 = vmatprep.subr.mxu0 0.0
    %3586 = vmatpush1.msra.mxu0 %v1100
    %3587 = vmatprep.subr.mxu0 0.0
    %3588 = vmatpush1.msra.mxu0 %v3035
    %3589 = vmatprep.mubr.f32.mxu0 %v3523
    %3590 = vmatmul.mubr.f32.gmra.mrb[0].mxu0 %v3520
    %v3591 = vpop.f32.mrb[0].mxu0
    %v3592 = vadd.f32 0.0, %v3591
    %v3593 = vpop.f32.mrb[0].mxu0
    %3594 = vdwg.mxu0
    %s3595 = sld [smem:[#allocation7 + $0x25]]
    %v3596 = vstv %s3595
    %v3597 = vmul.f32 %v3596, %v3104
    %v3598 = vadd.f32 %v3597, 0.0
    %s3599 = sld [smem:[#allocation7 + $0x26]]
    %v3600 = vstv %s3599
    %v3601 = vmul.f32 %v3600, %v3104
    %3603 = vrot.lane.b32.xlu0 %v3601, 127
    %v3604 = vpop.permute.xlu0 %3603
    %v3606 = vadd.f32 %v3598, %v3604
    %s3607 = sld [smem:[#allocation7 + $0x27]]
    %v3608 = vstv %s3607
    %v3609 = vmul.f32 %v3608, %v3104
    %3611 = vrot.lane.b32.xlu0 %v3609, 126
    %v3612 = vpop.permute.xlu0 %3611
    %v3614 = vadd.f32 %v3606, %v3612
    %s3615 = sld [smem:[#allocation7 + $0x28]]
    %v3616 = vstv %s3615
    %v3617 = vmul.f32 %v3616, %v3104
    %3619 = vrot.lane.b32.xlu0 %v3617, 125
    %v3620 = vpop.permute.xlu0 %3619
    %v3622 = vadd.f32 %v3614, %v3620
    %s3623 = sld [smem:[#allocation7 + $0x29]]
    %v3624 = vstv %s3623
    %v3625 = vmul.f32 %v3624, %v3348
    %v3626 = vadd.f32 %v3622, %v3625
    %s3627 = sld [smem:[#allocation7 + $0x2a]]
    %v3628 = vstv %s3627
    %v3629 = vmul.f32 %v3628, %v3348
    %3631 = vrot.lane.b32.xlu0 %v3629, 127
    %v3632 = vpop.permute.xlu0 %3631
    %v3634 = vadd.f32 %v3626, %v3632
    %s3635 = sld [smem:[#allocation7 + $0x2b]]
    %v3636 = vstv %s3635
    %v3637 = vmul.f32 %v3636, %v3348
    %3639 = vrot.lane.b32.xlu0 %v3637, 126
    %v3640 = vpop.permute.xlu0 %3639
    %v3642 = vadd.f32 %v3634, %v3640
    %s3643 = sld [smem:[#allocation7 + $0x2c]]
    %v3644 = vstv %s3643
    %v3645 = vmul.f32 %v3644, %v3348
    %3647 = vrot.lane.b32.xlu0 %v3645, 125
    %v3648 = vpop.permute.xlu0 %3647
    %v3650 = vadd.f32 %v3642, %v3648
    %s3651 = sld [smem:[#allocation7 + $0x2d]]
    %v3652 = vstv %s3651
    %v3653 = vmul.f32 %v3652, %v3592
    %v3654 = vadd.f32 %v3650, %v3653
    %s3655 = sld [smem:[#allocation7 + $0x2e]]
    %v3656 = vstv %s3655
    %v3657 = vmul.f32 %v3656, %v3592
    %3659 = vrot.lane.b32.xlu0 %v3657, 127
    %v3660 = vpop.permute.xlu0 %3659
    %v3662 = vadd.f32 %v3654, %v3660
    %s3663 = sld [smem:[#allocation7 + $0x2f]]
    %v3664 = vstv %s3663
    %v3665 = vmul.f32 %v3664, %v3592
    %3667 = vrot.lane.b32.xlu0 %v3665, 126
    %v3668 = vpop.permute.xlu0 %3667
    %v3670 = vadd.f32 %v3662, %v3668
    %s3671 = sld [smem:[#allocation7 + $0x30]]
    %v3672 = vstv %s3671
    %v3673 = vmul.f32 %v3672, %v3592
    %3675 = vrot.lane.b32.xlu0 %v3673, 125
    %v3676 = vpop.permute.xlu0 %3675
    %v3678 = vadd.f32 %v3670, %v3676
    %s3679 = sld [smem:[#allocation7 + $0x55]]
    %v3680 = vstv %s3679
    %v3681 = vadd.f32 %v3678, %v3680
    %v3682 = vmax.f32 %v3681, 0.0
    %3684 = vrot.lane.b32.xlu0 %v3682, 126
    %v3685 = vpop.permute.xlu0 %3684
    %v3687 = vmax.f32 %v3682, %v3685
    %vm3688 = vcmask 515072
    %v3690 = vsel %vm3688, %v3687, 0
    %v3693 = vsel %vm1560, %v1031, 0
    %3695 = vmatprep.subr.mxu0 0.0
    %3696 = vmatpush1.msra.mxu0 %v1010
    %3697 = vmatprep.subr.mxu0 0.0
    %3698 = vmatpush1.msra.mxu0 %v1013
    %3699 = vmatprep.subr.mxu0 0.0
    %3700 = vmatpush1.msra.mxu0 %v1016
    %3701 = vmatprep.subr.mxu0 0.0
    %3702 = vmatpush1.msra.mxu0 %v1019
    %3703 = vmatprep.subr.mxu0 0.0
    %3704 = vmatpush1.msra.mxu0 %v1022
    %3705 = vmatprep.subr.mxu0 0.0
    %3706 = vmatpush1.msra.mxu0 %v1025
    %3707 = vmatprep.subr.mxu0 0.0
    %3708 = vmatpush1.msra.mxu0 %v1028
    %3709 = vmatprep.subr.mxu0 0.0
    %3710 = vmatpush1.msra.mxu0 %v3693
    %3711 = vmatprep.subr.mxu0 0.0
    %3712 = vmatpush1.msra.mxu0 0.0
    %3713 = vmatprep.subr.mxu0 0.0
    %3714 = vmatpush1.msra.mxu0 0.0
    %3715 = vmatprep.subr.mxu0 0.0
    %3716 = vmatpush1.msra.mxu0 0.0
    %3717 = vmatprep.subr.mxu0 0.0
    %3718 = vmatpush1.msra.mxu0 0.0
    %3719 = vmatprep.subr.mxu0 0.0
    %3720 = vmatpush1.msra.mxu0 0.0
    %3721 = vmatprep.subr.mxu0 0.0
    %3722 = vmatpush1.msra.mxu0 0.0
    %3723 = vmatprep.subr.mxu0 0.0
    %3724 = vmatpush1.msra.mxu0 0.0
    %3725 = vmatprep.subr.mxu0 0.0
    %3726 = vmatpush1.msra.mxu0 0.0
    %3727 = vmatprep.subr.mxu0 0.0
    %3728 = vmatpush1.msra.mxu0 0.0
    %3729 = vmatprep.subr.mxu0 0.0
    %3730 = vmatpush1.msra.mxu0 0.0
    %3731 = vmatprep.subr.mxu0 0.0
    %3732 = vmatpush1.msra.mxu0 0.0
    %3733 = vmatprep.subr.mxu0 0.0
    %3734 = vmatpush1.msra.mxu0 0.0
    %3735 = vmatprep.subr.mxu0 0.0
    %3736 = vmatpush1.msra.mxu0 0.0
    %3737 = vmatprep.subr.mxu0 0.0
    %3738 = vmatpush1.msra.mxu0 0.0
    %3739 = vmatprep.subr.mxu0 0.0
    %3740 = vmatpush1.msra.mxu0 0.0
    %3741 = vmatprep.subr.mxu0 0.0
    %3742 = vmatpush1.msra.mxu0 0.0
    %3743 = vmatprep.subr.mxu0 0.0
    %3744 = vmatpush1.msra.mxu0 0.0
    %3745 = vmatprep.subr.mxu0 0.0
    %3746 = vmatpush1.msra.mxu0 0.0
    %3747 = vmatprep.subr.mxu0 0.0
    %3748 = vmatpush1.msra.mxu0 0.0
    %3749 = vmatprep.subr.mxu0 0.0
    %3750 = vmatpush1.msra.mxu0 0.0
    %3751 = vmatprep.subr.mxu0 0.0
    %3752 = vmatpush1.msra.mxu0 0.0
    %3753 = vmatprep.subr.mxu0 0.0
    %3754 = vmatpush1.msra.mxu0 0.0
    %3755 = vmatprep.subr.mxu0 0.0
    %3756 = vmatpush1.msra.mxu0 0.0
    %3757 = vmatprep.subr.mxu0 0.0
    %3758 = vmatpush1.msra.mxu0 0.0
    %3759 = vmatprep.mubr.f32.mxu0 0.0
    %3760 = vmatmul.mubr.f32.gmra.mrb[0].mxu0 %v3690
    %v3761 = vpop.f32.mrb[0].mxu0
    %v3762 = vadd.f32 0.0, %v3761
    %v3763 = vpop.f32.mrb[0].mxu0
    %3764 = vdwg.mxu0
    %s3765 = sld [smem:[#allocation7 + $0x31]]
    %v3766 = vstv %s3765
    %v3767 = vmul.f32 %v3766, %v3104
    %v3768 = vadd.f32 %v3767, 0.0
    %s3769 = sld [smem:[#allocation7 + $0x32]]
    %v3770 = vstv %s3769
    %v3771 = vmul.f32 %v3770, %v3104
    %3773 = vrot.lane.b32.xlu0 %v3771, 127
    %v3774 = vpop.permute.xlu0 %3773
    %v3776 = vadd.f32 %v3768, %v3774
    %s3777 = sld [smem:[#allocation7 + $0x33]]
    %v3778 = vstv %s3777
    %v3779 = vmul.f32 %v3778, %v3104
    %3781 = vrot.lane.b32.xlu0 %v3779, 126
    %v3782 = vpop.permute.xlu0 %3781
    %v3784 = vadd.f32 %v3776, %v3782
    %s3785 = sld [smem:[#allocation7 + $0x34]]
    %v3786 = vstv %s3785
    %v3787 = vmul.f32 %v3786, %v3104
    %3789 = vrot.lane.b32.xlu0 %v3787, 125
    %v3790 = vpop.permute.xlu0 %3789
    %v3792 = vadd.f32 %v3784, %v3790
    %s3793 = sld [smem:[#allocation7 + $0x35]]
    %v3794 = vstv %s3793
    %v3795 = vmul.f32 %v3794, %v3348
    %v3796 = vadd.f32 %v3792, %v3795
    %s3797 = sld [smem:[#allocation7 + $0x36]]
    %v3798 = vstv %s3797
    %v3799 = vmul.f32 %v3798, %v3348
    %3801 = vrot.lane.b32.xlu0 %v3799, 127
    %v3802 = vpop.permute.xlu0 %3801
    %v3804 = vadd.f32 %v3796, %v3802
    %s3805 = sld [smem:[#allocation7 + $0x37]]
    %v3806 = vstv %s3805
    %v3807 = vmul.f32 %v3806, %v3348
    %3809 = vrot.lane.b32.xlu0 %v3807, 126
    %v3810 = vpop.permute.xlu0 %3809
    %v3812 = vadd.f32 %v3804, %v3810
    %s3813 = sld [smem:[#allocation7 + $0x38]]
    %v3814 = vstv %s3813
    %v3815 = vmul.f32 %v3814, %v3348
    %3817 = vrot.lane.b32.xlu0 %v3815, 125
    %v3818 = vpop.permute.xlu0 %3817
    %v3820 = vadd.f32 %v3812, %v3818
    %s3821 = sld [smem:[#allocation7 + $0x39]]
    %v3822 = vstv %s3821
    %v3823 = vmul.f32 %v3822, %v3592
    %v3824 = vadd.f32 %v3820, %v3823
    %s3825 = sld [smem:[#allocation7 + $0x3a]]
    %v3826 = vstv %s3825
    %v3827 = vmul.f32 %v3826, %v3592
    %3829 = vrot.lane.b32.xlu0 %v3827, 127
    %v3830 = vpop.permute.xlu0 %3829
    %v3832 = vadd.f32 %v3824, %v3830
    %s3833 = sld [smem:[#allocation7 + $0x3b]]
    %v3834 = vstv %s3833
    %v3835 = vmul.f32 %v3834, %v3592
    %3837 = vrot.lane.b32.xlu0 %v3835, 126
    %v3838 = vpop.permute.xlu0 %3837
    %v3840 = vadd.f32 %v3832, %v3838
    %s3841 = sld [smem:[#allocation7 + $0x3c]]
    %v3842 = vstv %s3841
    %v3843 = vmul.f32 %v3842, %v3592
    %3845 = vrot.lane.b32.xlu0 %v3843, 125
    %v3846 = vpop.permute.xlu0 %3845
    %v3848 = vadd.f32 %v3840, %v3846
    %s3849 = sld [smem:[#allocation7 + $0x56]]
    %v3850 = vstv %s3849
    %v3851 = vadd.f32 %v3848, %v3850
    %v3852 = vmax.f32 %v3851, 0.0
    %3854 = vrot.lane.b32.xlu0 %v3852, 126
    %v3855 = vpop.permute.xlu0 %3854
    %v3857 = vmax.f32 %v3852, %v3855
    %v3859 = vsel %vm3688, %v3857, 0
    %3861 = vmatprep.subr.mxu0 0.0
    %3862 = vmatpush1.msra.mxu0 %v1010
    %3863 = vmatprep.subr.mxu0 0.0
    %3864 = vmatpush1.msra.mxu0 %v1013
    %3865 = vmatprep.subr.mxu0 0.0
    %3866 = vmatpush1.msra.mxu0 %v1016
    %3867 = vmatprep.subr.mxu0 0.0
    %3868 = vmatpush1.msra.mxu0 %v1019
    %3869 = vmatprep.subr.mxu0 0.0
    %3870 = vmatpush1.msra.mxu0 %v1022
    %3871 = vmatprep.subr.mxu0 0.0
    %3872 = vmatpush1.msra.mxu0 %v1025
    %3873 = vmatprep.subr.mxu0 0.0
    %3874 = vmatpush1.msra.mxu0 %v1028
    %3875 = vmatprep.subr.mxu0 0.0
    %3876 = vmatpush1.msra.mxu0 %v3693
    %3877 = vmatprep.subr.mxu0 0.0
    %3878 = vmatpush1.msra.mxu0 0.0
    %3879 = vmatprep.subr.mxu0 0.0
    %3880 = vmatpush1.msra.mxu0 0.0
    %3881 = vmatprep.subr.mxu0 0.0
    %3882 = vmatpush1.msra.mxu0 0.0
    %3883 = vmatprep.subr.mxu0 0.0
    %3884 = vmatpush1.msra.mxu0 0.0
    %3885 = vmatprep.subr.mxu0 0.0
    %3886 = vmatpush1.msra.mxu0 0.0
    %3887 = vmatprep.subr.mxu0 0.0
    %3888 = vmatpush1.msra.mxu0 0.0
    %3889 = vmatprep.subr.mxu0 0.0
    %3890 = vmatpush1.msra.mxu0 0.0
    %3891 = vmatprep.subr.mxu0 0.0
    %3892 = vmatpush1.msra.mxu0 0.0
    %3893 = vmatprep.subr.mxu0 0.0
    %3894 = vmatpush1.msra.mxu0 0.0
    %3895 = vmatprep.subr.mxu0 0.0
    %3896 = vmatpush1.msra.mxu0 0.0
    %3897 = vmatprep.subr.mxu0 0.0
    %3898 = vmatpush1.msra.mxu0 0.0
    %3899 = vmatprep.subr.mxu0 0.0
    %3900 = vmatpush1.msra.mxu0 0.0
    %3901 = vmatprep.subr.mxu0 0.0
    %3902 = vmatpush1.msra.mxu0 0.0
    %3903 = vmatprep.subr.mxu0 0.0
    %3904 = vmatpush1.msra.mxu0 0.0
    %3905 = vmatprep.subr.mxu0 0.0
    %3906 = vmatpush1.msra.mxu0 0.0
    %3907 = vmatprep.subr.mxu0 0.0
    %3908 = vmatpush1.msra.mxu0 0.0
    %3909 = vmatprep.subr.mxu0 0.0
    %3910 = vmatpush1.msra.mxu0 0.0
    %3911 = vmatprep.subr.mxu0 0.0
    %3912 = vmatpush1.msra.mxu0 0.0
    %3913 = vmatprep.subr.mxu0 0.0
    %3914 = vmatpush1.msra.mxu0 0.0
    %3915 = vmatprep.subr.mxu0 0.0
    %3916 = vmatpush1.msra.mxu0 0.0
    %3917 = vmatprep.subr.mxu0 0.0
    %3918 = vmatpush1.msra.mxu0 0.0
    %3919 = vmatprep.subr.mxu0 0.0
    %3920 = vmatpush1.msra.mxu0 0.0
    %3921 = vmatprep.subr.mxu0 0.0
    %3922 = vmatpush1.msra.mxu0 0.0
    %3923 = vmatprep.subr.mxu0 0.0
    %3924 = vmatpush1.msra.mxu0 0.0
    %3925 = vmatprep.mubr.f32.mxu0 0.0
    %3926 = vmatmul.mubr.f32.gmra.mrb[0].mxu0 %v3859
    %v3927 = vpop.f32.mrb[0].mxu0
    %v3928 = vadd.f32 0.0, %v3927
    %v3929 = vpop.f32.mrb[0].mxu0
    %3930 = vdwg.mxu0
    %s3931 = sld [smem:[#allocation7 + $0x3d]]
    %v3932 = vstv %s3931
    %v3933 = vmul.f32 %v3932, %v3104
    %v3934 = vadd.f32 %v3933, 0.0
    %s3935 = sld [smem:[#allocation7 + $0x3e]]
    %v3936 = vstv %s3935
    %v3937 = vmul.f32 %v3936, %v3104
    %3939 = vrot.lane.b32.xlu0 %v3937, 127
    %v3940 = vpop.permute.xlu0 %3939
    %v3942 = vadd.f32 %v3934, %v3940
    %s3943 = sld [smem:[#allocation7 + $0x3f]]
    %v3944 = vstv %s3943
    %v3945 = vmul.f32 %v3944, %v3104
    %3947 = vrot.lane.b32.xlu0 %v3945, 126
    %v3948 = vpop.permute.xlu0 %3947
    %v3950 = vadd.f32 %v3942, %v3948
    %s3951 = sld [smem:[#allocation7 + $0x40]]
    %v3952 = vstv %s3951
    %v3953 = vmul.f32 %v3952, %v3104
    %3955 = vrot.lane.b32.xlu0 %v3953, 125
    %v3956 = vpop.permute.xlu0 %3955
    %v3958 = vadd.f32 %v3950, %v3956
    %s3959 = sld [smem:[#allocation7 + $0x41]]
    %v3960 = vstv %s3959
    %v3961 = vmul.f32 %v3960, %v3348
    %v3962 = vadd.f32 %v3958, %v3961
    %s3963 = sld [smem:[#allocation7 + $0x42]]
    %v3964 = vstv %s3963
    %v3965 = vmul.f32 %v3964, %v3348
    %3967 = vrot.lane.b32.xlu0 %v3965, 127
    %v3968 = vpop.permute.xlu0 %3967
    %v3970 = vadd.f32 %v3962, %v3968
    %s3971 = sld [smem:[#allocation7 + $0x43]]
    %v3972 = vstv %s3971
    %v3973 = vmul.f32 %v3972, %v3348
    %3975 = vrot.lane.b32.xlu0 %v3973, 126
    %v3976 = vpop.permute.xlu0 %3975
    %v3978 = vadd.f32 %v3970, %v3976
    %s3979 = sld [smem:[#allocation7 + $0x44]]
    %v3980 = vstv %s3979
    %v3981 = vmul.f32 %v3980, %v3348
    %3983 = vrot.lane.b32.xlu0 %v3981, 125
    %v3984 = vpop.permute.xlu0 %3983
    %v3986 = vadd.f32 %v3978, %v3984
    %s3987 = sld [smem:[#allocation7 + $0x45]]
    %v3988 = vstv %s3987
    %v3989 = vmul.f32 %v3988, %v3592
    %v3990 = vadd.f32 %v3986, %v3989
    %s3991 = sld [smem:[#allocation7 + $0x46]]
    %v3992 = vstv %s3991
    %v3993 = vmul.f32 %v3992, %v3592
    %3995 = vrot.lane.b32.xlu0 %v3993, 127
    %v3996 = vpop.permute.xlu0 %3995
    %v3998 = vadd.f32 %v3990, %v3996
    %s3999 = sld [smem:[#allocation7 + $0x47]]
    %v4000 = vstv %s3999
    %v4001 = vmul.f32 %v4000, %v3592
    %4003 = vrot.lane.b32.xlu0 %v4001, 126
    %v4004 = vpop.permute.xlu0 %4003
    %v4006 = vadd.f32 %v3998, %v4004
    %s4007 = sld [smem:[#allocation7 + $0x48]]
    %v4008 = vstv %s4007
    %v4009 = vmul.f32 %v4008, %v3592
    %4011 = vrot.lane.b32.xlu0 %v4009, 125
    %v4012 = vpop.permute.xlu0 %4011
    %v4014 = vadd.f32 %v4006, %v4012
    %s4015 = sld [smem:[#allocation7 + $0x57]]
    %v4016 = vstv %s4015
    %v4017 = vadd.f32 %v4014, %v4016
    %v4018 = vmax.f32 %v4017, 0.0
    %4020 = vrot.lane.b32.xlu0 %v4018, 126
    %v4021 = vpop.permute.xlu0 %4020
    %v4023 = vmax.f32 %v4018, %v4021
    %v4025 = vsel %vm3688, %v4023, 0
    %4027 = vmatprep.subr.mxu0 0.0
    %4028 = vmatpush1.msra.mxu0 %v1010
    %4029 = vmatprep.subr.mxu0 0.0
    %4030 = vmatpush1.msra.mxu0 %v1013
    %4031 = vmatprep.subr.mxu0 0.0
    %4032 = vmatpush1.msra.mxu0 %v1016
    %4033 = vmatprep.subr.mxu0 0.0
    %4034 = vmatpush1.msra.mxu0 %v1019
    %4035 = vmatprep.subr.mxu0 0.0
    %4036 = vmatpush1.msra.mxu0 %v1022
    %4037 = vmatprep.subr.mxu0 0.0
    %4038 = vmatpush1.msra.mxu0 %v1025
    %4039 = vmatprep.subr.mxu0 0.0
    %4040 = vmatpush1.msra.mxu0 %v1028
    %4041 = vmatprep.subr.mxu0 0.0
    %4042 = vmatpush1.msra.mxu0 %v3693
    %4043 = vmatprep.subr.mxu0 0.0
    %4044 = vmatpush1.msra.mxu0 0.0
    %4045 = vmatprep.subr.mxu0 0.0
    %4046 = vmatpush1.msra.mxu0 0.0
    %4047 = vmatprep.subr.mxu0 0.0
    %4048 = vmatpush1.msra.mxu0 0.0
    %4049 = vmatprep.subr.mxu0 0.0
    %4050 = vmatpush1.msra.mxu0 0.0
    %4051 = vmatprep.subr.mxu0 0.0
    %4052 = vmatpush1.msra.mxu0 0.0
    %4053 = vmatprep.subr.mxu0 0.0
    %4054 = vmatpush1.msra.mxu0 0.0
    %4055 = vmatprep.subr.mxu0 0.0
    %4056 = vmatpush1.msra.mxu0 0.0
    %4057 = vmatprep.subr.mxu0 0.0
    %4058 = vmatpush1.msra.mxu0 0.0
    %4059 = vmatprep.subr.mxu0 0.0
    %4060 = vmatpush1.msra.mxu0 0.0
    %4061 = vmatprep.subr.mxu0 0.0
    %4062 = vmatpush1.msra.mxu0 0.0
    %4063 = vmatprep.subr.mxu0 0.0
    %4064 = vmatpush1.msra.mxu0 0.0
    %4065 = vmatprep.subr.mxu0 0.0
    %4066 = vmatpush1.msra.mxu0 0.0
    %4067 = vmatprep.subr.mxu0 0.0
    %4068 = vmatpush1.msra.mxu0 0.0
    %4069 = vmatprep.subr.mxu0 0.0
    %4070 = vmatpush1.msra.mxu0 0.0
    %4071 = vmatprep.subr.mxu0 0.0
    %4072 = vmatpush1.msra.mxu0 0.0
    %4073 = vmatprep.subr.mxu0 0.0
    %4074 = vmatpush1.msra.mxu0 0.0
    %4075 = vmatprep.subr.mxu0 0.0
    %4076 = vmatpush1.msra.mxu0 0.0
    %4077 = vmatprep.subr.mxu0 0.0
    %4078 = vmatpush1.msra.mxu0 0.0
    %4079 = vmatprep.subr.mxu0 0.0
    %4080 = vmatpush1.msra.mxu0 0.0
    %4081 = vmatprep.subr.mxu0 0.0
    %4082 = vmatpush1.msra.mxu0 0.0
    %4083 = vmatprep.subr.mxu0 0.0
    %4084 = vmatpush1.msra.mxu0 0.0
    %4085 = vmatprep.subr.mxu0 0.0
    %4086 = vmatpush1.msra.mxu0 0.0
    %4087 = vmatprep.subr.mxu0 0.0
    %4088 = vmatpush1.msra.mxu0 0.0
    %4089 = vmatprep.subr.mxu0 0.0
    %4090 = vmatpush1.msra.mxu0 0.0
    %4091 = vmatprep.mubr.f32.mxu0 0.0
    %4092 = vmatmul.mubr.f32.gmra.mrb[0].mxu0 %v4025
    %v4093 = vpop.f32.mrb[0].mxu0
    %v4094 = vadd.f32 0.0, %v4093
    %v4095 = vpop.f32.mrb[0].mxu0
    %4096 = vdwg.mxu0
    %s4097 = sld [smem:[#allocation7 + $0x49]]
    %v4098 = vstv %s4097
    %v4099 = vmul.f32 %v4098, %v3104
    %v4100 = vadd.f32 %v4099, 0.0
    %s4101 = sld [smem:[#allocation7 + $0x4a]]
    %v4102 = vstv %s4101
    %v4103 = vmul.f32 %v4102, %v3104
    %4105 = vrot.lane.b32.xlu0 %v4103, 127
    %v4106 = vpop.permute.xlu0 %4105
    %v4108 = vadd.f32 %v4100, %v4106
    %s4109 = sld [smem:[#allocation7 + $0x4b]]
    %v4110 = vstv %s4109
    %v4111 = vmul.f32 %v4110, %v3104
    %4113 = vrot.lane.b32.xlu0 %v4111, 126
    %v4114 = vpop.permute.xlu0 %4113
    %v4116 = vadd.f32 %v4108, %v4114
    %s4117 = sld [smem:[#allocation7 + $0x4c]]
    %v4118 = vstv %s4117
    %v4119 = vmul.f32 %v4118, %v3104
    %4121 = vrot.lane.b32.xlu0 %v4119, 125
    %v4122 = vpop.permute.xlu0 %4121
    %v4124 = vadd.f32 %v4116, %v4122
    %s4125 = sld [smem:[#allocation7 + $0x4d]]
    %v4126 = vstv %s4125
    %v4127 = vmul.f32 %v4126, %v3348
    %v4128 = vadd.f32 %v4124, %v4127
    %s4129 = sld [smem:[#allocation7 + $0x4e]]
    %v4130 = vstv %s4129
    %v4131 = vmul.f32 %v4130, %v3348
    %4133 = vrot.lane.b32.xlu0 %v4131, 127
    %v4134 = vpop.permute.xlu0 %4133
    %v4136 = vadd.f32 %v4128, %v4134
    %s4137 = sld [smem:[#allocation7 + $0x4f]]
    %v4138 = vstv %s4137
    %v4139 = vmul.f32 %v4138, %v3348
    %4141 = vrot.lane.b32.xlu0 %v4139, 126
    %v4142 = vpop.permute.xlu0 %4141
    %v4144 = vadd.f32 %v4136, %v4142
    %s4145 = sld [smem:[#allocation7 + $0x50]]
    %v4146 = vstv %s4145
    %v4147 = vmul.f32 %v4146, %v3348
    %4149 = vrot.lane.b32.xlu0 %v4147, 125
    %v4150 = vpop.permute.xlu0 %4149
    %v4152 = vadd.f32 %v4144, %v4150
    %s4153 = sld [smem:[#allocation7 + $0x51]]
    %v4154 = vstv %s4153
    %v4155 = vmul.f32 %v4154, %v3592
    %v4156 = vadd.f32 %v4152, %v4155
    %s4157 = sld [smem:[#allocation7 + $0x52]]
    %v4158 = vstv %s4157
    %v4159 = vmul.f32 %v4158, %v3592
    %4161 = vrot.lane.b32.xlu0 %v4159, 127
    %v4162 = vpop.permute.xlu0 %4161
    %v4164 = vadd.f32 %v4156, %v4162
    %s4165 = sld [smem:[#allocation7 + $0x53]]
    %v4166 = vstv %s4165
    %v4167 = vmul.f32 %v4166, %v3592
    %4169 = vrot.lane.b32.xlu0 %v4167, 126
    %v4170 = vpop.permute.xlu0 %4169
    %v4172 = vadd.f32 %v4164, %v4170
    %s4173 = sld [smem:[#allocation7 + $0x54]]
    %v4174 = vstv %s4173
    %v4175 = vmul.f32 %v4174, %v3592
    %4177 = vrot.lane.b32.xlu0 %v4175, 125
    %v4178 = vpop.permute.xlu0 %4177
    %v4180 = vadd.f32 %v4172, %v4178
    %s4181 = sld [smem:[#allocation7 + $0x58]]
    %v4182 = vstv %s4181
    %v4183 = vadd.f32 %v4180, %v4182
    %v4184 = vmax.f32 %v4183, 0.0
    %4186 = vrot.lane.b32.xlu0 %v4184, 126
    %v4187 = vpop.permute.xlu0 %4186
    %v4189 = vmax.f32 %v4184, %v4187
    %v4191 = vsel %vm3688, %v4189, 0
    %4193 = vmatprep.subr.mxu0 0.0
    %4194 = vmatpush1.msra.mxu0 %v1010
    %4195 = vmatprep.subr.mxu0 0.0
    %4196 = vmatpush1.msra.mxu0 %v1013
    %4197 = vmatprep.subr.mxu0 0.0
    %4198 = vmatpush1.msra.mxu0 %v1016
    %4199 = vmatprep.subr.mxu0 0.0
    %4200 = vmatpush1.msra.mxu0 %v1019
    %4201 = vmatprep.subr.mxu0 0.0
    %4202 = vmatpush1.msra.mxu0 %v1022
    %4203 = vmatprep.subr.mxu0 0.0
    %4204 = vmatpush1.msra.mxu0 %v1025
    %4205 = vmatprep.subr.mxu0 0.0
    %4206 = vmatpush1.msra.mxu0 %v1028
    %4207 = vmatprep.subr.mxu0 0.0
    %4208 = vmatpush1.msra.mxu0 %v3693
    %4209 = vmatprep.subr.mxu0 0.0
    %4210 = vmatpush1.msra.mxu0 0.0
    %4211 = vmatprep.subr.mxu0 0.0
    %4212 = vmatpush1.msra.mxu0 0.0
    %4213 = vmatprep.subr.mxu0 0.0
    %4214 = vmatpush1.msra.mxu0 0.0
    %4215 = vmatprep.subr.mxu0 0.0
    %4216 = vmatpush1.msra.mxu0 0.0
    %4217 = vmatprep.subr.mxu0 0.0
    %4218 = vmatpush1.msra.mxu0 0.0
    %4219 = vmatprep.subr.mxu0 0.0
    %4220 = vmatpush1.msra.mxu0 0.0
    %4221 = vmatprep.subr.mxu0 0.0
    %4222 = vmatpush1.msra.mxu0 0.0
    %4223 = vmatprep.subr.mxu0 0.0
    %4224 = vmatpush1.msra.mxu0 0.0
    %4225 = vmatprep.subr.mxu0 0.0
    %4226 = vmatpush1.msra.mxu0 0.0
    %4227 = vmatprep.subr.mxu0 0.0
    %4228 = vmatpush1.msra.mxu0 0.0
    %4229 = vmatprep.subr.mxu0 0.0
    %4230 = vmatpush1.msra.mxu0 0.0
    %4231 = vmatprep.subr.mxu0 0.0
    %4232 = vmatpush1.msra.mxu0 0.0
    %4233 = vmatprep.subr.mxu0 0.0
    %4234 = vmatpush1.msra.mxu0 0.0
    %4235 = vmatprep.subr.mxu0 0.0
    %4236 = vmatpush1.msra.mxu0 0.0
    %4237 = vmatprep.subr.mxu0 0.0
    %4238 = vmatpush1.msra.mxu0 0.0
    %4239 = vmatprep.subr.mxu0 0.0
    %4240 = vmatpush1.msra.mxu0 0.0
    %4241 = vmatprep.subr.mxu0 0.0
    %4242 = vmatpush1.msra.mxu0 0.0
    %4243 = vmatprep.subr.mxu0 0.0
    %4244 = vmatpush1.msra.mxu0 0.0
    %4245 = vmatprep.subr.mxu0 0.0
    %4246 = vmatpush1.msra.mxu0 0.0
    %4247 = vmatprep.subr.mxu0 0.0
    %4248 = vmatpush1.msra.mxu0 0.0
    %4249 = vmatprep.subr.mxu0 0.0
    %4250 = vmatpush1.msra.mxu0 0.0
    %4251 = vmatprep.subr.mxu0 0.0
    %4252 = vmatpush1.msra.mxu0 0.0
    %4253 = vmatprep.subr.mxu0 0.0
    %4254 = vmatpush1.msra.mxu0 0.0
    %4255 = vmatprep.subr.mxu0 0.0
    %4256 = vmatpush1.msra.mxu0 0.0
    %4257 = vmatprep.mubr.f32.mxu0 0.0
    %4258 = vmatmul.mubr.f32.gmra.mrb[0].mxu0 %v4191
    %v4259 = vpop.f32.mrb[0].mxu0
    %v4260 = vadd.f32 0.0, %v4259
    %v4261 = vpop.f32.mrb[0].mxu0
    %4262 = vdwg.mxu0
    %v4263 = vmul.u32 %v233, 4
    %vm4264 = vcmp.eq.s32.totalorder %v104, %v4263
    %vm4265 = vcmp.eq.s32.totalorder %v105, %v4263
    %v4266 = vsel %vm4264, 1, 0
    %v4267 = vsel %vm4265, 1, 0
    %v4268 = vcvt.s32.f32 %v4266
    %v4269 = vcvt.s32.f32 %v4267
    %s4270 = sld [smem:[#allocation7 + $0x59]]
    %v4271 = vstv %s4270
    %v4272 = vmul.f32 %v4271, %v3762
    %v4273 = vadd.f32 %v4272, 0.0
    %s4274 = sld [smem:[#allocation7 + $0x5a]]
    %v4275 = vstv %s4274
    %v4276 = vmul.f32 %v4275, %v3762
    %4278 = vrot.lane.b32.xlu0 %v4276, 127
    %v4279 = vpop.permute.xlu0 %4278
    %v4281 = vadd.f32 %v4273, %v4279
    %s4282 = sld [smem:[#allocation7 + $0x5b]]
    %v4283 = vstv %s4282
    %v4284 = vmul.f32 %v4283, %v3762
    %4286 = vrot.lane.b32.xlu0 %v4284, 126
    %v4287 = vpop.permute.xlu0 %4286
    %v4289 = vadd.f32 %v4281, %v4287
    %s4290 = sld [smem:[#allocation7 + $0x5c]]
    %v4291 = vstv %s4290
    %v4292 = vmul.f32 %v4291, %v3762
    %4294 = vrot.lane.b32.xlu0 %v4292, 125
    %v4295 = vpop.permute.xlu0 %4294
    %v4297 = vadd.f32 %v4289, %v4295
    %s4298 = sld [smem:[#allocation7 + $0x5d]]
    %v4299 = vstv %s4298
    %v4300 = vmul.f32 %v4299, %v3928
    %v4301 = vadd.f32 %v4297, %v4300
    %s4302 = sld [smem:[#allocation7 + $0x5e]]
    %v4303 = vstv %s4302
    %v4304 = vmul.f32 %v4303, %v3928
    %4306 = vrot.lane.b32.xlu0 %v4304, 127
    %v4307 = vpop.permute.xlu0 %4306
    %v4309 = vadd.f32 %v4301, %v4307
    %s4310 = sld [smem:[#allocation7 + $0x5f]]
    %v4311 = vstv %s4310
    %v4312 = vmul.f32 %v4311, %v3928
    %4314 = vrot.lane.b32.xlu0 %v4312, 126
    %v4315 = vpop.permute.xlu0 %4314
    %v4317 = vadd.f32 %v4309, %v4315
    %s4318 = sld [smem:[#allocation7 + $0x60]]
    %v4319 = vstv %s4318
    %v4320 = vmul.f32 %v4319, %v3928
    %4322 = vrot.lane.b32.xlu0 %v4320, 125
    %v4323 = vpop.permute.xlu0 %4322
    %v4325 = vadd.f32 %v4317, %v4323
    %s4326 = sld [smem:[#allocation7 + $0x61]]
    %v4327 = vstv %s4326
    %v4328 = vmul.f32 %v4327, %v4094
    %v4329 = vadd.f32 %v4325, %v4328
    %s4330 = sld [smem:[#allocation7 + $0x62]]
    %v4331 = vstv %s4330
    %v4332 = vmul.f32 %v4331, %v4094
    %4334 = vrot.lane.b32.xlu0 %v4332, 127
    %v4335 = vpop.permute.xlu0 %4334
    %v4337 = vadd.f32 %v4329, %v4335
    %s4338 = sld [smem:[#allocation7 + $0x63]]
    %v4339 = vstv %s4338
    %v4340 = vmul.f32 %v4339, %v4094
    %4342 = vrot.lane.b32.xlu0 %v4340, 126
    %v4343 = vpop.permute.xlu0 %4342
    %v4345 = vadd.f32 %v4337, %v4343
    %s4346 = sld [smem:[#allocation7 + $0x64]]
    %v4347 = vstv %s4346
    %v4348 = vmul.f32 %v4347, %v4094
    %4350 = vrot.lane.b32.xlu0 %v4348, 125
    %v4351 = vpop.permute.xlu0 %4350
    %v4353 = vadd.f32 %v4345, %v4351
    %s4354 = sld [smem:[#allocation7 + $0x65]]
    %v4355 = vstv %s4354
    %v4356 = vmul.f32 %v4355, %v4260
    %v4357 = vadd.f32 %v4353, %v4356
    %s4358 = sld [smem:[#allocation7 + $0x66]]
    %v4359 = vstv %s4358
    %v4360 = vmul.f32 %v4359, %v4260
    %4362 = vrot.lane.b32.xlu0 %v4360, 127
    %v4363 = vpop.permute.xlu0 %4362
    %v4365 = vadd.f32 %v4357, %v4363
    %s4366 = sld [smem:[#allocation7 + $0x67]]
    %v4367 = vstv %s4366
    %v4368 = vmul.f32 %v4367, %v4260
    %4370 = vrot.lane.b32.xlu0 %v4368, 126
    %v4371 = vpop.permute.xlu0 %4370
    %v4373 = vadd.f32 %v4365, %v4371
    %s4374 = sld [smem:[#allocation7 + $0x68]]
    %v4375 = vstv %s4374
    %v4376 = vmul.f32 %v4375, %v4260
    %4378 = vrot.lane.b32.xlu0 %v4376, 125
    %v4379 = vpop.permute.xlu0 %4378
    %v4381 = vadd.f32 %v4373, %v4379
    %s4382 = sld [smem:[#allocation7 + $0xa9]]
    %v4383 = vstv %s4382
    %v4384 = vadd.f32 %v4381, %v4383
    %v4385 = vmax.f32 %v4384, 0.0
    %4387 = vrot.lane.b32.xlu0 %v4385, 126
    %v4388 = vpop.permute.xlu0 %4387
    %v4390 = vmax.f32 %v4385, %v4388
    %vm4391 = vcmask 121856
    %v4393 = vsel %vm4391, %v4390, 0
    %v4396 = vsel %vm1560, %v4269, 0
    %4398 = vmatprep.subr.mxu0 0.0
    %4399 = vmatpush1.msra.mxu0 %v4268
    %4400 = vmatprep.subr.mxu0 0.0
    %4401 = vmatpush1.msra.mxu0 %v4396
    %4402 = vmatprep.subr.mxu0 0.0
    %4403 = vmatpush1.msra.mxu0 0.0
    %4404 = vmatprep.subr.mxu0 0.0
    %4405 = vmatpush1.msra.mxu0 0.0
    %4406 = vmatprep.subr.mxu0 0.0
    %4407 = vmatpush1.msra.mxu0 0.0
    %4408 = vmatprep.subr.mxu0 0.0
    %4409 = vmatpush1.msra.mxu0 0.0
    %4410 = vmatprep.subr.mxu0 0.0
    %4411 = vmatpush1.msra.mxu0 0.0
    %4412 = vmatprep.subr.mxu0 0.0
    %4413 = vmatpush1.msra.mxu0 0.0
    %4414 = vmatprep.subr.mxu0 0.0
    %4415 = vmatpush1.msra.mxu0 0.0
    %4416 = vmatprep.subr.mxu0 0.0
    %4417 = vmatpush1.msra.mxu0 0.0
    %4418 = vmatprep.subr.mxu0 0.0
    %4419 = vmatpush1.msra.mxu0 0.0
    %4420 = vmatprep.subr.mxu0 0.0
    %4421 = vmatpush1.msra.mxu0 0.0
    %4422 = vmatprep.subr.mxu0 0.0
    %4423 = vmatpush1.msra.mxu0 0.0
    %4424 = vmatprep.subr.mxu0 0.0
    %4425 = vmatpush1.msra.mxu0 0.0
    %4426 = vmatprep.subr.mxu0 0.0
    %4427 = vmatpush1.msra.mxu0 0.0
    %4428 = vmatprep.subr.mxu0 0.0
    %4429 = vmatpush1.msra.mxu0 0.0
    %4430 = vmatprep.subr.mxu0 0.0
    %4431 = vmatpush1.msra.mxu0 0.0
    %4432 = vmatprep.subr.mxu0 0.0
    %4433 = vmatpush1.msra.mxu0 0.0
    %4434 = vmatprep.subr.mxu0 0.0
    %4435 = vmatpush1.msra.mxu0 0.0
    %4436 = vmatprep.subr.mxu0 0.0
    %4437 = vmatpush1.msra.mxu0 0.0
    %4438 = vmatprep.subr.mxu0 0.0
    %4439 = vmatpush1.msra.mxu0 0.0
    %4440 = vmatprep.subr.mxu0 0.0
    %4441 = vmatpush1.msra.mxu0 0.0
    %4442 = vmatprep.subr.mxu0 0.0
    %4443 = vmatpush1.msra.mxu0 0.0
    %4444 = vmatprep.subr.mxu0 0.0
    %4445 = vmatpush1.msra.mxu0 0.0
    %4446 = vmatprep.subr.mxu0 0.0
    %4447 = vmatpush1.msra.mxu0 0.0
    %4448 = vmatprep.subr.mxu0 0.0
    %4449 = vmatpush1.msra.mxu0 0.0
    %4450 = vmatprep.subr.mxu0 0.0
    %4451 = vmatpush1.msra.mxu0 0.0
    %4452 = vmatprep.subr.mxu0 0.0
    %4453 = vmatpush1.msra.mxu0 0.0
    %4454 = vmatprep.subr.mxu0 0.0
    %4455 = vmatpush1.msra.mxu0 0.0
    %4456 = vmatprep.subr.mxu0 0.0
    %4457 = vmatpush1.msra.mxu0 0.0
    %4458 = vmatprep.subr.mxu0 0.0
    %4459 = vmatpush1.msra.mxu0 0.0
    %4460 = vmatprep.subr.mxu0 0.0
    %4461 = vmatpush1.msra.mxu0 0.0
    %4462 = vmatprep.mubr.f32.mxu0 0.0
    %4463 = vmatmul.mubr.f32.gmra.mrb[0].mxu0 %v4393
    %v4464 = vpop.f32.mrb[0].mxu0
    %v4465 = vadd.f32 0.0, %v4464
    %v4466 = vpop.f32.mrb[0].mxu0
    %4467 = vdwg.mxu0
    %s4468 = sld [smem:[#allocation7 + $0x69]]
    %v4469 = vstv %s4468
    %v4470 = vmul.f32 %v4469, %v3762
    %v4471 = vadd.f32 %v4470, 0.0
    %s4472 = sld [smem:[#allocation7 + $0x6a]]
    %v4473 = vstv %s4472
    %v4474 = vmul.f32 %v4473, %v3762
    %4476 = vrot.lane.b32.xlu0 %v4474, 127
    %v4477 = vpop.permute.xlu0 %4476
    %v4479 = vadd.f32 %v4471, %v4477
    %s4480 = sld [smem:[#allocation7 + $0x6b]]
    %v4481 = vstv %s4480
    %v4482 = vmul.f32 %v4481, %v3762
    %4484 = vrot.lane.b32.xlu0 %v4482, 126
    %v4485 = vpop.permute.xlu0 %4484
    %v4487 = vadd.f32 %v4479, %v4485
    %s4488 = sld [smem:[#allocation7 + $0x6c]]
    %v4489 = vstv %s4488
    %v4490 = vmul.f32 %v4489, %v3762
    %4492 = vrot.lane.b32.xlu0 %v4490, 125
    %v4493 = vpop.permute.xlu0 %4492
    %v4495 = vadd.f32 %v4487, %v4493
    %s4496 = sld [smem:[#allocation7 + $0x6d]]
    %v4497 = vstv %s4496
    %v4498 = vmul.f32 %v4497, %v3928
    %v4499 = vadd.f32 %v4495, %v4498
    %s4500 = sld [smem:[#allocation7 + $0x6e]]
    %v4501 = vstv %s4500
    %v4502 = vmul.f32 %v4501, %v3928
    %4504 = vrot.lane.b32.xlu0 %v4502, 127
    %v4505 = vpop.permute.xlu0 %4504
    %v4507 = vadd.f32 %v4499, %v4505
    %s4508 = sld [smem:[#allocation7 + $0x6f]]
    %v4509 = vstv %s4508
    %v4510 = vmul.f32 %v4509, %v3928
    %4512 = vrot.lane.b32.xlu0 %v4510, 126
    %v4513 = vpop.permute.xlu0 %4512
    %v4515 = vadd.f32 %v4507, %v4513
    %s4516 = sld [smem:[#allocation7 + $0x70]]
    %v4517 = vstv %s4516
    %v4518 = vmul.f32 %v4517, %v3928
    %4520 = vrot.lane.b32.xlu0 %v4518, 125
    %v4521 = vpop.permute.xlu0 %4520
    %v4523 = vadd.f32 %v4515, %v4521
    %s4524 = sld [smem:[#allocation7 + $0x71]]
    %v4525 = vstv %s4524
    %v4526 = vmul.f32 %v4525, %v4094
    %v4527 = vadd.f32 %v4523, %v4526
    %s4528 = sld [smem:[#allocation7 + $0x72]]
    %v4529 = vstv %s4528
    %v4530 = vmul.f32 %v4529, %v4094
    %4532 = vrot.lane.b32.xlu0 %v4530, 127
    %v4533 = vpop.permute.xlu0 %4532
    %v4535 = vadd.f32 %v4527, %v4533
    %s4536 = sld [smem:[#allocation7 + $0x73]]
    %v4537 = vstv %s4536
    %v4538 = vmul.f32 %v4537, %v4094
    %4540 = vrot.lane.b32.xlu0 %v4538, 126
    %v4541 = vpop.permute.xlu0 %4540
    %v4543 = vadd.f32 %v4535, %v4541
    %s4544 = sld [smem:[#allocation7 + $0x74]]
    %v4545 = vstv %s4544
    %v4546 = vmul.f32 %v4545, %v4094
    %4548 = vrot.lane.b32.xlu0 %v4546, 125
    %v4549 = vpop.permute.xlu0 %4548
    %v4551 = vadd.f32 %v4543, %v4549
    %s4552 = sld [smem:[#allocation7 + $0x75]]
    %v4553 = vstv %s4552
    %v4554 = vmul.f32 %v4553, %v4260
    %v4555 = vadd.f32 %v4551, %v4554
    %s4556 = sld [smem:[#allocation7 + $0x76]]
    %v4557 = vstv %s4556
    %v4558 = vmul.f32 %v4557, %v4260
    %4560 = vrot.lane.b32.xlu0 %v4558, 127
    %v4561 = vpop.permute.xlu0 %4560
    %v4563 = vadd.f32 %v4555, %v4561
    %s4564 = sld [smem:[#allocation7 + $0x77]]
    %v4565 = vstv %s4564
    %v4566 = vmul.f32 %v4565, %v4260
    %4568 = vrot.lane.b32.xlu0 %v4566, 126
    %v4569 = vpop.permute.xlu0 %4568
    %v4571 = vadd.f32 %v4563, %v4569
    %s4572 = sld [smem:[#allocation7 + $0x78]]
    %v4573 = vstv %s4572
    %v4574 = vmul.f32 %v4573, %v4260
    %4576 = vrot.lane.b32.xlu0 %v4574, 125
    %v4577 = vpop.permute.xlu0 %4576
    %v4579 = vadd.f32 %v4571, %v4577
    %s4580 = sld [smem:[#allocation7 + $0xaa]]
    %v4581 = vstv %s4580
    %v4582 = vadd.f32 %v4579, %v4581
    %v4583 = vmax.f32 %v4582, 0.0
    %4585 = vrot.lane.b32.xlu0 %v4583, 126
    %v4586 = vpop.permute.xlu0 %4585
    %v4588 = vmax.f32 %v4583, %v4586
    %v4590 = vsel %vm4391, %v4588, 0
    %4592 = vmatprep.subr.mxu0 0.0
    %4593 = vmatpush1.msra.mxu0 %v4268
    %4594 = vmatprep.subr.mxu0 0.0
    %4595 = vmatpush1.msra.mxu0 %v4396
    %4596 = vmatprep.subr.mxu0 0.0
    %4597 = vmatpush1.msra.mxu0 0.0
    %4598 = vmatprep.subr.mxu0 0.0
    %4599 = vmatpush1.msra.mxu0 0.0
    %4600 = vmatprep.subr.mxu0 0.0
    %4601 = vmatpush1.msra.mxu0 0.0
    %4602 = vmatprep.subr.mxu0 0.0
    %4603 = vmatpush1.msra.mxu0 0.0
    %4604 = vmatprep.subr.mxu0 0.0
    %4605 = vmatpush1.msra.mxu0 0.0
    %4606 = vmatprep.subr.mxu0 0.0
    %4607 = vmatpush1.msra.mxu0 0.0
    %4608 = vmatprep.subr.mxu0 0.0
    %4609 = vmatpush1.msra.mxu0 0.0
    %4610 = vmatprep.subr.mxu0 0.0
    %4611 = vmatpush1.msra.mxu0 0.0
    %4612 = vmatprep.subr.mxu0 0.0
    %4613 = vmatpush1.msra.mxu0 0.0
    %4614 = vmatprep.subr.mxu0 0.0
    %4615 = vmatpush1.msra.mxu0 0.0
    %4616 = vmatprep.subr.mxu0 0.0
    %4617 = vmatpush1.msra.mxu0 0.0
    %4618 = vmatprep.subr.mxu0 0.0
    %4619 = vmatpush1.msra.mxu0 0.0
    %4620 = vmatprep.subr.mxu0 0.0
    %4621 = vmatpush1.msra.mxu0 0.0
    %4622 = vmatprep.subr.mxu0 0.0
    %4623 = vmatpush1.msra.mxu0 0.0
    %4624 = vmatprep.subr.mxu0 0.0
    %4625 = vmatpush1.msra.mxu0 0.0
    %4626 = vmatprep.subr.mxu0 0.0
    %4627 = vmatpush1.msra.mxu0 0.0
    %4628 = vmatprep.subr.mxu0 0.0
    %4629 = vmatpush1.msra.mxu0 0.0
    %4630 = vmatprep.subr.mxu0 0.0
    %4631 = vmatpush1.msra.mxu0 0.0
    %4632 = vmatprep.subr.mxu0 0.0
    %4633 = vmatpush1.msra.mxu0 0.0
    %4634 = vmatprep.subr.mxu0 0.0
    %4635 = vmatpush1.msra.mxu0 0.0
    %4636 = vmatprep.subr.mxu0 0.0
    %4637 = vmatpush1.msra.mxu0 0.0
    %4638 = vmatprep.subr.mxu0 0.0
    %4639 = vmatpush1.msra.mxu0 0.0
    %4640 = vmatprep.subr.mxu0 0.0
    %4641 = vmatpush1.msra.mxu0 0.0
    %4642 = vmatprep.subr.mxu0 0.0
    %4643 = vmatpush1.msra.mxu0 0.0
    %4644 = vmatprep.subr.mxu0 0.0
    %4645 = vmatpush1.msra.mxu0 0.0
    %4646 = vmatprep.subr.mxu0 0.0
    %4647 = vmatpush1.msra.mxu0 0.0
    %4648 = vmatprep.subr.mxu0 0.0
    %4649 = vmatpush1.msra.mxu0 0.0
    %4650 = vmatprep.subr.mxu0 0.0
    %4651 = vmatpush1.msra.mxu0 0.0
    %4652 = vmatprep.subr.mxu0 0.0
    %4653 = vmatpush1.msra.mxu0 0.0
    %4654 = vmatprep.subr.mxu0 0.0
    %4655 = vmatpush1.msra.mxu0 0.0
    %4656 = vmatprep.mubr.f32.mxu0 0.0
    %4657 = vmatmul.mubr.f32.gmra.mrb[0].mxu0 %v4590
    %v4658 = vpop.f32.mrb[0].mxu0
    %v4659 = vadd.f32 0.0, %v4658
    %v4660 = vpop.f32.mrb[0].mxu0
    %4661 = vdwg.mxu0
    %s4662 = sld [smem:[#allocation7 + $0x79]]
    %v4663 = vstv %s4662
    %v4664 = vmul.f32 %v4663, %v3762
    %v4665 = vadd.f32 %v4664, 0.0
    %s4666 = sld [smem:[#allocation7 + $0x7a]]
    %v4667 = vstv %s4666
    %v4668 = vmul.f32 %v4667, %v3762
    %4670 = vrot.lane.b32.xlu0 %v4668, 127
    %v4671 = vpop.permute.xlu0 %4670
    %v4673 = vadd.f32 %v4665, %v4671
    %s4674 = sld [smem:[#allocation7 + $0x7b]]
    %v4675 = vstv %s4674
    %v4676 = vmul.f32 %v4675, %v3762
    %4678 = vrot.lane.b32.xlu0 %v4676, 126
    %v4679 = vpop.permute.xlu0 %4678
    %v4681 = vadd.f32 %v4673, %v4679
    %s4682 = sld [smem:[#allocation7 + $0x7c]]
    %v4683 = vstv %s4682
    %v4684 = vmul.f32 %v4683, %v3762
    %4686 = vrot.lane.b32.xlu0 %v4684, 125
    %v4687 = vpop.permute.xlu0 %4686
    %v4689 = vadd.f32 %v4681, %v4687
    %s4690 = sld [smem:[#allocation7 + $0x7d]]
    %v4691 = vstv %s4690
    %v4692 = vmul.f32 %v4691, %v3928
    %v4693 = vadd.f32 %v4689, %v4692
    %s4694 = sld [smem:[#allocation7 + $0x7e]]
    %v4695 = vstv %s4694
    %v4696 = vmul.f32 %v4695, %v3928
    %4698 = vrot.lane.b32.xlu0 %v4696, 127
    %v4699 = vpop.permute.xlu0 %4698
    %v4701 = vadd.f32 %v4693, %v4699
    %s4702 = sld [smem:[#allocation7 + $0x7f]]
    %v4703 = vstv %s4702
    %v4704 = vmul.f32 %v4703, %v3928
    %4706 = vrot.lane.b32.xlu0 %v4704, 126
    %v4707 = vpop.permute.xlu0 %4706
    %v4709 = vadd.f32 %v4701, %v4707
    %s4710 = sld [smem:[#allocation7 + $0x80]]
    %v4711 = vstv %s4710
    %v4712 = vmul.f32 %v4711, %v3928
    %4714 = vrot.lane.b32.xlu0 %v4712, 125
    %v4715 = vpop.permute.xlu0 %4714
    %v4717 = vadd.f32 %v4709, %v4715
    %s4718 = sld [smem:[#allocation7 + $0x81]]
    %v4719 = vstv %s4718
    %v4720 = vmul.f32 %v4719, %v4094
    %v4721 = vadd.f32 %v4717, %v4720
    %s4722 = sld [smem:[#allocation7 + $0x82]]
    %v4723 = vstv %s4722
    %v4724 = vmul.f32 %v4723, %v4094
    %4726 = vrot.lane.b32.xlu0 %v4724, 127
    %v4727 = vpop.permute.xlu0 %4726
    %v4729 = vadd.f32 %v4721, %v4727
    %s4730 = sld [smem:[#allocation7 + $0x83]]
    %v4731 = vstv %s4730
    %v4732 = vmul.f32 %v4731, %v4094
    %4734 = vrot.lane.b32.xlu0 %v4732, 126
    %v4735 = vpop.permute.xlu0 %4734
    %v4737 = vadd.f32 %v4729, %v4735
    %s4738 = sld [smem:[#allocation7 + $0x84]]
    %v4739 = vstv %s4738
    %v4740 = vmul.f32 %v4739, %v4094
    %4742 = vrot.lane.b32.xlu0 %v4740, 125
    %v4743 = vpop.permute.xlu0 %4742
    %v4745 = vadd.f32 %v4737, %v4743
    %s4746 = sld [smem:[#allocation7 + $0x85]]
    %v4747 = vstv %s4746
    %v4748 = vmul.f32 %v4747, %v4260
    %v4749 = vadd.f32 %v4745, %v4748
    %s4750 = sld [smem:[#allocation7 + $0x86]]
    %v4751 = vstv %s4750
    %v4752 = vmul.f32 %v4751, %v4260
    %4754 = vrot.lane.b32.xlu0 %v4752, 127
    %v4755 = vpop.permute.xlu0 %4754
    %v4757 = vadd.f32 %v4749, %v4755
    %s4758 = sld [smem:[#allocation7 + $0x87]]
    %v4759 = vstv %s4758
    %v4760 = vmul.f32 %v4759, %v4260
    %4762 = vrot.lane.b32.xlu0 %v4760, 126
    %v4763 = vpop.permute.xlu0 %4762
    %v4765 = vadd.f32 %v4757, %v4763
    %s4766 = sld [smem:[#allocation7 + $0x88]]
    %v4767 = vstv %s4766
    %v4768 = vmul.f32 %v4767, %v4260
    %4770 = vrot.lane.b32.xlu0 %v4768, 125
    %v4771 = vpop.permute.xlu0 %4770
    %v4773 = vadd.f32 %v4765, %v4771
    %s4774 = sld [smem:[#allocation7 + $0xab]]
    %v4775 = vstv %s4774
    %v4776 = vadd.f32 %v4773, %v4775
    %v4777 = vmax.f32 %v4776, 0.0
    %4779 = vrot.lane.b32.xlu0 %v4777, 126
    %v4780 = vpop.permute.xlu0 %4779
    %v4782 = vmax.f32 %v4777, %v4780
    %v4784 = vsel %vm4391, %v4782, 0
    %4786 = vmatprep.subr.mxu0 0.0
    %4787 = vmatpush1.msra.mxu0 %v4268
    %4788 = vmatprep.subr.mxu0 0.0
    %4789 = vmatpush1.msra.mxu0 %v4396
    %4790 = vmatprep.subr.mxu0 0.0
    %4791 = vmatpush1.msra.mxu0 0.0
    %4792 = vmatprep.subr.mxu0 0.0
    %4793 = vmatpush1.msra.mxu0 0.0
    %4794 = vmatprep.subr.mxu0 0.0
    %4795 = vmatpush1.msra.mxu0 0.0
    %4796 = vmatprep.subr.mxu0 0.0
    %4797 = vmatpush1.msra.mxu0 0.0
    %4798 = vmatprep.subr.mxu0 0.0
    %4799 = vmatpush1.msra.mxu0 0.0
    %4800 = vmatprep.subr.mxu0 0.0
    %4801 = vmatpush1.msra.mxu0 0.0
    %4802 = vmatprep.subr.mxu0 0.0
    %4803 = vmatpush1.msra.mxu0 0.0
    %4804 = vmatprep.subr.mxu0 0.0
    %4805 = vmatpush1.msra.mxu0 0.0
    %4806 = vmatprep.subr.mxu0 0.0
    %4807 = vmatpush1.msra.mxu0 0.0
    %4808 = vmatprep.subr.mxu0 0.0
    %4809 = vmatpush1.msra.mxu0 0.0
    %4810 = vmatprep.subr.mxu0 0.0
    %4811 = vmatpush1.msra.mxu0 0.0
    %4812 = vmatprep.subr.mxu0 0.0
    %4813 = vmatpush1.msra.mxu0 0.0
    %4814 = vmatprep.subr.mxu0 0.0
    %4815 = vmatpush1.msra.mxu0 0.0
    %4816 = vmatprep.subr.mxu0 0.0
    %4817 = vmatpush1.msra.mxu0 0.0
    %4818 = vmatprep.subr.mxu0 0.0
    %4819 = vmatpush1.msra.mxu0 0.0
    %4820 = vmatprep.subr.mxu0 0.0
    %4821 = vmatpush1.msra.mxu0 0.0
    %4822 = vmatprep.subr.mxu0 0.0
    %4823 = vmatpush1.msra.mxu0 0.0
    %4824 = vmatprep.subr.mxu0 0.0
    %4825 = vmatpush1.msra.mxu0 0.0
    %4826 = vmatprep.subr.mxu0 0.0
    %4827 = vmatpush1.msra.mxu0 0.0
    %4828 = vmatprep.subr.mxu0 0.0
    %4829 = vmatpush1.msra.mxu0 0.0
    %4830 = vmatprep.subr.mxu0 0.0
    %4831 = vmatpush1.msra.mxu0 0.0
    %4832 = vmatprep.subr.mxu0 0.0
    %4833 = vmatpush1.msra.mxu0 0.0
    %4834 = vmatprep.subr.mxu0 0.0
    %4835 = vmatpush1.msra.mxu0 0.0
    %4836 = vmatprep.subr.mxu0 0.0
    %4837 = vmatpush1.msra.mxu0 0.0
    %4838 = vmatprep.subr.mxu0 0.0
    %4839 = vmatpush1.msra.mxu0 0.0
    %4840 = vmatprep.subr.mxu0 0.0
    %4841 = vmatpush1.msra.mxu0 0.0
    %4842 = vmatprep.subr.mxu0 0.0
    %4843 = vmatpush1.msra.mxu0 0.0
    %4844 = vmatprep.subr.mxu0 0.0
    %4845 = vmatpush1.msra.mxu0 0.0
    %4846 = vmatprep.subr.mxu0 0.0
    %4847 = vmatpush1.msra.mxu0 0.0
    %4848 = vmatprep.subr.mxu0 0.0
    %4849 = vmatpush1.msra.mxu0 0.0
    %4850 = vmatprep.mubr.f32.mxu0 0.0
    %4851 = vmatmul.mubr.f32.gmra.mrb[0].mxu0 %v4784
    %v4852 = vpop.f32.mrb[0].mxu0
    %v4853 = vadd.f32 0.0, %v4852
    %v4854 = vpop.f32.mrb[0].mxu0
    %4855 = vdwg.mxu0
    %s4856 = sld [smem:[#allocation7 + $0x89]]
    %v4857 = vstv %s4856
    %v4858 = vmul.f32 %v4857, %v3762
    %v4859 = vadd.f32 %v4858, 0.0
    %s4860 = sld [smem:[#allocation7 + $0x8a]]
    %v4861 = vstv %s4860
    %v4862 = vmul.f32 %v4861, %v3762
    %4864 = vrot.lane.b32.xlu0 %v4862, 127
    %v4865 = vpop.permute.xlu0 %4864
    %v4867 = vadd.f32 %v4859, %v4865
    %s4868 = sld [smem:[#allocation7 + $0x8b]]
    %v4869 = vstv %s4868
    %v4870 = vmul.f32 %v4869, %v3762
    %4872 = vrot.lane.b32.xlu0 %v4870, 126
    %v4873 = vpop.permute.xlu0 %4872
    %v4875 = vadd.f32 %v4867, %v4873
    %s4876 = sld [smem:[#allocation7 + $0x8c]]
    %v4877 = vstv %s4876
    %v4878 = vmul.f32 %v4877, %v3762
    %4880 = vrot.lane.b32.xlu0 %v4878, 125
    %v4881 = vpop.permute.xlu0 %4880
    %v4883 = vadd.f32 %v4875, %v4881
    %s4884 = sld [smem:[#allocation7 + $0x8d]]
    %v4885 = vstv %s4884
    %v4886 = vmul.f32 %v4885, %v3928
    %v4887 = vadd.f32 %v4883, %v4886
    %s4888 = sld [smem:[#allocation7 + $0x8e]]
    %v4889 = vstv %s4888
    %v4890 = vmul.f32 %v4889, %v3928
    %4892 = vrot.lane.b32.xlu0 %v4890, 127
    %v4893 = vpop.permute.xlu0 %4892
    %v4895 = vadd.f32 %v4887, %v4893
    %s4896 = sld [smem:[#allocation7 + $0x8f]]
    %v4897 = vstv %s4896
    %v4898 = vmul.f32 %v4897, %v3928
    %4900 = vrot.lane.b32.xlu0 %v4898, 126
    %v4901 = vpop.permute.xlu0 %4900
    %v4903 = vadd.f32 %v4895, %v4901
    %s4904 = sld [smem:[#allocation7 + $0x90]]
    %v4905 = vstv %s4904
    %v4906 = vmul.f32 %v4905, %v3928
    %4908 = vrot.lane.b32.xlu0 %v4906, 125
    %v4909 = vpop.permute.xlu0 %4908
    %v4911 = vadd.f32 %v4903, %v4909
    %s4912 = sld [smem:[#allocation7 + $0x91]]
    %v4913 = vstv %s4912
    %v4914 = vmul.f32 %v4913, %v4094
    %v4915 = vadd.f32 %v4911, %v4914
    %s4916 = sld [smem:[#allocation7 + $0x92]]
    %v4917 = vstv %s4916
    %v4918 = vmul.f32 %v4917, %v4094
    %4920 = vrot.lane.b32.xlu0 %v4918, 127
    %v4921 = vpop.permute.xlu0 %4920
    %v4923 = vadd.f32 %v4915, %v4921
    %s4924 = sld [smem:[#allocation7 + $0x93]]
    %v4925 = vstv %s4924
    %v4926 = vmul.f32 %v4925, %v4094
    %4928 = vrot.lane.b32.xlu0 %v4926, 126
    %v4929 = vpop.permute.xlu0 %4928
    %v4931 = vadd.f32 %v4923, %v4929
    %s4932 = sld [smem:[#allocation7 + $0x94]]
    %v4933 = vstv %s4932
    %v4934 = vmul.f32 %v4933, %v4094
    %4936 = vrot.lane.b32.xlu0 %v4934, 125
    %v4937 = vpop.permute.xlu0 %4936
    %v4939 = vadd.f32 %v4931, %v4937
    %s4940 = sld [smem:[#allocation7 + $0x95]]
    %v4941 = vstv %s4940
    %v4942 = vmul.f32 %v4941, %v4260
    %v4943 = vadd.f32 %v4939, %v4942
    %s4944 = sld [smem:[#allocation7 + $0x96]]
    %v4945 = vstv %s4944
    %v4946 = vmul.f32 %v4945, %v4260
    %4948 = vrot.lane.b32.xlu0 %v4946, 127
    %v4949 = vpop.permute.xlu0 %4948
    %v4951 = vadd.f32 %v4943, %v4949
    %s4952 = sld [smem:[#allocation7 + $0x97]]
    %v4953 = vstv %s4952
    %v4954 = vmul.f32 %v4953, %v4260
    %4956 = vrot.lane.b32.xlu0 %v4954, 126
    %v4957 = vpop.permute.xlu0 %4956
    %v4959 = vadd.f32 %v4951, %v4957
    %s4960 = sld [smem:[#allocation7 + $0x98]]
    %v4961 = vstv %s4960
    %v4962 = vmul.f32 %v4961, %v4260
    %4964 = vrot.lane.b32.xlu0 %v4962, 125
    %v4965 = vpop.permute.xlu0 %4964
    %v4967 = vadd.f32 %v4959, %v4965
    %s4968 = sld [smem:[#allocation7 + $0xac]]
    %v4969 = vstv %s4968
    %v4970 = vadd.f32 %v4967, %v4969
    %v4971 = vmax.f32 %v4970, 0.0
    %4973 = vrot.lane.b32.xlu0 %v4971, 126
    %v4974 = vpop.permute.xlu0 %4973
    %v4976 = vmax.f32 %v4971, %v4974
    %v4978 = vsel %vm4391, %v4976, 0
    %4980 = vmatprep.subr.mxu0 0.0
    %4981 = vmatpush1.msra.mxu0 %v4268
    %4982 = vmatprep.subr.mxu0 0.0
    %4983 = vmatpush1.msra.mxu0 %v4396
    %4984 = vmatprep.subr.mxu0 0.0
    %4985 = vmatpush1.msra.mxu0 0.0
    %4986 = vmatprep.subr.mxu0 0.0
    %4987 = vmatpush1.msra.mxu0 0.0
    %4988 = vmatprep.subr.mxu0 0.0
    %4989 = vmatpush1.msra.mxu0 0.0
    %4990 = vmatprep.subr.mxu0 0.0
    %4991 = vmatpush1.msra.mxu0 0.0
    %4992 = vmatprep.subr.mxu0 0.0
    %4993 = vmatpush1.msra.mxu0 0.0
    %4994 = vmatprep.subr.mxu0 0.0
    %4995 = vmatpush1.msra.mxu0 0.0
    %4996 = vmatprep.subr.mxu0 0.0
    %4997 = vmatpush1.msra.mxu0 0.0
    %4998 = vmatprep.subr.mxu0 0.0
    %4999 = vmatpush1.msra.mxu0 0.0
    %5000 = vmatprep.subr.mxu0 0.0
    %5001 = vmatpush1.msra.mxu0 0.0
    %5002 = vmatprep.subr.mxu0 0.0
    %5003 = vmatpush1.msra.mxu0 0.0
    %5004 = vmatprep.subr.mxu0 0.0
    %5005 = vmatpush1.msra.mxu0 0.0
    %5006 = vmatprep.subr.mxu0 0.0
    %5007 = vmatpush1.msra.mxu0 0.0
    %5008 = vmatprep.subr.mxu0 0.0
    %5009 = vmatpush1.msra.mxu0 0.0
    %5010 = vmatprep.subr.mxu0 0.0
    %5011 = vmatpush1.msra.mxu0 0.0
    %5012 = vmatprep.subr.mxu0 0.0
    %5013 = vmatpush1.msra.mxu0 0.0
    %5014 = vmatprep.subr.mxu0 0.0
    %5015 = vmatpush1.msra.mxu0 0.0
    %5016 = vmatprep.subr.mxu0 0.0
    %5017 = vmatpush1.msra.mxu0 0.0
    %5018 = vmatprep.subr.mxu0 0.0
    %5019 = vmatpush1.msra.mxu0 0.0
    %5020 = vmatprep.subr.mxu0 0.0
    %5021 = vmatpush1.msra.mxu0 0.0
    %5022 = vmatprep.subr.mxu0 0.0
    %5023 = vmatpush1.msra.mxu0 0.0
    %5024 = vmatprep.subr.mxu0 0.0
    %5025 = vmatpush1.msra.mxu0 0.0
    %5026 = vmatprep.subr.mxu0 0.0
    %5027 = vmatpush1.msra.mxu0 0.0
    %5028 = vmatprep.subr.mxu0 0.0
    %5029 = vmatpush1.msra.mxu0 0.0
    %5030 = vmatprep.subr.mxu0 0.0
    %5031 = vmatpush1.msra.mxu0 0.0
    %5032 = vmatprep.subr.mxu0 0.0
    %5033 = vmatpush1.msra.mxu0 0.0
    %5034 = vmatprep.subr.mxu0 0.0
    %5035 = vmatpush1.msra.mxu0 0.0
    %5036 = vmatprep.subr.mxu0 0.0
    %5037 = vmatpush1.msra.mxu0 0.0
    %5038 = vmatprep.subr.mxu0 0.0
    %5039 = vmatpush1.msra.mxu0 0.0
    %5040 = vmatprep.subr.mxu0 0.0
    %5041 = vmatpush1.msra.mxu0 0.0
    %5042 = vmatprep.subr.mxu0 0.0
    %5043 = vmatpush1.msra.mxu0 0.0
    %5044 = vmatprep.mubr.f32.mxu0 0.0
    %5045 = vmatmul.mubr.f32.gmra.mrb[0].mxu0 %v4978
    %v5046 = vpop.f32.mrb[0].mxu0
    %v5047 = vadd.f32 0.0, %v5046
    %v5048 = vpop.f32.mrb[0].mxu0
    %5049 = vdwg.mxu0
    %s5050 = sld [smem:[#allocation7 + $0x99]]
    %v5051 = vstv %s5050
    %v5052 = vmul.f32 %v5051, %v3762
    %v5053 = vadd.f32 %v5052, 0.0
    %s5054 = sld [smem:[#allocation7 + $0x9a]]
    %v5055 = vstv %s5054
    %v5056 = vmul.f32 %v5055, %v3762
    %5058 = vrot.lane.b32.xlu0 %v5056, 127
    %v5059 = vpop.permute.xlu0 %5058
    %v5061 = vadd.f32 %v5053, %v5059
    %s5062 = sld [smem:[#allocation7 + $0x9b]]
    %v5063 = vstv %s5062
    %v5064 = vmul.f32 %v5063, %v3762
    %5066 = vrot.lane.b32.xlu0 %v5064, 126
    %v5067 = vpop.permute.xlu0 %5066
    %v5069 = vadd.f32 %v5061, %v5067
    %s5070 = sld [smem:[#allocation7 + $0x9c]]
    %v5071 = vstv %s5070
    %v5072 = vmul.f32 %v5071, %v3762
    %5074 = vrot.lane.b32.xlu0 %v5072, 125
    %v5075 = vpop.permute.xlu0 %5074
    %v5077 = vadd.f32 %v5069, %v5075
    %s5078 = sld [smem:[#allocation7 + $0x9d]]
    %v5079 = vstv %s5078
    %v5080 = vmul.f32 %v5079, %v3928
    %v5081 = vadd.f32 %v5077, %v5080
    %s5082 = sld [smem:[#allocation7 + $0x9e]]
    %v5083 = vstv %s5082
    %v5084 = vmul.f32 %v5083, %v3928
    %5086 = vrot.lane.b32.xlu0 %v5084, 127
    %v5087 = vpop.permute.xlu0 %5086
    %v5089 = vadd.f32 %v5081, %v5087
    %s5090 = sld [smem:[#allocation7 + $0x9f]]
    %v5091 = vstv %s5090
    %v5092 = vmul.f32 %v5091, %v3928
    %5094 = vrot.lane.b32.xlu0 %v5092, 126
    %v5095 = vpop.permute.xlu0 %5094
    %v5097 = vadd.f32 %v5089, %v5095
    %s5098 = sld [smem:[#allocation7 + $0xa0]]
    %v5099 = vstv %s5098
    %v5100 = vmul.f32 %v5099, %v3928
    %5102 = vrot.lane.b32.xlu0 %v5100, 125
    %v5103 = vpop.permute.xlu0 %5102
    %v5105 = vadd.f32 %v5097, %v5103
    %s5106 = sld [smem:[#allocation7 + $0xa1]]
    %v5107 = vstv %s5106
    %v5108 = vmul.f32 %v5107, %v4094
    %v5109 = vadd.f32 %v5105, %v5108
    %s5110 = sld [smem:[#allocation7 + $0xa2]]
    %v5111 = vstv %s5110
    %v5112 = vmul.f32 %v5111, %v4094
    %5114 = vrot.lane.b32.xlu0 %v5112, 127
    %v5115 = vpop.permute.xlu0 %5114
    %v5117 = vadd.f32 %v5109, %v5115
    %s5118 = sld [smem:[#allocation7 + $0xa3]]
    %v5119 = vstv %s5118
    %v5120 = vmul.f32 %v5119, %v4094
    %5122 = vrot.lane.b32.xlu0 %v5120, 126
    %v5123 = vpop.permute.xlu0 %5122
    %v5125 = vadd.f32 %v5117, %v5123
    %s5126 = sld [smem:[#allocation7 + $0xa4]]
    %v5127 = vstv %s5126
    %v5128 = vmul.f32 %v5127, %v4094
    %5130 = vrot.lane.b32.xlu0 %v5128, 125
    %v5131 = vpop.permute.xlu0 %5130
    %v5133 = vadd.f32 %v5125, %v5131
    %s5134 = sld [smem:[#allocation7 + $0xa5]]
    %v5135 = vstv %s5134
    %v5136 = vmul.f32 %v5135, %v4260
    %v5137 = vadd.f32 %v5133, %v5136
    %s5138 = sld [smem:[#allocation7 + $0xa6]]
    %v5139 = vstv %s5138
    %v5140 = vmul.f32 %v5139, %v4260
    %5142 = vrot.lane.b32.xlu0 %v5140, 127
    %v5143 = vpop.permute.xlu0 %5142
    %v5145 = vadd.f32 %v5137, %v5143
    %s5146 = sld [smem:[#allocation7 + $0xa7]]
    %v5147 = vstv %s5146
    %v5148 = vmul.f32 %v5147, %v4260
    %5150 = vrot.lane.b32.xlu0 %v5148, 126
    %v5151 = vpop.permute.xlu0 %5150
    %v5153 = vadd.f32 %v5145, %v5151
    %s5154 = sld [smem:[#allocation7 + $0xa8]]
    %v5155 = vstv %s5154
    %v5156 = vmul.f32 %v5155, %v4260
    %5158 = vrot.lane.b32.xlu0 %v5156, 125
    %v5159 = vpop.permute.xlu0 %5158
    %v5161 = vadd.f32 %v5153, %v5159
    %s5162 = sld [smem:[#allocation7 + $0xad]]
    %v5163 = vstv %s5162
    %v5164 = vadd.f32 %v5161, %v5163
    %v5165 = vmax.f32 %v5164, 0.0
    %5167 = vrot.lane.b32.xlu0 %v5165, 126
    %v5168 = vpop.permute.xlu0 %5167
    %v5170 = vmax.f32 %v5165, %v5168
    %v5172 = vsel %vm4391, %v5170, 0
    %5174 = vmatprep.subr.mxu0 0.0
    %5175 = vmatpush1.msra.mxu0 %v4268
    %5176 = vmatprep.subr.mxu0 0.0
    %5177 = vmatpush1.msra.mxu0 %v4396
    %5178 = vmatprep.subr.mxu0 0.0
    %5179 = vmatpush1.msra.mxu0 0.0
    %5180 = vmatprep.subr.mxu0 0.0
    %5181 = vmatpush1.msra.mxu0 0.0
    %5182 = vmatprep.subr.mxu0 0.0
    %5183 = vmatpush1.msra.mxu0 0.0
    %5184 = vmatprep.subr.mxu0 0.0
    %5185 = vmatpush1.msra.mxu0 0.0
    %5186 = vmatprep.subr.mxu0 0.0
    %5187 = vmatpush1.msra.mxu0 0.0
    %5188 = vmatprep.subr.mxu0 0.0
    %5189 = vmatpush1.msra.mxu0 0.0
    %5190 = vmatprep.subr.mxu0 0.0
    %5191 = vmatpush1.msra.mxu0 0.0
    %5192 = vmatprep.subr.mxu0 0.0
    %5193 = vmatpush1.msra.mxu0 0.0
    %5194 = vmatprep.subr.mxu0 0.0
    %5195 = vmatpush1.msra.mxu0 0.0
    %5196 = vmatprep.subr.mxu0 0.0
    %5197 = vmatpush1.msra.mxu0 0.0
    %5198 = vmatprep.subr.mxu0 0.0
    %5199 = vmatpush1.msra.mxu0 0.0
    %5200 = vmatprep.subr.mxu0 0.0
    %5201 = vmatpush1.msra.mxu0 0.0
    %5202 = vmatprep.subr.mxu0 0.0
    %5203 = vmatpush1.msra.mxu0 0.0
    %5204 = vmatprep.subr.mxu0 0.0
    %5205 = vmatpush1.msra.mxu0 0.0
    %5206 = vmatprep.subr.mxu0 0.0
    %5207 = vmatpush1.msra.mxu0 0.0
    %5208 = vmatprep.subr.mxu0 0.0
    %5209 = vmatpush1.msra.mxu0 0.0
    %5210 = vmatprep.subr.mxu0 0.0
    %5211 = vmatpush1.msra.mxu0 0.0
    %5212 = vmatprep.subr.mxu0 0.0
    %5213 = vmatpush1.msra.mxu0 0.0
    %5214 = vmatprep.subr.mxu0 0.0
    %5215 = vmatpush1.msra.mxu0 0.0
    %5216 = vmatprep.subr.mxu0 0.0
    %5217 = vmatpush1.msra.mxu0 0.0
    %5218 = vmatprep.subr.mxu0 0.0
    %5219 = vmatpush1.msra.mxu0 0.0
    %5220 = vmatprep.subr.mxu0 0.0
    %5221 = vmatpush1.msra.mxu0 0.0
    %5222 = vmatprep.subr.mxu0 0.0
    %5223 = vmatpush1.msra.mxu0 0.0
    %5224 = vmatprep.subr.mxu0 0.0
    %5225 = vmatpush1.msra.mxu0 0.0
    %5226 = vmatprep.subr.mxu0 0.0
    %5227 = vmatpush1.msra.mxu0 0.0
    %5228 = vmatprep.subr.mxu0 0.0
    %5229 = vmatpush1.msra.mxu0 0.0
    %5230 = vmatprep.subr.mxu0 0.0
    %5231 = vmatpush1.msra.mxu0 0.0
    %5232 = vmatprep.subr.mxu0 0.0
    %5233 = vmatpush1.msra.mxu0 0.0
    %5234 = vmatprep.subr.mxu0 0.0
    %5235 = vmatpush1.msra.mxu0 0.0
    %5236 = vmatprep.subr.mxu0 0.0
    %5237 = vmatpush1.msra.mxu0 0.0
    %5238 = vmatprep.mubr.f32.mxu0 0.0
    %5239 = vmatmul.mubr.f32.gmra.mrb[0].mxu0 %v5172
    %v5240 = vpop.f32.mrb[0].mxu0
    %v5241 = vadd.f32 0.0, %v5240
    %v5242 = vpop.f32.mrb[0].mxu0
    %5243 = vdwg.mxu0
    %v5244 = vld [vmem:[%s2] sm:$0xf]
    %v5245 = vld [vmem:[%s2 + $0x4] sm:$0xf]
    %v5246 = vld [vmem:[%s2 + $0x8] sm:$0xf]
    %v5247 = vld [vmem:[%s2 + $0xc] sm:$0xf]
    %v5248 = vld [vmem:[%s2 + $0x10] sm:$0xf]
    %vm5249 = vcmask 31744
    %v5251 = vsel %vm5249, %v4659, 0
    %vm5253 = vcmask 1043456
    %v5255 = vsel %vm5253, %v5245, 0
    %5257 = vmatprep.subr.mxu0 0.0
    %5258 = vmatpush1.msra.mxu0 %v5255
    %5259 = vmatprep.subr.mxu0 0.0
    %5260 = vmatpush1.msra.mxu0 0.0
    %5261 = vmatprep.subr.mxu0 0.0
    %5262 = vmatpush1.msra.mxu0 0.0
    %5263 = vmatprep.subr.mxu0 0.0
    %5264 = vmatpush1.msra.mxu0 0.0
    %5265 = vmatprep.subr.mxu0 0.0
    %5266 = vmatpush1.msra.mxu0 0.0
    %5267 = vmatprep.subr.mxu0 0.0
    %5268 = vmatpush1.msra.mxu0 0.0
    %5269 = vmatprep.subr.mxu0 0.0
    %5270 = vmatpush1.msra.mxu0 0.0
    %5271 = vmatprep.subr.mxu0 0.0
    %5272 = vmatpush1.msra.mxu0 0.0
    %5273 = vmatprep.subr.mxu0 0.0
    %5274 = vmatpush1.msra.mxu0 0.0
    %5275 = vmatprep.subr.mxu0 0.0
    %5276 = vmatpush1.msra.mxu0 0.0
    %5277 = vmatprep.subr.mxu0 0.0
    %5278 = vmatpush1.msra.mxu0 0.0
    %5279 = vmatprep.subr.mxu0 0.0
    %5280 = vmatpush1.msra.mxu0 0.0
    %5281 = vmatprep.subr.mxu0 0.0
    %5282 = vmatpush1.msra.mxu0 0.0
    %5283 = vmatprep.subr.mxu0 0.0
    %5284 = vmatpush1.msra.mxu0 0.0
    %5285 = vmatprep.subr.mxu0 0.0
    %5286 = vmatpush1.msra.mxu0 0.0
    %5287 = vmatprep.subr.mxu0 0.0
    %5288 = vmatpush1.msra.mxu0 0.0
    %5289 = vmatprep.subr.mxu0 0.0
    %5290 = vmatpush1.msra.mxu0 0.0
    %5291 = vmatprep.subr.mxu0 0.0
    %5292 = vmatpush1.msra.mxu0 0.0
    %5293 = vmatprep.subr.mxu0 0.0
    %5294 = vmatpush1.msra.mxu0 0.0
    %5295 = vmatprep.subr.mxu0 0.0
    %5296 = vmatpush1.msra.mxu0 0.0
    %5297 = vmatprep.subr.mxu0 0.0
    %5298 = vmatpush1.msra.mxu0 0.0
    %5299 = vmatprep.subr.mxu0 0.0
    %5300 = vmatpush1.msra.mxu0 0.0
    %5301 = vmatprep.subr.mxu0 0.0
    %5302 = vmatpush1.msra.mxu0 0.0
    %5303 = vmatprep.subr.mxu0 0.0
    %5304 = vmatpush1.msra.mxu0 0.0
    %5305 = vmatprep.subr.mxu0 0.0
    %5306 = vmatpush1.msra.mxu0 0.0
    %5307 = vmatprep.subr.mxu0 0.0
    %5308 = vmatpush1.msra.mxu0 0.0
    %5309 = vmatprep.subr.mxu0 0.0
    %5310 = vmatpush1.msra.mxu0 0.0
    %5311 = vmatprep.subr.mxu0 0.0
    %5312 = vmatpush1.msra.mxu0 0.0
    %5313 = vmatprep.subr.mxu0 0.0
    %5314 = vmatpush1.msra.mxu0 0.0
    %5315 = vmatprep.subr.mxu0 0.0
    %5316 = vmatpush1.msra.mxu0 0.0
    %5317 = vmatprep.subr.mxu0 0.0
    %5318 = vmatpush1.msra.mxu0 0.0
    %5319 = vmatprep.subr.mxu0 0.0
    %5320 = vmatpush1.msra.mxu0 0.0
    %5321 = vmatprep.mubr.f32.mxu0 0.0
    %5322 = vmatmul.mubr.f32.gmra.mrb[0].mxu0 %v5251
    %v5323 = vpop.f32.mrb[0].mxu0
    %v5324 = vadd.f32 0.0, %v5323
    %v5325 = vpop.f32.mrb[0].mxu0
    %5326 = vdwg.mxu0
    %v5328 = vsel %vm5249, %v4465, 0
    %v5331 = vsel %vm5253, %v5244, 0
    %5333 = vmatprep.subr.mxu0 0.0
    %5334 = vmatpush1.msra.mxu0 %v5331
    %5335 = vmatprep.subr.mxu0 0.0
    %5336 = vmatpush1.msra.mxu0 0.0
    %5337 = vmatprep.subr.mxu0 0.0
    %5338 = vmatpush1.msra.mxu0 0.0
    %5339 = vmatprep.subr.mxu0 0.0
    %5340 = vmatpush1.msra.mxu0 0.0
    %5341 = vmatprep.subr.mxu0 0.0
    %5342 = vmatpush1.msra.mxu0 0.0
    %5343 = vmatprep.subr.mxu0 0.0
    %5344 = vmatpush1.msra.mxu0 0.0
    %5345 = vmatprep.subr.mxu0 0.0
    %5346 = vmatpush1.msra.mxu0 0.0
    %5347 = vmatprep.subr.mxu0 0.0
    %5348 = vmatpush1.msra.mxu0 0.0
    %5349 = vmatprep.subr.mxu0 0.0
    %5350 = vmatpush1.msra.mxu0 0.0
    %5351 = vmatprep.subr.mxu0 0.0
    %5352 = vmatpush1.msra.mxu0 0.0
    %5353 = vmatprep.subr.mxu0 0.0
    %5354 = vmatpush1.msra.mxu0 0.0
    %5355 = vmatprep.subr.mxu0 0.0
    %5356 = vmatpush1.msra.mxu0 0.0
    %5357 = vmatprep.subr.mxu0 0.0
    %5358 = vmatpush1.msra.mxu0 0.0
    %5359 = vmatprep.subr.mxu0 0.0
    %5360 = vmatpush1.msra.mxu0 0.0
    %5361 = vmatprep.subr.mxu0 0.0
    %5362 = vmatpush1.msra.mxu0 0.0
    %5363 = vmatprep.subr.mxu0 0.0
    %5364 = vmatpush1.msra.mxu0 0.0
    %5365 = vmatprep.subr.mxu0 0.0
    %5366 = vmatpush1.msra.mxu0 0.0
    %5367 = vmatprep.subr.mxu0 0.0
    %5368 = vmatpush1.msra.mxu0 0.0
    %5369 = vmatprep.subr.mxu0 0.0
    %5370 = vmatpush1.msra.mxu0 0.0
    %5371 = vmatprep.subr.mxu0 0.0
    %5372 = vmatpush1.msra.mxu0 0.0
    %5373 = vmatprep.subr.mxu0 0.0
    %5374 = vmatpush1.msra.mxu0 0.0
    %5375 = vmatprep.subr.mxu0 0.0
    %5376 = vmatpush1.msra.mxu0 0.0
    %5377 = vmatprep.subr.mxu0 0.0
    %5378 = vmatpush1.msra.mxu0 0.0
    %5379 = vmatprep.subr.mxu0 0.0
    %5380 = vmatpush1.msra.mxu0 0.0
    %5381 = vmatprep.subr.mxu0 0.0
    %5382 = vmatpush1.msra.mxu0 0.0
    %5383 = vmatprep.subr.mxu0 0.0
    %5384 = vmatpush1.msra.mxu0 0.0
    %5385 = vmatprep.subr.mxu0 0.0
    %5386 = vmatpush1.msra.mxu0 0.0
    %5387 = vmatprep.subr.mxu0 0.0
    %5388 = vmatpush1.msra.mxu0 0.0
    %5389 = vmatprep.subr.mxu0 0.0
    %5390 = vmatpush1.msra.mxu0 0.0
    %5391 = vmatprep.subr.mxu0 0.0
    %5392 = vmatpush1.msra.mxu0 0.0
    %5393 = vmatprep.subr.mxu0 0.0
    %5394 = vmatpush1.msra.mxu0 0.0
    %5395 = vmatprep.subr.mxu0 0.0
    %5396 = vmatpush1.msra.mxu0 0.0
    %5397 = vmatprep.mubr.f32.mxu0 0.0
    %5398 = vmatmul.mubr.f32.gmra.mrb[0].mxu0 %v5328
    %v5399 = vpop.f32.mrb[0].mxu0
    %v5400 = vadd.f32 %v5324, %v5399
    %v5401 = vpop.f32.mrb[0].mxu0
    %5402 = vdwg.mxu0
    %v5404 = vsel %vm5249, %v4853, 0
    %v5407 = vsel %vm5253, %v5246, 0
    %5409 = vmatprep.subr.mxu0 0.0
    %5410 = vmatpush1.msra.mxu0 %v5407
    %5411 = vmatprep.subr.mxu0 0.0
    %5412 = vmatpush1.msra.mxu0 0.0
    %5413 = vmatprep.subr.mxu0 0.0
    %5414 = vmatpush1.msra.mxu0 0.0
    %5415 = vmatprep.subr.mxu0 0.0
    %5416 = vmatpush1.msra.mxu0 0.0
    %5417 = vmatprep.subr.mxu0 0.0
    %5418 = vmatpush1.msra.mxu0 0.0
    %5419 = vmatprep.subr.mxu0 0.0
    %5420 = vmatpush1.msra.mxu0 0.0
    %5421 = vmatprep.subr.mxu0 0.0
    %5422 = vmatpush1.msra.mxu0 0.0
    %5423 = vmatprep.subr.mxu0 0.0
    %5424 = vmatpush1.msra.mxu0 0.0
    %5425 = vmatprep.subr.mxu0 0.0
    %5426 = vmatpush1.msra.mxu0 0.0
    %5427 = vmatprep.subr.mxu0 0.0
    %5428 = vmatpush1.msra.mxu0 0.0
    %5429 = vmatprep.subr.mxu0 0.0
    %5430 = vmatpush1.msra.mxu0 0.0
    %5431 = vmatprep.subr.mxu0 0.0
    %5432 = vmatpush1.msra.mxu0 0.0
    %5433 = vmatprep.subr.mxu0 0.0
    %5434 = vmatpush1.msra.mxu0 0.0
    %5435 = vmatprep.subr.mxu0 0.0
    %5436 = vmatpush1.msra.mxu0 0.0
    %5437 = vmatprep.subr.mxu0 0.0
    %5438 = vmatpush1.msra.mxu0 0.0
    %5439 = vmatprep.subr.mxu0 0.0
    %5440 = vmatpush1.msra.mxu0 0.0
    %5441 = vmatprep.subr.mxu0 0.0
    %5442 = vmatpush1.msra.mxu0 0.0
    %5443 = vmatprep.subr.mxu0 0.0
    %5444 = vmatpush1.msra.mxu0 0.0
    %5445 = vmatprep.subr.mxu0 0.0
    %5446 = vmatpush1.msra.mxu0 0.0
    %5447 = vmatprep.subr.mxu0 0.0
    %5448 = vmatpush1.msra.mxu0 0.0
    %5449 = vmatprep.subr.mxu0 0.0
    %5450 = vmatpush1.msra.mxu0 0.0
    %5451 = vmatprep.subr.mxu0 0.0
    %5452 = vmatpush1.msra.mxu0 0.0
    %5453 = vmatprep.subr.mxu0 0.0
    %5454 = vmatpush1.msra.mxu0 0.0
    %5455 = vmatprep.subr.mxu0 0.0
    %5456 = vmatpush1.msra.mxu0 0.0
    %5457 = vmatprep.subr.mxu0 0.0
    %5458 = vmatpush1.msra.mxu0 0.0
    %5459 = vmatprep.subr.mxu0 0.0
    %5460 = vmatpush1.msra.mxu0 0.0
    %5461 = vmatprep.subr.mxu0 0.0
    %5462 = vmatpush1.msra.mxu0 0.0
    %5463 = vmatprep.subr.mxu0 0.0
    %5464 = vmatpush1.msra.mxu0 0.0
    %5465 = vmatprep.subr.mxu0 0.0
    %5466 = vmatpush1.msra.mxu0 0.0
    %5467 = vmatprep.subr.mxu0 0.0
    %5468 = vmatpush1.msra.mxu0 0.0
    %5469 = vmatprep.subr.mxu0 0.0
    %5470 = vmatpush1.msra.mxu0 0.0
    %5471 = vmatprep.subr.mxu0 0.0
    %5472 = vmatpush1.msra.mxu0 0.0
    %5473 = vmatprep.mubr.f32.mxu0 0.0
    %5474 = vmatmul.mubr.f32.gmra.mrb[0].mxu0 %v5404
    %v5475 = vpop.f32.mrb[0].mxu0
    %v5476 = vadd.f32 0.0, %v5475
    %v5477 = vpop.f32.mrb[0].mxu0
    %5478 = vdwg.mxu0
    %v5479 = vadd.f32 %v5400, %v5476
    %v5481 = vsel %vm5249, %v5047, 0
    %v5484 = vsel %vm5253, %v5247, 0
    %5486 = vmatprep.subr.mxu0 0.0
    %5487 = vmatpush1.msra.mxu0 %v5484
    %5488 = vmatprep.subr.mxu0 0.0
    %5489 = vmatpush1.msra.mxu0 0.0
    %5490 = vmatprep.subr.mxu0 0.0
    %5491 = vmatpush1.msra.mxu0 0.0
    %5492 = vmatprep.subr.mxu0 0.0
    %5493 = vmatpush1.msra.mxu0 0.0
    %5494 = vmatprep.subr.mxu0 0.0
    %5495 = vmatpush1.msra.mxu0 0.0
    %5496 = vmatprep.subr.mxu0 0.0
    %5497 = vmatpush1.msra.mxu0 0.0
    %5498 = vmatprep.subr.mxu0 0.0
    %5499 = vmatpush1.msra.mxu0 0.0
    %5500 = vmatprep.subr.mxu0 0.0
    %5501 = vmatpush1.msra.mxu0 0.0
    %5502 = vmatprep.subr.mxu0 0.0
    %5503 = vmatpush1.msra.mxu0 0.0
    %5504 = vmatprep.subr.mxu0 0.0
    %5505 = vmatpush1.msra.mxu0 0.0
    %5506 = vmatprep.subr.mxu0 0.0
    %5507 = vmatpush1.msra.mxu0 0.0
    %5508 = vmatprep.subr.mxu0 0.0
    %5509 = vmatpush1.msra.mxu0 0.0
    %5510 = vmatprep.subr.mxu0 0.0
    %5511 = vmatpush1.msra.mxu0 0.0
    %5512 = vmatprep.subr.mxu0 0.0
    %5513 = vmatpush1.msra.mxu0 0.0
    %5514 = vmatprep.subr.mxu0 0.0
    %5515 = vmatpush1.msra.mxu0 0.0
    %5516 = vmatprep.subr.mxu0 0.0
    %5517 = vmatpush1.msra.mxu0 0.0
    %5518 = vmatprep.subr.mxu0 0.0
    %5519 = vmatpush1.msra.mxu0 0.0
    %5520 = vmatprep.subr.mxu0 0.0
    %5521 = vmatpush1.msra.mxu0 0.0
    %5522 = vmatprep.subr.mxu0 0.0
    %5523 = vmatpush1.msra.mxu0 0.0
    %5524 = vmatprep.subr.mxu0 0.0
    %5525 = vmatpush1.msra.mxu0 0.0
    %5526 = vmatprep.subr.mxu0 0.0
    %5527 = vmatpush1.msra.mxu0 0.0
    %5528 = vmatprep.subr.mxu0 0.0
    %5529 = vmatpush1.msra.mxu0 0.0
    %5530 = vmatprep.subr.mxu0 0.0
    %5531 = vmatpush1.msra.mxu0 0.0
    %5532 = vmatprep.subr.mxu0 0.0
    %5533 = vmatpush1.msra.mxu0 0.0
    %5534 = vmatprep.subr.mxu0 0.0
    %5535 = vmatpush1.msra.mxu0 0.0
    %5536 = vmatprep.subr.mxu0 0.0
    %5537 = vmatpush1.msra.mxu0 0.0
    %5538 = vmatprep.subr.mxu0 0.0
    %5539 = vmatpush1.msra.mxu0 0.0
    %5540 = vmatprep.subr.mxu0 0.0
    %5541 = vmatpush1.msra.mxu0 0.0
    %5542 = vmatprep.subr.mxu0 0.0
    %5543 = vmatpush1.msra.mxu0 0.0
    %5544 = vmatprep.subr.mxu0 0.0
    %5545 = vmatpush1.msra.mxu0 0.0
    %5546 = vmatprep.subr.mxu0 0.0
    %5547 = vmatpush1.msra.mxu0 0.0
    %5548 = vmatprep.subr.mxu0 0.0
    %5549 = vmatpush1.msra.mxu0 0.0
    %5550 = vmatprep.mubr.f32.mxu0 0.0
    %5551 = vmatmul.mubr.f32.gmra.mrb[0].mxu0 %v5481
    %v5552 = vpop.f32.mrb[0].mxu0
    %v5553 = vadd.f32 0.0, %v5552
    %v5554 = vpop.f32.mrb[0].mxu0
    %5555 = vdwg.mxu0
    %v5556 = vadd.f32 %v5479, %v5553
    %v5558 = vsel %vm5249, %v5241, 0
    %v5561 = vsel %vm5253, %v5248, 0
    %5563 = vmatprep.subr.mxu0 0.0
    %5564 = vmatpush1.msra.mxu0 %v5561
    %5565 = vmatprep.subr.mxu0 0.0
    %5566 = vmatpush1.msra.mxu0 0.0
    %5567 = vmatprep.subr.mxu0 0.0
    %5568 = vmatpush1.msra.mxu0 0.0
    %5569 = vmatprep.subr.mxu0 0.0
    %5570 = vmatpush1.msra.mxu0 0.0
    %5571 = vmatprep.subr.mxu0 0.0
    %5572 = vmatpush1.msra.mxu0 0.0
    %5573 = vmatprep.subr.mxu0 0.0
    %5574 = vmatpush1.msra.mxu0 0.0
    %5575 = vmatprep.subr.mxu0 0.0
    %5576 = vmatpush1.msra.mxu0 0.0
    %5577 = vmatprep.subr.mxu0 0.0
    %5578 = vmatpush1.msra.mxu0 0.0
    %5579 = vmatprep.subr.mxu0 0.0
    %5580 = vmatpush1.msra.mxu0 0.0
    %5581 = vmatprep.subr.mxu0 0.0
    %5582 = vmatpush1.msra.mxu0 0.0
    %5583 = vmatprep.subr.mxu0 0.0
    %5584 = vmatpush1.msra.mxu0 0.0
    %5585 = vmatprep.subr.mxu0 0.0
    %5586 = vmatpush1.msra.mxu0 0.0
    %5587 = vmatprep.subr.mxu0 0.0
    %5588 = vmatpush1.msra.mxu0 0.0
    %5589 = vmatprep.subr.mxu0 0.0
    %5590 = vmatpush1.msra.mxu0 0.0
    %5591 = vmatprep.subr.mxu0 0.0
    %5592 = vmatpush1.msra.mxu0 0.0
    %5593 = vmatprep.subr.mxu0 0.0
    %5594 = vmatpush1.msra.mxu0 0.0
    %5595 = vmatprep.subr.mxu0 0.0
    %5596 = vmatpush1.msra.mxu0 0.0
    %5597 = vmatprep.subr.mxu0 0.0
    %5598 = vmatpush1.msra.mxu0 0.0
    %5599 = vmatprep.subr.mxu0 0.0
    %5600 = vmatpush1.msra.mxu0 0.0
    %5601 = vmatprep.subr.mxu0 0.0
    %5602 = vmatpush1.msra.mxu0 0.0
    %5603 = vmatprep.subr.mxu0 0.0
    %5604 = vmatpush1.msra.mxu0 0.0
    %5605 = vmatprep.subr.mxu0 0.0
    %5606 = vmatpush1.msra.mxu0 0.0
    %5607 = vmatprep.subr.mxu0 0.0
    %5608 = vmatpush1.msra.mxu0 0.0
    %5609 = vmatprep.subr.mxu0 0.0
    %5610 = vmatpush1.msra.mxu0 0.0
    %5611 = vmatprep.subr.mxu0 0.0
    %5612 = vmatpush1.msra.mxu0 0.0
    %5613 = vmatprep.subr.mxu0 0.0
    %5614 = vmatpush1.msra.mxu0 0.0
    %5615 = vmatprep.subr.mxu0 0.0
    %5616 = vmatpush1.msra.mxu0 0.0
    %5617 = vmatprep.subr.mxu0 0.0
    %5618 = vmatpush1.msra.mxu0 0.0
    %5619 = vmatprep.subr.mxu0 0.0
    %5620 = vmatpush1.msra.mxu0 0.0
    %5621 = vmatprep.subr.mxu0 0.0
    %5622 = vmatpush1.msra.mxu0 0.0
    %5623 = vmatprep.subr.mxu0 0.0
    %5624 = vmatpush1.msra.mxu0 0.0
    %5625 = vmatprep.subr.mxu0 0.0
    %5626 = vmatpush1.msra.mxu0 0.0
    %5627 = vmatprep.mubr.f32.mxu0 0.0
    %5628 = vmatmul.mubr.f32.gmra.mrb[0].mxu0 %v5558
    %v5629 = vpop.f32.mrb[0].mxu0
    %v5630 = vadd.f32 0.0, %v5629
    %v5631 = vpop.f32.mrb[0].mxu0
    %5632 = vdwg.mxu0
    %v5633 = vadd.f32 %v5556, %v5630
    %v5634 = vld [vmem:[%s3] sm:$0x1]
    %v5636 = vlaneseq
    %v5637 = vshrl.u32 %v5636, 7
    %v5638 = vsub.s32 0, %v5637
    %v5639 = vrot.slane %v5634, %v5638
    %v5641 = vadd.f32 %v5633, %v5639
    %v5642 = vmax.f32 %v5641, 0.0
    %v5643 = vld [vmem:[%s4] sm:$0xff]
    %v5644 = vld [vmem:[%s4 + $0x8] sm:$0x3]
    %v5645 = vld [vmem:[%s5] sm:$0x1]
    %v5647 = vlaneseq
    %v5648 = vshrl.u32 %v5647, 7
    %v5649 = vsub.s32 0, %v5648
    %v5650 = vrot.slane %v5645, %v5649
    %vm5652 = vcmask 80896
    %v5654 = vsel %vm5652, %v5642, 0
    %v5657 = vsel %vm83, %v5644, 0
    %5659 = vmatprep.subr.mxu0 0.0
    %5660 = vmatpush1.msra.mxu0 %v5643
    %5661 = vmatprep.subr.mxu0 0.0
    %5662 = vmatpush1.msra.mxu0 %v5657
    %5663 = vmatprep.subr.mxu0 0.0
    %5664 = vmatpush1.msra.mxu0 0.0
    %5665 = vmatprep.subr.mxu0 0.0
    %5666 = vmatpush1.msra.mxu0 0.0
    %5667 = vmatprep.subr.mxu0 0.0
    %5668 = vmatpush1.msra.mxu0 0.0
    %5669 = vmatprep.subr.mxu0 0.0
    %5670 = vmatpush1.msra.mxu0 0.0
    %5671 = vmatprep.subr.mxu0 0.0
    %5672 = vmatpush1.msra.mxu0 0.0
    %5673 = vmatprep.subr.mxu0 0.0
    %5674 = vmatpush1.msra.mxu0 0.0
    %5675 = vmatprep.subr.mxu0 0.0
    %5676 = vmatpush1.msra.mxu0 0.0
    %5677 = vmatprep.subr.mxu0 0.0
    %5678 = vmatpush1.msra.mxu0 0.0
    %5679 = vmatprep.subr.mxu0 0.0
    %5680 = vmatpush1.msra.mxu0 0.0
    %5681 = vmatprep.subr.mxu0 0.0
    %5682 = vmatpush1.msra.mxu0 0.0
    %5683 = vmatprep.subr.mxu0 0.0
    %5684 = vmatpush1.msra.mxu0 0.0
    %5685 = vmatprep.subr.mxu0 0.0
    %5686 = vmatpush1.msra.mxu0 0.0
    %5687 = vmatprep.subr.mxu0 0.0
    %5688 = vmatpush1.msra.mxu0 0.0
    %5689 = vmatprep.subr.mxu0 0.0
    %5690 = vmatpush1.msra.mxu0 0.0
    %5691 = vmatprep.subr.mxu0 0.0
    %5692 = vmatpush1.msra.mxu0 0.0
    %5693 = vmatprep.subr.mxu0 0.0
    %5694 = vmatpush1.msra.mxu0 0.0
    %5695 = vmatprep.subr.mxu0 0.0
    %5696 = vmatpush1.msra.mxu0 0.0
    %5697 = vmatprep.subr.mxu0 0.0
    %5698 = vmatpush1.msra.mxu0 0.0
    %5699 = vmatprep.subr.mxu0 0.0
    %5700 = vmatpush1.msra.mxu0 0.0
    %5701 = vmatprep.subr.mxu0 0.0
    %5702 = vmatpush1.msra.mxu0 0.0
    %5703 = vmatprep.subr.mxu0 0.0
    %5704 = vmatpush1.msra.mxu0 0.0
    %5705 = vmatprep.subr.mxu0 0.0
    %5706 = vmatpush1.msra.mxu0 0.0
    %5707 = vmatprep.subr.mxu0 0.0
    %5708 = vmatpush1.msra.mxu0 0.0
    %5709 = vmatprep.subr.mxu0 0.0
    %5710 = vmatpush1.msra.mxu0 0.0
    %5711 = vmatprep.subr.mxu0 0.0
    %5712 = vmatpush1.msra.mxu0 0.0
    %5713 = vmatprep.subr.mxu0 0.0
    %5714 = vmatpush1.msra.mxu0 0.0
    %5715 = vmatprep.subr.mxu0 0.0
    %5716 = vmatpush1.msra.mxu0 0.0
    %5717 = vmatprep.subr.mxu0 0.0
    %5718 = vmatpush1.msra.mxu0 0.0
    %5719 = vmatprep.subr.mxu0 0.0
    %5720 = vmatpush1.msra.mxu0 0.0
    %5721 = vmatprep.subr.mxu0 0.0
    %5722 = vmatpush1.msra.mxu0 0.0
    %5723 = vmatprep.mubr.f32.mxu0 0.0
    %5724 = vmatmul.mubr.f32.gmra.mrb[0].mxu0 %v5654
    %v5725 = vpop.f32.mrb[0].mxu0
    %v5726 = vadd.f32 %v5650, %v5725
    %v5727 = vpop.f32.mrb[0].mxu0
    %5728 = vdwg.mxu0
    %5729 = vst.msk [vmem:[#allocation8] sm:$0x3] %vm98, %v5726
    // Predicated region
    $region34: #{time_encoder_forward.1} parent=1 // pred_check
      _
    $region35: #{time_encoder_forward.1} parent=1 // pred_check_branch
      %5731 = sbr.rel (0) target = $region37
    $region36: #{time_encoder_forward.1} parent=1 // pred_region
      %s5733 = ssub.s32 32, 32
      %5734 = vsyncadd [#allocation5], %s5733
      %s5736 = sshll.u32 [#allocation8], 4
      %s5737 = int_to_ptr.vmem [resolvable:$true] %s5736
      %5739 = dma.vmem_to_hbm [thread:$0]  %s5737, 32, %s6, [#allocation5]
    $region37: #{time_encoder_forward.1} parent=1 // pred_fallthru
      _
    // Predicated region
    $region38: #{time_encoder_forward.1} parent=1 // pred_check
      _
    $region39: #{time_encoder_forward.1} parent=1 // pred_check_branch
      %5741 = sbr.rel (0) target = $region41
    $region40: #{time_encoder_forward.1} parent=1 // pred_region
      %5742 = dma.done [#allocation5], 32
    $region41: #{time_encoder_forward.1} parent=1 // pred_fallthru
      _
    %5743 = vsyncpa [#allocation4], 1
    %5744 = vsyncpa [#allocation5], 1
    %5745 = vsyncpa [#allocation6], 1

</llo_original>
